<compile_context>
chip_gen: v7x
topology: tpu7x:2x2x1
jax: 0.10.0
libtpu: 0.0.40
codegen_flags: <defaults>
</compile_context>

<pallas_src>
import functools

import jax
import jax.numpy as jnp
from jax.experimental import pallas as pl
from jax.experimental.pallas import tpu as pltpu

LN_EPS = 1e-6


# ----------------------------------------------------------------------------
# Shared helpers
# ----------------------------------------------------------------------------
def _layernorm(x, w, b, eps=LN_EPS):
    mu = jnp.mean(x, axis=-1, keepdims=True)
    var = jnp.mean((x - mu) ** 2, axis=-1, keepdims=True)
    return (x - mu) * jax.lax.rsqrt(var + eps) * w + b


# ----------------------------------------------------------------------------
# Pallas kernel: whole encoder stack
# ----------------------------------------------------------------------------
def encoder_stack_kernel(x_ref, ln1w, ln1b,
                         wq, bq, wk, bk, wv, bv, wo, bo,
                         ln2w, ln2b, w1, b1, w2, b2,
                         out_ref,
                         h2_ref, q_ref, k_ref, v_ref, mrg_ref,
                         *, num_heads, kv_tile, exp_bf16):
    l = pl.program_id(1)      # layer index
    it = pl.program_id(2)     # MLP intermediate tile index
    Bb, N, D = out_ref.shape
    H = num_heads
    hd = D // H
    scale = 1.0 / (hd ** 0.5)
    bf16, f32 = jnp.bfloat16, jnp.float32

    # Seed the cross-layer carry (held in the VMEM-resident output block).
    @pl.when((l == 0) & (it == 0))
    def _seed_carry():
        out_ref[...] = x_ref[...]

    # LayerNorm1 + flash attention + residual + LayerNorm2 : once per (b-block, l).
    @pl.when(it == 0)
    def _attention_and_ln2():
        def split_heads_into(ref, t):
            # (N, D) fp32 -> head-major (H, N, hd) bf16, written straight to scratch
            # (avoids stack/concatenate value relayouts and keeps fp32 q/k/v short-lived).
            for hh in range(H):
                ref[hh] = t[:, hh * hd:(hh + 1) * hd].astype(bf16)

        for bi in range(Bb):
            h_prev = out_ref[bi]                               # (N, D) fp32 carry
            hb = _layernorm(h_prev, ln1w[0], ln1b[0]).astype(bf16)

            # Projections; 1/sqrt(hd) folded into q (N*D mul instead of H*N*N).
            q = (jnp.dot(hb, wq[0], preferred_element_type=f32) + bq[0]) * scale
            split_heads_into(q_ref, q)
            k = jnp.dot(hb, wk[0], preferred_element_type=f32) + bk[0]
            split_heads_into(k_ref, k)
            v = jnp.dot(hb, wv[0], preferred_element_type=f32) + bv[0]
            split_heads_into(v_ref, v)

            qh = q_ref[...]                                    # (H, N, hd) bf16
            m_i = l_i = acc = None
            for j in range(N // kv_tile):                      # flash-style KV tiling
                kj = k_ref[:, j * kv_tile:(j + 1) * kv_tile, :]
                vj = v_ref[:, j * kv_tile:(j + 1) * kv_tile, :]
                s = jnp.einsum('hqd,hkd->hqk', qh, kj,
                               preferred_element_type=f32)     # (H, N, tk) only
                s_max = jnp.max(s, axis=-1, keepdims=True)
                m_new = s_max if j == 0 else jnp.maximum(m_i, s_max)
                if exp_bf16:                                   # bf16 EUP path (v6e/v7x)
                    p = jnp.exp((s - m_new).astype(bf16))
                    p_sum = jnp.sum(p, axis=-1, keepdims=True, dtype=f32)
                else:                                          # fp32 exp (v5e has no bf16 EUP)
                    pf = jnp.exp(s - m_new)
                    p_sum = jnp.sum(pf, axis=-1, keepdims=True)
                    p = pf.astype(bf16)
                pv = jnp.einsum('hqk,hkd->hqd', p, vj,
                                preferred_element_type=f32)    # (H, N, hd)
                if j == 0:
                    l_i, acc = p_sum, pv
                else:
                    alpha = jnp.exp(m_i - m_new)
                    l_i = alpha * l_i + p_sum
                    acc = alpha * acc + pv
                m_i = m_new

            o = acc * pl.reciprocal(l_i, approx=True)          # (H, N, hd) fp32
            for hh in range(H):                                # merge heads via ref stores
                mrg_ref[:, hh * hd:(hh + 1) * hd] = o[hh].astype(bf16)
            attn = jnp.dot(mrg_ref[...], wo[0],
                           preferred_element_type=f32) + bo[0]

            x_mid = h_prev + attn                              # residual 1 (fp32)
            h2 = _layernorm(x_mid, ln2w[0], ln2b[0])
            h2_ref[bi * N:(bi + 1) * N, :] = h2.astype(bf16)   # fc1 input, reused per tile
            out_ref[bi] = x_mid + b2[0]                        # residual base + fc2 bias

    # MLP partial for this intermediate tile (all Bb images in one big matmul).
    f = jnp.dot(h2_ref[...], w1[0], preferred_element_type=f32) + b1[0]
    f = jax.nn.gelu(f, approximate=True)       # matches torch gelu(approximate='tanh')
    part = jnp.dot(f.astype(bf16), w2[0], preferred_element_type=f32)   # (Bb*N, D)
    for bi in range(Bb):
        out_ref[bi] = out_ref[bi] + part[bi * N:(bi + 1) * N, :]


# ----------------------------------------------------------------------------
# Generation-aware configuration
# ----------------------------------------------------------------------------
def _device_kind():
    try:
        return jax.devices()[0].device_kind.lower()
    except Exception:
        return ""


def _vmem_capacity_bytes():
    try:
        info = pltpu.get_tpu_info()
        cap = getattr(info, "vmem_capacity_bytes", None)
        if cap:
            cap = int(cap)
            if cap >= (32 << 20):
                return cap
    except Exception:
        pass
    return 64 << 20      # conservative: v7x per-TensorCore VMEM


def _largest_divisor_leq(n, target, multiple=1):
    target = max(1, min(n, target))
    for t in range(target, 0, -1):
        if n % t == 0 and t % multiple == 0:
            return t
    for t in range(target, 0, -1):
        if n % t == 0:
            return t
    return 1


def _auto_config(B, N, I, batch_block=None, inter_tile=None, kv_tile=None):
    kind = _device_kind()
    cap = _vmem_capacity_bytes()
    small_vmem = cap <= (80 << 20)                      # v7x: 64 MiB per TC
    old_gen = ("v5" in kind) or ("v4" in kind)

    ti_target = inter_tile or (256 if old_gen else 512)  # v5e: match 128-wide MXU
    ti = _largest_divisor_leq(I, ti_target, multiple=128)

    bb_target = batch_block or (2 if small_vmem else 4)  # images per block
    if "v7" in kind and B >= 2:
        bb_target = max(1, min(bb_target, B // 2))       # keep blocks for both TCs
    bb = _largest_divisor_leq(B, bb_target)

    kv = _largest_divisor_leq(N, kv_tile or 256, multiple=8)

    exp_bf16 = ("v6" in kind) or ("v7" in kind)          # never bf16 EUP on v4/v5
    return bb, ti, kv, exp_bf16, cap


# ----------------------------------------------------------------------------
# pallas_call wrapper
# ----------------------------------------------------------------------------
def siglip_encoder(x, params, cfg, *, batch_block=None, inter_tile=None, kv_tile=None):
    B, N, D = x.shape
    L = cfg["num_hidden_layers"]
    H = cfg["num_attention_heads"]
    I = cfg["intermediate_size"]
    assert D % 128 == 0 and N % 8 == 0, "pad N to a multiple of 8 and D to 128"
    assert D % H == 0

    Bb, ti, kv, exp_bf16, vmem_cap = _auto_config(B, N, I, batch_block, inter_tile, kv_tile)
    assert B % Bb == 0 and I % ti == 0 and N % kv == 0
    IT = I // ti
    hd = D // H

    def lspec(tail):   # per-layer (non I-tiled) parameter block
        return pl.BlockSpec((1,) + tuple(tail), lambda b, l, it: (l, 0, 0))

    in_specs = [
        pl.BlockSpec((Bb, N, D), lambda b, l, it: (b, 0, 0)),     # x (hidden states)
        lspec((1, D)), lspec((1, D)),                             # ln1 w, b
        lspec((D, D)), lspec((1, D)),                             # wq, bq
        lspec((D, D)), lspec((1, D)),                             # wk, bk
        lspec((D, D)), lspec((1, D)),                             # wv, bv
        lspec((D, D)), lspec((1, D)),                             # wo, bo
        lspec((1, D)), lspec((1, D)),                             # ln2 w, b
        pl.BlockSpec((1, D, ti), lambda b, l, it: (l, 0, it)),    # fc1 weight tile
        pl.BlockSpec((1, 1, ti), lambda b, l, it: (l, 0, it)),    # fc1 bias tile
        pl.BlockSpec((1, ti, D), lambda b, l, it: (l, it, 0)),    # fc2 weight tile
        lspec((1, D)),                                            # fc2 bias
    ]
    out_spec = pl.BlockSpec((Bb, N, D), lambda b, l, it: (b, 0, 0))

    # Generation-aware VMEM budget (double-buffered weights + resident blocks + live attn).
    wblk = (4 * D * D + 2 * D * ti) * 2 + (10 * D + ti) * 4       # weights per step
    ablk = Bb * N * D * 4                                          # x / out block (fp32)
    scr = (Bb * N * D + 4 * N * D) * 2                             # bf16 scratch
    live = 2 * H * N * kv * 4 + 3 * N * D * 4                      # score tile + acc + q/k/v
    need = 2 * wblk + 4 * ablk + scr + live + (16 << 20)
    vmem_bytes = int(min(max(need, 32 << 20), int(vmem_cap * 0.82)))

    kern = functools.partial(encoder_stack_kernel, num_heads=H,
                             kv_tile=kv, exp_bf16=exp_bf16)
    return pl.pallas_call(
        kern,
        out_shape=jax.ShapeDtypeStruct((B, N, D), jnp.float32),
        grid=(B // Bb, L, IT),
        in_specs=in_specs,
        out_specs=out_spec,
        scratch_shapes=[
            pltpu.VMEM((Bb * N, D), jnp.bfloat16),   # ln2(x) rows for all Bb images
            pltpu.VMEM((H, N, hd), jnp.bfloat16),    # q heads (scale folded in)
            pltpu.VMEM((H, N, hd), jnp.bfloat16),    # k heads
            pltpu.VMEM((H, N, hd), jnp.bfloat16),    # v heads
            pltpu.VMEM((N, D), jnp.bfloat16),        # merged attention output
        ],
        compiler_params=pltpu.CompilerParams(
            dimension_semantics=("parallel", "arbitrary", "arbitrary"),
            vmem_limit_bytes=vmem_bytes),
    )(x,
      params["ln1_w"], params["ln1_b"],
      params["wq"], params["bq"], params["wk"], params["bk"],
      params["wv"], params["bv"], params["wo"], params["bo"],
      params["ln2_w"], params["ln2_b"],
      params["w1"], params["b1"], params["w2"], params["b2"])


# ----------------------------------------------------------------------------
# Deterministic parameter init (stacked (L, ...) arrays; weights bf16, rest fp32)
# ----------------------------------------------------------------------------
def init_params(key, cfg):
    D = cfg["hidden_size"]
    I = cfg["intermediate_size"]
    L = cfg["num_hidden_layers"]
    std = 0.02
    ks = jax.random.split(key, 16)

    def w(k, shape):   # matmul weights stored bf16 (MXU-native)
        return (jax.random.normal(k, shape, jnp.float32) * std).astype(jnp.bfloat16)

    def b(k, shape):   # biases / LN params stay fp32
        return jax.random.normal(k, shape, jnp.float32) * std

    return {
        "ln1_w": 1.0 + b(ks[0], (L, 1, D)),
        "ln1_b": b(ks[1], (L, 1, D)),
        "wq": w(ks[2], (L, D, D)), "bq": b(ks[3], (L, 1, D)),
        "wk": w(ks[4], (L, D, D)), "bk": b(ks[5], (L, 1, D)),
        "wv": w(ks[6], (L, D, D)), "bv": b(ks[7], (L, 1, D)),
        "wo": w(ks[8], (L, D, D)), "bo": b(ks[9], (L, 1, D)),
        "ln2_w": 1.0 + b(ks[10], (L, 1, D)),
        "ln2_b": b(ks[11], (L, 1, D)),
        "w1": w(ks[12], (L, D, I)), "b1": b(ks[13], (L, 1, I)),
        "w2": w(ks[14], (L, I, D)), "b2": b(ks[15], (L, 1, D)),
    }


# ----------------------------------------------------------------------------
# Pure-JAX reference (mirrors the PyTorch forward; same bf16-operand matmuls)
# ----------------------------------------------------------------------------
def reference_forward(x, params, num_heads):
    f32, bf16 = jnp.float32, jnp.bfloat16
    B, N, D = x.shape
    H = num_heads
    hd = D // H
    scale = 1.0 / (hd ** 0.5)
    L = params["wq"].shape[0]

    h = x
    for l in range(L):
        g = lambda name: params[name][l]

        residual = h
        hn = _layernorm(h, g("ln1_w"), g("ln1_b")).astype(bf16)
        q = jnp.einsum('bnd,de->bne', hn, g("wq"), preferred_element_type=f32) + g("bq")
        k = jnp.einsum('bnd,de->bne', hn, g("wk"), preferred_element_type=f32) + g("bk")
        v = jnp.einsum('bnd,de->bne', hn, g("wv"), preferred_element_type=f32) + g("bv")

        def split(t):  # (B, N, D) -> (B, H, N, hd)
            return t.reshape(B, N, H, hd).transpose(0, 2, 1, 3).astype(bf16)

        qh, kh, vh = split(q), split(k), split(v)
        s = jnp.einsum('bhqd,bhkd->bhqk', qh, kh, preferred_element_type=f32) * scale
        p = jax.nn.softmax(s, axis=-1)
        o = jnp.einsum('bhqk,bhkd->bhqd', p.astype(bf16), vh, preferred_element_type=f32)
        o = o.transpose(0, 2, 1, 3).reshape(B, N, D)
        attn = jnp.einsum('bnd,de->bne', o.astype(bf16), g("wo"),
                          preferred_element_type=f32) + g("bo")
        h = residual + attn

        residual = h
        hn2 = _layernorm(h, g("ln2_w"), g("ln2_b")).astype(bf16)
        f = jnp.einsum('bnd,di->bni', hn2, g("w1"), preferred_element_type=f32) + g("b1")
        f = jax.nn.gelu(f, approximate=True)
        h = residual + jnp.einsum('bni,id->bnd', f.astype(bf16), g("w2"),
                                  preferred_element_type=f32) + g("b2")
    return h


# ----------------------------------------------------------------------------
if __name__ == "__main__":
    cfg = dict(
        hidden_size=128,          # multiple of 128 lanes -> unmasked stores
        intermediate_size=256,
        num_hidden_layers=2,
        num_attention_heads=4,
        layer_norm_eps=LN_EPS,
    )
    B, N = 2, 64                  # N multiple of 8 sublanes

    key = jax.random.PRNGKey(0)
    pkey, xkey = jax.random.split(key)
    params = init_params(pkey, cfg)
    x = jax.random.normal(xkey, (B, N, cfg["hidden_size"]), jnp.float32)

    out = siglip_encoder(x, params, cfg)
    out = jax.block_until_ready(out)

    ref = reference_forward(x, params, cfg["num_attention_heads"])
    assert out.shape == (B, N, cfg["hidden_size"])
    max_err = float(jnp.max(jnp.abs(out - ref)))
    assert jnp.allclose(out, ref, atol=2e-2, rtol=2e-2), f"mismatch: max abs err {max_err}"

    print("KERNEL_OK")
</pallas_src>

<mosaic_0001>
module attributes {stable_mosaic.version = 11 : i64} {
  func.func @encoder_stack_kernel(%arg0: i32, %arg1: i32, %arg2: i32, %arg3: memref<2x64x128xf32, #tpu.memory_space<vmem>>, %arg4: memref<1x1x128xf32, #tpu.memory_space<vmem>>, %arg5: memref<1x1x128xf32, #tpu.memory_space<vmem>>, %arg6: memref<1x128x128xbf16, #tpu.memory_space<vmem>>, %arg7: memref<1x1x128xf32, #tpu.memory_space<vmem>>, %arg8: memref<1x128x128xbf16, #tpu.memory_space<vmem>>, %arg9: memref<1x1x128xf32, #tpu.memory_space<vmem>>, %arg10: memref<1x128x128xbf16, #tpu.memory_space<vmem>>, %arg11: memref<1x1x128xf32, #tpu.memory_space<vmem>>, %arg12: memref<1x128x128xbf16, #tpu.memory_space<vmem>>, %arg13: memref<1x1x128xf32, #tpu.memory_space<vmem>>, %arg14: memref<1x1x128xf32, #tpu.memory_space<vmem>>, %arg15: memref<1x1x128xf32, #tpu.memory_space<vmem>>, %arg16: memref<1x128x256xbf16, #tpu.memory_space<vmem>>, %arg17: memref<1x1x256xf32, #tpu.memory_space<vmem>>, %arg18: memref<1x256x128xbf16, #tpu.memory_space<vmem>>, %arg19: memref<1x1x128xf32, #tpu.memory_space<vmem>>, %arg20: memref<2x64x128xf32, #tpu.memory_space<vmem>>, %arg21: memref<128x128xbf16, #tpu.memory_space<vmem>>, %arg22: memref<4x64x32xbf16, #tpu.memory_space<vmem>>, %arg23: memref<4x64x32xbf16, #tpu.memory_space<vmem>>, %arg24: memref<4x64x32xbf16, #tpu.memory_space<vmem>>, %arg25: memref<64x128xbf16, #tpu.memory_space<vmem>>) attributes {dimension_semantics = [#tpu.dimension_semantics<parallel>, #tpu.dimension_semantics<arbitrary>, #tpu.dimension_semantics<arbitrary>], iteration_bounds = array<i64: 1, 2, 1>, scalar_prefetch = 0 : i64, scratch_operands = 5 : i64, tpu.core_type = #tpu.core_type<tc>, window_params = [{transform_indices = @transform_0, window_bounds = array<i64: 2, 64, 128>}, {transform_indices = @transform_1, window_bounds = array<i64: 1, 1, 128>}, {transform_indices = @transform_2, window_bounds = array<i64: 1, 1, 128>}, {transform_indices = @transform_3, window_bounds = array<i64: 1, 128, 128>}, {transform_indices = @transform_4, window_bounds = array<i64: 1, 1, 128>}, {transform_indices = @transform_5, window_bounds = array<i64: 1, 128, 128>}, {transform_indices = @transform_6, window_bounds = array<i64: 1, 1, 128>}, {transform_indices = @transform_7, window_bounds = array<i64: 1, 128, 128>}, {transform_indices = @transform_8, window_bounds = array<i64: 1, 1, 128>}, {transform_indices = @transform_9, window_bounds = array<i64: 1, 128, 128>}, {transform_indices = @transform_10, window_bounds = array<i64: 1, 1, 128>}, {transform_indices = @transform_11, window_bounds = array<i64: 1, 1, 128>}, {transform_indices = @transform_12, window_bounds = array<i64: 1, 1, 128>}, {transform_indices = @transform_13, window_bounds = array<i64: 1, 128, 256>}, {transform_indices = @transform_14, window_bounds = array<i64: 1, 1, 256>}, {transform_indices = @transform_15, window_bounds = array<i64: 1, 256, 128>}, {transform_indices = @transform_16, window_bounds = array<i64: 1, 1, 128>}, {transform_indices = @transform_17, window_bounds = array<i64: 2, 64, 128>}]} {
    %c0_i32 = arith.constant 0 : i32
    %0 = arith.cmpi eq, %arg1, %c0_i32 : i32
    %c0_i32_0 = arith.constant 0 : i32
    %1 = arith.cmpi eq, %arg2, %c0_i32_0 : i32
    %2 = arith.andi %0, %1 : i1
    %3 = arith.extui %2 : i1 to i32
    %c0_i32_1 = arith.constant 0 : i32
    %4 = arith.cmpi ne, %3, %c0_i32_1 : i32
    scf.if %4 {
      %c0_30 = arith.constant 0 : index
      %c0_31 = arith.constant 0 : index
      %c0_32 = arith.constant 0 : index
      %47 = vector.load %arg3[%c0_30, %c0_31, %c0_32] : memref<2x64x128xf32, #tpu.memory_space<vmem>>, vector<2x64x128xf32>
      %c0_33 = arith.constant 0 : index
      %c0_34 = arith.constant 0 : index
      %c0_35 = arith.constant 0 : index
      %48 = vector.load %arg20[%c0_33, %c0_34, %c0_35] : memref<2x64x128xf32, #tpu.memory_space<vmem>>, vector<2x64x128xf32>
      tpu.vector_store %arg20[%c0_33, %c0_34, %c0_35], %47 {strides = array<i32>} : memref<2x64x128xf32, #tpu.memory_space<vmem>>, vector<2x64x128xf32>,
    } else {
    }
    %c0_i32_2 = arith.constant 0 : i32
    %5 = arith.cmpi eq, %arg2, %c0_i32_2 : i32
    %6 = arith.extui %5 : i1 to i32
    %c0_i32_3 = arith.constant 0 : i32
    %7 = arith.cmpi ne, %6, %c0_i32_3 : i32
    scf.if %7 {
      %c0_30 = arith.constant 0 : index
      %c0_31 = arith.constant 0 : index
      %c0_32 = arith.constant 0 : index
      %47 = vector.load %arg20[%c0_30, %c0_31, %c0_32] : memref<2x64x128xf32, #tpu.memory_space<vmem>>, vector<1x64x128xf32>
      %48 = vector.shape_cast %47 : vector<1x64x128xf32> to vector<64x128xf32>
      %c0_33 = arith.constant 0 : index
      %c0_34 = arith.constant 0 : index
      %c0_35 = arith.constant 0 : index
      %49 = vector.load %arg4[%c0_33, %c0_34, %c0_35] : memref<1x1x128xf32, #tpu.memory_space<vmem>>, vector<1x1x128xf32>
      %50 = vector.shape_cast %49 : vector<1x1x128xf32> to vector<1x128xf32>
      %c0_36 = arith.constant 0 : index
      %c0_37 = arith.constant 0 : index
      %c0_38 = arith.constant 0 : index
      %51 = vector.load %arg5[%c0_36, %c0_37, %c0_38] : memref<1x1x128xf32, #tpu.memory_space<vmem>>, vector<1x1x128xf32>
      %52 = vector.shape_cast %51 : vector<1x1x128xf32> to vector<1x128xf32>
      %cst_39 = arith.constant dense<0.000000e+00> : vector<64xf32>
      %53 = vector.multi_reduction <add>, %48, %cst_39 [1] : vector<64x128xf32> to vector<64xf32>
      %54 = vector.shape_cast %53 : vector<64xf32> to vector<64x1xf32>
      %cst_40 = arith.constant 1.280000e+02 : f32
      %55 = vector.broadcast %cst_40 : f32 to vector<64x1xf32>
      %56 = arith.divf %54, %55 : vector<64x1xf32>
      %57 = vector.broadcast %56 : vector<64x1xf32> to vector<64x128xf32>
      %58 = arith.subf %48, %57 : vector<64x128xf32>
      %59 = arith.mulf %58, %58 : vector<64x128xf32>
      %cst_41 = arith.constant dense<0.000000e+00> : vector<64xf32>
      %60 = vector.multi_reduction <add>, %59, %cst_41 [1] : vector<64x128xf32> to vector<64xf32>
      %61 = vector.shape_cast %60 : vector<64xf32> to vector<64x1xf32>
      %cst_42 = arith.constant 1.280000e+02 : f32
      %62 = vector.broadcast %cst_42 : f32 to vector<64x1xf32>
      %63 = arith.divf %61, %62 : vector<64x1xf32>
      %64 = vector.broadcast %56 : vector<64x1xf32> to vector<64x128xf32>
      %65 = arith.subf %48, %64 : vector<64x128xf32>
      %cst_43 = arith.constant 9.99999997E-7 : f32
      %66 = vector.broadcast %cst_43 : f32 to vector<64x1xf32>
      %67 = arith.addf %63, %66 : vector<64x1xf32>
      %68 = math.rsqrt %67 : vector<64x1xf32>
      %69 = vector.broadcast %68 : vector<64x1xf32> to vector<64x128xf32>
      %70 = arith.mulf %65, %69 : vector<64x128xf32>
      %71 = vector.broadcast %50 : vector<1x128xf32> to vector<64x128xf32>
      %72 = arith.mulf %70, %71 : vector<64x128xf32>
      %73 = vector.broadcast %52 : vector<1x128xf32> to vector<64x128xf32>
      %74 = arith.addf %72, %73 : vector<64x128xf32>
      %75 = arith.truncf %74 : vector<64x128xf32> to vector<64x128xbf16>
      %c0_44 = arith.constant 0 : index
      %c0_45 = arith.constant 0 : index
      %c0_46 = arith.constant 0 : index
      %76 = vector.load %arg6[%c0_44, %c0_45, %c0_46] : memref<1x128x128xbf16, #tpu.memory_space<vmem>>, vector<1x128x128xbf16>
      %77 = vector.shape_cast %76 : vector<1x128x128xbf16> to vector<128x128xbf16>
      %cst_47 = arith.constant dense<0.000000e+00> : vector<64x128xf32>
      %78 = tpu.matmul %75, %77, %cst_47 {dimension_numbers = #tpu.dot_dimension_numbers<[1], [0], [0], [1], [0, 0, 1, 1], [], []>} : vector<64x128xbf16>, vector<128x128xbf16>, vector<64x128xf32> -> vector<64x128xf32>
      %c0_48 = arith.constant 0 : index
      %c0_49 = arith.constant 0 : index
      %c0_50 = arith.constant 0 : index
      %79 = vector.load %arg7[%c0_48, %c0_49, %c0_50] : memref<1x1x128xf32, #tpu.memory_space<vmem>>, vector<1x1x128xf32>
      %80 = vector.shape_cast %79 : vector<1x1x128xf32> to vector<1x128xf32>
      %81 = vector.broadcast %80 : vector<1x128xf32> to vector<64x128xf32>
      %82 = arith.addf %78, %81 : vector<64x128xf32>
      %cst_51 = arith.constant 0.176776692 : f32
      %83 = vector.broadcast %cst_51 : f32 to vector<64x128xf32>
      %84 = arith.mulf %82, %83 : vector<64x128xf32>
      %85 = vector.extract_strided_slice %84 {offsets = [0, 0], sizes = [64, 32], strides = [1, 1]} : vector<64x128xf32> to vector<64x32xf32>
      %86 = arith.truncf %85 : vector<64x32xf32> to vector<64x32xbf16>
      %c0_52 = arith.constant 0 : index
      %c0_53 = arith.constant 0 : index
      %c0_54 = arith.constant 0 : index
      %87 = vector.load %arg22[%c0_52, %c0_53, %c0_54] : memref<4x64x32xbf16, #tpu.memory_space<vmem>>, vector<1x64x32xbf16>
      %88 = vector.shape_cast %87 : vector<1x64x32xbf16> to vector<64x32xbf16>
      %89 = vector.shape_cast %86 : vector<64x32xbf16> to vector<1x64x32xbf16>
      tpu.vector_store %arg22[%c0_52, %c0_53, %c0_54], %89 {strides = array<i32>} : memref<4x64x32xbf16, #tpu.memory_space<vmem>>, vector<1x64x32xbf16>,
      %90 = vector.extract_strided_slice %84 {offsets = [0, 32], sizes = [64, 32], strides = [1, 1]} : vector<64x128xf32> to vector<64x32xf32>
      %91 = arith.truncf %90 : vector<64x32xf32> to vector<64x32xbf16>
      %c1_55 = arith.constant 1 : index
      %c0_56 = arith.constant 0 : index
      %c0_57 = arith.constant 0 : index
      %92 = vector.load %arg22[%c1_55, %c0_56, %c0_57] : memref<4x64x32xbf16, #tpu.memory_space<vmem>>, vector<1x64x32xbf16>
      %93 = vector.shape_cast %92 : vector<1x64x32xbf16> to vector<64x32xbf16>
      %94 = vector.shape_cast %91 : vector<64x32xbf16> to vector<1x64x32xbf16>
      tpu.vector_store %arg22[%c1_55, %c0_56, %c0_57], %94 {strides = array<i32>} : memref<4x64x32xbf16, #tpu.memory_space<vmem>>, vector<1x64x32xbf16>,
      %95 = vector.extract_strided_slice %84 {offsets = [0, 64], sizes = [64, 32], strides = [1, 1]} : vector<64x128xf32> to vector<64x32xf32>
      %96 = arith.truncf %95 : vector<64x32xf32> to vector<64x32xbf16>
      %c2 = arith.constant 2 : index
      %c0_58 = arith.constant 0 : index
      %c0_59 = arith.constant 0 : index
      %97 = vector.load %arg22[%c2, %c0_58, %c0_59] : memref<4x64x32xbf16, #tpu.memory_space<vmem>>, vector<1x64x32xbf16>
      %98 = vector.shape_cast %97 : vector<1x64x32xbf16> to vector<64x32xbf16>
      %99 = vector.shape_cast %96 : vector<64x32xbf16> to vector<1x64x32xbf16>
      tpu.vector_store %arg22[%c2, %c0_58, %c0_59], %99 {strides = array<i32>} : memref<4x64x32xbf16, #tpu.memory_space<vmem>>, vector<1x64x32xbf16>,
      %100 = vector.extract_strided_slice %84 {offsets = [0, 96], sizes = [64, 32], strides = [1, 1]} : vector<64x128xf32> to vector<64x32xf32>
      %101 = arith.truncf %100 : vector<64x32xf32> to vector<64x32xbf16>
      %c3 = arith.constant 3 : index
      %c0_60 = arith.constant 0 : index
      %c0_61 = arith.constant 0 : index
      %102 = vector.load %arg22[%c3, %c0_60, %c0_61] : memref<4x64x32xbf16, #tpu.memory_space<vmem>>, vector<1x64x32xbf16>
      %103 = vector.shape_cast %102 : vector<1x64x32xbf16> to vector<64x32xbf16>
      %104 = vector.shape_cast %101 : vector<64x32xbf16> to vector<1x64x32xbf16>
      tpu.vector_store %arg22[%c3, %c0_60, %c0_61], %104 {strides = array<i32>} : memref<4x64x32xbf16, #tpu.memory_space<vmem>>, vector<1x64x32xbf16>,
      %c0_62 = arith.constant 0 : index
      %c0_63 = arith.constant 0 : index
      %c0_64 = arith.constant 0 : index
      %105 = vector.load %arg8[%c0_62, %c0_63, %c0_64] : memref<1x128x128xbf16, #tpu.memory_space<vmem>>, vector<1x128x128xbf16>
      %106 = vector.shape_cast %105 : vector<1x128x128xbf16> to vector<128x128xbf16>
      %cst_65 = arith.constant dense<0.000000e+00> : vector<64x128xf32>
      %107 = tpu.matmul %75, %106, %cst_65 {dimension_numbers = #tpu.dot_dimension_numbers<[1], [0], [0], [1], [0, 0, 1, 1], [], []>} : vector<64x128xbf16>, vector<128x128xbf16>, vector<64x128xf32> -> vector<64x128xf32>
      %c0_66 = arith.constant 0 : index
      %c0_67 = arith.constant 0 : index
      %c0_68 = arith.constant 0 : index
      %108 = vector.load %arg9[%c0_66, %c0_67, %c0_68] : memref<1x1x128xf32, #tpu.memory_space<vmem>>, vector<1x1x128xf32>
      %109 = vector.shape_cast %108 : vector<1x1x128xf32> to vector<1x128xf32>
      %110 = vector.broadcast %109 : vector<1x128xf32> to vector<64x128xf32>
      %111 = arith.addf %107, %110 : vector<64x128xf32>
      %112 = vector.extract_strided_slice %111 {offsets = [0, 0], sizes = [64, 32], strides = [1, 1]} : vector<64x128xf32> to vector<64x32xf32>
      %113 = arith.truncf %112 : vector<64x32xf32> to vector<64x32xbf16>
      %c0_69 = arith.constant 0 : index
      %c0_70 = arith.constant 0 : index
      %c0_71 = arith.constant 0 : index
      %114 = vector.load %arg23[%c0_69, %c0_70, %c0_71] : memref<4x64x32xbf16, #tpu.memory_space<vmem>>, vector<1x64x32xbf16>
      %115 = vector.shape_cast %114 : vector<1x64x32xbf16> to vector<64x32xbf16>
      %116 = vector.shape_cast %113 : vector<64x32xbf16> to vector<1x64x32xbf16>
      tpu.vector_store %arg23[%c0_69, %c0_70, %c0_71], %116 {strides = array<i32>} : memref<4x64x32xbf16, #tpu.memory_space<vmem>>, vector<1x64x32xbf16>,
      %117 = vector.extract_strided_slice %111 {offsets = [0, 32], sizes = [64, 32], strides = [1, 1]} : vector<64x128xf32> to vector<64x32xf32>
      %118 = arith.truncf %117 : vector<64x32xf32> to vector<64x32xbf16>
      %c1_72 = arith.constant 1 : index
      %c0_73 = arith.constant 0 : index
      %c0_74 = arith.constant 0 : index
      %119 = vector.load %arg23[%c1_72, %c0_73, %c0_74] : memref<4x64x32xbf16, #tpu.memory_space<vmem>>, vector<1x64x32xbf16>
      %120 = vector.shape_cast %119 : vector<1x64x32xbf16> to vector<64x32xbf16>
      %121 = vector.shape_cast %118 : vector<64x32xbf16> to vector<1x64x32xbf16>
      tpu.vector_store %arg23[%c1_72, %c0_73, %c0_74], %121 {strides = array<i32>} : memref<4x64x32xbf16, #tpu.memory_space<vmem>>, vector<1x64x32xbf16>,
      %122 = vector.extract_strided_slice %111 {offsets = [0, 64], sizes = [64, 32], strides = [1, 1]} : vector<64x128xf32> to vector<64x32xf32>
      %123 = arith.truncf %122 : vector<64x32xf32> to vector<64x32xbf16>
      %c2_75 = arith.constant 2 : index
      %c0_76 = arith.constant 0 : index
      %c0_77 = arith.constant 0 : index
      %124 = vector.load %arg23[%c2_75, %c0_76, %c0_77] : memref<4x64x32xbf16, #tpu.memory_space<vmem>>, vector<1x64x32xbf16>
      %125 = vector.shape_cast %124 : vector<1x64x32xbf16> to vector<64x32xbf16>
      %126 = vector.shape_cast %123 : vector<64x32xbf16> to vector<1x64x32xbf16>
      tpu.vector_store %arg23[%c2_75, %c0_76, %c0_77], %126 {strides = array<i32>} : memref<4x64x32xbf16, #tpu.memory_space<vmem>>, vector<1x64x32xbf16>,
      %127 = vector.extract_strided_slice %111 {offsets = [0, 96], sizes = [64, 32], strides = [1, 1]} : vector<64x128xf32> to vector<64x32xf32>
      %128 = arith.truncf %127 : vector<64x32xf32> to vector<64x32xbf16>
      %c3_78 = arith.constant 3 : index
      %c0_79 = arith.constant 0 : index
      %c0_80 = arith.constant 0 : index
      %129 = vector.load %arg23[%c3_78, %c0_79, %c0_80] : memref<4x64x32xbf16, #tpu.memory_space<vmem>>, vector<1x64x32xbf16>
      %130 = vector.shape_cast %129 : vector<1x64x32xbf16> to vector<64x32xbf16>
      %131 = vector.shape_cast %128 : vector<64x32xbf16> to vector<1x64x32xbf16>
      tpu.vector_store %arg23[%c3_78, %c0_79, %c0_80], %131 {strides = array<i32>} : memref<4x64x32xbf16, #tpu.memory_space<vmem>>, vector<1x64x32xbf16>,
      %c0_81 = arith.constant 0 : index
      %c0_82 = arith.constant 0 : index
      %c0_83 = arith.constant 0 : index
      %132 = vector.load %arg10[%c0_81, %c0_82, %c0_83] : memref<1x128x128xbf16, #tpu.memory_space<vmem>>, vector<1x128x128xbf16>
      %133 = vector.shape_cast %132 : vector<1x128x128xbf16> to vector<128x128xbf16>
      %cst_84 = arith.constant dense<0.000000e+00> : vector<64x128xf32>
      %134 = tpu.matmul %75, %133, %cst_84 {dimension_numbers = #tpu.dot_dimension_numbers<[1], [0], [0], [1], [0, 0, 1, 1], [], []>} : vector<64x128xbf16>, vector<128x128xbf16>, vector<64x128xf32> -> vector<64x128xf32>
      %c0_85 = arith.constant 0 : index
      %c0_86 = arith.constant 0 : index
      %c0_87 = arith.constant 0 : index
      %135 = vector.load %arg11[%c0_85, %c0_86, %c0_87] : memref<1x1x128xf32, #tpu.memory_space<vmem>>, vector<1x1x128xf32>
      %136 = vector.shape_cast %135 : vector<1x1x128xf32> to vector<1x128xf32>
      %137 = vector.broadcast %136 : vector<1x128xf32> to vector<64x128xf32>
      %138 = arith.addf %134, %137 : vector<64x128xf32>
      %139 = vector.extract_strided_slice %138 {offsets = [0, 0], sizes = [64, 32], strides = [1, 1]} : vector<64x128xf32> to vector<64x32xf32>
      %140 = arith.truncf %139 : vector<64x32xf32> to vector<64x32xbf16>
      %c0_88 = arith.constant 0 : index
      %c0_89 = arith.constant 0 : index
      %c0_90 = arith.constant 0 : index
      %141 = vector.load %arg24[%c0_88, %c0_89, %c0_90] : memref<4x64x32xbf16, #tpu.memory_space<vmem>>, vector<1x64x32xbf16>
      %142 = vector.shape_cast %141 : vector<1x64x32xbf16> to vector<64x32xbf16>
      %143 = vector.shape_cast %140 : vector<64x32xbf16> to vector<1x64x32xbf16>
      tpu.vector_store %arg24[%c0_88, %c0_89, %c0_90], %143 {strides = array<i32>} : memref<4x64x32xbf16, #tpu.memory_space<vmem>>, vector<1x64x32xbf16>,
      %144 = vector.extract_strided_slice %138 {offsets = [0, 32], sizes = [64, 32], strides = [1, 1]} : vector<64x128xf32> to vector<64x32xf32>
      %145 = arith.truncf %144 : vector<64x32xf32> to vector<64x32xbf16>
      %c1_91 = arith.constant 1 : index
      %c0_92 = arith.constant 0 : index
      %c0_93 = arith.constant 0 : index
      %146 = vector.load %arg24[%c1_91, %c0_92, %c0_93] : memref<4x64x32xbf16, #tpu.memory_space<vmem>>, vector<1x64x32xbf16>
      %147 = vector.shape_cast %146 : vector<1x64x32xbf16> to vector<64x32xbf16>
      %148 = vector.shape_cast %145 : vector<64x32xbf16> to vector<1x64x32xbf16>
      tpu.vector_store %arg24[%c1_91, %c0_92, %c0_93], %148 {strides = array<i32>} : memref<4x64x32xbf16, #tpu.memory_space<vmem>>, vector<1x64x32xbf16>,
      %149 = vector.extract_strided_slice %138 {offsets = [0, 64], sizes = [64, 32], strides = [1, 1]} : vector<64x128xf32> to vector<64x32xf32>
      %150 = arith.truncf %149 : vector<64x32xf32> to vector<64x32xbf16>
      %c2_94 = arith.constant 2 : index
      %c0_95 = arith.constant 0 : index
      %c0_96 = arith.constant 0 : index
      %151 = vector.load %arg24[%c2_94, %c0_95, %c0_96] : memref<4x64x32xbf16, #tpu.memory_space<vmem>>, vector<1x64x32xbf16>
      %152 = vector.shape_cast %151 : vector<1x64x32xbf16> to vector<64x32xbf16>
      %153 = vector.shape_cast %150 : vector<64x32xbf16> to vector<1x64x32xbf16>
      tpu.vector_store %arg24[%c2_94, %c0_95, %c0_96], %153 {strides = array<i32>} : memref<4x64x32xbf16, #tpu.memory_space<vmem>>, vector<1x64x32xbf16>,
      %154 = vector.extract_strided_slice %138 {offsets = [0, 96], sizes = [64, 32], strides = [1, 1]} : vector<64x128xf32> to vector<64x32xf32>
      %155 = arith.truncf %154 : vector<64x32xf32> to vector<64x32xbf16>
      %c3_97 = arith.constant 3 : index
      %c0_98 = arith.constant 0 : index
      %c0_99 = arith.constant 0 : index
      %156 = vector.load %arg24[%c3_97, %c0_98, %c0_99] : memref<4x64x32xbf16, #tpu.memory_space<vmem>>, vector<1x64x32xbf16>
      %157 = vector.shape_cast %156 : vector<1x64x32xbf16> to vector<64x32xbf16>
      %158 = vector.shape_cast %155 : vector<64x32xbf16> to vector<1x64x32xbf16>
      tpu.vector_store %arg24[%c3_97, %c0_98, %c0_99], %158 {strides = array<i32>} : memref<4x64x32xbf16, #tpu.memory_space<vmem>>, vector<1x64x32xbf16>,
      %c0_100 = arith.constant 0 : index
      %c0_101 = arith.constant 0 : index
      %c0_102 = arith.constant 0 : index
      %159 = vector.load %arg22[%c0_100, %c0_101, %c0_102] : memref<4x64x32xbf16, #tpu.memory_space<vmem>>, vector<4x64x32xbf16>
      %c0_103 = arith.constant 0 : index
      %c0_104 = arith.constant 0 : index
      %c0_105 = arith.constant 0 : index
      %160 = vector.load %arg23[%c0_103, %c0_104, %c0_105] : memref<4x64x32xbf16, #tpu.memory_space<vmem>>, vector<4x64x32xbf16>
      %c0_106 = arith.constant 0 : index
      %c0_107 = arith.constant 0 : index
      %c0_108 = arith.constant 0 : index
      %161 = vector.load %arg24[%c0_106, %c0_107, %c0_108] : memref<4x64x32xbf16, #tpu.memory_space<vmem>>, vector<4x64x32xbf16>
      "tpu.trace_start"() <{level = 10 : i32, message = "hqd,hkd->hqk"}> : () -> ()
      %cst_109 = arith.constant dense<0.000000e+00> : vector<4x64x64xf32>
      %162 = tpu.matmul %159, %160, %cst_109 {dimension_numbers = #tpu.dot_dimension_numbers<[2], [2], [1], [1], [0, 0, 0, 1, 1, 1], [0], [0]>} : vector<4x64x32xbf16>, vector<4x64x32xbf16>, vector<4x64x64xf32> -> vector<4x64x64xf32>
      "tpu.trace_stop"() : () -> ()
      %cst_110 = arith.constant dense<0xFF800000> : vector<4x64xf32>
      %163 = vector.multi_reduction <maximumf>, %162, %cst_110 [2] : vector<4x64x64xf32> to vector<4x64xf32>
      %164 = vector.shape_cast %163 : vector<4x64xf32> to vector<4x64x1xf32>
      %165 = vector.broadcast %164 : vector<4x64x1xf32> to vector<4x64x64xf32>
      %166 = arith.subf %162, %165 : vector<4x64x64xf32>
      %167 = math.exp %166 : vector<4x64x64xf32>
      %cst_111 = arith.constant dense<0.000000e+00> : vector<4x64xf32>
      %168 = vector.multi_reduction <add>, %167, %cst_111 [2] : vector<4x64x64xf32> to vector<4x64xf32>
      %169 = vector.shape_cast %168 : vector<4x64xf32> to vector<4x64x1xf32>
      %170 = arith.truncf %167 : vector<4x64x64xf32> to vector<4x64x64xbf16>
      "tpu.trace_start"() <{level = 10 : i32, message = "hqk,hkd->hqd"}> : () -> ()
      %cst_112 = arith.constant dense<0.000000e+00> : vector<4x64x32xf32>
      %171 = tpu.matmul %170, %161, %cst_112 {dimension_numbers = #tpu.dot_dimension_numbers<[2], [1], [1], [2], [0, 0, 0, 1, 1, 2], [0], [0]>} : vector<4x64x64xbf16>, vector<4x64x32xbf16>, vector<4x64x32xf32> -> vector<4x64x32xf32>
      "tpu.trace_stop"() : () -> ()
      %172 = tpu.reciprocal %169 {approx = true} : vector<4x64x1xf32> -> vector<4x64x1xf32>
      %173 = vector.broadcast %172 : vector<4x64x1xf32> to vector<4x64x32xf32>
      %174 = arith.mulf %171, %173 : vector<4x64x32xf32>
      %175 = vector.extract_strided_slice %174 {offsets = [0, 0, 0], sizes = [1, 64, 32], strides = [1, 1, 1]} : vector<4x64x32xf32> to vector<1x64x32xf32>
      %176 = vector.shape_cast %175 : vector<1x64x32xf32> to vector<64x32xf32>
      %177 = arith.truncf %176 : vector<64x32xf32> to vector<64x32xbf16>
      %c0_113 = arith.constant 0 : index
      %c0_114 = arith.constant 0 : index
      %178 = vector.load %arg25[%c0_113, %c0_114] : memref<64x128xbf16, #tpu.memory_space<vmem>>, vector<64x32xbf16>
      tpu.vector_store %arg25[%c0_113, %c0_114], %177 {strides = array<i32>} : memref<64x128xbf16, #tpu.memory_space<vmem>>, vector<64x32xbf16>,
      %179 = vector.extract_strided_slice %174 {offsets = [1, 0, 0], sizes = [1, 64, 32], strides = [1, 1, 1]} : vector<4x64x32xf32> to vector<1x64x32xf32>
      %180 = vector.shape_cast %179 : vector<1x64x32xf32> to vector<64x32xf32>
      %181 = arith.truncf %180 : vector<64x32xf32> to vector<64x32xbf16>
      %c0_115 = arith.constant 0 : index
      %c32 = arith.constant 32 : index
      %182 = vector.load %arg25[%c0_115, %c32] : memref<64x128xbf16, #tpu.memory_space<vmem>>, vector<64x32xbf16>
      tpu.vector_store %arg25[%c0_115, %c32], %181 {strides = array<i32>} : memref<64x128xbf16, #tpu.memory_space<vmem>>, vector<64x32xbf16>,
      %183 = vector.extract_strided_slice %174 {offsets = [2, 0, 0], sizes = [1, 64, 32], strides = [1, 1, 1]} : vector<4x64x32xf32> to vector<1x64x32xf32>
      %184 = vector.shape_cast %183 : vector<1x64x32xf32> to vector<64x32xf32>
      %185 = arith.truncf %184 : vector<64x32xf32> to vector<64x32xbf16>
      %c0_116 = arith.constant 0 : index
      %c64 = arith.constant 64 : index
      %186 = vector.load %arg25[%c0_116, %c64] : memref<64x128xbf16, #tpu.memory_space<vmem>>, vector<64x32xbf16>
      tpu.vector_store %arg25[%c0_116, %c64], %185 {strides = array<i32>} : memref<64x128xbf16, #tpu.memory_space<vmem>>, vector<64x32xbf16>,
      %187 = vector.extract_strided_slice %174 {offsets = [3, 0, 0], sizes = [1, 64, 32], strides = [1, 1, 1]} : vector<4x64x32xf32> to vector<1x64x32xf32>
      %188 = vector.shape_cast %187 : vector<1x64x32xf32> to vector<64x32xf32>
      %189 = arith.truncf %188 : vector<64x32xf32> to vector<64x32xbf16>
      %c0_117 = arith.constant 0 : index
      %c96 = arith.constant 96 : index
      %190 = vector.load %arg25[%c0_117, %c96] : memref<64x128xbf16, #tpu.memory_space<vmem>>, vector<64x32xbf16>
      tpu.vector_store %arg25[%c0_117, %c96], %189 {strides = array<i32>} : memref<64x128xbf16, #tpu.memory_space<vmem>>, vector<64x32xbf16>,
      %c0_118 = arith.constant 0 : index
      %c0_119 = arith.constant 0 : index
      %191 = vector.load %arg25[%c0_118, %c0_119] : memref<64x128xbf16, #tpu.memory_space<vmem>>, vector<64x128xbf16>
      %c0_120 = arith.constant 0 : index
      %c0_121 = arith.constant 0 : index
      %c0_122 = arith.constant 0 : index
      %192 = vector.load %arg12[%c0_120, %c0_121, %c0_122] : memref<1x128x128xbf16, #tpu.memory_space<vmem>>, vector<1x128x128xbf16>
      %193 = vector.shape_cast %192 : vector<1x128x128xbf16> to vector<128x128xbf16>
      %cst_123 = arith.constant dense<0.000000e+00> : vector<64x128xf32>
      %194 = tpu.matmul %191, %193, %cst_123 {dimension_numbers = #tpu.dot_dimension_numbers<[1], [0], [0], [1], [0, 0, 1, 1], [], []>} : vector<64x128xbf16>, vector<128x128xbf16>, vector<64x128xf32> -> vector<64x128xf32>
      %c0_124 = arith.constant 0 : index
      %c0_125 = arith.constant 0 : index
      %c0_126 = arith.constant 0 : index
      %195 = vector.load %arg13[%c0_124, %c0_125, %c0_126] : memref<1x1x128xf32, #tpu.memory_space<vmem>>, vector<1x1x128xf32>
      %196 = vector.shape_cast %195 : vector<1x1x128xf32> to vector<1x128xf32>
      %197 = vector.broadcast %196 : vector<1x128xf32> to vector<64x128xf32>
      %198 = arith.addf %194, %197 : vector<64x128xf32>
      %199 = arith.addf %48, %198 : vector<64x128xf32>
      %c0_127 = arith.constant 0 : index
      %c0_128 = arith.constant 0 : index
      %c0_129 = arith.constant 0 : index
      %200 = vector.load %arg14[%c0_127, %c0_128, %c0_129] : memref<1x1x128xf32, #tpu.memory_space<vmem>>, vector<1x1x128xf32>
      %201 = vector.shape_cast %200 : vector<1x1x128xf32> to vector<1x128xf32>
      %c0_130 = arith.constant 0 : index
      %c0_131 = arith.constant 0 : index
      %c0_132 = arith.constant 0 : index
      %202 = vector.load %arg15[%c0_130, %c0_131, %c0_132] : memref<1x1x128xf32, #tpu.memory_space<vmem>>, vector<1x1x128xf32>
      %203 = vector.shape_cast %202 : vector<1x1x128xf32> to vector<1x128xf32>
      %cst_133 = arith.constant dense<0.000000e+00> : vector<64xf32>
      %204 = vector.multi_reduction <add>, %199, %cst_133 [1] : vector<64x128xf32> to vector<64xf32>
      %205 = vector.shape_cast %204 : vector<64xf32> to vector<64x1xf32>
      %cst_134 = arith.constant 1.280000e+02 : f32
      %206 = vector.broadcast %cst_134 : f32 to vector<64x1xf32>
      %207 = arith.divf %205, %206 : vector<64x1xf32>
      %208 = vector.broadcast %207 : vector<64x1xf32> to vector<64x128xf32>
      %209 = arith.subf %199, %208 : vector<64x128xf32>
      %210 = arith.mulf %209, %209 : vector<64x128xf32>
      %cst_135 = arith.constant dense<0.000000e+00> : vector<64xf32>
      %211 = vector.multi_reduction <add>, %210, %cst_135 [1] : vector<64x128xf32> to vector<64xf32>
      %212 = vector.shape_cast %211 : vector<64xf32> to vector<64x1xf32>
      %cst_136 = arith.constant 1.280000e+02 : f32
      %213 = vector.broadcast %cst_136 : f32 to vector<64x1xf32>
      %214 = arith.divf %212, %213 : vector<64x1xf32>
      %215 = vector.broadcast %207 : vector<64x1xf32> to vector<64x128xf32>
      %216 = arith.subf %199, %215 : vector<64x128xf32>
      %cst_137 = arith.constant 9.99999997E-7 : f32
      %217 = vector.broadcast %cst_137 : f32 to vector<64x1xf32>
      %218 = arith.addf %214, %217 : vector<64x1xf32>
      %219 = math.rsqrt %218 : vector<64x1xf32>
      %220 = vector.broadcast %219 : vector<64x1xf32> to vector<64x128xf32>
      %221 = arith.mulf %216, %220 : vector<64x128xf32>
      %222 = vector.broadcast %201 : vector<1x128xf32> to vector<64x128xf32>
      %223 = arith.mulf %221, %222 : vector<64x128xf32>
      %224 = vector.broadcast %203 : vector<1x128xf32> to vector<64x128xf32>
      %225 = arith.addf %223, %224 : vector<64x128xf32>
      %226 = arith.truncf %225 : vector<64x128xf32> to vector<64x128xbf16>
      %c0_138 = arith.constant 0 : index
      %c0_139 = arith.constant 0 : index
      %227 = vector.load %arg21[%c0_138, %c0_139] : memref<128x128xbf16, #tpu.memory_space<vmem>>, vector<64x128xbf16>
      tpu.vector_store %arg21[%c0_138, %c0_139], %226 {strides = array<i32>} : memref<128x128xbf16, #tpu.memory_space<vmem>>, vector<64x128xbf16>,
      %c0_140 = arith.constant 0 : index
      %c0_141 = arith.constant 0 : index
      %c0_142 = arith.constant 0 : index
      %228 = vector.load %arg19[%c0_140, %c0_141, %c0_142] : memref<1x1x128xf32, #tpu.memory_space<vmem>>, vector<1x1x128xf32>
      %229 = vector.shape_cast %228 : vector<1x1x128xf32> to vector<1x128xf32>
      %230 = vector.broadcast %229 : vector<1x128xf32> to vector<64x128xf32>
      %231 = arith.addf %199, %230 : vector<64x128xf32>
      %c0_143 = arith.constant 0 : index
      %c0_144 = arith.constant 0 : index
      %c0_145 = arith.constant 0 : index
      %232 = vector.load %arg20[%c0_143, %c0_144, %c0_145] : memref<2x64x128xf32, #tpu.memory_space<vmem>>, vector<1x64x128xf32>
      %233 = vector.shape_cast %232 : vector<1x64x128xf32> to vector<64x128xf32>
      %234 = vector.shape_cast %231 : vector<64x128xf32> to vector<1x64x128xf32>
      tpu.vector_store %arg20[%c0_143, %c0_144, %c0_145], %234 {strides = array<i32>} : memref<2x64x128xf32, #tpu.memory_space<vmem>>, vector<1x64x128xf32>,
      %c1_146 = arith.constant 1 : index
      %c0_147 = arith.constant 0 : index
      %c0_148 = arith.constant 0 : index
      %235 = vector.load %arg20[%c1_146, %c0_147, %c0_148] : memref<2x64x128xf32, #tpu.memory_space<vmem>>, vector<1x64x128xf32>
      %236 = vector.shape_cast %235 : vector<1x64x128xf32> to vector<64x128xf32>
      %c0_149 = arith.constant 0 : index
      %c0_150 = arith.constant 0 : index
      %c0_151 = arith.constant 0 : index
      %237 = vector.load %arg4[%c0_149, %c0_150, %c0_151] : memref<1x1x128xf32, #tpu.memory_space<vmem>>, vector<1x1x128xf32>
      %238 = vector.shape_cast %237 : vector<1x1x128xf32> to vector<1x128xf32>
      %c0_152 = arith.constant 0 : index
      %c0_153 = arith.constant 0 : index
      %c0_154 = arith.constant 0 : index
      %239 = vector.load %arg5[%c0_152, %c0_153, %c0_154] : memref<1x1x128xf32, #tpu.memory_space<vmem>>, vector<1x1x128xf32>
      %240 = vector.shape_cast %239 : vector<1x1x128xf32> to vector<1x128xf32>
      %cst_155 = arith.constant dense<0.000000e+00> : vector<64xf32>
      %241 = vector.multi_reduction <add>, %236, %cst_155 [1] : vector<64x128xf32> to vector<64xf32>
      %242 = vector.shape_cast %241 : vector<64xf32> to vector<64x1xf32>
      %cst_156 = arith.constant 1.280000e+02 : f32
      %243 = vector.broadcast %cst_156 : f32 to vector<64x1xf32>
      %244 = arith.divf %242, %243 : vector<64x1xf32>
      %245 = vector.broadcast %244 : vector<64x1xf32> to vector<64x128xf32>
      %246 = arith.subf %236, %245 : vector<64x128xf32>
      %247 = arith.mulf %246, %246 : vector<64x128xf32>
      %cst_157 = arith.constant dense<0.000000e+00> : vector<64xf32>
      %248 = vector.multi_reduction <add>, %247, %cst_157 [1] : vector<64x128xf32> to vector<64xf32>
      %249 = vector.shape_cast %248 : vector<64xf32> to vector<64x1xf32>
      %cst_158 = arith.constant 1.280000e+02 : f32
      %250 = vector.broadcast %cst_158 : f32 to vector<64x1xf32>
      %251 = arith.divf %249, %250 : vector<64x1xf32>
      %252 = vector.broadcast %244 : vector<64x1xf32> to vector<64x128xf32>
      %253 = arith.subf %236, %252 : vector<64x128xf32>
      %cst_159 = arith.constant 9.99999997E-7 : f32
      %254 = vector.broadcast %cst_159 : f32 to vector<64x1xf32>
      %255 = arith.addf %251, %254 : vector<64x1xf32>
      %256 = math.rsqrt %255 : vector<64x1xf32>
      %257 = vector.broadcast %256 : vector<64x1xf32> to vector<64x128xf32>
      %258 = arith.mulf %253, %257 : vector<64x128xf32>
      %259 = vector.broadcast %238 : vector<1x128xf32> to vector<64x128xf32>
      %260 = arith.mulf %258, %259 : vector<64x128xf32>
      %261 = vector.broadcast %240 : vector<1x128xf32> to vector<64x128xf32>
      %262 = arith.addf %260, %261 : vector<64x128xf32>
      %263 = arith.truncf %262 : vector<64x128xf32> to vector<64x128xbf16>
      %c0_160 = arith.constant 0 : index
      %c0_161 = arith.constant 0 : index
      %c0_162 = arith.constant 0 : index
      %264 = vector.load %arg6[%c0_160, %c0_161, %c0_162] : memref<1x128x128xbf16, #tpu.memory_space<vmem>>, vector<1x128x128xbf16>
      %265 = vector.shape_cast %264 : vector<1x128x128xbf16> to vector<128x128xbf16>
      %cst_163 = arith.constant dense<0.000000e+00> : vector<64x128xf32>
      %266 = tpu.matmul %263, %265, %cst_163 {dimension_numbers = #tpu.dot_dimension_numbers<[1], [0], [0], [1], [0, 0, 1, 1], [], []>} : vector<64x128xbf16>, vector<128x128xbf16>, vector<64x128xf32> -> vector<64x128xf32>
      %c0_164 = arith.constant 0 : index
      %c0_165 = arith.constant 0 : index
      %c0_166 = arith.constant 0 : index
      %267 = vector.load %arg7[%c0_164, %c0_165, %c0_166] : memref<1x1x128xf32, #tpu.memory_space<vmem>>, vector<1x1x128xf32>
      %268 = vector.shape_cast %267 : vector<1x1x128xf32> to vector<1x128xf32>
      %269 = vector.broadcast %268 : vector<1x128xf32> to vector<64x128xf32>
      %270 = arith.addf %266, %269 : vector<64x128xf32>
      %cst_167 = arith.constant 0.176776692 : f32
      %271 = vector.broadcast %cst_167 : f32 to vector<64x128xf32>
      %272 = arith.mulf %270, %271 : vector<64x128xf32>
      %273 = vector.extract_strided_slice %272 {offsets = [0, 0], sizes = [64, 32], strides = [1, 1]} : vector<64x128xf32> to vector<64x32xf32>
      %274 = arith.truncf %273 : vector<64x32xf32> to vector<64x32xbf16>
      %c0_168 = arith.constant 0 : index
      %c0_169 = arith.constant 0 : index
      %c0_170 = arith.constant 0 : index
      %275 = vector.load %arg22[%c0_168, %c0_169, %c0_170] : memref<4x64x32xbf16, #tpu.memory_space<vmem>>, vector<1x64x32xbf16>
      %276 = vector.shape_cast %275 : vector<1x64x32xbf16> to vector<64x32xbf16>
      %277 = vector.shape_cast %274 : vector<64x32xbf16> to vector<1x64x32xbf16>
      tpu.vector_store %arg22[%c0_168, %c0_169, %c0_170], %277 {strides = array<i32>} : memref<4x64x32xbf16, #tpu.memory_space<vmem>>, vector<1x64x32xbf16>,
      %278 = vector.extract_strided_slice %272 {offsets = [0, 32], sizes = [64, 32], strides = [1, 1]} : vector<64x128xf32> to vector<64x32xf32>
      %279 = arith.truncf %278 : vector<64x32xf32> to vector<64x32xbf16>
      %c1_171 = arith.constant 1 : index
      %c0_172 = arith.constant 0 : index
      %c0_173 = arith.constant 0 : index
      %280 = vector.load %arg22[%c1_171, %c0_172, %c0_173] : memref<4x64x32xbf16, #tpu.memory_space<vmem>>, vector<1x64x32xbf16>
      %281 = vector.shape_cast %280 : vector<1x64x32xbf16> to vector<64x32xbf16>
      %282 = vector.shape_cast %279 : vector<64x32xbf16> to vector<1x64x32xbf16>
      tpu.vector_store %arg22[%c1_171, %c0_172, %c0_173], %282 {strides = array<i32>} : memref<4x64x32xbf16, #tpu.memory_space<vmem>>, vector<1x64x32xbf16>,
      %283 = vector.extract_strided_slice %272 {offsets = [0, 64], sizes = [64, 32], strides = [1, 1]} : vector<64x128xf32> to vector<64x32xf32>
      %284 = arith.truncf %283 : vector<64x32xf32> to vector<64x32xbf16>
      %c2_174 = arith.constant 2 : index
      %c0_175 = arith.constant 0 : index
      %c0_176 = arith.constant 0 : index
      %285 = vector.load %arg22[%c2_174, %c0_175, %c0_176] : memref<4x64x32xbf16, #tpu.memory_space<vmem>>, vector<1x64x32xbf16>
      %286 = vector.shape_cast %285 : vector<1x64x32xbf16> to vector<64x32xbf16>
      %287 = vector.shape_cast %284 : vector<64x32xbf16> to vector<1x64x32xbf16>
      tpu.vector_store %arg22[%c2_174, %c0_175, %c0_176], %287 {strides = array<i32>} : memref<4x64x32xbf16, #tpu.memory_space<vmem>>, vector<1x64x32xbf16>,
      %288 = vector.extract_strided_slice %272 {offsets = [0, 96], sizes = [64, 32], strides = [1, 1]} : vector<64x128xf32> to vector<64x32xf32>
      %289 = arith.truncf %288 : vector<64x32xf32> to vector<64x32xbf16>
      %c3_177 = arith.constant 3 : index
      %c0_178 = arith.constant 0 : index
      %c0_179 = arith.constant 0 : index
      %290 = vector.load %arg22[%c3_177, %c0_178, %c0_179] : memref<4x64x32xbf16, #tpu.memory_space<vmem>>, vector<1x64x32xbf16>
      %291 = vector.shape_cast %290 : vector<1x64x32xbf16> to vector<64x32xbf16>
      %292 = vector.shape_cast %289 : vector<64x32xbf16> to vector<1x64x32xbf16>
      tpu.vector_store %arg22[%c3_177, %c0_178, %c0_179], %292 {strides = array<i32>} : memref<4x64x32xbf16, #tpu.memory_space<vmem>>, vector<1x64x32xbf16>,
      %c0_180 = arith.constant 0 : index
      %c0_181 = arith.constant 0 : index
      %c0_182 = arith.constant 0 : index
      %293 = vector.load %arg8[%c0_180, %c0_181, %c0_182] : memref<1x128x128xbf16, #tpu.memory_space<vmem>>, vector<1x128x128xbf16>
      %294 = vector.shape_cast %293 : vector<1x128x128xbf16> to vector<128x128xbf16>
      %cst_183 = arith.constant dense<0.000000e+00> : vector<64x128xf32>
      %295 = tpu.matmul %263, %294, %cst_183 {dimension_numbers = #tpu.dot_dimension_numbers<[1], [0], [0], [1], [0, 0, 1, 1], [], []>} : vector<64x128xbf16>, vector<128x128xbf16>, vector<64x128xf32> -> vector<64x128xf32>
      %c0_184 = arith.constant 0 : index
      %c0_185 = arith.constant 0 : index
      %c0_186 = arith.constant 0 : index
      %296 = vector.load %arg9[%c0_184, %c0_185, %c0_186] : memref<1x1x128xf32, #tpu.memory_space<vmem>>, vector<1x1x128xf32>
      %297 = vector.shape_cast %296 : vector<1x1x128xf32> to vector<1x128xf32>
      %298 = vector.broadcast %297 : vector<1x128xf32> to vector<64x128xf32>
      %299 = arith.addf %295, %298 : vector<64x128xf32>
      %300 = vector.extract_strided_slice %299 {offsets = [0, 0], sizes = [64, 32], strides = [1, 1]} : vector<64x128xf32> to vector<64x32xf32>
      %301 = arith.truncf %300 : vector<64x32xf32> to vector<64x32xbf16>
      %c0_187 = arith.constant 0 : index
      %c0_188 = arith.constant 0 : index
      %c0_189 = arith.constant 0 : index
      %302 = vector.load %arg23[%c0_187, %c0_188, %c0_189] : memref<4x64x32xbf16, #tpu.memory_space<vmem>>, vector<1x64x32xbf16>
      %303 = vector.shape_cast %302 : vector<1x64x32xbf16> to vector<64x32xbf16>
      %304 = vector.shape_cast %301 : vector<64x32xbf16> to vector<1x64x32xbf16>
      tpu.vector_store %arg23[%c0_187, %c0_188, %c0_189], %304 {strides = array<i32>} : memref<4x64x32xbf16, #tpu.memory_space<vmem>>, vector<1x64x32xbf16>,
      %305 = vector.extract_strided_slice %299 {offsets = [0, 32], sizes = [64, 32], strides = [1, 1]} : vector<64x128xf32> to vector<64x32xf32>
      %306 = arith.truncf %305 : vector<64x32xf32> to vector<64x32xbf16>
      %c1_190 = arith.constant 1 : index
      %c0_191 = arith.constant 0 : index
      %c0_192 = arith.constant 0 : index
      %307 = vector.load %arg23[%c1_190, %c0_191, %c0_192] : memref<4x64x32xbf16, #tpu.memory_space<vmem>>, vector<1x64x32xbf16>
      %308 = vector.shape_cast %307 : vector<1x64x32xbf16> to vector<64x32xbf16>
      %309 = vector.shape_cast %306 : vector<64x32xbf16> to vector<1x64x32xbf16>
      tpu.vector_store %arg23[%c1_190, %c0_191, %c0_192], %309 {strides = array<i32>} : memref<4x64x32xbf16, #tpu.memory_space<vmem>>, vector<1x64x32xbf16>,
      %310 = vector.extract_strided_slice %299 {offsets = [0, 64], sizes = [64, 32], strides = [1, 1]} : vector<64x128xf32> to vector<64x32xf32>
      %311 = arith.truncf %310 : vector<64x32xf32> to vector<64x32xbf16>
      %c2_193 = arith.constant 2 : index
      %c0_194 = arith.constant 0 : index
      %c0_195 = arith.constant 0 : index
      %312 = vector.load %arg23[%c2_193, %c0_194, %c0_195] : memref<4x64x32xbf16, #tpu.memory_space<vmem>>, vector<1x64x32xbf16>
      %313 = vector.shape_cast %312 : vector<1x64x32xbf16> to vector<64x32xbf16>
      %314 = vector.shape_cast %311 : vector<64x32xbf16> to vector<1x64x32xbf16>
      tpu.vector_store %arg23[%c2_193, %c0_194, %c0_195], %314 {strides = array<i32>} : memref<4x64x32xbf16, #tpu.memory_space<vmem>>, vector<1x64x32xbf16>,
      %315 = vector.extract_strided_slice %299 {offsets = [0, 96], sizes = [64, 32], strides = [1, 1]} : vector<64x128xf32> to vector<64x32xf32>
      %316 = arith.truncf %315 : vector<64x32xf32> to vector<64x32xbf16>
      %c3_196 = arith.constant 3 : index
      %c0_197 = arith.constant 0 : index
      %c0_198 = arith.constant 0 : index
      %317 = vector.load %arg23[%c3_196, %c0_197, %c0_198] : memref<4x64x32xbf16, #tpu.memory_space<vmem>>, vector<1x64x32xbf16>
      %318 = vector.shape_cast %317 : vector<1x64x32xbf16> to vector<64x32xbf16>
      %319 = vector.shape_cast %316 : vector<64x32xbf16> to vector<1x64x32xbf16>
      tpu.vector_store %arg23[%c3_196, %c0_197, %c0_198], %319 {strides = array<i32>} : memref<4x64x32xbf16, #tpu.memory_space<vmem>>, vector<1x64x32xbf16>,
      %c0_199 = arith.constant 0 : index
      %c0_200 = arith.constant 0 : index
      %c0_201 = arith.constant 0 : index
      %320 = vector.load %arg10[%c0_199, %c0_200, %c0_201] : memref<1x128x128xbf16, #tpu.memory_space<vmem>>, vector<1x128x128xbf16>
      %321 = vector.shape_cast %320 : vector<1x128x128xbf16> to vector<128x128xbf16>
      %cst_202 = arith.constant dense<0.000000e+00> : vector<64x128xf32>
      %322 = tpu.matmul %263, %321, %cst_202 {dimension_numbers = #tpu.dot_dimension_numbers<[1], [0], [0], [1], [0, 0, 1, 1], [], []>} : vector<64x128xbf16>, vector<128x128xbf16>, vector<64x128xf32> -> vector<64x128xf32>
      %c0_203 = arith.constant 0 : index
      %c0_204 = arith.constant 0 : index
      %c0_205 = arith.constant 0 : index
      %323 = vector.load %arg11[%c0_203, %c0_204, %c0_205] : memref<1x1x128xf32, #tpu.memory_space<vmem>>, vector<1x1x128xf32>
      %324 = vector.shape_cast %323 : vector<1x1x128xf32> to vector<1x128xf32>
      %325 = vector.broadcast %324 : vector<1x128xf32> to vector<64x128xf32>
      %326 = arith.addf %322, %325 : vector<64x128xf32>
      %327 = vector.extract_strided_slice %326 {offsets = [0, 0], sizes = [64, 32], strides = [1, 1]} : vector<64x128xf32> to vector<64x32xf32>
      %328 = arith.truncf %327 : vector<64x32xf32> to vector<64x32xbf16>
      %c0_206 = arith.constant 0 : index
      %c0_207 = arith.constant 0 : index
      %c0_208 = arith.constant 0 : index
      %329 = vector.load %arg24[%c0_206, %c0_207, %c0_208] : memref<4x64x32xbf16, #tpu.memory_space<vmem>>, vector<1x64x32xbf16>
      %330 = vector.shape_cast %329 : vector<1x64x32xbf16> to vector<64x32xbf16>
      %331 = vector.shape_cast %328 : vector<64x32xbf16> to vector<1x64x32xbf16>
      tpu.vector_store %arg24[%c0_206, %c0_207, %c0_208], %331 {strides = array<i32>} : memref<4x64x32xbf16, #tpu.memory_space<vmem>>, vector<1x64x32xbf16>,
      %332 = vector.extract_strided_slice %326 {offsets = [0, 32], sizes = [64, 32], strides = [1, 1]} : vector<64x128xf32> to vector<64x32xf32>
      %333 = arith.truncf %332 : vector<64x32xf32> to vector<64x32xbf16>
      %c1_209 = arith.constant 1 : index
      %c0_210 = arith.constant 0 : index
      %c0_211 = arith.constant 0 : index
      %334 = vector.load %arg24[%c1_209, %c0_210, %c0_211] : memref<4x64x32xbf16, #tpu.memory_space<vmem>>, vector<1x64x32xbf16>
      %335 = vector.shape_cast %334 : vector<1x64x32xbf16> to vector<64x32xbf16>
      %336 = vector.shape_cast %333 : vector<64x32xbf16> to vector<1x64x32xbf16>
      tpu.vector_store %arg24[%c1_209, %c0_210, %c0_211], %336 {strides = array<i32>} : memref<4x64x32xbf16, #tpu.memory_space<vmem>>, vector<1x64x32xbf16>,
      %337 = vector.extract_strided_slice %326 {offsets = [0, 64], sizes = [64, 32], strides = [1, 1]} : vector<64x128xf32> to vector<64x32xf32>
      %338 = arith.truncf %337 : vector<64x32xf32> to vector<64x32xbf16>
      %c2_212 = arith.constant 2 : index
      %c0_213 = arith.constant 0 : index
      %c0_214 = arith.constant 0 : index
      %339 = vector.load %arg24[%c2_212, %c0_213, %c0_214] : memref<4x64x32xbf16, #tpu.memory_space<vmem>>, vector<1x64x32xbf16>
      %340 = vector.shape_cast %339 : vector<1x64x32xbf16> to vector<64x32xbf16>
      %341 = vector.shape_cast %338 : vector<64x32xbf16> to vector<1x64x32xbf16>
      tpu.vector_store %arg24[%c2_212, %c0_213, %c0_214], %341 {strides = array<i32>} : memref<4x64x32xbf16, #tpu.memory_space<vmem>>, vector<1x64x32xbf16>,
      %342 = vector.extract_strided_slice %326 {offsets = [0, 96], sizes = [64, 32], strides = [1, 1]} : vector<64x128xf32> to vector<64x32xf32>
      %343 = arith.truncf %342 : vector<64x32xf32> to vector<64x32xbf16>
      %c3_215 = arith.constant 3 : index
      %c0_216 = arith.constant 0 : index
      %c0_217 = arith.constant 0 : index
      %344 = vector.load %arg24[%c3_215, %c0_216, %c0_217] : memref<4x64x32xbf16, #tpu.memory_space<vmem>>, vector<1x64x32xbf16>
      %345 = vector.shape_cast %344 : vector<1x64x32xbf16> to vector<64x32xbf16>
      %346 = vector.shape_cast %343 : vector<64x32xbf16> to vector<1x64x32xbf16>
      tpu.vector_store %arg24[%c3_215, %c0_216, %c0_217], %346 {strides = array<i32>} : memref<4x64x32xbf16, #tpu.memory_space<vmem>>, vector<1x64x32xbf16>,
      %c0_218 = arith.constant 0 : index
      %c0_219 = arith.constant 0 : index
      %c0_220 = arith.constant 0 : index
      %347 = vector.load %arg22[%c0_218, %c0_219, %c0_220] : memref<4x64x32xbf16, #tpu.memory_space<vmem>>, vector<4x64x32xbf16>
      %c0_221 = arith.constant 0 : index
      %c0_222 = arith.constant 0 : index
      %c0_223 = arith.constant 0 : index
      %348 = vector.load %arg23[%c0_221, %c0_222, %c0_223] : memref<4x64x32xbf16, #tpu.memory_space<vmem>>, vector<4x64x32xbf16>
      %c0_224 = arith.constant 0 : index
      %c0_225 = arith.constant 0 : index
      %c0_226 = arith.constant 0 : index
      %349 = vector.load %arg24[%c0_224, %c0_225, %c0_226] : memref<4x64x32xbf16, #tpu.memory_space<vmem>>, vector<4x64x32xbf16>
      "tpu.trace_start"() <{level = 10 : i32, message = "hqd,hkd->hqk"}> : () -> ()
      %cst_227 = arith.constant dense<0.000000e+00> : vector<4x64x64xf32>
      %350 = tpu.matmul %347, %348, %cst_227 {dimension_numbers = #tpu.dot_dimension_numbers<[2], [2], [1], [1], [0, 0, 0, 1, 1, 1], [0], [0]>} : vector<4x64x32xbf16>, vector<4x64x32xbf16>, vector<4x64x64xf32> -> vector<4x64x64xf32>
      "tpu.trace_stop"() : () -> ()
      %cst_228 = arith.constant dense<0xFF800000> : vector<4x64xf32>
      %351 = vector.multi_reduction <maximumf>, %350, %cst_228 [2] : vector<4x64x64xf32> to vector<4x64xf32>
      %352 = vector.shape_cast %351 : vector<4x64xf32> to vector<4x64x1xf32>
      %353 = vector.broadcast %352 : vector<4x64x1xf32> to vector<4x64x64xf32>
      %354 = arith.subf %350, %353 : vector<4x64x64xf32>
      %355 = math.exp %354 : vector<4x64x64xf32>
      %cst_229 = arith.constant dense<0.000000e+00> : vector<4x64xf32>
      %356 = vector.multi_reduction <add>, %355, %cst_229 [2] : vector<4x64x64xf32> to vector<4x64xf32>
      %357 = vector.shape_cast %356 : vector<4x64xf32> to vector<4x64x1xf32>
      %358 = arith.truncf %355 : vector<4x64x64xf32> to vector<4x64x64xbf16>
      "tpu.trace_start"() <{level = 10 : i32, message = "hqk,hkd->hqd"}> : () -> ()
      %cst_230 = arith.constant dense<0.000000e+00> : vector<4x64x32xf32>
      %359 = tpu.matmul %358, %349, %cst_230 {dimension_numbers = #tpu.dot_dimension_numbers<[2], [1], [1], [2], [0, 0, 0, 1, 1, 2], [0], [0]>} : vector<4x64x64xbf16>, vector<4x64x32xbf16>, vector<4x64x32xf32> -> vector<4x64x32xf32>
      "tpu.trace_stop"() : () -> ()
      %360 = tpu.reciprocal %357 {approx = true} : vector<4x64x1xf32> -> vector<4x64x1xf32>
      %361 = vector.broadcast %360 : vector<4x64x1xf32> to vector<4x64x32xf32>
      %362 = arith.mulf %359, %361 : vector<4x64x32xf32>
      %363 = vector.extract_strided_slice %362 {offsets = [0, 0, 0], sizes = [1, 64, 32], strides = [1, 1, 1]} : vector<4x64x32xf32> to vector<1x64x32xf32>
      %364 = vector.shape_cast %363 : vector<1x64x32xf32> to vector<64x32xf32>
      %365 = arith.truncf %364 : vector<64x32xf32> to vector<64x32xbf16>
      %c0_231 = arith.constant 0 : index
      %c0_232 = arith.constant 0 : index
      %366 = vector.load %arg25[%c0_231, %c0_232] : memref<64x128xbf16, #tpu.memory_space<vmem>>, vector<64x32xbf16>
      tpu.vector_store %arg25[%c0_231, %c0_232], %365 {strides = array<i32>} : memref<64x128xbf16, #tpu.memory_space<vmem>>, vector<64x32xbf16>,
      %367 = vector.extract_strided_slice %362 {offsets = [1, 0, 0], sizes = [1, 64, 32], strides = [1, 1, 1]} : vector<4x64x32xf32> to vector<1x64x32xf32>
      %368 = vector.shape_cast %367 : vector<1x64x32xf32> to vector<64x32xf32>
      %369 = arith.truncf %368 : vector<64x32xf32> to vector<64x32xbf16>
      %c0_233 = arith.constant 0 : index
      %c32_234 = arith.constant 32 : index
      %370 = vector.load %arg25[%c0_233, %c32_234] : memref<64x128xbf16, #tpu.memory_space<vmem>>, vector<64x32xbf16>
      tpu.vector_store %arg25[%c0_233, %c32_234], %369 {strides = array<i32>} : memref<64x128xbf16, #tpu.memory_space<vmem>>, vector<64x32xbf16>,
      %371 = vector.extract_strided_slice %362 {offsets = [2, 0, 0], sizes = [1, 64, 32], strides = [1, 1, 1]} : vector<4x64x32xf32> to vector<1x64x32xf32>
      %372 = vector.shape_cast %371 : vector<1x64x32xf32> to vector<64x32xf32>
      %373 = arith.truncf %372 : vector<64x32xf32> to vector<64x32xbf16>
      %c0_235 = arith.constant 0 : index
      %c64_236 = arith.constant 64 : index
      %374 = vector.load %arg25[%c0_235, %c64_236] : memref<64x128xbf16, #tpu.memory_space<vmem>>, vector<64x32xbf16>
      tpu.vector_store %arg25[%c0_235, %c64_236], %373 {strides = array<i32>} : memref<64x128xbf16, #tpu.memory_space<vmem>>, vector<64x32xbf16>,
      %375 = vector.extract_strided_slice %362 {offsets = [3, 0, 0], sizes = [1, 64, 32], strides = [1, 1, 1]} : vector<4x64x32xf32> to vector<1x64x32xf32>
      %376 = vector.shape_cast %375 : vector<1x64x32xf32> to vector<64x32xf32>
      %377 = arith.truncf %376 : vector<64x32xf32> to vector<64x32xbf16>
      %c0_237 = arith.constant 0 : index
      %c96_238 = arith.constant 96 : index
      %378 = vector.load %arg25[%c0_237, %c96_238] : memref<64x128xbf16, #tpu.memory_space<vmem>>, vector<64x32xbf16>
      tpu.vector_store %arg25[%c0_237, %c96_238], %377 {strides = array<i32>} : memref<64x128xbf16, #tpu.memory_space<vmem>>, vector<64x32xbf16>,
      %c0_239 = arith.constant 0 : index
      %c0_240 = arith.constant 0 : index
      %379 = vector.load %arg25[%c0_239, %c0_240] : memref<64x128xbf16, #tpu.memory_space<vmem>>, vector<64x128xbf16>
      %c0_241 = arith.constant 0 : index
      %c0_242 = arith.constant 0 : index
      %c0_243 = arith.constant 0 : index
      %380 = vector.load %arg12[%c0_241, %c0_242, %c0_243] : memref<1x128x128xbf16, #tpu.memory_space<vmem>>, vector<1x128x128xbf16>
      %381 = vector.shape_cast %380 : vector<1x128x128xbf16> to vector<128x128xbf16>
      %cst_244 = arith.constant dense<0.000000e+00> : vector<64x128xf32>
      %382 = tpu.matmul %379, %381, %cst_244 {dimension_numbers = #tpu.dot_dimension_numbers<[1], [0], [0], [1], [0, 0, 1, 1], [], []>} : vector<64x128xbf16>, vector<128x128xbf16>, vector<64x128xf32> -> vector<64x128xf32>
      %c0_245 = arith.constant 0 : index
      %c0_246 = arith.constant 0 : index
      %c0_247 = arith.constant 0 : index
      %383 = vector.load %arg13[%c0_245, %c0_246, %c0_247] : memref<1x1x128xf32, #tpu.memory_space<vmem>>, vector<1x1x128xf32>
      %384 = vector.shape_cast %383 : vector<1x1x128xf32> to vector<1x128xf32>
      %385 = vector.broadcast %384 : vector<1x128xf32> to vector<64x128xf32>
      %386 = arith.addf %382, %385 : vector<64x128xf32>
      %387 = arith.addf %236, %386 : vector<64x128xf32>
      %c0_248 = arith.constant 0 : index
      %c0_249 = arith.constant 0 : index
      %c0_250 = arith.constant 0 : index
      %388 = vector.load %arg14[%c0_248, %c0_249, %c0_250] : memref<1x1x128xf32, #tpu.memory_space<vmem>>, vector<1x1x128xf32>
      %389 = vector.shape_cast %388 : vector<1x1x128xf32> to vector<1x128xf32>
      %c0_251 = arith.constant 0 : index
      %c0_252 = arith.constant 0 : index
      %c0_253 = arith.constant 0 : index
      %390 = vector.load %arg15[%c0_251, %c0_252, %c0_253] : memref<1x1x128xf32, #tpu.memory_space<vmem>>, vector<1x1x128xf32>
      %391 = vector.shape_cast %390 : vector<1x1x128xf32> to vector<1x128xf32>
      %cst_254 = arith.constant dense<0.000000e+00> : vector<64xf32>
      %392 = vector.multi_reduction <add>, %387, %cst_254 [1] : vector<64x128xf32> to vector<64xf32>
      %393 = vector.shape_cast %392 : vector<64xf32> to vector<64x1xf32>
      %cst_255 = arith.constant 1.280000e+02 : f32
      %394 = vector.broadcast %cst_255 : f32 to vector<64x1xf32>
      %395 = arith.divf %393, %394 : vector<64x1xf32>
      %396 = vector.broadcast %395 : vector<64x1xf32> to vector<64x128xf32>
      %397 = arith.subf %387, %396 : vector<64x128xf32>
      %398 = arith.mulf %397, %397 : vector<64x128xf32>
      %cst_256 = arith.constant dense<0.000000e+00> : vector<64xf32>
      %399 = vector.multi_reduction <add>, %398, %cst_256 [1] : vector<64x128xf32> to vector<64xf32>
      %400 = vector.shape_cast %399 : vector<64xf32> to vector<64x1xf32>
      %cst_257 = arith.constant 1.280000e+02 : f32
      %401 = vector.broadcast %cst_257 : f32 to vector<64x1xf32>
      %402 = arith.divf %400, %401 : vector<64x1xf32>
      %403 = vector.broadcast %395 : vector<64x1xf32> to vector<64x128xf32>
      %404 = arith.subf %387, %403 : vector<64x128xf32>
      %cst_258 = arith.constant 9.99999997E-7 : f32
      %405 = vector.broadcast %cst_258 : f32 to vector<64x1xf32>
      %406 = arith.addf %402, %405 : vector<64x1xf32>
      %407 = math.rsqrt %406 : vector<64x1xf32>
      %408 = vector.broadcast %407 : vector<64x1xf32> to vector<64x128xf32>
      %409 = arith.mulf %404, %408 : vector<64x128xf32>
      %410 = vector.broadcast %389 : vector<1x128xf32> to vector<64x128xf32>
      %411 = arith.mulf %409, %410 : vector<64x128xf32>
      %412 = vector.broadcast %391 : vector<1x128xf32> to vector<64x128xf32>
      %413 = arith.addf %411, %412 : vector<64x128xf32>
      %414 = arith.truncf %413 : vector<64x128xf32> to vector<64x128xbf16>
      %c64_259 = arith.constant 64 : index
      %c0_260 = arith.constant 0 : index
      %415 = vector.load %arg21[%c64_259, %c0_260] : memref<128x128xbf16, #tpu.memory_space<vmem>>, vector<64x128xbf16>
      tpu.vector_store %arg21[%c64_259, %c0_260], %414 {strides = array<i32>} : memref<128x128xbf16, #tpu.memory_space<vmem>>, vector<64x128xbf16>,
      %c0_261 = arith.constant 0 : index
      %c0_262 = arith.constant 0 : index
      %c0_263 = arith.constant 0 : index
      %416 = vector.load %arg19[%c0_261, %c0_262, %c0_263] : memref<1x1x128xf32, #tpu.memory_space<vmem>>, vector<1x1x128xf32>
      %417 = vector.shape_cast %416 : vector<1x1x128xf32> to vector<1x128xf32>
      %418 = vector.broadcast %417 : vector<1x128xf32> to vector<64x128xf32>
      %419 = arith.addf %387, %418 : vector<64x128xf32>
      %c1_264 = arith.constant 1 : index
      %c0_265 = arith.constant 0 : index
      %c0_266 = arith.constant 0 : index
      %420 = vector.load %arg20[%c1_264, %c0_265, %c0_266] : memref<2x64x128xf32, #tpu.memory_space<vmem>>, vector<1x64x128xf32>
      %421 = vector.shape_cast %420 : vector<1x64x128xf32> to vector<64x128xf32>
      %422 = vector.shape_cast %419 : vector<64x128xf32> to vector<1x64x128xf32>
      tpu.vector_store %arg20[%c1_264, %c0_265, %c0_266], %422 {strides = array<i32>} : memref<2x64x128xf32, #tpu.memory_space<vmem>>, vector<1x64x128xf32>,
    } else {
    }
    %c0 = arith.constant 0 : index
    %c0_4 = arith.constant 0 : index
    %8 = vector.load %arg21[%c0, %c0_4] : memref<128x128xbf16, #tpu.memory_space<vmem>>, vector<128x128xbf16>
    %c0_5 = arith.constant 0 : index
    %c0_6 = arith.constant 0 : index
    %c0_7 = arith.constant 0 : index
    %9 = vector.load %arg16[%c0_5, %c0_6, %c0_7] : memref<1x128x256xbf16, #tpu.memory_space<vmem>>, vector<1x128x256xbf16>
    %10 = vector.shape_cast %9 : vector<1x128x256xbf16> to vector<128x256xbf16>
    %cst = arith.constant dense<0.000000e+00> : vector<128x256xf32>
    %11 = tpu.matmul %8, %10, %cst {dimension_numbers = #tpu.dot_dimension_numbers<[1], [0], [0], [1], [0, 0, 1, 1], [], []>} : vector<128x128xbf16>, vector<128x256xbf16>, vector<128x256xf32> -> vector<128x256xf32>
    %c0_8 = arith.constant 0 : index
    %c0_9 = arith.constant 0 : index
    %c0_10 = arith.constant 0 : index
    %12 = vector.load %arg17[%c0_8, %c0_9, %c0_10] : memref<1x1x256xf32, #tpu.memory_space<vmem>>, vector<1x1x256xf32>
    %13 = vector.shape_cast %12 : vector<1x1x256xf32> to vector<1x256xf32>
    %14 = vector.broadcast %13 : vector<1x256xf32> to vector<128x256xf32>
    %15 = arith.addf %11, %14 : vector<128x256xf32>
    %16 = arith.mulf %15, %15 : vector<128x256xf32>
    %17 = arith.mulf %15, %16 : vector<128x256xf32>
    %cst_11 = arith.constant 4.471500e-02 : f32
    %18 = vector.broadcast %cst_11 : f32 to vector<128x256xf32>
    %19 = arith.mulf %18, %17 : vector<128x256xf32>
    %20 = arith.addf %15, %19 : vector<128x256xf32>
    %cst_12 = arith.constant 0.797884583 : f32
    %21 = vector.broadcast %cst_12 : f32 to vector<128x256xf32>
    %22 = arith.mulf %21, %20 : vector<128x256xf32>
    %23 = math.tanh %22 : vector<128x256xf32>
    %cst_13 = arith.constant 1.000000e+00 : f32
    %24 = vector.broadcast %cst_13 : f32 to vector<128x256xf32>
    %25 = arith.addf %24, %23 : vector<128x256xf32>
    %cst_14 = arith.constant 5.000000e-01 : f32
    %26 = vector.broadcast %cst_14 : f32 to vector<128x256xf32>
    %27 = arith.mulf %26, %25 : vector<128x256xf32>
    %28 = arith.mulf %15, %27 : vector<128x256xf32>
    %29 = arith.truncf %28 : vector<128x256xf32> to vector<128x256xbf16>
    %c0_15 = arith.constant 0 : index
    %c0_16 = arith.constant 0 : index
    %c0_17 = arith.constant 0 : index
    %30 = vector.load %arg18[%c0_15, %c0_16, %c0_17] : memref<1x256x128xbf16, #tpu.memory_space<vmem>>, vector<1x256x128xbf16>
    %31 = vector.shape_cast %30 : vector<1x256x128xbf16> to vector<256x128xbf16>
    %cst_18 = arith.constant dense<0.000000e+00> : vector<128x128xf32>
    %32 = tpu.matmul %29, %31, %cst_18 {dimension_numbers = #tpu.dot_dimension_numbers<[1], [0], [0], [1], [0, 0, 1, 1], [], []>} : vector<128x256xbf16>, vector<256x128xbf16>, vector<128x128xf32> -> vector<128x128xf32>
    %c0_19 = arith.constant 0 : index
    %c0_20 = arith.constant 0 : index
    %c0_21 = arith.constant 0 : index
    %33 = vector.load %arg20[%c0_19, %c0_20, %c0_21] : memref<2x64x128xf32, #tpu.memory_space<vmem>>, vector<1x64x128xf32>
    %34 = vector.shape_cast %33 : vector<1x64x128xf32> to vector<64x128xf32>
    %35 = vector.extract_strided_slice %32 {offsets = [0, 0], sizes = [64, 128], strides = [1, 1]} : vector<128x128xf32> to vector<64x128xf32>
    %36 = arith.addf %34, %35 : vector<64x128xf32>
    %c0_22 = arith.constant 0 : index
    %c0_23 = arith.constant 0 : index
    %c0_24 = arith.constant 0 : index
    %37 = vector.load %arg20[%c0_22, %c0_23, %c0_24] : memref<2x64x128xf32, #tpu.memory_space<vmem>>, vector<1x64x128xf32>
    %38 = vector.shape_cast %37 : vector<1x64x128xf32> to vector<64x128xf32>
    %39 = vector.shape_cast %36 : vector<64x128xf32> to vector<1x64x128xf32>
    tpu.vector_store %arg20[%c0_22, %c0_23, %c0_24], %39 {strides = array<i32>} : memref<2x64x128xf32, #tpu.memory_space<vmem>>, vector<1x64x128xf32>,
    %c1 = arith.constant 1 : index
    %c0_25 = arith.constant 0 : index
    %c0_26 = arith.constant 0 : index
    %40 = vector.load %arg20[%c1, %c0_25, %c0_26] : memref<2x64x128xf32, #tpu.memory_space<vmem>>, vector<1x64x128xf32>
    %41 = vector.shape_cast %40 : vector<1x64x128xf32> to vector<64x128xf32>
    %42 = vector.extract_strided_slice %32 {offsets = [64, 0], sizes = [64, 128], strides = [1, 1]} : vector<128x128xf32> to vector<64x128xf32>
    %43 = arith.addf %41, %42 : vector<64x128xf32>
    %c1_27 = arith.constant 1 : index
    %c0_28 = arith.constant 0 : index
    %c0_29 = arith.constant 0 : index
    %44 = vector.load %arg20[%c1_27, %c0_28, %c0_29] : memref<2x64x128xf32, #tpu.memory_space<vmem>>, vector<1x64x128xf32>
    %45 = vector.shape_cast %44 : vector<1x64x128xf32> to vector<64x128xf32>
    %46 = vector.shape_cast %43 : vector<64x128xf32> to vector<1x64x128xf32>
    tpu.vector_store %arg20[%c1_27, %c0_28, %c0_29], %46 {strides = array<i32>} : memref<2x64x128xf32, #tpu.memory_space<vmem>>, vector<1x64x128xf32>,
    return
  }
  func.func @transform_0(%arg0: i32, %arg1: i32, %arg2: i32) -> (i32, i32, i32) {
    %c0_i32 = arith.constant 0 : i32
    %c0_i32_0 = arith.constant 0 : i32
    %c0_i32_1 = arith.constant 0 : i32
    return %arg0, %c0_i32, %c0_i32_0 : i32, i32, i32
  }
  func.func @transform_1(%arg0: i32, %arg1: i32, %arg2: i32) -> (i32, i32, i32) {
    %c0_i32 = arith.constant 0 : i32
    %c0_i32_0 = arith.constant 0 : i32
    %c0_i32_1 = arith.constant 0 : i32
    return %arg1, %c0_i32, %c0_i32_0 : i32, i32, i32
  }
  func.func @transform_2(%arg0: i32, %arg1: i32, %arg2: i32) -> (i32, i32, i32) {
    %c0_i32 = arith.constant 0 : i32
    %c0_i32_0 = arith.constant 0 : i32
    %c0_i32_1 = arith.constant 0 : i32
    return %arg1, %c0_i32, %c0_i32_0 : i32, i32, i32
  }
  func.func @transform_3(%arg0: i32, %arg1: i32, %arg2: i32) -> (i32, i32, i32) {
    %c0_i32 = arith.constant 0 : i32
    %c0_i32_0 = arith.constant 0 : i32
    %c0_i32_1 = arith.constant 0 : i32
    return %arg1, %c0_i32, %c0_i32_0 : i32, i32, i32
  }
  func.func @transform_4(%arg0: i32, %arg1: i32, %arg2: i32) -> (i32, i32, i32) {
    %c0_i32 = arith.constant 0 : i32
    %c0_i32_0 = arith.constant 0 : i32
    %c0_i32_1 = arith.constant 0 : i32
    return %arg1, %c0_i32, %c0_i32_0 : i32, i32, i32
  }
  func.func @transform_5(%arg0: i32, %arg1: i32, %arg2: i32) -> (i32, i32, i32) {
    %c0_i32 = arith.constant 0 : i32
    %c0_i32_0 = arith.constant 0 : i32
    %c0_i32_1 = arith.constant 0 : i32
    return %arg1, %c0_i32, %c0_i32_0 : i32, i32, i32
  }
  func.func @transform_6(%arg0: i32, %arg1: i32, %arg2: i32) -> (i32, i32, i32) {
    %c0_i32 = arith.constant 0 : i32
    %c0_i32_0 = arith.constant 0 : i32
    %c0_i32_1 = arith.constant 0 : i32
    return %arg1, %c0_i32, %c0_i32_0 : i32, i32, i32
  }
  func.func @transform_7(%arg0: i32, %arg1: i32, %arg2: i32) -> (i32, i32, i32) {
    %c0_i32 = arith.constant 0 : i32
    %c0_i32_0 = arith.constant 0 : i32
    %c0_i32_1 = arith.constant 0 : i32
    return %arg1, %c0_i32, %c0_i32_0 : i32, i32, i32
  }
  func.func @transform_8(%arg0: i32, %arg1: i32, %arg2: i32) -> (i32, i32, i32) {
    %c0_i32 = arith.constant 0 : i32
    %c0_i32_0 = arith.constant 0 : i32
    %c0_i32_1 = arith.constant 0 : i32
    return %arg1, %c0_i32, %c0_i32_0 : i32, i32, i32
  }
  func.func @transform_9(%arg0: i32, %arg1: i32, %arg2: i32) -> (i32, i32, i32) {
    %c0_i32 = arith.constant 0 : i32
    %c0_i32_0 = arith.constant 0 : i32
    %c0_i32_1 = arith.constant 0 : i32
    return %arg1, %c0_i32, %c0_i32_0 : i32, i32, i32
  }
  func.func @transform_10(%arg0: i32, %arg1: i32, %arg2: i32) -> (i32, i32, i32) {
    %c0_i32 = arith.constant 0 : i32
    %c0_i32_0 = arith.constant 0 : i32
    %c0_i32_1 = arith.constant 0 : i32
    return %arg1, %c0_i32, %c0_i32_0 : i32, i32, i32
  }
  func.func @transform_11(%arg0: i32, %arg1: i32, %arg2: i32) -> (i32, i32, i32) {
    %c0_i32 = arith.constant 0 : i32
    %c0_i32_0 = arith.constant 0 : i32
    %c0_i32_1 = arith.constant 0 : i32
    return %arg1, %c0_i32, %c0_i32_0 : i32, i32, i32
  }
  func.func @transform_12(%arg0: i32, %arg1: i32, %arg2: i32) -> (i32, i32, i32) {
    %c0_i32 = arith.constant 0 : i32
    %c0_i32_0 = arith.constant 0 : i32
    %c0_i32_1 = arith.constant 0 : i32
    return %arg1, %c0_i32, %c0_i32_0 : i32, i32, i32
  }
  func.func @transform_13(%arg0: i32, %arg1: i32, %arg2: i32) -> (i32, i32, i32) {
    %c0_i32 = arith.constant 0 : i32
    %c0_i32_0 = arith.constant 0 : i32
    return %arg1, %c0_i32, %arg2 : i32, i32, i32
  }
  func.func @transform_14(%arg0: i32, %arg1: i32, %arg2: i32) -> (i32, i32, i32) {
    %c0_i32 = arith.constant 0 : i32
    %c0_i32_0 = arith.constant 0 : i32
    return %arg1, %c0_i32, %arg2 : i32, i32, i32
  }
  func.func @transform_15(%arg0: i32, %arg1: i32, %arg2: i32) -> (i32, i32, i32) {
    %c0_i32 = arith.constant 0 : i32
    %c0_i32_0 = arith.constant 0 : i32
    return %arg1, %arg2, %c0_i32 : i32, i32, i32
  }
  func.func @transform_16(%arg0: i32, %arg1: i32, %arg2: i32) -> (i32, i32, i32) {
    %c0_i32 = arith.constant 0 : i32
    %c0_i32_0 = arith.constant 0 : i32
    %c0_i32_1 = arith.constant 0 : i32
    return %arg1, %c0_i32, %c0_i32_0 : i32, i32, i32
  }
  func.func @transform_17(%arg0: i32, %arg1: i32, %arg2: i32) -> (i32, i32, i32) {
    %c0_i32 = arith.constant 0 : i32
    %c0_i32_0 = arith.constant 0 : i32
    %c0_i32_1 = arith.constant 0 : i32
    return %arg0, %c0_i32, %c0_i32_0 : i32, i32, i32
  }
}

</mosaic_0001>

<llo_original>
// kernel: tpu_custom_call.1
$region0: #{tpu_custom_call.1}
  #allocation0 [shape = 'u32[]', space=smem, size = 0x4, offset = 0x4, fixed_abs, tag = 'smem constant byte address 0x4 - core index']
  #allocation1 [shape = 'u32[144,128]{1,0:T(1,128)}', space=vmem, size = 0x12000, scoped, tag = 'internal scratch']
  #allocation2 [shape = 'bf16[128,128]{1,0:T(16,128)(2,1)}', space=vmem, size = 0x8000, scoped, tag = 'scratch operand']
  #allocation3 [shape = 'bf16[4,64,32]{2,1,0:T(16,128)(2,1)}', space=vmem, size = 0x10000, scoped, tag = 'scratch operand']
  #allocation4 [shape = 'bf16[4,64,32]{2,1,0:T(16,128)(2,1)}', space=vmem, size = 0x10000, scoped, tag = 'scratch operand']
  #allocation5 [shape = 'bf16[4,64,32]{2,1,0:T(16,128)(2,1)}', space=vmem, size = 0x10000, scoped, tag = 'scratch operand']
  #allocation6 [shape = 'bf16[64,128]{1,0:T(16,128)(2,1)}', space=vmem, size = 0x4000, scoped, tag = 'scratch operand']
  %s0 = inlined_call_operand.hbm [shape: f32[2,64,128], index: 0, kind: input, shape index: {}]
  %s1 = inlined_call_operand.vmem [shape: f32[2,1,128], index: 1, kind: input, shape index: {}]
  %s2 = inlined_call_operand.hbm [shape: f32[2,1,128], index: 2, kind: input, shape index: {}]
  %s3 = inlined_call_operand.hbm [shape: bf16[2,128,128], index: 3, kind: input, shape index: {}]
  %s4 = inlined_call_operand.vmem [shape: f32[2,1,128], index: 4, kind: input, shape index: {}]
  %s5 = inlined_call_operand.hbm [shape: bf16[2,128,128], index: 5, kind: input, shape index: {}]
  %s6 = inlined_call_operand.vmem [shape: f32[2,1,128], index: 6, kind: input, shape index: {}]
  %s7 = inlined_call_operand.hbm [shape: bf16[2,128,128], index: 7, kind: input, shape index: {}]
  %s8 = inlined_call_operand.vmem [shape: f32[2,1,128], index: 8, kind: input, shape index: {}]
  %s9 = inlined_call_operand.hbm [shape: bf16[2,128,128], index: 9, kind: input, shape index: {}]
  %s10 = inlined_call_operand.vmem [shape: f32[2,1,128], index: 10, kind: input, shape index: {}]
  %s11 = inlined_call_operand.vmem [shape: f32[2,1,128], index: 11, kind: input, shape index: {}]
  %s12 = inlined_call_operand.vmem [shape: f32[2,1,128], index: 12, kind: input, shape index: {}]
  %s13 = inlined_call_operand.hbm [shape: bf16[2,128,256], index: 13, kind: input, shape index: {}]
  %s14 = inlined_call_operand.vmem [shape: f32[2,1,256], index: 14, kind: input, shape index: {}]
  %s15 = inlined_call_operand.hbm [shape: bf16[2,256,128], index: 15, kind: input, shape index: {}]
  %s16 = inlined_call_operand.vmem [shape: f32[2,1,128], index: 16, kind: input, shape index: {}]
  %s17 = inlined_call_operand.hbm [shape: f32[2,64,128], index: 17, kind: output, shape index: {}]
  %s18 = sld [smem:[#allocation0]]
  $region141: #{tpu_custom_call.1} parent=0
    _
  %s20 = ssub.s32 1, %s18
  %s21 = scalar_select 0, %s20, %s18
  $region1: #{tpu_custom_call.1} parent=0
    #allocation7 [shape = 'u8[65536]{0}', space=vmem, size = 0x10000, scoped, tag = 'input window, operand 0, single buffered']
    #allocation8 [shape = 's32[2]{0}', space=sflag, size = 0x8, scoped, tag = 'scoped memory for tpu_custom_call.1']
    #allocation9 [shape = 's32[2]{0}', space=sflag, size = 0x8, scoped, tag = 'scoped memory for tpu_custom_call.1']
    #allocation10 [shape = 'u8[1024]{0}', space=vmem, size = 0x400, scoped, tag = 'input window, operand 2']
    #allocation11 [shape = 's32[2]{0}', space=sflag, size = 0x8, scoped, tag = 'scoped memory for tpu_custom_call.1']
    #allocation12 [shape = 'u8[65536]{0}', space=vmem, size = 0x10000, scoped, tag = 'input window, operand 3']
    #allocation13 [shape = 'u8[65536]{0}', space=vmem, size = 0x10000, scoped, tag = 'input window, operand 5']
    #allocation14 [shape = 's32[2]{0}', space=sflag, size = 0x8, scoped, tag = 'scoped memory for tpu_custom_call.1']
    #allocation15 [shape = 'u8[65536]{0}', space=vmem, size = 0x10000, scoped, tag = 'input window, operand 7']
    #allocation16 [shape = 'u8[65536]{0}', space=vmem, size = 0x10000, scoped, tag = 'input window, operand 9']
    #allocation17 [shape = 's32[2]{0}', space=sflag, size = 0x8, scoped, tag = 'scoped memory for tpu_custom_call.1']
    #allocation18 [shape = 'u8[131072]{0}', space=vmem, size = 0x20000, scoped, tag = 'input window, operand 13']
    #allocation19 [shape = 'u8[131072]{0}', space=vmem, size = 0x20000, scoped, tag = 'input window, operand 15']
    #allocation20 [shape = 's32[2]{0}', space=sflag, size = 0x8, scoped, tag = 'scoped memory for tpu_custom_call.1']
    #allocation21 [shape = 'u8[65536]{0}', space=vmem, size = 0x10000, scoped, tag = 'output window, operand 0, single buffered']
    %22 = vsyncpa [#allocation8], 0
    %23 = vsyncpa [#allocation11], 0
    %s24 = scalar_lea.sflag [#allocation11], 1
    %25 = vsyncpa %s24, 0
    %26 = vsyncpa [#allocation14], 0
    %s27 = scalar_lea.sflag [#allocation14], 1
    %28 = vsyncpa %s27, 0
    %29 = vsyncpa [#allocation17], 0
    %s30 = scalar_lea.sflag [#allocation17], 1
    %31 = vsyncpa %s30, 0
    %32 = vsyncpa [#allocation20], 0
    %s33 = scalar_lea.sflag [#allocation20], 1
    %34 = vsyncpa %s33, 0
    %35 = vsyncpa [#allocation9], 0
    loop: start=0, step=1, limit=4
    $region2: #{tpu_custom_call.1} parent=1 // loop_pre_header
      _
    $region3: #{tpu_custom_call.1} parent=1 // loop_header
      %s37 = sphi 0, %s41
      %p38 = scmp.ge.s32.totalorder %s37, 4
      %s44 = sphi 0, %s63
      %s45 = sphi 0, %s59
      %s46 = sphi 0, %s55
      %s47 = sphi 0, %s44
      %s48 = sphi 0, %s45
      %s49 = sphi 0, %s46
      %s50 = sphi 0, %s47
      %s51 = sphi 0, %s48
      %s52 = sphi 0, %s49
      %s66 = sphi 0, %s68
      %s69 = sphi 0, %s66
      %s70 = sphi 0, %s69
      %s86 = sphi 0, %s70
      %s92 = sphi 0, %s94
      %s95 = sphi 0, %s92
      %s96 = sphi 0, %s95
      %s112 = sphi 0, %s96
      %s118 = sphi 0, %s120
      %s121 = sphi 0, %s118
      %s122 = sphi 0, %s121
      %s138 = sphi 0, %s122
      %s144 = sphi 0, %s146
      %s147 = sphi 0, %s144
      %s148 = sphi 0, %s147
      %s164 = sphi 0, %s148
      %s170 = sphi 0, %s172
      %s173 = sphi 0, %s170
      %s174 = sphi 0, %s173
      %s190 = sphi 0, %s174
      %s196 = sphi 0, %s198
      %s199 = sphi 0, %s196
      %s200 = sphi 0, %s199
      %s216 = sphi 0, %s200
      %s222 = sphi 0, %s224
      %s225 = sphi 0, %s222
      %s226 = sphi 0, %s225
      %s242 = sphi 0, %s226
      %s248 = sphi 0, %s250
      %s251 = sphi 0, %s248
      %s252 = sphi 0, %s251
      %s268 = sphi 0, %s252
      %s274 = sphi 0, %s276
      %s277 = sphi 0, %s274
      %s278 = sphi 0, %s277
      %s294 = sphi 0, %s278
      %s300 = sphi 0, %s302
      %s303 = sphi 0, %s300
      %s304 = sphi 0, %s303
      %s320 = sphi 0, %s304
      %s326 = sphi 0, %s328
      %s329 = sphi 0, %s326
      %s330 = sphi 0, %s329
      %s346 = sphi 0, %s330
      %s352 = sphi 0, %s354
      %s355 = sphi 0, %s352
      %s356 = sphi 0, %s355
      %s372 = sphi 0, %s356
      %s378 = sphi 0, %s380
      %s381 = sphi 0, %s378
      %s382 = sphi 0, %s381
      %s398 = sphi 0, %s382
      %s406 = sphi 0, %s408
      %s409 = sphi 0, %s406
      %s410 = sphi 0, %s409
      %s426 = sphi 0, %s410
      %s434 = sphi 0, %s436
      %s437 = sphi 0, %s434
      %s438 = sphi 0, %s437
      %s454 = sphi 0, %s438
      %s462 = sphi 0, %s464
      %s465 = sphi 0, %s462
      %s466 = sphi 0, %s465
      %s482 = sphi 0, %s466
      %s488 = sphi 0, %s490
      %s491 = sphi 0, %s488
      %s492 = sphi 0, %s491
      %s508 = sphi 0, %s492
      %s514 = sphi 0, %s516
      %s517 = sphi 0, %s514
      %s518 = sphi 0, %s517
      %s534 = sphi 0, %s518
    $region4: #{tpu_custom_call.1} parent=1 // loop_header_branch
      %40 = sbr.rel (%p38) target = $region8
    $region5: #{tpu_custom_call.1} parent=1 // loop_body
      %s42 = ssub.s32 %s37, 1
      %s43 = ssub.s32 %s37, 2
      %s53 = sadd.s32 1, %s46
      %p54 = scmp.ge.s32.totalorder %s53, 1
      %s55 = scalar_select %p54, 0, %s53
      %s56 = sadd.s32 1, %s45
      %s57 = scalar_select %p54, %s56, %s45
      %p58 = scmp.ge.s32.totalorder %s57, 2
      %s59 = scalar_select %p58, 0, %s57
      %s60 = sadd.s32 1, %s44
      %s61 = scalar_select %p58, %s60, %s44
      %p62 = scmp.ge.s32.totalorder %s61, 1
      %s63 = scalar_select %p62, 0, %s61
      %s64 = ssub.s32 %s44, %s63
      %p65 = scmp.eq.s32.totalorder %s64, 0
      %s67 = sadd.s32 %s66, 1
      %s68 = scalar_select %p65, %s66, %s67
      %p71 = pneg %p65
      %p72 = scmp.eq.s32.totalorder %s37, 1
      %p73 = por %p71, %p72
      %p74 = scmp.ne.s32.totalorder %s66, %s69
      %p75 = scmp.eq.s32.totalorder %s37, 0
      %p76 = por %p74, %p75
      %p77 = scmp.ne.s32.totalorder %s66, %s69
      %p78 = scmp.eq.s32.totalorder %s42, 1
      %p79 = por %p77, %p78
      %p80 = scmp.ne.s32.totalorder %s69, %s70
      %p81 = scmp.eq.s32.totalorder %s42, 0
      %p82 = por %p80, %p81
      %p83 = scmp.ne.s32.totalorder %s69, %s70
      %p84 = scmp.eq.s32.totalorder %s43, 1
      %p85 = por %p83, %p84
      %p87 = scmp.ne.s32.totalorder %s70, %s86
      %p88 = scmp.eq.s32.totalorder %s43, 0
      %p89 = por %p87, %p88
      %s90 = ssub.s32 %s45, %s59
      %p91 = scmp.eq.s32.totalorder %s90, 0
      %s93 = sadd.s32 %s92, 1
      %s94 = scalar_select %p91, %s92, %s93
      %p97 = pneg %p91
      %p98 = scmp.eq.s32.totalorder %s37, 1
      %p99 = por %p97, %p98
      %p100 = scmp.ne.s32.totalorder %s92, %s95
      %p101 = scmp.eq.s32.totalorder %s37, 0
      %p102 = por %p100, %p101
      %p103 = scmp.ne.s32.totalorder %s92, %s95
      %p104 = scmp.eq.s32.totalorder %s42, 1
      %p105 = por %p103, %p104
      %p106 = scmp.ne.s32.totalorder %s95, %s96
      %p107 = scmp.eq.s32.totalorder %s42, 0
      %p108 = por %p106, %p107
      %p109 = scmp.ne.s32.totalorder %s95, %s96
      %p110 = scmp.eq.s32.totalorder %s43, 1
      %p111 = por %p109, %p110
      %p113 = scmp.ne.s32.totalorder %s96, %s112
      %p114 = scmp.eq.s32.totalorder %s43, 0
      %p115 = por %p113, %p114
      %s116 = ssub.s32 %s45, %s59
      %p117 = scmp.eq.s32.totalorder %s116, 0
      %s119 = sadd.s32 %s118, 1
      %s120 = scalar_select %p117, %s118, %s119
      %p123 = pneg %p117
      %p124 = scmp.eq.s32.totalorder %s37, 1
      %p125 = por %p123, %p124
      %p126 = scmp.ne.s32.totalorder %s118, %s121
      %p127 = scmp.eq.s32.totalorder %s37, 0
      %p128 = por %p126, %p127
      %p129 = scmp.ne.s32.totalorder %s118, %s121
      %p130 = scmp.eq.s32.totalorder %s42, 1
      %p131 = por %p129, %p130
      %p132 = scmp.ne.s32.totalorder %s121, %s122
      %p133 = scmp.eq.s32.totalorder %s42, 0
      %p134 = por %p132, %p133
      %p135 = scmp.ne.s32.totalorder %s121, %s122
      %p136 = scmp.eq.s32.totalorder %s43, 1
      %p137 = por %p135, %p136
      %p139 = scmp.ne.s32.totalorder %s122, %s138
      %p140 = scmp.eq.s32.totalorder %s43, 0
      %p141 = por %p139, %p140
      %s142 = ssub.s32 %s45, %s59
      %p143 = scmp.eq.s32.totalorder %s142, 0
      %s145 = sadd.s32 %s144, 1
      %s146 = scalar_select %p143, %s144, %s145
      %p149 = pneg %p143
      %p150 = scmp.eq.s32.totalorder %s37, 1
      %p151 = por %p149, %p150
      %p152 = scmp.ne.s32.totalorder %s144, %s147
      %p153 = scmp.eq.s32.totalorder %s37, 0
      %p154 = por %p152, %p153
      %p155 = scmp.ne.s32.totalorder %s144, %s147
      %p156 = scmp.eq.s32.totalorder %s42, 1
      %p157 = por %p155, %p156
      %p158 = scmp.ne.s32.totalorder %s147, %s148
      %p159 = scmp.eq.s32.totalorder %s42, 0
      %p160 = por %p158, %p159
      %p161 = scmp.ne.s32.totalorder %s147, %s148
      %p162 = scmp.eq.s32.totalorder %s43, 1
      %p163 = por %p161, %p162
      %p165 = scmp.ne.s32.totalorder %s148, %s164
      %p166 = scmp.eq.s32.totalorder %s43, 0
      %p167 = por %p165, %p166
      %s168 = ssub.s32 %s45, %s59
      %p169 = scmp.eq.s32.totalorder %s168, 0
      %s171 = sadd.s32 %s170, 1
      %s172 = scalar_select %p169, %s170, %s171
      %p175 = pneg %p169
      %p176 = scmp.eq.s32.totalorder %s37, 1
      %p177 = por %p175, %p176
      %p178 = scmp.ne.s32.totalorder %s170, %s173
      %p179 = scmp.eq.s32.totalorder %s37, 0
      %p180 = por %p178, %p179
      %p181 = scmp.ne.s32.totalorder %s170, %s173
      %p182 = scmp.eq.s32.totalorder %s42, 1
      %p183 = por %p181, %p182
      %p184 = scmp.ne.s32.totalorder %s173, %s174
      %p185 = scmp.eq.s32.totalorder %s42, 0
      %p186 = por %p184, %p185
      %p187 = scmp.ne.s32.totalorder %s173, %s174
      %p188 = scmp.eq.s32.totalorder %s43, 1
      %p189 = por %p187, %p188
      %p191 = scmp.ne.s32.totalorder %s174, %s190
      %p192 = scmp.eq.s32.totalorder %s43, 0
      %p193 = por %p191, %p192
      %s194 = ssub.s32 %s45, %s59
      %p195 = scmp.eq.s32.totalorder %s194, 0
      %s197 = sadd.s32 %s196, 1
      %s198 = scalar_select %p195, %s196, %s197
      %p201 = pneg %p195
      %p202 = scmp.eq.s32.totalorder %s37, 1
      %p203 = por %p201, %p202
      %p204 = scmp.ne.s32.totalorder %s196, %s199
      %p205 = scmp.eq.s32.totalorder %s37, 0
      %p206 = por %p204, %p205
      %p207 = scmp.ne.s32.totalorder %s196, %s199
      %p208 = scmp.eq.s32.totalorder %s42, 1
      %p209 = por %p207, %p208
      %p210 = scmp.ne.s32.totalorder %s199, %s200
      %p211 = scmp.eq.s32.totalorder %s42, 0
      %p212 = por %p210, %p211
      %p213 = scmp.ne.s32.totalorder %s199, %s200
      %p214 = scmp.eq.s32.totalorder %s43, 1
      %p215 = por %p213, %p214
      %p217 = scmp.ne.s32.totalorder %s200, %s216
      %p218 = scmp.eq.s32.totalorder %s43, 0
      %p219 = por %p217, %p218
      %s220 = ssub.s32 %s45, %s59
      %p221 = scmp.eq.s32.totalorder %s220, 0
      %s223 = sadd.s32 %s222, 1
      %s224 = scalar_select %p221, %s222, %s223
      %p227 = pneg %p221
      %p228 = scmp.eq.s32.totalorder %s37, 1
      %p229 = por %p227, %p228
      %p230 = scmp.ne.s32.totalorder %s222, %s225
      %p231 = scmp.eq.s32.totalorder %s37, 0
      %p232 = por %p230, %p231
      %p233 = scmp.ne.s32.totalorder %s222, %s225
      %p234 = scmp.eq.s32.totalorder %s42, 1
      %p235 = por %p233, %p234
      %p236 = scmp.ne.s32.totalorder %s225, %s226
      %p237 = scmp.eq.s32.totalorder %s42, 0
      %p238 = por %p236, %p237
      %p239 = scmp.ne.s32.totalorder %s225, %s226
      %p240 = scmp.eq.s32.totalorder %s43, 1
      %p241 = por %p239, %p240
      %p243 = scmp.ne.s32.totalorder %s226, %s242
      %p244 = scmp.eq.s32.totalorder %s43, 0
      %p245 = por %p243, %p244
      %s246 = ssub.s32 %s45, %s59
      %p247 = scmp.eq.s32.totalorder %s246, 0
      %s249 = sadd.s32 %s248, 1
      %s250 = scalar_select %p247, %s248, %s249
      %p253 = pneg %p247
      %p254 = scmp.eq.s32.totalorder %s37, 1
      %p255 = por %p253, %p254
      %p256 = scmp.ne.s32.totalorder %s248, %s251
      %p257 = scmp.eq.s32.totalorder %s37, 0
      %p258 = por %p256, %p257
      %p259 = scmp.ne.s32.totalorder %s248, %s251
      %p260 = scmp.eq.s32.totalorder %s42, 1
      %p261 = por %p259, %p260
      %p262 = scmp.ne.s32.totalorder %s251, %s252
      %p263 = scmp.eq.s32.totalorder %s42, 0
      %p264 = por %p262, %p263
      %p265 = scmp.ne.s32.totalorder %s251, %s252
      %p266 = scmp.eq.s32.totalorder %s43, 1
      %p267 = por %p265, %p266
      %p269 = scmp.ne.s32.totalorder %s252, %s268
      %p270 = scmp.eq.s32.totalorder %s43, 0
      %p271 = por %p269, %p270
      %s272 = ssub.s32 %s45, %s59
      %p273 = scmp.eq.s32.totalorder %s272, 0
      %s275 = sadd.s32 %s274, 1
      %s276 = scalar_select %p273, %s274, %s275
      %p279 = pneg %p273
      %p280 = scmp.eq.s32.totalorder %s37, 1
      %p281 = por %p279, %p280
      %p282 = scmp.ne.s32.totalorder %s274, %s277
      %p283 = scmp.eq.s32.totalorder %s37, 0
      %p284 = por %p282, %p283
      %p285 = scmp.ne.s32.totalorder %s274, %s277
      %p286 = scmp.eq.s32.totalorder %s42, 1
      %p287 = por %p285, %p286
      %p288 = scmp.ne.s32.totalorder %s277, %s278
      %p289 = scmp.eq.s32.totalorder %s42, 0
      %p290 = por %p288, %p289
      %p291 = scmp.ne.s32.totalorder %s277, %s278
      %p292 = scmp.eq.s32.totalorder %s43, 1
      %p293 = por %p291, %p292
      %p295 = scmp.ne.s32.totalorder %s278, %s294
      %p296 = scmp.eq.s32.totalorder %s43, 0
      %p297 = por %p295, %p296
      %s298 = ssub.s32 %s45, %s59
      %p299 = scmp.eq.s32.totalorder %s298, 0
      %s301 = sadd.s32 %s300, 1
      %s302 = scalar_select %p299, %s300, %s301
      %p305 = pneg %p299
      %p306 = scmp.eq.s32.totalorder %s37, 1
      %p307 = por %p305, %p306
      %p308 = scmp.ne.s32.totalorder %s300, %s303
      %p309 = scmp.eq.s32.totalorder %s37, 0
      %p310 = por %p308, %p309
      %p311 = scmp.ne.s32.totalorder %s300, %s303
      %p312 = scmp.eq.s32.totalorder %s42, 1
      %p313 = por %p311, %p312
      %p314 = scmp.ne.s32.totalorder %s303, %s304
      %p315 = scmp.eq.s32.totalorder %s42, 0
      %p316 = por %p314, %p315
      %p317 = scmp.ne.s32.totalorder %s303, %s304
      %p318 = scmp.eq.s32.totalorder %s43, 1
      %p319 = por %p317, %p318
      %p321 = scmp.ne.s32.totalorder %s304, %s320
      %p322 = scmp.eq.s32.totalorder %s43, 0
      %p323 = por %p321, %p322
      %s324 = ssub.s32 %s45, %s59
      %p325 = scmp.eq.s32.totalorder %s324, 0
      %s327 = sadd.s32 %s326, 1
      %s328 = scalar_select %p325, %s326, %s327
      %p331 = pneg %p325
      %p332 = scmp.eq.s32.totalorder %s37, 1
      %p333 = por %p331, %p332
      %p334 = scmp.ne.s32.totalorder %s326, %s329
      %p335 = scmp.eq.s32.totalorder %s37, 0
      %p336 = por %p334, %p335
      %p337 = scmp.ne.s32.totalorder %s326, %s329
      %p338 = scmp.eq.s32.totalorder %s42, 1
      %p339 = por %p337, %p338
      %p340 = scmp.ne.s32.totalorder %s329, %s330
      %p341 = scmp.eq.s32.totalorder %s42, 0
      %p342 = por %p340, %p341
      %p343 = scmp.ne.s32.totalorder %s329, %s330
      %p344 = scmp.eq.s32.totalorder %s43, 1
      %p345 = por %p343, %p344
      %p347 = scmp.ne.s32.totalorder %s330, %s346
      %p348 = scmp.eq.s32.totalorder %s43, 0
      %p349 = por %p347, %p348
      %s350 = ssub.s32 %s45, %s59
      %p351 = scmp.eq.s32.totalorder %s350, 0
      %s353 = sadd.s32 %s352, 1
      %s354 = scalar_select %p351, %s352, %s353
      %p357 = pneg %p351
      %p358 = scmp.eq.s32.totalorder %s37, 1
      %p359 = por %p357, %p358
      %p360 = scmp.ne.s32.totalorder %s352, %s355
      %p361 = scmp.eq.s32.totalorder %s37, 0
      %p362 = por %p360, %p361
      %p363 = scmp.ne.s32.totalorder %s352, %s355
      %p364 = scmp.eq.s32.totalorder %s42, 1
      %p365 = por %p363, %p364
      %p366 = scmp.ne.s32.totalorder %s355, %s356
      %p367 = scmp.eq.s32.totalorder %s42, 0
      %p368 = por %p366, %p367
      %p369 = scmp.ne.s32.totalorder %s355, %s356
      %p370 = scmp.eq.s32.totalorder %s43, 1
      %p371 = por %p369, %p370
      %p373 = scmp.ne.s32.totalorder %s356, %s372
      %p374 = scmp.eq.s32.totalorder %s43, 0
      %p375 = por %p373, %p374
      %s376 = ssub.s32 %s45, %s59
      %p377 = scmp.eq.s32.totalorder %s376, 0
      %s379 = sadd.s32 %s378, 1
      %s380 = scalar_select %p377, %s378, %s379
      %p383 = pneg %p377
      %p384 = scmp.eq.s32.totalorder %s37, 1
      %p385 = por %p383, %p384
      %p386 = scmp.ne.s32.totalorder %s378, %s381
      %p387 = scmp.eq.s32.totalorder %s37, 0
      %p388 = por %p386, %p387
      %p389 = scmp.ne.s32.totalorder %s378, %s381
      %p390 = scmp.eq.s32.totalorder %s42, 1
      %p391 = por %p389, %p390
      %p392 = scmp.ne.s32.totalorder %s381, %s382
      %p393 = scmp.eq.s32.totalorder %s42, 0
      %p394 = por %p392, %p393
      %p395 = scmp.ne.s32.totalorder %s381, %s382
      %p396 = scmp.eq.s32.totalorder %s43, 1
      %p397 = por %p395, %p396
      %p399 = scmp.ne.s32.totalorder %s382, %s398
      %p400 = scmp.eq.s32.totalorder %s43, 0
      %p401 = por %p399, %p400
      %s402 = ssub.s32 %s45, %s59
      %s403 = ssub.s32 %s46, %s55
      %s404 = sor.u32 %s402, %s403
      %p405 = scmp.eq.s32.totalorder %s404, 0
      %s407 = sadd.s32 %s406, 1
      %s408 = scalar_select %p405, %s406, %s407
      %p411 = pneg %p405
      %p412 = scmp.eq.s32.totalorder %s37, 1
      %p413 = por %p411, %p412
      %p414 = scmp.ne.s32.totalorder %s406, %s409
      %p415 = scmp.eq.s32.totalorder %s37, 0
      %p416 = por %p414, %p415
      %p417 = scmp.ne.s32.totalorder %s406, %s409
      %p418 = scmp.eq.s32.totalorder %s42, 1
      %p419 = por %p417, %p418
      %p420 = scmp.ne.s32.totalorder %s409, %s410
      %p421 = scmp.eq.s32.totalorder %s42, 0
      %p422 = por %p420, %p421
      %p423 = scmp.ne.s32.totalorder %s409, %s410
      %p424 = scmp.eq.s32.totalorder %s43, 1
      %p425 = por %p423, %p424
      %p427 = scmp.ne.s32.totalorder %s410, %s426
      %p428 = scmp.eq.s32.totalorder %s43, 0
      %p429 = por %p427, %p428
      %s430 = ssub.s32 %s45, %s59
      %s431 = ssub.s32 %s46, %s55
      %s432 = sor.u32 %s430, %s431
      %p433 = scmp.eq.s32.totalorder %s432, 0
      %s435 = sadd.s32 %s434, 1
      %s436 = scalar_select %p433, %s434, %s435
      %p439 = pneg %p433
      %p440 = scmp.eq.s32.totalorder %s37, 1
      %p441 = por %p439, %p440
      %p442 = scmp.ne.s32.totalorder %s434, %s437
      %p443 = scmp.eq.s32.totalorder %s37, 0
      %p444 = por %p442, %p443
      %p445 = scmp.ne.s32.totalorder %s434, %s437
      %p446 = scmp.eq.s32.totalorder %s42, 1
      %p447 = por %p445, %p446
      %p448 = scmp.ne.s32.totalorder %s437, %s438
      %p449 = scmp.eq.s32.totalorder %s42, 0
      %p450 = por %p448, %p449
      %p451 = scmp.ne.s32.totalorder %s437, %s438
      %p452 = scmp.eq.s32.totalorder %s43, 1
      %p453 = por %p451, %p452
      %p455 = scmp.ne.s32.totalorder %s438, %s454
      %p456 = scmp.eq.s32.totalorder %s43, 0
      %p457 = por %p455, %p456
      %s458 = ssub.s32 %s45, %s59
      %s459 = ssub.s32 %s46, %s55
      %s460 = sor.u32 %s458, %s459
      %p461 = scmp.eq.s32.totalorder %s460, 0
      %s463 = sadd.s32 %s462, 1
      %s464 = scalar_select %p461, %s462, %s463
      %p467 = pneg %p461
      %p468 = scmp.eq.s32.totalorder %s37, 1
      %p469 = por %p467, %p468
      %p470 = scmp.ne.s32.totalorder %s462, %s465
      %p471 = scmp.eq.s32.totalorder %s37, 0
      %p472 = por %p470, %p471
      %p473 = scmp.ne.s32.totalorder %s462, %s465
      %p474 = scmp.eq.s32.totalorder %s42, 1
      %p475 = por %p473, %p474
      %p476 = scmp.ne.s32.totalorder %s465, %s466
      %p477 = scmp.eq.s32.totalorder %s42, 0
      %p478 = por %p476, %p477
      %p479 = scmp.ne.s32.totalorder %s465, %s466
      %p480 = scmp.eq.s32.totalorder %s43, 1
      %p481 = por %p479, %p480
      %p483 = scmp.ne.s32.totalorder %s466, %s482
      %p484 = scmp.eq.s32.totalorder %s43, 0
      %p485 = por %p483, %p484
      %s486 = ssub.s32 %s45, %s59
      %p487 = scmp.eq.s32.totalorder %s486, 0
      %s489 = sadd.s32 %s488, 1
      %s490 = scalar_select %p487, %s488, %s489
      %p493 = pneg %p487
      %p494 = scmp.eq.s32.totalorder %s37, 1
      %p495 = por %p493, %p494
      %p496 = scmp.ne.s32.totalorder %s488, %s491
      %p497 = scmp.eq.s32.totalorder %s37, 0
      %p498 = por %p496, %p497
      %p499 = scmp.ne.s32.totalorder %s488, %s491
      %p500 = scmp.eq.s32.totalorder %s42, 1
      %p501 = por %p499, %p500
      %p502 = scmp.ne.s32.totalorder %s491, %s492
      %p503 = scmp.eq.s32.totalorder %s42, 0
      %p504 = por %p502, %p503
      %p505 = scmp.ne.s32.totalorder %s491, %s492
      %p506 = scmp.eq.s32.totalorder %s43, 1
      %p507 = por %p505, %p506
      %p509 = scmp.ne.s32.totalorder %s492, %s508
      %p510 = scmp.eq.s32.totalorder %s43, 0
      %p511 = por %p509, %p510
      %s512 = ssub.s32 %s44, %s63
      %p513 = scmp.eq.s32.totalorder %s512, 0
      %s515 = sadd.s32 %s514, 1
      %s516 = scalar_select %p513, %s514, %s515
      %p519 = pneg %p513
      %p520 = scmp.eq.s32.totalorder %s37, 1
      %p521 = por %p519, %p520
      %p522 = scmp.ne.s32.totalorder %s514, %s517
      %p523 = scmp.eq.s32.totalorder %s37, 0
      %p524 = por %p522, %p523
      %p525 = scmp.ne.s32.totalorder %s514, %s517
      %p526 = scmp.eq.s32.totalorder %s42, 1
      %p527 = por %p525, %p526
      %p528 = scmp.ne.s32.totalorder %s517, %s518
      %p529 = scmp.eq.s32.totalorder %s42, 0
      %p530 = por %p528, %p529
      %p531 = scmp.ne.s32.totalorder %s517, %s518
      %p532 = scmp.eq.s32.totalorder %s43, 1
      %p533 = por %p531, %p532
      %p535 = scmp.ne.s32.totalorder %s518, %s534
      %p536 = scmp.eq.s32.totalorder %s43, 0
      %p537 = por %p535, %p536
      %p538 = scmp.le.s32.totalorder 1, %s37
      %p539 = scmp.lt.s32.totalorder %s37, 3
      %p540 = pnand %p538, %p539
      %p541 = pneg %p540
      // Predicated region
      $region9: #{tpu_custom_call.1} parent=5 // pred_check
        _
      $region10: #{tpu_custom_call.1} parent=5 // pred_check_branch
        %543 = sbr.rel (%p540) target = $region12
      $region11: #{tpu_custom_call.1} parent=5 // pred_region
        %s544 = ssub.s32 %s37, 1
        // Predicated region
        $region13: #{tpu_custom_call.1} parent=11 // pred_check
          %p545 = pneg %p82
        $region14: #{tpu_custom_call.1} parent=11 // pred_check_branch
          %547 = sbr.rel (%p545) target = $region16
        $region15: #{tpu_custom_call.1} parent=11 // pred_region
          %s548 = smul.u32 2, %s47
          %s550 = ssub.s32 2048, 2048
          %551 = vsyncadd [#allocation8], %s550
          %s552 = smul.addr %s548, 8
          %s553 = smul.addr %s552, 128
          %s554 = scalar_lea.hbm %s0, %s553
          %s555 = sshll.u32 [#allocation7], 4
          %s556 = int_to_ptr.vmem [resolvable:$true] %s555
          %561 = dma.hbm_to_vmem [thread:$0]  %s554, 2048, %s556, [#allocation8], 128, 128, 8
        $region16: #{tpu_custom_call.1} parent=11 // pred_fallthru
          _
      $region12: #{tpu_custom_call.1} parent=5 // pred_fallthru
        _
      %p562 = scmp.lt.s32.totalorder %s37, 2
      // Predicated region
      $region17: #{tpu_custom_call.1} parent=5 // pred_check
        %p563 = pneg %p562
      $region18: #{tpu_custom_call.1} parent=5 // pred_check_branch
        %565 = sbr.rel (%p563) target = $region20
      $region19: #{tpu_custom_call.1} parent=5 // pred_region
        // Predicated region
        $region21: #{tpu_custom_call.1} parent=19 // pred_check
          %p566 = pneg %p102
        $region22: #{tpu_custom_call.1} parent=19 // pred_check_branch
          %568 = sbr.rel (%p566) target = $region24
        $region23: #{tpu_custom_call.1} parent=19 // pred_region
          %p569 = scmp.lt.s32.totalorder %s45, 1
          %s570 = scalar_select %p569, %s45, 1
          %s571 = scalar_lea.vmem %s1, %s570
        $region24: #{tpu_custom_call.1} parent=19 // pred_fallthru
          _
        // Predicated region
        $region25: #{tpu_custom_call.1} parent=19 // pred_check
          %p572 = pneg %p128
        $region26: #{tpu_custom_call.1} parent=19 // pred_check_branch
          %574 = sbr.rel (%p572) target = $region28
        $region27: #{tpu_custom_call.1} parent=19 // pred_region
          %s575 = sand.u32 %s37, 1
          %s576 = scalar_lea.sflag [#allocation11], %s575
          %s577 = sand.u32 %s118, 1
          %s578 = scalar_lea.vmem [#allocation10], %s577
          %s580 = ssub.s32 16, 16
          %581 = vsyncadd %s576, %s580
          %s582 = smul.addr %s45, 16
          %s583 = scalar_lea.hbm %s2, %s582
          %s585 = sshll.u32 %s578, 4
          %s586 = int_to_ptr.vmem [resolvable:$true] %s585
          %588 = dma.hbm_to_vmem [thread:$0]  %s583, 16, %s586, %s576
        $region28: #{tpu_custom_call.1} parent=19 // pred_fallthru
          _
        // Predicated region
        $region29: #{tpu_custom_call.1} parent=19 // pred_check
          %p589 = pneg %p154
        $region30: #{tpu_custom_call.1} parent=19 // pred_check_branch
          %591 = sbr.rel (%p589) target = $region32
        $region31: #{tpu_custom_call.1} parent=19 // pred_region
          %s592 = sand.u32 %s37, 1
          %s593 = scalar_lea.sflag [#allocation11], %s592
          %s594 = sand.u32 %s144, 1
          %s595 = smul.addr %s594, 64
          %s596 = scalar_lea.vmem [#allocation12], %s595
          %s598 = ssub.s32 1024, 1024
          %599 = vsyncadd %s593, %s598
          %s600 = smul.addr %s45, 16
          %s601 = smul.addr %s600, 64
          %s602 = scalar_lea.hbm %s3, %s601
          %s603 = sshll.u32 %s596, 4
          %s604 = int_to_ptr.vmem [resolvable:$true] %s603
          %609 = dma.hbm_to_vmem [thread:$0]  %s602, 1024, %s604, %s593, 64, 64, 4
        $region32: #{tpu_custom_call.1} parent=19 // pred_fallthru
          _
        // Predicated region
        $region33: #{tpu_custom_call.1} parent=19 // pred_check
          %p610 = pneg %p180
        $region34: #{tpu_custom_call.1} parent=19 // pred_check_branch
          %612 = sbr.rel (%p610) target = $region36
        $region35: #{tpu_custom_call.1} parent=19 // pred_region
          %p613 = scmp.lt.s32.totalorder %s45, 1
          %s614 = scalar_select %p613, %s45, 1
          %s615 = scalar_lea.vmem %s4, %s614
        $region36: #{tpu_custom_call.1} parent=19 // pred_fallthru
          _
        // Predicated region
        $region37: #{tpu_custom_call.1} parent=19 // pred_check
          %p616 = pneg %p206
        $region38: #{tpu_custom_call.1} parent=19 // pred_check_branch
          %618 = sbr.rel (%p616) target = $region40
        $region39: #{tpu_custom_call.1} parent=19 // pred_region
          %s619 = sand.u32 %s37, 1
          %s620 = scalar_lea.sflag [#allocation14], %s619
          %s621 = sand.u32 %s196, 1
          %s622 = smul.addr %s621, 64
          %s623 = scalar_lea.vmem [#allocation13], %s622
          %s625 = ssub.s32 1024, 1024
          %626 = vsyncadd %s620, %s625
          %s627 = smul.addr %s45, 16
          %s628 = smul.addr %s627, 64
          %s629 = scalar_lea.hbm %s5, %s628
          %s630 = sshll.u32 %s623, 4
          %s631 = int_to_ptr.vmem [resolvable:$true] %s630
          %636 = dma.hbm_to_vmem [thread:$0]  %s629, 1024, %s631, %s620, 64, 64, 4
        $region40: #{tpu_custom_call.1} parent=19 // pred_fallthru
          _
        // Predicated region
        $region41: #{tpu_custom_call.1} parent=19 // pred_check
          %p637 = pneg %p232
        $region42: #{tpu_custom_call.1} parent=19 // pred_check_branch
          %639 = sbr.rel (%p637) target = $region44
        $region43: #{tpu_custom_call.1} parent=19 // pred_region
          %p640 = scmp.lt.s32.totalorder %s45, 1
          %s641 = scalar_select %p640, %s45, 1
          %s642 = scalar_lea.vmem %s6, %s641
        $region44: #{tpu_custom_call.1} parent=19 // pred_fallthru
          _
        // Predicated region
        $region45: #{tpu_custom_call.1} parent=19 // pred_check
          %p643 = pneg %p258
        $region46: #{tpu_custom_call.1} parent=19 // pred_check_branch
          %645 = sbr.rel (%p643) target = $region48
        $region47: #{tpu_custom_call.1} parent=19 // pred_region
          %s646 = sand.u32 %s37, 1
          %s647 = scalar_lea.sflag [#allocation14], %s646
          %s648 = sand.u32 %s248, 1
          %s649 = smul.addr %s648, 64
          %s650 = scalar_lea.vmem [#allocation15], %s649
          %s652 = ssub.s32 1024, 1024
          %653 = vsyncadd %s647, %s652
          %s654 = smul.addr %s45, 16
          %s655 = smul.addr %s654, 64
          %s656 = scalar_lea.hbm %s7, %s655
          %s657 = sshll.u32 %s650, 4
          %s658 = int_to_ptr.vmem [resolvable:$true] %s657
          %663 = dma.hbm_to_vmem [thread:$0]  %s656, 1024, %s658, %s647, 64, 64, 4
        $region48: #{tpu_custom_call.1} parent=19 // pred_fallthru
          _
        // Predicated region
        $region49: #{tpu_custom_call.1} parent=19 // pred_check
          %p664 = pneg %p284
        $region50: #{tpu_custom_call.1} parent=19 // pred_check_branch
          %666 = sbr.rel (%p664) target = $region52
        $region51: #{tpu_custom_call.1} parent=19 // pred_region
          %p667 = scmp.lt.s32.totalorder %s45, 1
          %s668 = scalar_select %p667, %s45, 1
          %s669 = scalar_lea.vmem %s8, %s668
        $region52: #{tpu_custom_call.1} parent=19 // pred_fallthru
          _
        // Predicated region
        $region53: #{tpu_custom_call.1} parent=19 // pred_check
          %p670 = pneg %p310
        $region54: #{tpu_custom_call.1} parent=19 // pred_check_branch
          %672 = sbr.rel (%p670) target = $region56
        $region55: #{tpu_custom_call.1} parent=19 // pred_region
          %s673 = sand.u32 %s37, 1
          %s674 = scalar_lea.sflag [#allocation17], %s673
          %s675 = sand.u32 %s300, 1
          %s676 = smul.addr %s675, 64
          %s677 = scalar_lea.vmem [#allocation16], %s676
          %s679 = ssub.s32 1024, 1024
          %680 = vsyncadd %s674, %s679
          %s681 = smul.addr %s45, 16
          %s682 = smul.addr %s681, 64
          %s683 = scalar_lea.hbm %s9, %s682
          %s684 = sshll.u32 %s677, 4
          %s685 = int_to_ptr.vmem [resolvable:$true] %s684
          %690 = dma.hbm_to_vmem [thread:$0]  %s683, 1024, %s685, %s674, 64, 64, 4
        $region56: #{tpu_custom_call.1} parent=19 // pred_fallthru
          _
        // Predicated region
        $region57: #{tpu_custom_call.1} parent=19 // pred_check
          %p691 = pneg %p336
        $region58: #{tpu_custom_call.1} parent=19 // pred_check_branch
          %693 = sbr.rel (%p691) target = $region60
        $region59: #{tpu_custom_call.1} parent=19 // pred_region
          %p694 = scmp.lt.s32.totalorder %s45, 1
          %s695 = scalar_select %p694, %s45, 1
          %s696 = scalar_lea.vmem %s10, %s695
        $region60: #{tpu_custom_call.1} parent=19 // pred_fallthru
          _
        // Predicated region
        $region61: #{tpu_custom_call.1} parent=19 // pred_check
          %p697 = pneg %p362
        $region62: #{tpu_custom_call.1} parent=19 // pred_check_branch
          %699 = sbr.rel (%p697) target = $region64
        $region63: #{tpu_custom_call.1} parent=19 // pred_region
          %p700 = scmp.lt.s32.totalorder %s45, 1
          %s701 = scalar_select %p700, %s45, 1
          %s702 = scalar_lea.vmem %s11, %s701
        $region64: #{tpu_custom_call.1} parent=19 // pred_fallthru
          _
        // Predicated region
        $region65: #{tpu_custom_call.1} parent=19 // pred_check
          %p703 = pneg %p388
        $region66: #{tpu_custom_call.1} parent=19 // pred_check_branch
          %705 = sbr.rel (%p703) target = $region68
        $region67: #{tpu_custom_call.1} parent=19 // pred_region
          %p706 = scmp.lt.s32.totalorder %s45, 1
          %s707 = scalar_select %p706, %s45, 1
          %s708 = scalar_lea.vmem %s12, %s707
        $region68: #{tpu_custom_call.1} parent=19 // pred_fallthru
          _
        // Predicated region
        $region69: #{tpu_custom_call.1} parent=19 // pred_check
          %p709 = pneg %p416
        $region70: #{tpu_custom_call.1} parent=19 // pred_check_branch
          %711 = sbr.rel (%p709) target = $region72
        $region71: #{tpu_custom_call.1} parent=19 // pred_region
          %s712 = sand.u32 %s37, 1
          %s713 = scalar_lea.sflag [#allocation17], %s712
          %s714 = sand.u32 %s406, 1
          %s715 = smul.addr %s714, 128
          %s716 = scalar_lea.vmem [#allocation18], %s715
          %s717 = smul.u32 2, %s46
          %s719 = ssub.s32 2048, 2048
          %720 = vsyncadd %s713, %s719
          %s721 = smul.addr %s45, 32
          %s722 = sadd.s32 %s717, %s721
          %s723 = smul.addr %s722, 64
          %s724 = scalar_lea.hbm %s13, %s723
          %s725 = sshll.u32 %s716, 4
          %s726 = int_to_ptr.vmem [resolvable:$true] %s725
          %731 = dma.hbm_to_vmem [thread:$0]  %s724, 2048, %s726, %s713, 128, 128, 8
        $region72: #{tpu_custom_call.1} parent=19 // pred_fallthru
          _
        // Predicated region
        $region73: #{tpu_custom_call.1} parent=19 // pred_check
          %p732 = pneg %p444
        $region74: #{tpu_custom_call.1} parent=19 // pred_check_branch
          %734 = sbr.rel (%p732) target = $region76
        $region75: #{tpu_custom_call.1} parent=19 // pred_region
          %s735 = smul.u32 2, %s46
          %p736 = scmp.lt.s32.totalorder %s45, 1
          %s737 = scalar_select %p736, %s45, 1
          %p738 = scmp.lt.s32.totalorder %s735, 1
          %s739 = scalar_select %p738, %s735, 1
          %s740 = smul.addr %s737, 2
          %s741 = sadd.s32 %s739, %s740
          %s742 = scalar_lea.vmem %s14, %s741
          %s743 = smul.u32 2, %s46
        $region76: #{tpu_custom_call.1} parent=19 // pred_fallthru
          _
        // Predicated region
        $region77: #{tpu_custom_call.1} parent=19 // pred_check
          %p744 = pneg %p472
        $region78: #{tpu_custom_call.1} parent=19 // pred_check_branch
          %746 = sbr.rel (%p744) target = $region80
        $region79: #{tpu_custom_call.1} parent=19 // pred_region
          %s747 = sand.u32 %s462, 1
          %s748 = scalar_lea.sflag [#allocation20], %s747
          %s749 = sand.u32 %s462, 1
          %s750 = smul.addr %s749, 128
          %s751 = scalar_lea.vmem [#allocation19], %s750
          %s752 = smul.u32 32, %s46
          %s754 = ssub.s32 2048, 2048
          %755 = vsyncadd %s748, %s754
          %s756 = smul.addr %s45, 32
          %s757 = sadd.s32 %s752, %s756
          %s758 = smul.addr %s757, 64
          %s759 = scalar_lea.hbm %s15, %s758
          %s760 = sshll.u32 %s751, 4
          %s761 = int_to_ptr.vmem [resolvable:$true] %s760
          %766 = dma.hbm_to_vmem [thread:$0]  %s759, 2048, %s761, %s748, 64, 64, 4
        $region80: #{tpu_custom_call.1} parent=19 // pred_fallthru
          _
        // Predicated region
        $region81: #{tpu_custom_call.1} parent=19 // pred_check
          %p767 = pneg %p498
        $region82: #{tpu_custom_call.1} parent=19 // pred_check_branch
          %769 = sbr.rel (%p767) target = $region84
        $region83: #{tpu_custom_call.1} parent=19 // pred_region
          %p770 = scmp.lt.s32.totalorder %s45, 1
          %s771 = scalar_select %p770, %s45, 1
          %s772 = scalar_lea.vmem %s16, %s771
        $region84: #{tpu_custom_call.1} parent=19 // pred_fallthru
          _
      $region20: #{tpu_custom_call.1} parent=5 // pred_fallthru
        _
      %p773 = scmp.le.s32.totalorder 1, %s37
      %p774 = scmp.lt.s32.totalorder %s37, 3
      %p775 = pnand %p773, %p774
      %p776 = pneg %p775
      // Predicated region
      $region85: #{tpu_custom_call.1} parent=5 // pred_check
        _
      $region86: #{tpu_custom_call.1} parent=5 // pred_check_branch
        %778 = sbr.rel (%p775) target = $region88
      $region87: #{tpu_custom_call.1} parent=5 // pred_region
        %s779 = ssub.s32 %s37, 1
        // Predicated region
        $region89: #{tpu_custom_call.1} parent=87 // pred_check
          %p780 = pneg %p82
        $region90: #{tpu_custom_call.1} parent=87 // pred_check_branch
          %782 = sbr.rel (%p780) target = $region92
        $region91: #{tpu_custom_call.1} parent=87 // pred_region
          %783 = dma.done [#allocation8], 2048
        $region92: #{tpu_custom_call.1} parent=87 // pred_fallthru
          _
        %s784 = sand.u32 %s42, 1
        %s785 = scalar_lea.sflag [#allocation11], %s784
        %s786 = sand.u32 %s121, 1
        %s787 = scalar_lea.vmem [#allocation10], %s786
        // Predicated region
        $region93: #{tpu_custom_call.1} parent=87 // pred_check
          %p788 = pneg %p134
        $region94: #{tpu_custom_call.1} parent=87 // pred_check_branch
          %790 = sbr.rel (%p788) target = $region96
        $region95: #{tpu_custom_call.1} parent=87 // pred_region
          %791 = dma.done %s785, 16
        $region96: #{tpu_custom_call.1} parent=87 // pred_fallthru
          _
        %s792 = sand.u32 %s42, 1
        %s793 = scalar_lea.sflag [#allocation11], %s792
        %s794 = sand.u32 %s147, 1
        %s795 = smul.addr %s794, 64
        %s796 = scalar_lea.vmem [#allocation12], %s795
        // Predicated region
        $region97: #{tpu_custom_call.1} parent=87 // pred_check
          %p797 = pneg %p160
        $region98: #{tpu_custom_call.1} parent=87 // pred_check_branch
          %799 = sbr.rel (%p797) target = $region100
        $region99: #{tpu_custom_call.1} parent=87 // pred_region
          %800 = dma.done %s793, 1024
        $region100: #{tpu_custom_call.1} parent=87 // pred_fallthru
          _
        %s801 = sand.u32 %s42, 1
        %s802 = scalar_lea.sflag [#allocation14], %s801
        %s803 = sand.u32 %s199, 1
        %s804 = smul.addr %s803, 64
        %s805 = scalar_lea.vmem [#allocation13], %s804
        // Predicated region
        $region101: #{tpu_custom_call.1} parent=87 // pred_check
          %p806 = pneg %p212
        $region102: #{tpu_custom_call.1} parent=87 // pred_check_branch
          %808 = sbr.rel (%p806) target = $region104
        $region103: #{tpu_custom_call.1} parent=87 // pred_region
          %809 = dma.done %s802, 1024
        $region104: #{tpu_custom_call.1} parent=87 // pred_fallthru
          _
        %s810 = sand.u32 %s42, 1
        %s811 = scalar_lea.sflag [#allocation14], %s810
        %s812 = sand.u32 %s251, 1
        %s813 = smul.addr %s812, 64
        %s814 = scalar_lea.vmem [#allocation15], %s813
        // Predicated region
        $region105: #{tpu_custom_call.1} parent=87 // pred_check
          %p815 = pneg %p264
        $region106: #{tpu_custom_call.1} parent=87 // pred_check_branch
          %817 = sbr.rel (%p815) target = $region108
        $region107: #{tpu_custom_call.1} parent=87 // pred_region
          %818 = dma.done %s811, 1024
        $region108: #{tpu_custom_call.1} parent=87 // pred_fallthru
          _
        %s819 = sand.u32 %s42, 1
        %s820 = scalar_lea.sflag [#allocation17], %s819
        %s821 = sand.u32 %s303, 1
        %s822 = smul.addr %s821, 64
        %s823 = scalar_lea.vmem [#allocation16], %s822
        // Predicated region
        $region109: #{tpu_custom_call.1} parent=87 // pred_check
          %p824 = pneg %p316
        $region110: #{tpu_custom_call.1} parent=87 // pred_check_branch
          %826 = sbr.rel (%p824) target = $region112
        $region111: #{tpu_custom_call.1} parent=87 // pred_region
          %827 = dma.done %s820, 1024
        $region112: #{tpu_custom_call.1} parent=87 // pred_fallthru
          _
        %s828 = sand.u32 %s42, 1
        %s829 = scalar_lea.sflag [#allocation17], %s828
        %s830 = sand.u32 %s409, 1
        %s831 = smul.addr %s830, 128
        %s832 = scalar_lea.vmem [#allocation18], %s831
        // Predicated region
        $region113: #{tpu_custom_call.1} parent=87 // pred_check
          %p833 = pneg %p422
        $region114: #{tpu_custom_call.1} parent=87 // pred_check_branch
          %835 = sbr.rel (%p833) target = $region116
        $region115: #{tpu_custom_call.1} parent=87 // pred_region
          %836 = dma.done %s829, 2048
        $region116: #{tpu_custom_call.1} parent=87 // pred_fallthru
          _
        %s837 = sand.u32 %s465, 1
        %s838 = scalar_lea.sflag [#allocation20], %s837
        %s839 = sand.u32 %s465, 1
        %s840 = smul.addr %s839, 128
        %s841 = scalar_lea.vmem [#allocation19], %s840
        // Predicated region
        $region117: #{tpu_custom_call.1} parent=87 // pred_check
          %p842 = pneg %p478
        $region118: #{tpu_custom_call.1} parent=87 // pred_check_branch
          %844 = sbr.rel (%p842) target = $region120
        $region119: #{tpu_custom_call.1} parent=87 // pred_region
          %845 = dma.done %s838, 2048
        $region120: #{tpu_custom_call.1} parent=87 // pred_fallthru
          _
        %p846 = pneg %p82
        %p847 = pneg %p79
        %p848 = scmp.lt.s32.totalorder %s48, 1
        %s849 = scalar_select %p848, %s48, 1
        %s850 = scalar_lea.vmem %s1, %s849
        %p851 = pneg %p108
        %p852 = pneg %p105
        %s853 = sand.u32 %s42, 1
        %s854 = scalar_lea.sflag [#allocation11], %s853
        %s855 = sand.u32 %s121, 1
        %s856 = scalar_lea.vmem [#allocation10], %s855
        %p857 = pneg %p134
        %p858 = pneg %p131
        %s859 = sand.u32 %s42, 1
        %s860 = scalar_lea.sflag [#allocation11], %s859
        %s861 = sand.u32 %s147, 1
        %s862 = smul.addr %s861, 64
        %s863 = scalar_lea.vmem [#allocation12], %s862
        %p864 = pneg %p160
        %p865 = pneg %p157
        %p866 = scmp.lt.s32.totalorder %s48, 1
        %s867 = scalar_select %p866, %s48, 1
        %s868 = scalar_lea.vmem %s4, %s867
        %p869 = pneg %p186
        %p870 = pneg %p183
        %s871 = sand.u32 %s42, 1
        %s872 = scalar_lea.sflag [#allocation14], %s871
        %s873 = sand.u32 %s199, 1
        %s874 = smul.addr %s873, 64
        %s875 = scalar_lea.vmem [#allocation13], %s874
        %p876 = pneg %p212
        %p877 = pneg %p209
        %p878 = scmp.lt.s32.totalorder %s48, 1
        %s879 = scalar_select %p878, %s48, 1
        %s880 = scalar_lea.vmem %s6, %s879
        %p881 = pneg %p238
        %p882 = pneg %p235
        %s883 = sand.u32 %s42, 1
        %s884 = scalar_lea.sflag [#allocation14], %s883
        %s885 = sand.u32 %s251, 1
        %s886 = smul.addr %s885, 64
        %s887 = scalar_lea.vmem [#allocation15], %s886
        %p888 = pneg %p264
        %p889 = pneg %p261
        %p890 = scmp.lt.s32.totalorder %s48, 1
        %s891 = scalar_select %p890, %s48, 1
        %s892 = scalar_lea.vmem %s8, %s891
        %p893 = pneg %p290
        %p894 = pneg %p287
        %s895 = sand.u32 %s42, 1
        %s896 = scalar_lea.sflag [#allocation17], %s895
        %s897 = sand.u32 %s303, 1
        %s898 = smul.addr %s897, 64
        %s899 = scalar_lea.vmem [#allocation16], %s898
        %p900 = pneg %p316
        %p901 = pneg %p313
        %p902 = scmp.lt.s32.totalorder %s48, 1
        %s903 = scalar_select %p902, %s48, 1
        %s904 = scalar_lea.vmem %s10, %s903
        %p905 = pneg %p342
        %p906 = pneg %p339
        %p907 = scmp.lt.s32.totalorder %s48, 1
        %s908 = scalar_select %p907, %s48, 1
        %s909 = scalar_lea.vmem %s11, %s908
        %p910 = pneg %p368
        %p911 = pneg %p365
        %p912 = scmp.lt.s32.totalorder %s48, 1
        %s913 = scalar_select %p912, %s48, 1
        %s914 = scalar_lea.vmem %s12, %s913
        %p915 = pneg %p394
        %p916 = pneg %p391
        %s917 = sand.u32 %s42, 1
        %s918 = scalar_lea.sflag [#allocation17], %s917
        %s919 = sand.u32 %s409, 1
        %s920 = smul.addr %s919, 128
        %s921 = scalar_lea.vmem [#allocation18], %s920
        %p922 = pneg %p422
        %p923 = pneg %p419
        %s924 = smul.u32 2, %s49
        %p925 = scmp.lt.s32.totalorder %s48, 1
        %s926 = scalar_select %p925, %s48, 1
        %p927 = scmp.lt.s32.totalorder %s924, 1
        %s928 = scalar_select %p927, %s924, 1
        %s929 = smul.addr %s926, 2
        %s930 = sadd.s32 %s928, %s929
        %s931 = scalar_lea.vmem %s14, %s930
        %p932 = pneg %p450
        %p933 = pneg %p447
        %s934 = sand.u32 %s465, 1
        %s935 = scalar_lea.sflag [#allocation20], %s934
        %s936 = sand.u32 %s465, 1
        %s937 = smul.addr %s936, 128
        %s938 = scalar_lea.vmem [#allocation19], %s937
        %p939 = pneg %p478
        %p940 = pneg %p475
        %p941 = scmp.lt.s32.totalorder %s48, 1
        %s942 = scalar_select %p941, %s48, 1
        %s943 = scalar_lea.vmem %s16, %s942
        %p944 = pneg %p504
        %p945 = pneg %p501
        %p946 = pneg %p530
        %p947 = pneg %p527
        %s948 = smul.u32 2, %s47
        %p949 = scmp.lt.s32.totalorder %s48, 1
        %s950 = scalar_select %p949, %s48, 1
        %s951 = scalar_lea.vmem %s1, %s950
        %p952 = scmp.lt.s32.totalorder %s48, 1
        %s953 = scalar_select %p952, %s48, 1
        %s954 = scalar_lea.vmem %s4, %s953
        %p955 = scmp.lt.s32.totalorder %s48, 1
        %s956 = scalar_select %p955, %s48, 1
        %s957 = scalar_lea.vmem %s6, %s956
        %p958 = scmp.lt.s32.totalorder %s48, 1
        %s959 = scalar_select %p958, %s48, 1
        %s960 = scalar_lea.vmem %s8, %s959
        %p961 = scmp.lt.s32.totalorder %s48, 1
        %s962 = scalar_select %p961, %s48, 1
        %s963 = scalar_lea.vmem %s10, %s962
        %p964 = scmp.lt.s32.totalorder %s48, 1
        %s965 = scalar_select %p964, %s48, 1
        %s966 = scalar_lea.vmem %s11, %s965
        %p967 = scmp.lt.s32.totalorder %s48, 1
        %s968 = scalar_select %p967, %s48, 1
        %s969 = scalar_lea.vmem %s12, %s968
        %s970 = smul.u32 2, %s49
        %s971 = smul.u32 2, %s49
        %p972 = scmp.lt.s32.totalorder %s48, 1
        %s973 = scalar_select %p972, %s48, 1
        %p974 = scmp.lt.s32.totalorder %s971, 1
        %s975 = scalar_select %p974, %s971, 1
        %s976 = smul.addr %s973, 2
        %s977 = sadd.s32 %s975, %s976
        %s978 = scalar_lea.vmem %s14, %s977
        %s979 = smul.u32 2, %s49
        %s980 = smul.u32 32, %s49
        %p981 = scmp.lt.s32.totalorder %s48, 1
        %s982 = scalar_select %p981, %s48, 1
        %s983 = scalar_lea.vmem %s16, %s982
        %s984 = smul.u32 2, %s47
        %p986 = scmp.eq.s32.totalorder %s48, 0
        %p987 = scmp.eq.s32.totalorder %s49, 0
        %p988 = pnand %p986, %p987
        %p989 = pneg %p988
        // Predicated region
        $region121: #{tpu_custom_call.1} parent=87 // pred_check
          _
        $region122: #{tpu_custom_call.1} parent=87 // pred_check_branch
          %991 = sbr.rel (%p988) target = $region124
        $region123: #{tpu_custom_call.1} parent=87 // pred_region
          %v992 = vld [vmem:[#allocation7] sm:$0xff]
          %v993 = vld [vmem:[#allocation7 + $0x8] sm:$0xff]
          %v994 = vld [vmem:[#allocation7 + $0x10] sm:$0xff]
          %v995 = vld [vmem:[#allocation7 + $0x18] sm:$0xff]
          %v996 = vld [vmem:[#allocation7 + $0x20] sm:$0xff]
          %v997 = vld [vmem:[#allocation7 + $0x28] sm:$0xff]
          %v998 = vld [vmem:[#allocation7 + $0x30] sm:$0xff]
          %v999 = vld [vmem:[#allocation7 + $0x38] sm:$0xff]
          %v1000 = vld [vmem:[#allocation7 + $0x40] sm:$0xff]
          %v1001 = vld [vmem:[#allocation7 + $0x48] sm:$0xff]
          %v1002 = vld [vmem:[#allocation7 + $0x50] sm:$0xff]
          %v1003 = vld [vmem:[#allocation7 + $0x58] sm:$0xff]
          %v1004 = vld [vmem:[#allocation7 + $0x60] sm:$0xff]
          %v1005 = vld [vmem:[#allocation7 + $0x68] sm:$0xff]
          %v1006 = vld [vmem:[#allocation7 + $0x70] sm:$0xff]
          %v1007 = vld [vmem:[#allocation7 + $0x78] sm:$0xff]
          %1008 = vst [vmem:[#allocation21] sm:$0xff] %v992
          %1009 = vst [vmem:[#allocation21 + $0x8] sm:$0xff] %v993
          %1010 = vst [vmem:[#allocation21 + $0x10] sm:$0xff] %v994
          %1011 = vst [vmem:[#allocation21 + $0x18] sm:$0xff] %v995
          %1012 = vst [vmem:[#allocation21 + $0x20] sm:$0xff] %v996
          %1013 = vst [vmem:[#allocation21 + $0x28] sm:$0xff] %v997
          %1014 = vst [vmem:[#allocation21 + $0x30] sm:$0xff] %v998
          %1015 = vst [vmem:[#allocation21 + $0x38] sm:$0xff] %v999
          %1016 = vst [vmem:[#allocation21 + $0x40] sm:$0xff] %v1000
          %1017 = vst [vmem:[#allocation21 + $0x48] sm:$0xff] %v1001
          %1018 = vst [vmem:[#allocation21 + $0x50] sm:$0xff] %v1002
          %1019 = vst [vmem:[#allocation21 + $0x58] sm:$0xff] %v1003
          %1020 = vst [vmem:[#allocation21 + $0x60] sm:$0xff] %v1004
          %1021 = vst [vmem:[#allocation21 + $0x68] sm:$0xff] %v1005
          %1022 = vst [vmem:[#allocation21 + $0x70] sm:$0xff] %v1006
          %1023 = vst [vmem:[#allocation21 + $0x78] sm:$0xff] %v1007
        $region124: #{tpu_custom_call.1} parent=87 // pred_fallthru
          _
        // Predicated region
        $region125: #{tpu_custom_call.1} parent=87 // pred_check
          %p1024 = pneg %p987
        $region126: #{tpu_custom_call.1} parent=87 // pred_check_branch
          %1026 = sbr.rel (%p1024) target = $region128
        $region127: #{tpu_custom_call.1} parent=87 // pred_region
          %v1027 = vld [vmem:[#allocation21] sm:$0xff]
          %v1028 = vld [vmem:[#allocation21 + $0x8] sm:$0xff]
          %v1029 = vld [vmem:[#allocation21 + $0x10] sm:$0xff]
          %v1030 = vld [vmem:[#allocation21 + $0x18] sm:$0xff]
          %v1031 = vld [vmem:[#allocation21 + $0x20] sm:$0xff]
          %v1032 = vld [vmem:[#allocation21 + $0x28] sm:$0xff]
          %v1033 = vld [vmem:[#allocation21 + $0x30] sm:$0xff]
          %v1034 = vld [vmem:[#allocation21 + $0x38] sm:$0xff]
          %v1035 = vld [vmem:[%s951] sm:$0x1]
          %v1036 = vld [vmem:[%s787] sm:$0x1]
          %1037 = vadd.xlane.f32.xlu0 %v1027
          %v1038 = vpop.xlane.xlu0 %1037
          %1039 = vadd.xlane.f32.xlu0 %v1028
          %v1040 = vpop.xlane.xlu0 %1039
          %1041 = vadd.xlane.f32.xlu0 %v1029
          %v1042 = vpop.xlane.xlu0 %1041
          %1043 = vadd.xlane.f32.xlu0 %v1030
          %v1044 = vpop.xlane.xlu0 %1043
          %1045 = vadd.xlane.f32.xlu0 %v1031
          %v1046 = vpop.xlane.xlu0 %1045
          %1047 = vadd.xlane.f32.xlu0 %v1032
          %v1048 = vpop.xlane.xlu0 %1047
          %1049 = vadd.xlane.f32.xlu0 %v1033
          %v1050 = vpop.xlane.xlu0 %1049
          %1051 = vadd.xlane.f32.xlu0 %v1034
          %v1052 = vpop.xlane.xlu0 %1051
          %v1053 = vrcp.pop 128.0
          %v1054 = vmul.f32 %v1038, %v1053
          %v1055 = vmul.f32 %v1040, %v1053
          %v1056 = vmul.f32 %v1042, %v1053
          %v1057 = vmul.f32 %v1044, %v1053
          %v1058 = vmul.f32 %v1046, %v1053
          %v1059 = vmul.f32 %v1048, %v1053
          %v1060 = vmul.f32 %v1050, %v1053
          %v1061 = vmul.f32 %v1052, %v1053
          %v1062 = vsub.f32 %v1027, %v1054
          %v1063 = vsub.f32 %v1028, %v1055
          %v1064 = vsub.f32 %v1029, %v1056
          %v1065 = vsub.f32 %v1030, %v1057
          %v1066 = vsub.f32 %v1031, %v1058
          %v1067 = vsub.f32 %v1032, %v1059
          %v1068 = vsub.f32 %v1033, %v1060
          %v1069 = vsub.f32 %v1034, %v1061
          %v1070 = vmul.f32 %v1062, %v1062
          %v1071 = vmul.f32 %v1063, %v1063
          %v1072 = vmul.f32 %v1064, %v1064
          %v1073 = vmul.f32 %v1065, %v1065
          %v1074 = vmul.f32 %v1066, %v1066
          %v1075 = vmul.f32 %v1067, %v1067
          %v1076 = vmul.f32 %v1068, %v1068
          %v1077 = vmul.f32 %v1069, %v1069
          %1078 = vadd.xlane.f32.xlu0 %v1070
          %v1079 = vpop.xlane.xlu0 %1078
          %1080 = vadd.xlane.f32.xlu0 %v1071
          %v1081 = vpop.xlane.xlu0 %1080
          %1082 = vadd.xlane.f32.xlu0 %v1072
          %v1083 = vpop.xlane.xlu0 %1082
          %1084 = vadd.xlane.f32.xlu0 %v1073
          %v1085 = vpop.xlane.xlu0 %1084
          %1086 = vadd.xlane.f32.xlu0 %v1074
          %v1087 = vpop.xlane.xlu0 %1086
          %1088 = vadd.xlane.f32.xlu0 %v1075
          %v1089 = vpop.xlane.xlu0 %1088
          %1090 = vadd.xlane.f32.xlu0 %v1076
          %v1091 = vpop.xlane.xlu0 %1090
          %1092 = vadd.xlane.f32.xlu0 %v1077
          %v1093 = vpop.xlane.xlu0 %1092
          %v1094 = vmul.f32 %v1079, %v1053
          %v1095 = vmul.f32 %v1081, %v1053
          %v1096 = vmul.f32 %v1083, %v1053
          %v1097 = vmul.f32 %v1085, %v1053
          %v1098 = vmul.f32 %v1087, %v1053
          %v1099 = vmul.f32 %v1089, %v1053
          %v1100 = vmul.f32 %v1091, %v1053
          %v1101 = vmul.f32 %v1093, %v1053
          %v1102 = vadd.f32 %v1094, 1e-06
          %v1103 = vadd.f32 %v1095, 1e-06
          %v1104 = vadd.f32 %v1096, 1e-06
          %v1105 = vadd.f32 %v1097, 1e-06
          %v1106 = vadd.f32 %v1098, 1e-06
          %v1107 = vadd.f32 %v1099, 1e-06
          %v1108 = vadd.f32 %v1100, 1e-06
          %v1109 = vadd.f32 %v1101, 1e-06
          %v1110 = vrsqrt.pop %v1102
          %v1111 = vrsqrt.pop %v1103
          %v1112 = vrsqrt.pop %v1104
          %v1113 = vrsqrt.pop %v1105
          %v1114 = vrsqrt.pop %v1106
          %v1115 = vrsqrt.pop %v1107
          %v1116 = vrsqrt.pop %v1108
          %v1117 = vrsqrt.pop %v1109
          %v1118 = vmul.f32 %v1062, %v1110
          %v1119 = vmul.f32 %v1063, %v1111
          %v1120 = vmul.f32 %v1064, %v1112
          %v1121 = vmul.f32 %v1065, %v1113
          %v1122 = vmul.f32 %v1066, %v1114
          %v1123 = vmul.f32 %v1067, %v1115
          %v1124 = vmul.f32 %v1068, %v1116
          %v1125 = vmul.f32 %v1069, %v1117
          %v1127 = vlaneseq
          %v1128 = vshrl.u32 %v1127, 7
          %v1129 = vsub.s32 0, %v1128
          %v1130 = vrot.slane %v1035, %v1129
          %v1132 = vmul.f32 %v1118, %v1130
          %v1133 = vmul.f32 %v1119, %v1130
          %v1134 = vmul.f32 %v1120, %v1130
          %v1135 = vmul.f32 %v1121, %v1130
          %v1136 = vmul.f32 %v1122, %v1130
          %v1137 = vmul.f32 %v1123, %v1130
          %v1138 = vmul.f32 %v1124, %v1130
          %v1139 = vmul.f32 %v1125, %v1130
          %v1141 = vlaneseq
          %v1142 = vshrl.u32 %v1141, 7
          %v1143 = vsub.s32 0, %v1142
          %v1144 = vrot.slane %v1036, %v1143
          %v1146 = vadd.f32 %v1132, %v1144
          %v1147 = vadd.f32 %v1133, %v1144
          %v1148 = vadd.f32 %v1134, %v1144
          %v1149 = vadd.f32 %v1135, %v1144
          %v1150 = vadd.f32 %v1136, %v1144
          %v1151 = vadd.f32 %v1137, %v1144
          %v1152 = vadd.f32 %v1138, %v1144
          %v1153 = vadd.f32 %v1139, %v1144
          %v1154 = vpack.c.bf16 %v1147, %v1146
          %v1155 = vpack.c.bf16 %v1149, %v1148
          %v1156 = vpack.c.bf16 %v1151, %v1150
          %v1157 = vpack.c.bf16 %v1153, %v1152
          %v1158 = vld [vmem:[%s796] sm:$0xf]
          %v1159 = vld [vmem:[%s796 + $0x4] sm:$0xf]
          %v1160 = vld [vmem:[%s796 + $0x8] sm:$0xf]
          %v1161 = vld [vmem:[%s796 + $0xc] sm:$0xf]
          %v1162 = vld [vmem:[%s796 + $0x10] sm:$0xf]
          %v1163 = vld [vmem:[%s796 + $0x14] sm:$0xf]
          %v1164 = vld [vmem:[%s796 + $0x18] sm:$0xf]
          %v1165 = vld [vmem:[%s796 + $0x1c] sm:$0xf]
          %v1166 = vld [vmem:[%s796 + $0x20] sm:$0xf]
          %v1167 = vld [vmem:[%s796 + $0x24] sm:$0xf]
          %v1168 = vld [vmem:[%s796 + $0x28] sm:$0xf]
          %v1169 = vld [vmem:[%s796 + $0x2c] sm:$0xf]
          %v1170 = vld [vmem:[%s796 + $0x30] sm:$0xf]
          %v1171 = vld [vmem:[%s796 + $0x34] sm:$0xf]
          %v1172 = vld [vmem:[%s796 + $0x38] sm:$0xf]
          %v1173 = vld [vmem:[%s796 + $0x3c] sm:$0xf]
          %v1174 = vld [vmem:[%s954] sm:$0x1]
          %v1176 = vlaneseq
          %v1177 = vshrl.u32 %v1176, 7
          %v1178 = vsub.s32 0, %v1177
          %v1179 = vrot.slane %v1174, %v1178
          %v1197 = vunpack.c.l.b16 %v1158
          %v1198 = vunpack.c.l.b16 %v1159
          %v1199 = vunpack.c.l.b16 %v1160
          %v1200 = vunpack.c.l.b16 %v1161
          %v1201 = vunpack.c.l.b16 %v1162
          %v1202 = vunpack.c.l.b16 %v1163
          %v1203 = vunpack.c.l.b16 %v1164
          %v1204 = vunpack.c.l.b16 %v1165
          %v1205 = vunpack.c.l.b16 %v1166
          %v1206 = vunpack.c.l.b16 %v1167
          %v1207 = vunpack.c.l.b16 %v1168
          %v1208 = vunpack.c.l.b16 %v1169
          %v1209 = vunpack.c.l.b16 %v1170
          %v1210 = vunpack.c.l.b16 %v1171
          %v1211 = vunpack.c.l.b16 %v1172
          %v1212 = vunpack.c.l.b16 %v1173
          %v1213 = vpack.c.b16 %v1198, %v1197
          %v1214 = vpack.c.b16 %v1200, %v1199
          %v1215 = vpack.c.b16 %v1202, %v1201
          %v1216 = vpack.c.b16 %v1204, %v1203
          %v1217 = vpack.c.b16 %v1206, %v1205
          %v1218 = vpack.c.b16 %v1208, %v1207
          %v1219 = vpack.c.b16 %v1210, %v1209
          %v1220 = vpack.c.b16 %v1212, %v1211
          %1229 = vmatprep.subr.bf16.mxu0 0
          %1230 = vmatpush1.bf16.msra.mxu0 %v1213
          %1231 = vmatprep.subr.bf16.mxu0 0
          %1232 = vmatpush1.bf16.msra.mxu0 %v1214
          %1233 = vmatprep.subr.bf16.mxu0 0
          %1234 = vmatpush1.bf16.msra.mxu0 %v1215
          %1235 = vmatprep.subr.bf16.mxu0 0
          %1236 = vmatpush1.bf16.msra.mxu0 %v1216
          %1237 = vmatprep.subr.bf16.mxu0 0
          %1238 = vmatpush1.bf16.msra.mxu0 %v1217
          %1239 = vmatprep.subr.bf16.mxu0 0
          %1240 = vmatpush1.bf16.msra.mxu0 %v1218
          %1241 = vmatprep.subr.bf16.mxu0 0
          %1242 = vmatpush1.bf16.msra.mxu0 %v1219
          %1243 = vmatprep.subr.bf16.mxu0 0
          %1244 = vmatpush1.bf16.msra.mxu0 %v1220
          %1245 = vmatprep.subr.bf16.mxu0 0
          %1246 = vmatpush1.bf16.msra.mxu0 0
          %1247 = vmatprep.subr.bf16.mxu0 0
          %1248 = vmatpush1.bf16.msra.mxu0 0
          %1249 = vmatprep.subr.bf16.mxu0 0
          %1250 = vmatpush1.bf16.msra.mxu0 0
          %1251 = vmatprep.subr.bf16.mxu0 0
          %1252 = vmatpush1.bf16.msra.mxu0 0
          %1253 = vmatprep.subr.bf16.mxu0 0
          %1254 = vmatpush1.bf16.msra.mxu0 0
          %1255 = vmatprep.subr.bf16.mxu0 0
          %1256 = vmatpush1.bf16.msra.mxu0 0
          %1257 = vmatprep.subr.bf16.mxu0 0
          %1258 = vmatpush1.bf16.msra.mxu0 0
          %1259 = vmatprep.subr.bf16.mxu0 0
          %1260 = vmatpush1.bf16.msra.mxu0 0
          %1261 = vmatprep.mubr.bf16.mxu0 0
          %1262 = vmatmul.mubr.bf16.gmra.mrb[0].mxu0 %v1154
          %v1263 = vpop.f32.mrb[0].mxu0
          %v1264 = vadd.f32 %v1179, %v1263
          %v1265 = vpop.f32.mrb[0].mxu0
          %v1266 = vpop.f32.mrb[0].mxu0
          %v1267 = vadd.f32 %v1179, %v1266
          %v1268 = vpop.f32.mrb[0].mxu0
          %1269 = vmatprep.mubr.bf16.mxu0 0
          %1270 = vmatmul.mubr.bf16.gmra.mrb[0].mxu0 %v1155
          %v1271 = vpop.f32.mrb[0].mxu0
          %v1272 = vadd.f32 %v1179, %v1271
          %v1273 = vpop.f32.mrb[0].mxu0
          %v1274 = vpop.f32.mrb[0].mxu0
          %v1275 = vadd.f32 %v1179, %v1274
          %v1276 = vpop.f32.mrb[0].mxu0
          %1277 = vmatprep.mubr.bf16.mxu0 0
          %1278 = vmatmul.mubr.bf16.gmra.mrb[0].mxu0 %v1156
          %v1279 = vpop.f32.mrb[0].mxu0
          %v1280 = vadd.f32 %v1179, %v1279
          %v1281 = vpop.f32.mrb[0].mxu0
          %v1282 = vpop.f32.mrb[0].mxu0
          %v1283 = vadd.f32 %v1179, %v1282
          %v1284 = vpop.f32.mrb[0].mxu0
          %1285 = vmatprep.mubr.bf16.mxu0 0
          %1286 = vmatmul.mubr.bf16.gmra.mrb[0].mxu0 %v1157
          %v1287 = vpop.f32.mrb[0].mxu0
          %v1288 = vadd.f32 %v1179, %v1287
          %v1289 = vpop.f32.mrb[0].mxu0
          %v1290 = vpop.f32.mrb[0].mxu0
          %v1291 = vadd.f32 %v1179, %v1290
          %v1292 = vpop.f32.mrb[0].mxu0
          %1293 = vdwg.mxu0
          %v1294 = vmul.f32 %v1264, 0.17677669
          %v1295 = vmul.f32 %v1267, 0.17677669
          %v1296 = vmul.f32 %v1272, 0.17677669
          %v1297 = vmul.f32 %v1275, 0.17677669
          %v1298 = vmul.f32 %v1280, 0.17677669
          %v1299 = vmul.f32 %v1283, 0.17677669
          %v1300 = vmul.f32 %v1288, 0.17677669
          %v1301 = vmul.f32 %v1291, 0.17677669
          %v1302 = vpack.c.bf16 %v1295, %v1294
          %v1303 = vpack.c.bf16 %v1297, %v1296
          %v1304 = vpack.c.bf16 %v1299, %v1298
          %v1305 = vpack.c.bf16 %v1301, %v1300
          %vm1306 = vcmask 261120
          %1307 = vst.msk [vmem:[#allocation3] sm:$0xff] %vm1306, %v1302
          %1308 = vst.msk [vmem:[#allocation3 + $0x8] sm:$0xff] %vm1306, %v1303
          %1309 = vst.msk [vmem:[#allocation3 + $0x10] sm:$0xff] %vm1306, %v1304
          %1310 = vst.msk [vmem:[#allocation3 + $0x18] sm:$0xff] %vm1306, %v1305
          %1315 = vrot.lane.b32.xlu0 %v1302, 96
          %v1316 = vpop.permute.xlu0 %1315
          %1317 = vrot.lane.b32.xlu0 %v1303, 96
          %v1318 = vpop.permute.xlu0 %1317
          %1319 = vrot.lane.b32.xlu0 %v1304, 96
          %v1320 = vpop.permute.xlu0 %1319
          %1321 = vrot.lane.b32.xlu0 %v1305, 96
          %v1322 = vpop.permute.xlu0 %1321
          %s1327 = scalar_lea.vmem [#allocation3], 32
          %1328 = vst.msk [vmem:[%s1327] sm:$0xff] %vm1306, %v1316
          %1329 = vst.msk [vmem:[%s1327 + $0x8] sm:$0xff] %vm1306, %v1318
          %1330 = vst.msk [vmem:[%s1327 + $0x10] sm:$0xff] %vm1306, %v1320
          %1331 = vst.msk [vmem:[%s1327 + $0x18] sm:$0xff] %vm1306, %v1322
          %1332 = vrot.lane.b32.xlu0 %v1302, 64
          %v1333 = vpop.permute.xlu0 %1332
          %1334 = vrot.lane.b32.xlu0 %v1303, 64
          %v1335 = vpop.permute.xlu0 %1334
          %1336 = vrot.lane.b32.xlu0 %v1304, 64
          %v1337 = vpop.permute.xlu0 %1336
          %1338 = vrot.lane.b32.xlu0 %v1305, 64
          %v1339 = vpop.permute.xlu0 %1338
          %s1344 = scalar_lea.vmem [#allocation3], 64
          %1345 = vst.msk [vmem:[%s1344] sm:$0xff] %vm1306, %v1333
          %1346 = vst.msk [vmem:[%s1344 + $0x8] sm:$0xff] %vm1306, %v1335
          %1347 = vst.msk [vmem:[%s1344 + $0x10] sm:$0xff] %vm1306, %v1337
          %1348 = vst.msk [vmem:[%s1344 + $0x18] sm:$0xff] %vm1306, %v1339
          %1349 = vrot.lane.b32.xlu0 %v1302, 32
          %v1350 = vpop.permute.xlu0 %1349
          %1351 = vrot.lane.b32.xlu0 %v1303, 32
          %v1352 = vpop.permute.xlu0 %1351
          %1353 = vrot.lane.b32.xlu0 %v1304, 32
          %v1354 = vpop.permute.xlu0 %1353
          %1355 = vrot.lane.b32.xlu0 %v1305, 32
          %v1356 = vpop.permute.xlu0 %1355
          %s1361 = scalar_lea.vmem [#allocation3], 96
          %1362 = vst.msk [vmem:[%s1361] sm:$0xff] %vm1306, %v1350
          %1363 = vst.msk [vmem:[%s1361 + $0x8] sm:$0xff] %vm1306, %v1352
          %1364 = vst.msk [vmem:[%s1361 + $0x10] sm:$0xff] %vm1306, %v1354
          %1365 = vst.msk [vmem:[%s1361 + $0x18] sm:$0xff] %vm1306, %v1356
          %v1366 = vld [vmem:[%s805] sm:$0xf]
          %v1367 = vld [vmem:[%s805 + $0x4] sm:$0xf]
          %v1368 = vld [vmem:[%s805 + $0x8] sm:$0xf]
          %v1369 = vld [vmem:[%s805 + $0xc] sm:$0xf]
          %v1370 = vld [vmem:[%s805 + $0x10] sm:$0xf]
          %v1371 = vld [vmem:[%s805 + $0x14] sm:$0xf]
          %v1372 = vld [vmem:[%s805 + $0x18] sm:$0xf]
          %v1373 = vld [vmem:[%s805 + $0x1c] sm:$0xf]
          %v1374 = vld [vmem:[%s805 + $0x20] sm:$0xf]
          %v1375 = vld [vmem:[%s805 + $0x24] sm:$0xf]
          %v1376 = vld [vmem:[%s805 + $0x28] sm:$0xf]
          %v1377 = vld [vmem:[%s805 + $0x2c] sm:$0xf]
          %v1378 = vld [vmem:[%s805 + $0x30] sm:$0xf]
          %v1379 = vld [vmem:[%s805 + $0x34] sm:$0xf]
          %v1380 = vld [vmem:[%s805 + $0x38] sm:$0xf]
          %v1381 = vld [vmem:[%s805 + $0x3c] sm:$0xf]
          %v1382 = vld [vmem:[%s957] sm:$0x1]
          %v1384 = vlaneseq
          %v1385 = vshrl.u32 %v1384, 7
          %v1386 = vsub.s32 0, %v1385
          %v1387 = vrot.slane %v1382, %v1386
          %v1405 = vunpack.c.l.b16 %v1366
          %v1406 = vunpack.c.l.b16 %v1367
          %v1407 = vunpack.c.l.b16 %v1368
          %v1408 = vunpack.c.l.b16 %v1369
          %v1409 = vunpack.c.l.b16 %v1370
          %v1410 = vunpack.c.l.b16 %v1371
          %v1411 = vunpack.c.l.b16 %v1372
          %v1412 = vunpack.c.l.b16 %v1373
          %v1413 = vunpack.c.l.b16 %v1374
          %v1414 = vunpack.c.l.b16 %v1375
          %v1415 = vunpack.c.l.b16 %v1376
          %v1416 = vunpack.c.l.b16 %v1377
          %v1417 = vunpack.c.l.b16 %v1378
          %v1418 = vunpack.c.l.b16 %v1379
          %v1419 = vunpack.c.l.b16 %v1380
          %v1420 = vunpack.c.l.b16 %v1381
          %v1421 = vpack.c.b16 %v1406, %v1405
          %v1422 = vpack.c.b16 %v1408, %v1407
          %v1423 = vpack.c.b16 %v1410, %v1409
          %v1424 = vpack.c.b16 %v1412, %v1411
          %v1425 = vpack.c.b16 %v1414, %v1413
          %v1426 = vpack.c.b16 %v1416, %v1415
          %v1427 = vpack.c.b16 %v1418, %v1417
          %v1428 = vpack.c.b16 %v1420, %v1419
          %1437 = vmatprep.subr.bf16.mxu0 0
          %1438 = vmatpush1.bf16.msra.mxu0 %v1421
          %1439 = vmatprep.subr.bf16.mxu0 0
          %1440 = vmatpush1.bf16.msra.mxu0 %v1422
          %1441 = vmatprep.subr.bf16.mxu0 0
          %1442 = vmatpush1.bf16.msra.mxu0 %v1423
          %1443 = vmatprep.subr.bf16.mxu0 0
          %1444 = vmatpush1.bf16.msra.mxu0 %v1424
          %1445 = vmatprep.subr.bf16.mxu0 0
          %1446 = vmatpush1.bf16.msra.mxu0 %v1425
          %1447 = vmatprep.subr.bf16.mxu0 0
          %1448 = vmatpush1.bf16.msra.mxu0 %v1426
          %1449 = vmatprep.subr.bf16.mxu0 0
          %1450 = vmatpush1.bf16.msra.mxu0 %v1427
          %1451 = vmatprep.subr.bf16.mxu0 0
          %1452 = vmatpush1.bf16.msra.mxu0 %v1428
          %1453 = vmatprep.subr.bf16.mxu0 0
          %1454 = vmatpush1.bf16.msra.mxu0 0
          %1455 = vmatprep.subr.bf16.mxu0 0
          %1456 = vmatpush1.bf16.msra.mxu0 0
          %1457 = vmatprep.subr.bf16.mxu0 0
          %1458 = vmatpush1.bf16.msra.mxu0 0
          %1459 = vmatprep.subr.bf16.mxu0 0
          %1460 = vmatpush1.bf16.msra.mxu0 0
          %1461 = vmatprep.subr.bf16.mxu0 0
          %1462 = vmatpush1.bf16.msra.mxu0 0
          %1463 = vmatprep.subr.bf16.mxu0 0
          %1464 = vmatpush1.bf16.msra.mxu0 0
          %1465 = vmatprep.subr.bf16.mxu0 0
          %1466 = vmatpush1.bf16.msra.mxu0 0
          %1467 = vmatprep.subr.bf16.mxu0 0
          %1468 = vmatpush1.bf16.msra.mxu0 0
          %1469 = vmatprep.mubr.bf16.mxu0 0
          %1470 = vmatmul.mubr.bf16.gmra.mrb[0].mxu0 %v1154
          %v1471 = vpop.f32.mrb[0].mxu0
          %v1472 = vadd.f32 %v1387, %v1471
          %v1473 = vpop.f32.mrb[0].mxu0
          %v1474 = vpop.f32.mrb[0].mxu0
          %v1475 = vadd.f32 %v1387, %v1474
          %v1476 = vpop.f32.mrb[0].mxu0
          %1477 = vmatprep.mubr.bf16.mxu0 0
          %1478 = vmatmul.mubr.bf16.gmra.mrb[0].mxu0 %v1155
          %v1479 = vpop.f32.mrb[0].mxu0
          %v1480 = vadd.f32 %v1387, %v1479
          %v1481 = vpop.f32.mrb[0].mxu0
          %v1482 = vpop.f32.mrb[0].mxu0
          %v1483 = vadd.f32 %v1387, %v1482
          %v1484 = vpop.f32.mrb[0].mxu0
          %1485 = vmatprep.mubr.bf16.mxu0 0
          %1486 = vmatmul.mubr.bf16.gmra.mrb[0].mxu0 %v1156
          %v1487 = vpop.f32.mrb[0].mxu0
          %v1488 = vadd.f32 %v1387, %v1487
          %v1489 = vpop.f32.mrb[0].mxu0
          %v1490 = vpop.f32.mrb[0].mxu0
          %v1491 = vadd.f32 %v1387, %v1490
          %v1492 = vpop.f32.mrb[0].mxu0
          %1493 = vmatprep.mubr.bf16.mxu0 0
          %1494 = vmatmul.mubr.bf16.gmra.mrb[0].mxu0 %v1157
          %v1495 = vpop.f32.mrb[0].mxu0
          %v1496 = vadd.f32 %v1387, %v1495
          %v1497 = vpop.f32.mrb[0].mxu0
          %v1498 = vpop.f32.mrb[0].mxu0
          %v1499 = vadd.f32 %v1387, %v1498
          %v1500 = vpop.f32.mrb[0].mxu0
          %1501 = vdwg.mxu0
          %v1502 = vpack.c.bf16 %v1475, %v1472
          %v1503 = vpack.c.bf16 %v1483, %v1480
          %v1504 = vpack.c.bf16 %v1491, %v1488
          %v1505 = vpack.c.bf16 %v1499, %v1496
          %1506 = vst.msk [vmem:[#allocation4] sm:$0xff] %vm1306, %v1502
          %1507 = vst.msk [vmem:[#allocation4 + $0x8] sm:$0xff] %vm1306, %v1503
          %1508 = vst.msk [vmem:[#allocation4 + $0x10] sm:$0xff] %vm1306, %v1504
          %1509 = vst.msk [vmem:[#allocation4 + $0x18] sm:$0xff] %vm1306, %v1505
          %1514 = vrot.lane.b32.xlu0 %v1502, 96
          %v1515 = vpop.permute.xlu0 %1514
          %1516 = vrot.lane.b32.xlu0 %v1503, 96
          %v1517 = vpop.permute.xlu0 %1516
          %1518 = vrot.lane.b32.xlu0 %v1504, 96
          %v1519 = vpop.permute.xlu0 %1518
          %1520 = vrot.lane.b32.xlu0 %v1505, 96
          %v1521 = vpop.permute.xlu0 %1520
          %s1526 = scalar_lea.vmem [#allocation4], 32
          %1527 = vst.msk [vmem:[%s1526] sm:$0xff] %vm1306, %v1515
          %1528 = vst.msk [vmem:[%s1526 + $0x8] sm:$0xff] %vm1306, %v1517
          %1529 = vst.msk [vmem:[%s1526 + $0x10] sm:$0xff] %vm1306, %v1519
          %1530 = vst.msk [vmem:[%s1526 + $0x18] sm:$0xff] %vm1306, %v1521
          %1531 = vrot.lane.b32.xlu0 %v1502, 64
          %v1532 = vpop.permute.xlu0 %1531
          %1533 = vrot.lane.b32.xlu0 %v1503, 64
          %v1534 = vpop.permute.xlu0 %1533
          %1535 = vrot.lane.b32.xlu0 %v1504, 64
          %v1536 = vpop.permute.xlu0 %1535
          %1537 = vrot.lane.b32.xlu0 %v1505, 64
          %v1538 = vpop.permute.xlu0 %1537
          %s1543 = scalar_lea.vmem [#allocation4], 64
          %1544 = vst.msk [vmem:[%s1543] sm:$0xff] %vm1306, %v1532
          %1545 = vst.msk [vmem:[%s1543 + $0x8] sm:$0xff] %vm1306, %v1534
          %1546 = vst.msk [vmem:[%s1543 + $0x10] sm:$0xff] %vm1306, %v1536
          %1547 = vst.msk [vmem:[%s1543 + $0x18] sm:$0xff] %vm1306, %v1538
          %1548 = vrot.lane.b32.xlu0 %v1502, 32
          %v1549 = vpop.permute.xlu0 %1548
          %1550 = vrot.lane.b32.xlu0 %v1503, 32
          %v1551 = vpop.permute.xlu0 %1550
          %1552 = vrot.lane.b32.xlu0 %v1504, 32
          %v1553 = vpop.permute.xlu0 %1552
          %1554 = vrot.lane.b32.xlu0 %v1505, 32
          %v1555 = vpop.permute.xlu0 %1554
          %s1560 = scalar_lea.vmem [#allocation4], 96
          %1561 = vst.msk [vmem:[%s1560] sm:$0xff] %vm1306, %v1549
          %1562 = vst.msk [vmem:[%s1560 + $0x8] sm:$0xff] %vm1306, %v1551
          %1563 = vst.msk [vmem:[%s1560 + $0x10] sm:$0xff] %vm1306, %v1553
          %1564 = vst.msk [vmem:[%s1560 + $0x18] sm:$0xff] %vm1306, %v1555
          %v1565 = vld [vmem:[%s814] sm:$0xf]
          %v1566 = vld [vmem:[%s814 + $0x4] sm:$0xf]
          %v1567 = vld [vmem:[%s814 + $0x8] sm:$0xf]
          %v1568 = vld [vmem:[%s814 + $0xc] sm:$0xf]
          %v1569 = vld [vmem:[%s814 + $0x10] sm:$0xf]
          %v1570 = vld [vmem:[%s814 + $0x14] sm:$0xf]
          %v1571 = vld [vmem:[%s814 + $0x18] sm:$0xf]
          %v1572 = vld [vmem:[%s814 + $0x1c] sm:$0xf]
          %v1573 = vld [vmem:[%s814 + $0x20] sm:$0xf]
          %v1574 = vld [vmem:[%s814 + $0x24] sm:$0xf]
          %v1575 = vld [vmem:[%s814 + $0x28] sm:$0xf]
          %v1576 = vld [vmem:[%s814 + $0x2c] sm:$0xf]
          %v1577 = vld [vmem:[%s814 + $0x30] sm:$0xf]
          %v1578 = vld [vmem:[%s814 + $0x34] sm:$0xf]
          %v1579 = vld [vmem:[%s814 + $0x38] sm:$0xf]
          %v1580 = vld [vmem:[%s814 + $0x3c] sm:$0xf]
          %v1581 = vld [vmem:[%s960] sm:$0x1]
          %v1583 = vlaneseq
          %v1584 = vshrl.u32 %v1583, 7
          %v1585 = vsub.s32 0, %v1584
          %v1586 = vrot.slane %v1581, %v1585
          %v1604 = vunpack.c.l.b16 %v1565
          %v1605 = vunpack.c.l.b16 %v1566
          %v1606 = vunpack.c.l.b16 %v1567
          %v1607 = vunpack.c.l.b16 %v1568
          %v1608 = vunpack.c.l.b16 %v1569
          %v1609 = vunpack.c.l.b16 %v1570
          %v1610 = vunpack.c.l.b16 %v1571
          %v1611 = vunpack.c.l.b16 %v1572
          %v1612 = vunpack.c.l.b16 %v1573
          %v1613 = vunpack.c.l.b16 %v1574
          %v1614 = vunpack.c.l.b16 %v1575
          %v1615 = vunpack.c.l.b16 %v1576
          %v1616 = vunpack.c.l.b16 %v1577
          %v1617 = vunpack.c.l.b16 %v1578
          %v1618 = vunpack.c.l.b16 %v1579
          %v1619 = vunpack.c.l.b16 %v1580
          %v1620 = vpack.c.b16 %v1605, %v1604
          %v1621 = vpack.c.b16 %v1607, %v1606
          %v1622 = vpack.c.b16 %v1609, %v1608
          %v1623 = vpack.c.b16 %v1611, %v1610
          %v1624 = vpack.c.b16 %v1613, %v1612
          %v1625 = vpack.c.b16 %v1615, %v1614
          %v1626 = vpack.c.b16 %v1617, %v1616
          %v1627 = vpack.c.b16 %v1619, %v1618
          %1636 = vmatprep.subr.bf16.mxu0 0
          %1637 = vmatpush1.bf16.msra.mxu0 %v1620
          %1638 = vmatprep.subr.bf16.mxu0 0
          %1639 = vmatpush1.bf16.msra.mxu0 %v1621
          %1640 = vmatprep.subr.bf16.mxu0 0
          %1641 = vmatpush1.bf16.msra.mxu0 %v1622
          %1642 = vmatprep.subr.bf16.mxu0 0
          %1643 = vmatpush1.bf16.msra.mxu0 %v1623
          %1644 = vmatprep.subr.bf16.mxu0 0
          %1645 = vmatpush1.bf16.msra.mxu0 %v1624
          %1646 = vmatprep.subr.bf16.mxu0 0
          %1647 = vmatpush1.bf16.msra.mxu0 %v1625
          %1648 = vmatprep.subr.bf16.mxu0 0
          %1649 = vmatpush1.bf16.msra.mxu0 %v1626
          %1650 = vmatprep.subr.bf16.mxu0 0
          %1651 = vmatpush1.bf16.msra.mxu0 %v1627
          %1652 = vmatprep.subr.bf16.mxu0 0
          %1653 = vmatpush1.bf16.msra.mxu0 0
          %1654 = vmatprep.subr.bf16.mxu0 0
          %1655 = vmatpush1.bf16.msra.mxu0 0
          %1656 = vmatprep.subr.bf16.mxu0 0
          %1657 = vmatpush1.bf16.msra.mxu0 0
          %1658 = vmatprep.subr.bf16.mxu0 0
          %1659 = vmatpush1.bf16.msra.mxu0 0
          %1660 = vmatprep.subr.bf16.mxu0 0
          %1661 = vmatpush1.bf16.msra.mxu0 0
          %1662 = vmatprep.subr.bf16.mxu0 0
          %1663 = vmatpush1.bf16.msra.mxu0 0
          %1664 = vmatprep.subr.bf16.mxu0 0
          %1665 = vmatpush1.bf16.msra.mxu0 0
          %1666 = vmatprep.subr.bf16.mxu0 0
          %1667 = vmatpush1.bf16.msra.mxu0 0
          %1668 = vmatprep.mubr.bf16.mxu0 0
          %1669 = vmatmul.mubr.bf16.gmra.mrb[0].mxu0 %v1154
          %v1670 = vpop.f32.mrb[0].mxu0
          %v1671 = vadd.f32 %v1586, %v1670
          %v1672 = vpop.f32.mrb[0].mxu0
          %v1673 = vpop.f32.mrb[0].mxu0
          %v1674 = vadd.f32 %v1586, %v1673
          %v1675 = vpop.f32.mrb[0].mxu0
          %1676 = vmatprep.mubr.bf16.mxu0 0
          %1677 = vmatmul.mubr.bf16.gmra.mrb[0].mxu0 %v1155
          %v1678 = vpop.f32.mrb[0].mxu0
          %v1679 = vadd.f32 %v1586, %v1678
          %v1680 = vpop.f32.mrb[0].mxu0
          %v1681 = vpop.f32.mrb[0].mxu0
          %v1682 = vadd.f32 %v1586, %v1681
          %v1683 = vpop.f32.mrb[0].mxu0
          %1684 = vmatprep.mubr.bf16.mxu0 0
          %1685 = vmatmul.mubr.bf16.gmra.mrb[0].mxu0 %v1156
          %v1686 = vpop.f32.mrb[0].mxu0
          %v1687 = vadd.f32 %v1586, %v1686
          %v1688 = vpop.f32.mrb[0].mxu0
          %v1689 = vpop.f32.mrb[0].mxu0
          %v1690 = vadd.f32 %v1586, %v1689
          %v1691 = vpop.f32.mrb[0].mxu0
          %1692 = vmatprep.mubr.bf16.mxu0 0
          %1693 = vmatmul.mubr.bf16.gmra.mrb[0].mxu0 %v1157
          %v1694 = vpop.f32.mrb[0].mxu0
          %v1695 = vadd.f32 %v1586, %v1694
          %v1696 = vpop.f32.mrb[0].mxu0
          %v1697 = vpop.f32.mrb[0].mxu0
          %v1698 = vadd.f32 %v1586, %v1697
          %v1699 = vpop.f32.mrb[0].mxu0
          %1700 = vdwg.mxu0
          %v1701 = vpack.c.bf16 %v1674, %v1671
          %v1702 = vpack.c.bf16 %v1682, %v1679
          %v1703 = vpack.c.bf16 %v1690, %v1687
          %v1704 = vpack.c.bf16 %v1698, %v1695
          %1705 = vst.msk [vmem:[#allocation5] sm:$0xff] %vm1306, %v1701
          %1706 = vst.msk [vmem:[#allocation5 + $0x8] sm:$0xff] %vm1306, %v1702
          %1707 = vst.msk [vmem:[#allocation5 + $0x10] sm:$0xff] %vm1306, %v1703
          %1708 = vst.msk [vmem:[#allocation5 + $0x18] sm:$0xff] %vm1306, %v1704
          %1713 = vrot.lane.b32.xlu0 %v1701, 96
          %v1714 = vpop.permute.xlu0 %1713
          %1715 = vrot.lane.b32.xlu0 %v1702, 96
          %v1716 = vpop.permute.xlu0 %1715
          %1717 = vrot.lane.b32.xlu0 %v1703, 96
          %v1718 = vpop.permute.xlu0 %1717
          %1719 = vrot.lane.b32.xlu0 %v1704, 96
          %v1720 = vpop.permute.xlu0 %1719
          %s1725 = scalar_lea.vmem [#allocation5], 32
          %1726 = vst.msk [vmem:[%s1725] sm:$0xff] %vm1306, %v1714
          %1727 = vst.msk [vmem:[%s1725 + $0x8] sm:$0xff] %vm1306, %v1716
          %1728 = vst.msk [vmem:[%s1725 + $0x10] sm:$0xff] %vm1306, %v1718
          %1729 = vst.msk [vmem:[%s1725 + $0x18] sm:$0xff] %vm1306, %v1720
          %1730 = vrot.lane.b32.xlu0 %v1701, 64
          %v1731 = vpop.permute.xlu0 %1730
          %1732 = vrot.lane.b32.xlu0 %v1702, 64
          %v1733 = vpop.permute.xlu0 %1732
          %1734 = vrot.lane.b32.xlu0 %v1703, 64
          %v1735 = vpop.permute.xlu0 %1734
          %1736 = vrot.lane.b32.xlu0 %v1704, 64
          %v1737 = vpop.permute.xlu0 %1736
          %s1742 = scalar_lea.vmem [#allocation5], 64
          %1743 = vst.msk [vmem:[%s1742] sm:$0xff] %vm1306, %v1731
          %1744 = vst.msk [vmem:[%s1742 + $0x8] sm:$0xff] %vm1306, %v1733
          %1745 = vst.msk [vmem:[%s1742 + $0x10] sm:$0xff] %vm1306, %v1735
          %1746 = vst.msk [vmem:[%s1742 + $0x18] sm:$0xff] %vm1306, %v1737
          %1747 = vrot.lane.b32.xlu0 %v1701, 32
          %v1748 = vpop.permute.xlu0 %1747
          %1749 = vrot.lane.b32.xlu0 %v1702, 32
          %v1750 = vpop.permute.xlu0 %1749
          %1751 = vrot.lane.b32.xlu0 %v1703, 32
          %v1752 = vpop.permute.xlu0 %1751
          %1753 = vrot.lane.b32.xlu0 %v1704, 32
          %v1754 = vpop.permute.xlu0 %1753
          %s1759 = scalar_lea.vmem [#allocation5], 96
          %1760 = vst.msk [vmem:[%s1759] sm:$0xff] %vm1306, %v1748
          %1761 = vst.msk [vmem:[%s1759 + $0x8] sm:$0xff] %vm1306, %v1750
          %1762 = vst.msk [vmem:[%s1759 + $0x10] sm:$0xff] %vm1306, %v1752
          %1763 = vst.msk [vmem:[%s1759 + $0x18] sm:$0xff] %vm1306, %v1754
          %v1764 = vld [vmem:[#allocation3] sm:$0xff]
          %v1765 = vld [vmem:[#allocation3 + $0x8] sm:$0xff]
          %v1766 = vld [vmem:[#allocation3 + $0x10] sm:$0xff]
          %v1767 = vld [vmem:[#allocation3 + $0x18] sm:$0xff]
          %v1768 = vld [vmem:[#allocation3 + $0x20] sm:$0xff]
          %v1769 = vld [vmem:[#allocation3 + $0x28] sm:$0xff]
          %v1770 = vld [vmem:[#allocation3 + $0x30] sm:$0xff]
          %v1771 = vld [vmem:[#allocation3 + $0x38] sm:$0xff]
          %v1772 = vld [vmem:[#allocation3 + $0x40] sm:$0xff]
          %v1773 = vld [vmem:[#allocation3 + $0x48] sm:$0xff]
          %v1774 = vld [vmem:[#allocation3 + $0x50] sm:$0xff]
          %v1775 = vld [vmem:[#allocation3 + $0x58] sm:$0xff]
          %v1776 = vld [vmem:[#allocation3 + $0x60] sm:$0xff]
          %v1777 = vld [vmem:[#allocation3 + $0x68] sm:$0xff]
          %v1778 = vld [vmem:[#allocation3 + $0x70] sm:$0xff]
          %v1779 = vld [vmem:[#allocation3 + $0x78] sm:$0xff]
          %v1780 = vld [vmem:[#allocation4] sm:$0xff]
          %v1781 = vld [vmem:[#allocation4 + $0x8] sm:$0xff]
          %v1782 = vld [vmem:[#allocation4 + $0x10] sm:$0xff]
          %v1783 = vld [vmem:[#allocation4 + $0x18] sm:$0xff]
          %v1784 = vld [vmem:[#allocation4 + $0x20] sm:$0xff]
          %v1785 = vld [vmem:[#allocation4 + $0x28] sm:$0xff]
          %v1786 = vld [vmem:[#allocation4 + $0x30] sm:$0xff]
          %v1787 = vld [vmem:[#allocation4 + $0x38] sm:$0xff]
          %v1788 = vld [vmem:[#allocation4 + $0x40] sm:$0xff]
          %v1789 = vld [vmem:[#allocation4 + $0x48] sm:$0xff]
          %v1790 = vld [vmem:[#allocation4 + $0x50] sm:$0xff]
          %v1791 = vld [vmem:[#allocation4 + $0x58] sm:$0xff]
          %v1792 = vld [vmem:[#allocation4 + $0x60] sm:$0xff]
          %v1793 = vld [vmem:[#allocation4 + $0x68] sm:$0xff]
          %v1794 = vld [vmem:[#allocation4 + $0x70] sm:$0xff]
          %v1795 = vld [vmem:[#allocation4 + $0x78] sm:$0xff]
          %v1796 = vld [vmem:[#allocation5] sm:$0xff]
          %v1797 = vld [vmem:[#allocation5 + $0x8] sm:$0xff]
          %v1798 = vld [vmem:[#allocation5 + $0x10] sm:$0xff]
          %v1799 = vld [vmem:[#allocation5 + $0x18] sm:$0xff]
          %v1800 = vld [vmem:[#allocation5 + $0x20] sm:$0xff]
          %v1801 = vld [vmem:[#allocation5 + $0x28] sm:$0xff]
          %v1802 = vld [vmem:[#allocation5 + $0x30] sm:$0xff]
          %v1803 = vld [vmem:[#allocation5 + $0x38] sm:$0xff]
          %v1804 = vld [vmem:[#allocation5 + $0x40] sm:$0xff]
          %v1805 = vld [vmem:[#allocation5 + $0x48] sm:$0xff]
          %v1806 = vld [vmem:[#allocation5 + $0x50] sm:$0xff]
          %v1807 = vld [vmem:[#allocation5 + $0x58] sm:$0xff]
          %v1808 = vld [vmem:[#allocation5 + $0x60] sm:$0xff]
          %v1809 = vld [vmem:[#allocation5 + $0x68] sm:$0xff]
          %v1810 = vld [vmem:[#allocation5 + $0x70] sm:$0xff]
          %v1811 = vld [vmem:[#allocation5 + $0x78] sm:$0xff]
          %v1813 = vsel %vm1306, %v1764, 0
          %v1816 = vsel %vm1306, %v1765, 0
          %v1819 = vsel %vm1306, %v1766, 0
          %v1822 = vsel %vm1306, %v1767, 0
          %v1825 = vsel %vm1306, %v1780, 0
          %v1828 = vsel %vm1306, %v1781, 0
          %v1831 = vsel %vm1306, %v1782, 0
          %v1834 = vsel %vm1306, %v1783, 0
          %1836 = vmatprep.subr.bf16.mxu0 0
          %1837 = vmatpush1.bf16.xpose.msra.mxu0 %v1825
          %1838 = vmatprep.subr.bf16.mxu0 0
          %1839 = vmatpush1.bf16.xpose.msra.mxu0 %v1828
          %1840 = vmatprep.subr.bf16.mxu0 0
          %1841 = vmatpush1.bf16.xpose.msra.mxu0 %v1831
          %1842 = vmatprep.subr.bf16.mxu0 0
          %1843 = vmatpush1.bf16.xpose.msra.mxu0 %v1834
          %1844 = vmatprep.subr.bf16.mxu0 0
          %1845 = vmatpush1.bf16.xpose.msra.mxu0 0
          %1846 = vmatprep.subr.bf16.mxu0 0
          %1847 = vmatpush1.bf16.xpose.msra.mxu0 0
          %1848 = vmatprep.subr.bf16.mxu0 0
          %1849 = vmatpush1.bf16.xpose.msra.mxu0 0
          %1850 = vmatprep.subr.bf16.mxu0 0
          %1851 = vmatpush1.bf16.xpose.msra.mxu0 0
          %1852 = vmatprep.subr.bf16.mxu0 0
          %1853 = vmatpush1.bf16.xpose.msra.mxu0 0
          %1854 = vmatprep.subr.bf16.mxu0 0
          %1855 = vmatpush1.bf16.xpose.msra.mxu0 0
          %1856 = vmatprep.subr.bf16.mxu0 0
          %1857 = vmatpush1.bf16.xpose.msra.mxu0 0
          %1858 = vmatprep.subr.bf16.mxu0 0
          %1859 = vmatpush1.bf16.xpose.msra.mxu0 0
          %1860 = vmatprep.subr.bf16.mxu0 0
          %1861 = vmatpush1.bf16.xpose.msra.mxu0 0
          %1862 = vmatprep.subr.bf16.mxu0 0
          %1863 = vmatpush1.bf16.xpose.msra.mxu0 0
          %1864 = vmatprep.subr.bf16.mxu0 0
          %1865 = vmatpush1.bf16.xpose.msra.mxu0 0
          %1866 = vmatprep.subr.bf16.mxu0 0
          %1867 = vmatpush1.bf16.xpose.msra.mxu0 0
          %1868 = vmatprep.mubr.bf16.mxu0 0
          %1869 = vmatmul.mubr.bf16.gmra.mrb[0].mxu0 %v1813
          %v1870 = vpop.f32.mrb[0].mxu0
          %v1871 = vadd.f32 0.0, %v1870
          %v1872 = vpop.f32.mrb[0].mxu0
          %v1873 = vpop.f32.mrb[0].mxu0
          %v1874 = vadd.f32 0.0, %v1873
          %v1875 = vpop.f32.mrb[0].mxu0
          %1876 = vmatprep.mubr.bf16.mxu0 0
          %1877 = vmatmul.mubr.bf16.gmra.mrb[0].mxu0 %v1816
          %v1878 = vpop.f32.mrb[0].mxu0
          %v1879 = vadd.f32 0.0, %v1878
          %v1880 = vpop.f32.mrb[0].mxu0
          %v1881 = vpop.f32.mrb[0].mxu0
          %v1882 = vadd.f32 0.0, %v1881
          %v1883 = vpop.f32.mrb[0].mxu0
          %1884 = vmatprep.mubr.bf16.mxu0 0
          %1885 = vmatmul.mubr.bf16.gmra.mrb[0].mxu0 %v1819
          %v1886 = vpop.f32.mrb[0].mxu0
          %v1887 = vadd.f32 0.0, %v1886
          %v1888 = vpop.f32.mrb[0].mxu0
          %v1889 = vpop.f32.mrb[0].mxu0
          %v1890 = vadd.f32 0.0, %v1889
          %v1891 = vpop.f32.mrb[0].mxu0
          %1892 = vmatprep.mubr.bf16.mxu0 0
          %1893 = vmatmul.mubr.bf16.gmra.mrb[0].mxu0 %v1822
          %v1894 = vpop.f32.mrb[0].mxu0
          %v1895 = vadd.f32 0.0, %v1894
          %v1896 = vpop.f32.mrb[0].mxu0
          %v1897 = vpop.f32.mrb[0].mxu0
          %v1898 = vadd.f32 0.0, %v1897
          %v1899 = vpop.f32.mrb[0].mxu0
          %1900 = vdwg.mxu0
          %v1902 = vsel %vm1306, %v1768, 0
          %v1905 = vsel %vm1306, %v1769, 0
          %v1908 = vsel %vm1306, %v1770, 0
          %v1911 = vsel %vm1306, %v1771, 0
          %v1914 = vsel %vm1306, %v1784, 0
          %v1917 = vsel %vm1306, %v1785, 0
          %v1920 = vsel %vm1306, %v1786, 0
          %v1923 = vsel %vm1306, %v1787, 0
          %1925 = vmatprep.subr.bf16.mxu0 0
          %1926 = vmatpush1.bf16.xpose.msra.mxu0 %v1914
          %1927 = vmatprep.subr.bf16.mxu0 0
          %1928 = vmatpush1.bf16.xpose.msra.mxu0 %v1917
          %1929 = vmatprep.subr.bf16.mxu0 0
          %1930 = vmatpush1.bf16.xpose.msra.mxu0 %v1920
          %1931 = vmatprep.subr.bf16.mxu0 0
          %1932 = vmatpush1.bf16.xpose.msra.mxu0 %v1923
          %1933 = vmatprep.subr.bf16.mxu0 0
          %1934 = vmatpush1.bf16.xpose.msra.mxu0 0
          %1935 = vmatprep.subr.bf16.mxu0 0
          %1936 = vmatpush1.bf16.xpose.msra.mxu0 0
          %1937 = vmatprep.subr.bf16.mxu0 0
          %1938 = vmatpush1.bf16.xpose.msra.mxu0 0
          %1939 = vmatprep.subr.bf16.mxu0 0
          %1940 = vmatpush1.bf16.xpose.msra.mxu0 0
          %1941 = vmatprep.subr.bf16.mxu0 0
          %1942 = vmatpush1.bf16.xpose.msra.mxu0 0
          %1943 = vmatprep.subr.bf16.mxu0 0
          %1944 = vmatpush1.bf16.xpose.msra.mxu0 0
          %1945 = vmatprep.subr.bf16.mxu0 0
          %1946 = vmatpush1.bf16.xpose.msra.mxu0 0
          %1947 = vmatprep.subr.bf16.mxu0 0
          %1948 = vmatpush1.bf16.xpose.msra.mxu0 0
          %1949 = vmatprep.subr.bf16.mxu0 0
          %1950 = vmatpush1.bf16.xpose.msra.mxu0 0
          %1951 = vmatprep.subr.bf16.mxu0 0
          %1952 = vmatpush1.bf16.xpose.msra.mxu0 0
          %1953 = vmatprep.subr.bf16.mxu0 0
          %1954 = vmatpush1.bf16.xpose.msra.mxu0 0
          %1955 = vmatprep.subr.bf16.mxu0 0
          %1956 = vmatpush1.bf16.xpose.msra.mxu0 0
          %1957 = vmatprep.mubr.bf16.mxu0 0
          %1958 = vmatmul.mubr.bf16.gmra.mrb[0].mxu0 %v1902
          %v1959 = vpop.f32.mrb[0].mxu0
          %v1960 = vadd.f32 0.0, %v1959
          %v1961 = vpop.f32.mrb[0].mxu0
          %v1962 = vpop.f32.mrb[0].mxu0
          %v1963 = vadd.f32 0.0, %v1962
          %v1964 = vpop.f32.mrb[0].mxu0
          %1965 = vmatprep.mubr.bf16.mxu0 0
          %1966 = vmatmul.mubr.bf16.gmra.mrb[0].mxu0 %v1905
          %v1967 = vpop.f32.mrb[0].mxu0
          %v1968 = vadd.f32 0.0, %v1967
          %v1969 = vpop.f32.mrb[0].mxu0
          %v1970 = vpop.f32.mrb[0].mxu0
          %v1971 = vadd.f32 0.0, %v1970
          %v1972 = vpop.f32.mrb[0].mxu0
          %1973 = vmatprep.mubr.bf16.mxu0 0
          %1974 = vmatmul.mubr.bf16.gmra.mrb[0].mxu0 %v1908
          %v1975 = vpop.f32.mrb[0].mxu0
          %v1976 = vadd.f32 0.0, %v1975
          %v1977 = vpop.f32.mrb[0].mxu0
          %v1978 = vpop.f32.mrb[0].mxu0
          %v1979 = vadd.f32 0.0, %v1978
          %v1980 = vpop.f32.mrb[0].mxu0
          %1981 = vmatprep.mubr.bf16.mxu0 0
          %1982 = vmatmul.mubr.bf16.gmra.mrb[0].mxu0 %v1911
          %v1983 = vpop.f32.mrb[0].mxu0
          %v1984 = vadd.f32 0.0, %v1983
          %v1985 = vpop.f32.mrb[0].mxu0
          %v1986 = vpop.f32.mrb[0].mxu0
          %v1987 = vadd.f32 0.0, %v1986
          %v1988 = vpop.f32.mrb[0].mxu0
          %1989 = vdwg.mxu0
          %v1991 = vsel %vm1306, %v1772, 0
          %v1994 = vsel %vm1306, %v1773, 0
          %v1997 = vsel %vm1306, %v1774, 0
          %v2000 = vsel %vm1306, %v1775, 0
          %v2003 = vsel %vm1306, %v1788, 0
          %v2006 = vsel %vm1306, %v1789, 0
          %v2009 = vsel %vm1306, %v1790, 0
          %v2012 = vsel %vm1306, %v1791, 0
          %2014 = vmatprep.subr.bf16.mxu0 0
          %2015 = vmatpush1.bf16.xpose.msra.mxu0 %v2003
          %2016 = vmatprep.subr.bf16.mxu0 0
          %2017 = vmatpush1.bf16.xpose.msra.mxu0 %v2006
          %2018 = vmatprep.subr.bf16.mxu0 0
          %2019 = vmatpush1.bf16.xpose.msra.mxu0 %v2009
          %2020 = vmatprep.subr.bf16.mxu0 0
          %2021 = vmatpush1.bf16.xpose.msra.mxu0 %v2012
          %2022 = vmatprep.subr.bf16.mxu0 0
          %2023 = vmatpush1.bf16.xpose.msra.mxu0 0
          %2024 = vmatprep.subr.bf16.mxu0 0
          %2025 = vmatpush1.bf16.xpose.msra.mxu0 0
          %2026 = vmatprep.subr.bf16.mxu0 0
          %2027 = vmatpush1.bf16.xpose.msra.mxu0 0
          %2028 = vmatprep.subr.bf16.mxu0 0
          %2029 = vmatpush1.bf16.xpose.msra.mxu0 0
          %2030 = vmatprep.subr.bf16.mxu0 0
          %2031 = vmatpush1.bf16.xpose.msra.mxu0 0
          %2032 = vmatprep.subr.bf16.mxu0 0
          %2033 = vmatpush1.bf16.xpose.msra.mxu0 0
          %2034 = vmatprep.subr.bf16.mxu0 0
          %2035 = vmatpush1.bf16.xpose.msra.mxu0 0
          %2036 = vmatprep.subr.bf16.mxu0 0
          %2037 = vmatpush1.bf16.xpose.msra.mxu0 0
          %2038 = vmatprep.subr.bf16.mxu0 0
          %2039 = vmatpush1.bf16.xpose.msra.mxu0 0
          %2040 = vmatprep.subr.bf16.mxu0 0
          %2041 = vmatpush1.bf16.xpose.msra.mxu0 0
          %2042 = vmatprep.subr.bf16.mxu0 0
          %2043 = vmatpush1.bf16.xpose.msra.mxu0 0
          %2044 = vmatprep.subr.bf16.mxu0 0
          %2045 = vmatpush1.bf16.xpose.msra.mxu0 0
          %2046 = vmatprep.mubr.bf16.mxu0 0
          %2047 = vmatmul.mubr.bf16.gmra.mrb[0].mxu0 %v1991
          %v2048 = vpop.f32.mrb[0].mxu0
          %v2049 = vadd.f32 0.0, %v2048
          %v2050 = vpop.f32.mrb[0].mxu0
          %v2051 = vpop.f32.mrb[0].mxu0
          %v2052 = vadd.f32 0.0, %v2051
          %v2053 = vpop.f32.mrb[0].mxu0
          %2054 = vmatprep.mubr.bf16.mxu0 0
          %2055 = vmatmul.mubr.bf16.gmra.mrb[0].mxu0 %v1994
          %v2056 = vpop.f32.mrb[0].mxu0
          %v2057 = vadd.f32 0.0, %v2056
          %v2058 = vpop.f32.mrb[0].mxu0
          %v2059 = vpop.f32.mrb[0].mxu0
          %v2060 = vadd.f32 0.0, %v2059
          %v2061 = vpop.f32.mrb[0].mxu0
          %2062 = vmatprep.mubr.bf16.mxu0 0
          %2063 = vmatmul.mubr.bf16.gmra.mrb[0].mxu0 %v1997
          %v2064 = vpop.f32.mrb[0].mxu0
          %v2065 = vadd.f32 0.0, %v2064
          %v2066 = vpop.f32.mrb[0].mxu0
          %v2067 = vpop.f32.mrb[0].mxu0
          %v2068 = vadd.f32 0.0, %v2067
          %v2069 = vpop.f32.mrb[0].mxu0
          %2070 = vmatprep.mubr.bf16.mxu0 0
          %2071 = vmatmul.mubr.bf16.gmra.mrb[0].mxu0 %v2000
          %v2072 = vpop.f32.mrb[0].mxu0
          %v2073 = vadd.f32 0.0, %v2072
          %v2074 = vpop.f32.mrb[0].mxu0
          %v2075 = vpop.f32.mrb[0].mxu0
          %v2076 = vadd.f32 0.0, %v2075
          %v2077 = vpop.f32.mrb[0].mxu0
          %2078 = vdwg.mxu0
          %v2080 = vsel %vm1306, %v1776, 0
          %v2083 = vsel %vm1306, %v1777, 0
          %v2086 = vsel %vm1306, %v1778, 0
          %v2089 = vsel %vm1306, %v1779, 0
          %v2092 = vsel %vm1306, %v1792, 0
          %v2095 = vsel %vm1306, %v1793, 0
          %v2098 = vsel %vm1306, %v1794, 0
          %v2101 = vsel %vm1306, %v1795, 0
          %2103 = vmatprep.subr.bf16.mxu0 0
          %2104 = vmatpush1.bf16.xpose.msra.mxu0 %v2092
          %2105 = vmatprep.subr.bf16.mxu0 0
          %2106 = vmatpush1.bf16.xpose.msra.mxu0 %v2095
          %2107 = vmatprep.subr.bf16.mxu0 0
          %2108 = vmatpush1.bf16.xpose.msra.mxu0 %v2098
          %2109 = vmatprep.subr.bf16.mxu0 0
          %2110 = vmatpush1.bf16.xpose.msra.mxu0 %v2101
          %2111 = vmatprep.subr.bf16.mxu0 0
          %2112 = vmatpush1.bf16.xpose.msra.mxu0 0
          %2113 = vmatprep.subr.bf16.mxu0 0
          %2114 = vmatpush1.bf16.xpose.msra.mxu0 0
          %2115 = vmatprep.subr.bf16.mxu0 0
          %2116 = vmatpush1.bf16.xpose.msra.mxu0 0
          %2117 = vmatprep.subr.bf16.mxu0 0
          %2118 = vmatpush1.bf16.xpose.msra.mxu0 0
          %2119 = vmatprep.subr.bf16.mxu0 0
          %2120 = vmatpush1.bf16.xpose.msra.mxu0 0
          %2121 = vmatprep.subr.bf16.mxu0 0
          %2122 = vmatpush1.bf16.xpose.msra.mxu0 0
          %2123 = vmatprep.subr.bf16.mxu0 0
          %2124 = vmatpush1.bf16.xpose.msra.mxu0 0
          %2125 = vmatprep.subr.bf16.mxu0 0
          %2126 = vmatpush1.bf16.xpose.msra.mxu0 0
          %2127 = vmatprep.subr.bf16.mxu0 0
          %2128 = vmatpush1.bf16.xpose.msra.mxu0 0
          %2129 = vmatprep.subr.bf16.mxu0 0
          %2130 = vmatpush1.bf16.xpose.msra.mxu0 0
          %2131 = vmatprep.subr.bf16.mxu0 0
          %2132 = vmatpush1.bf16.xpose.msra.mxu0 0
          %2133 = vmatprep.subr.bf16.mxu0 0
          %2134 = vmatpush1.bf16.xpose.msra.mxu0 0
          %2135 = vmatprep.mubr.bf16.mxu0 0
          %2136 = vmatmul.mubr.bf16.gmra.mrb[0].mxu0 %v2080
          %v2137 = vpop.f32.mrb[0].mxu0
          %v2138 = vadd.f32 0.0, %v2137
          %v2139 = vpop.f32.mrb[0].mxu0
          %v2140 = vpop.f32.mrb[0].mxu0
          %v2141 = vadd.f32 0.0, %v2140
          %v2142 = vpop.f32.mrb[0].mxu0
          %2143 = vmatprep.mubr.bf16.mxu0 0
          %2144 = vmatmul.mubr.bf16.gmra.mrb[0].mxu0 %v2083
          %v2145 = vpop.f32.mrb[0].mxu0
          %v2146 = vadd.f32 0.0, %v2145
          %v2147 = vpop.f32.mrb[0].mxu0
          %v2148 = vpop.f32.mrb[0].mxu0
          %v2149 = vadd.f32 0.0, %v2148
          %v2150 = vpop.f32.mrb[0].mxu0
          %2151 = vmatprep.mubr.bf16.mxu0 0
          %2152 = vmatmul.mubr.bf16.gmra.mrb[0].mxu0 %v2086
          %v2153 = vpop.f32.mrb[0].mxu0
          %v2154 = vadd.f32 0.0, %v2153
          %v2155 = vpop.f32.mrb[0].mxu0
          %v2156 = vpop.f32.mrb[0].mxu0
          %v2157 = vadd.f32 0.0, %v2156
          %v2158 = vpop.f32.mrb[0].mxu0
          %2159 = vmatprep.mubr.bf16.mxu0 0
          %2160 = vmatmul.mubr.bf16.gmra.mrb[0].mxu0 %v2089
          %v2161 = vpop.f32.mrb[0].mxu0
          %v2162 = vadd.f32 0.0, %v2161
          %v2163 = vpop.f32.mrb[0].mxu0
          %v2164 = vpop.f32.mrb[0].mxu0
          %v2165 = vadd.f32 0.0, %v2164
          %v2166 = vpop.f32.mrb[0].mxu0
          %2167 = vdwg.mxu0
          %vm2168 = vcmask 523264
          %v2169 = vsel %vm2168, %v1871, -inf
          %2170 = vmax.xlane.f32.xlu0 %v2169
          %v2171 = vpop.xlane.xlu0 %2170
          %v2172 = vsel %vm2168, %v1874, -inf
          %2173 = vmax.xlane.f32.xlu0 %v2172
          %v2174 = vpop.xlane.xlu0 %2173
          %v2175 = vsel %vm2168, %v1879, -inf
          %2176 = vmax.xlane.f32.xlu0 %v2175
          %v2177 = vpop.xlane.xlu0 %2176
          %v2178 = vsel %vm2168, %v1882, -inf
          %2179 = vmax.xlane.f32.xlu0 %v2178
          %v2180 = vpop.xlane.xlu0 %2179
          %v2181 = vsel %vm2168, %v1887, -inf
          %2182 = vmax.xlane.f32.xlu0 %v2181
          %v2183 = vpop.xlane.xlu0 %2182
          %v2184 = vsel %vm2168, %v1890, -inf
          %2185 = vmax.xlane.f32.xlu0 %v2184
          %v2186 = vpop.xlane.xlu0 %2185
          %v2187 = vsel %vm2168, %v1895, -inf
          %2188 = vmax.xlane.f32.xlu0 %v2187
          %v2189 = vpop.xlane.xlu0 %2188
          %v2190 = vsel %vm2168, %v1898, -inf
          %2191 = vmax.xlane.f32.xlu0 %v2190
          %v2192 = vpop.xlane.xlu0 %2191
          %v2193 = vsel %vm2168, %v1960, -inf
          %2194 = vmax.xlane.f32.xlu0 %v2193
          %v2195 = vpop.xlane.xlu0 %2194
          %v2196 = vsel %vm2168, %v1963, -inf
          %2197 = vmax.xlane.f32.xlu0 %v2196
          %v2198 = vpop.xlane.xlu0 %2197
          %v2199 = vsel %vm2168, %v1968, -inf
          %2200 = vmax.xlane.f32.xlu0 %v2199
          %v2201 = vpop.xlane.xlu0 %2200
          %v2202 = vsel %vm2168, %v1971, -inf
          %2203 = vmax.xlane.f32.xlu0 %v2202
          %v2204 = vpop.xlane.xlu0 %2203
          %v2205 = vsel %vm2168, %v1976, -inf
          %2206 = vmax.xlane.f32.xlu0 %v2205
          %v2207 = vpop.xlane.xlu0 %2206
          %v2208 = vsel %vm2168, %v1979, -inf
          %2209 = vmax.xlane.f32.xlu0 %v2208
          %v2210 = vpop.xlane.xlu0 %2209
          %v2211 = vsel %vm2168, %v1984, -inf
          %2212 = vmax.xlane.f32.xlu0 %v2211
          %v2213 = vpop.xlane.xlu0 %2212
          %v2214 = vsel %vm2168, %v1987, -inf
          %2215 = vmax.xlane.f32.xlu0 %v2214
          %v2216 = vpop.xlane.xlu0 %2215
          %v2217 = vsel %vm2168, %v2049, -inf
          %2218 = vmax.xlane.f32.xlu0 %v2217
          %v2219 = vpop.xlane.xlu0 %2218
          %v2220 = vsel %vm2168, %v2052, -inf
          %2221 = vmax.xlane.f32.xlu0 %v2220
          %v2222 = vpop.xlane.xlu0 %2221
          %v2223 = vsel %vm2168, %v2057, -inf
          %2224 = vmax.xlane.f32.xlu0 %v2223
          %v2225 = vpop.xlane.xlu0 %2224
          %v2226 = vsel %vm2168, %v2060, -inf
          %2227 = vmax.xlane.f32.xlu0 %v2226
          %v2228 = vpop.xlane.xlu0 %2227
          %v2229 = vsel %vm2168, %v2065, -inf
          %2230 = vmax.xlane.f32.xlu0 %v2229
          %v2231 = vpop.xlane.xlu0 %2230
          %v2232 = vsel %vm2168, %v2068, -inf
          %2233 = vmax.xlane.f32.xlu0 %v2232
          %v2234 = vpop.xlane.xlu0 %2233
          %v2235 = vsel %vm2168, %v2073, -inf
          %2236 = vmax.xlane.f32.xlu0 %v2235
          %v2237 = vpop.xlane.xlu0 %2236
          %v2238 = vsel %vm2168, %v2076, -inf
          %2239 = vmax.xlane.f32.xlu0 %v2238
          %v2240 = vpop.xlane.xlu0 %2239
          %v2241 = vsel %vm2168, %v2138, -inf
          %2242 = vmax.xlane.f32.xlu0 %v2241
          %v2243 = vpop.xlane.xlu0 %2242
          %v2244 = vsel %vm2168, %v2141, -inf
          %2245 = vmax.xlane.f32.xlu0 %v2244
          %v2246 = vpop.xlane.xlu0 %2245
          %v2247 = vsel %vm2168, %v2146, -inf
          %2248 = vmax.xlane.f32.xlu0 %v2247
          %v2249 = vpop.xlane.xlu0 %2248
          %v2250 = vsel %vm2168, %v2149, -inf
          %2251 = vmax.xlane.f32.xlu0 %v2250
          %v2252 = vpop.xlane.xlu0 %2251
          %v2253 = vsel %vm2168, %v2154, -inf
          %2254 = vmax.xlane.f32.xlu0 %v2253
          %v2255 = vpop.xlane.xlu0 %2254
          %v2256 = vsel %vm2168, %v2157, -inf
          %2257 = vmax.xlane.f32.xlu0 %v2256
          %v2258 = vpop.xlane.xlu0 %2257
          %v2259 = vsel %vm2168, %v2162, -inf
          %2260 = vmax.xlane.f32.xlu0 %v2259
          %v2261 = vpop.xlane.xlu0 %2260
          %v2262 = vsel %vm2168, %v2165, -inf
          %2263 = vmax.xlane.f32.xlu0 %v2262
          %v2264 = vpop.xlane.xlu0 %2263
          %v2265 = vsub.f32 %v1871, %v2171
          %v2266 = vsub.f32 %v1874, %v2174
          %v2267 = vsub.f32 %v1879, %v2177
          %v2268 = vsub.f32 %v1882, %v2180
          %v2269 = vsub.f32 %v1887, %v2183
          %v2270 = vsub.f32 %v1890, %v2186
          %v2271 = vsub.f32 %v1895, %v2189
          %v2272 = vsub.f32 %v1898, %v2192
          %v2273 = vsub.f32 %v1960, %v2195
          %v2274 = vsub.f32 %v1963, %v2198
          %v2275 = vsub.f32 %v1968, %v2201
          %v2276 = vsub.f32 %v1971, %v2204
          %v2277 = vsub.f32 %v1976, %v2207
          %v2278 = vsub.f32 %v1979, %v2210
          %v2279 = vsub.f32 %v1984, %v2213
          %v2280 = vsub.f32 %v1987, %v2216
          %v2281 = vsub.f32 %v2049, %v2219
          %v2282 = vsub.f32 %v2052, %v2222
          %v2283 = vsub.f32 %v2057, %v2225
          %v2284 = vsub.f32 %v2060, %v2228
          %v2285 = vsub.f32 %v2065, %v2231
          %v2286 = vsub.f32 %v2068, %v2234
          %v2287 = vsub.f32 %v2073, %v2237
          %v2288 = vsub.f32 %v2076, %v2240
          %v2289 = vsub.f32 %v2138, %v2243
          %v2290 = vsub.f32 %v2141, %v2246
          %v2291 = vsub.f32 %v2146, %v2249
          %v2292 = vsub.f32 %v2149, %v2252
          %v2293 = vsub.f32 %v2154, %v2255
          %v2294 = vsub.f32 %v2157, %v2258
          %v2295 = vsub.f32 %v2162, %v2261
          %v2296 = vsub.f32 %v2165, %v2264
          %v2297 = vmul.f32 %v2265, 1.442695
          %v2298 = vpow.pop %v2297
          %v2299 = vmul.f32 %v2266, 1.442695
          %v2300 = vpow.pop %v2299
          %v2301 = vmul.f32 %v2267, 1.442695
          %v2302 = vpow.pop %v2301
          %v2303 = vmul.f32 %v2268, 1.442695
          %v2304 = vpow.pop %v2303
          %v2305 = vmul.f32 %v2269, 1.442695
          %v2306 = vpow.pop %v2305
          %v2307 = vmul.f32 %v2270, 1.442695
          %v2308 = vpow.pop %v2307
          %v2309 = vmul.f32 %v2271, 1.442695
          %v2310 = vpow.pop %v2309
          %v2311 = vmul.f32 %v2272, 1.442695
          %v2312 = vpow.pop %v2311
          %v2313 = vmul.f32 %v2273, 1.442695
          %v2314 = vpow.pop %v2313
          %v2315 = vmul.f32 %v2274, 1.442695
          %v2316 = vpow.pop %v2315
          %v2317 = vmul.f32 %v2275, 1.442695
          %v2318 = vpow.pop %v2317
          %v2319 = vmul.f32 %v2276, 1.442695
          %v2320 = vpow.pop %v2319
          %v2321 = vmul.f32 %v2277, 1.442695
          %v2322 = vpow.pop %v2321
          %v2323 = vmul.f32 %v2278, 1.442695
          %v2324 = vpow.pop %v2323
          %v2325 = vmul.f32 %v2279, 1.442695
          %v2326 = vpow.pop %v2325
          %v2327 = vmul.f32 %v2280, 1.442695
          %v2328 = vpow.pop %v2327
          %v2329 = vmul.f32 %v2281, 1.442695
          %v2330 = vpow.pop %v2329
          %v2331 = vmul.f32 %v2282, 1.442695
          %v2332 = vpow.pop %v2331
          %v2333 = vmul.f32 %v2283, 1.442695
          %v2334 = vpow.pop %v2333
          %v2335 = vmul.f32 %v2284, 1.442695
          %v2336 = vpow.pop %v2335
          %v2337 = vmul.f32 %v2285, 1.442695
          %v2338 = vpow.pop %v2337
          %v2339 = vmul.f32 %v2286, 1.442695
          %v2340 = vpow.pop %v2339
          %v2341 = vmul.f32 %v2287, 1.442695
          %v2342 = vpow.pop %v2341
          %v2343 = vmul.f32 %v2288, 1.442695
          %v2344 = vpow.pop %v2343
          %v2345 = vmul.f32 %v2289, 1.442695
          %v2346 = vpow.pop %v2345
          %v2347 = vmul.f32 %v2290, 1.442695
          %v2348 = vpow.pop %v2347
          %v2349 = vmul.f32 %v2291, 1.442695
          %v2350 = vpow.pop %v2349
          %v2351 = vmul.f32 %v2292, 1.442695
          %v2352 = vpow.pop %v2351
          %v2353 = vmul.f32 %v2293, 1.442695
          %v2354 = vpow.pop %v2353
          %v2355 = vmul.f32 %v2294, 1.442695
          %v2356 = vpow.pop %v2355
          %v2357 = vmul.f32 %v2295, 1.442695
          %v2358 = vpow.pop %v2357
          %v2359 = vmul.f32 %v2296, 1.442695
          %v2360 = vpow.pop %v2359
          %v2361 = vsel %vm2168, %v2298, 0.0
          %2362 = vadd.xlane.f32.xlu0 %v2361
          %v2363 = vpop.xlane.xlu0 %2362
          %v2364 = vsel %vm2168, %v2300, 0.0
          %2365 = vadd.xlane.f32.xlu0 %v2364
          %v2366 = vpop.xlane.xlu0 %2365
          %v2367 = vsel %vm2168, %v2302, 0.0
          %2368 = vadd.xlane.f32.xlu0 %v2367
          %v2369 = vpop.xlane.xlu0 %2368
          %v2370 = vsel %vm2168, %v2304, 0.0
          %2371 = vadd.xlane.f32.xlu0 %v2370
          %v2372 = vpop.xlane.xlu0 %2371
          %v2373 = vsel %vm2168, %v2306, 0.0
          %2374 = vadd.xlane.f32.xlu0 %v2373
          %v2375 = vpop.xlane.xlu0 %2374
          %v2376 = vsel %vm2168, %v2308, 0.0
          %2377 = vadd.xlane.f32.xlu0 %v2376
          %v2378 = vpop.xlane.xlu0 %2377
          %v2379 = vsel %vm2168, %v2310, 0.0
          %2380 = vadd.xlane.f32.xlu0 %v2379
          %v2381 = vpop.xlane.xlu0 %2380
          %v2382 = vsel %vm2168, %v2312, 0.0
          %2383 = vadd.xlane.f32.xlu0 %v2382
          %v2384 = vpop.xlane.xlu0 %2383
          %v2385 = vsel %vm2168, %v2314, 0.0
          %2386 = vadd.xlane.f32.xlu0 %v2385
          %v2387 = vpop.xlane.xlu0 %2386
          %v2388 = vsel %vm2168, %v2316, 0.0
          %2389 = vadd.xlane.f32.xlu0 %v2388
          %v2390 = vpop.xlane.xlu0 %2389
          %v2391 = vsel %vm2168, %v2318, 0.0
          %2392 = vadd.xlane.f32.xlu0 %v2391
          %v2393 = vpop.xlane.xlu0 %2392
          %v2394 = vsel %vm2168, %v2320, 0.0
          %2395 = vadd.xlane.f32.xlu0 %v2394
          %v2396 = vpop.xlane.xlu0 %2395
          %v2397 = vsel %vm2168, %v2322, 0.0
          %2398 = vadd.xlane.f32.xlu0 %v2397
          %v2399 = vpop.xlane.xlu0 %2398
          %v2400 = vsel %vm2168, %v2324, 0.0
          %2401 = vadd.xlane.f32.xlu0 %v2400
          %v2402 = vpop.xlane.xlu0 %2401
          %v2403 = vsel %vm2168, %v2326, 0.0
          %2404 = vadd.xlane.f32.xlu0 %v2403
          %v2405 = vpop.xlane.xlu0 %2404
          %v2406 = vsel %vm2168, %v2328, 0.0
          %2407 = vadd.xlane.f32.xlu0 %v2406
          %v2408 = vpop.xlane.xlu0 %2407
          %v2409 = vsel %vm2168, %v2330, 0.0
          %2410 = vadd.xlane.f32.xlu0 %v2409
          %v2411 = vpop.xlane.xlu0 %2410
          %v2412 = vsel %vm2168, %v2332, 0.0
          %2413 = vadd.xlane.f32.xlu0 %v2412
          %v2414 = vpop.xlane.xlu0 %2413
          %v2415 = vsel %vm2168, %v2334, 0.0
          %2416 = vadd.xlane.f32.xlu0 %v2415
          %v2417 = vpop.xlane.xlu0 %2416
          %v2418 = vsel %vm2168, %v2336, 0.0
          %2419 = vadd.xlane.f32.xlu0 %v2418
          %v2420 = vpop.xlane.xlu0 %2419
          %v2421 = vsel %vm2168, %v2338, 0.0
          %2422 = vadd.xlane.f32.xlu0 %v2421
          %v2423 = vpop.xlane.xlu0 %2422
          %v2424 = vsel %vm2168, %v2340, 0.0
          %2425 = vadd.xlane.f32.xlu0 %v2424
          %v2426 = vpop.xlane.xlu0 %2425
          %v2427 = vsel %vm2168, %v2342, 0.0
          %2428 = vadd.xlane.f32.xlu0 %v2427
          %v2429 = vpop.xlane.xlu0 %2428
          %v2430 = vsel %vm2168, %v2344, 0.0
          %2431 = vadd.xlane.f32.xlu0 %v2430
          %v2432 = vpop.xlane.xlu0 %2431
          %v2433 = vsel %vm2168, %v2346, 0.0
          %2434 = vadd.xlane.f32.xlu0 %v2433
          %v2435 = vpop.xlane.xlu0 %2434
          %v2436 = vsel %vm2168, %v2348, 0.0
          %2437 = vadd.xlane.f32.xlu0 %v2436
          %v2438 = vpop.xlane.xlu0 %2437
          %v2439 = vsel %vm2168, %v2350, 0.0
          %2440 = vadd.xlane.f32.xlu0 %v2439
          %v2441 = vpop.xlane.xlu0 %2440
          %v2442 = vsel %vm2168, %v2352, 0.0
          %2443 = vadd.xlane.f32.xlu0 %v2442
          %v2444 = vpop.xlane.xlu0 %2443
          %v2445 = vsel %vm2168, %v2354, 0.0
          %2446 = vadd.xlane.f32.xlu0 %v2445
          %v2447 = vpop.xlane.xlu0 %2446
          %v2448 = vsel %vm2168, %v2356, 0.0
          %2449 = vadd.xlane.f32.xlu0 %v2448
          %v2450 = vpop.xlane.xlu0 %2449
          %v2451 = vsel %vm2168, %v2358, 0.0
          %2452 = vadd.xlane.f32.xlu0 %v2451
          %v2453 = vpop.xlane.xlu0 %2452
          %v2454 = vsel %vm2168, %v2360, 0.0
          %2455 = vadd.xlane.f32.xlu0 %v2454
          %v2456 = vpop.xlane.xlu0 %2455
          %v2457 = vpack.c.bf16 %v2300, %v2298
          %v2458 = vpack.c.bf16 %v2304, %v2302
          %v2459 = vpack.c.bf16 %v2308, %v2306
          %v2460 = vpack.c.bf16 %v2312, %v2310
          %v2461 = vpack.c.bf16 %v2316, %v2314
          %v2462 = vpack.c.bf16 %v2320, %v2318
          %v2463 = vpack.c.bf16 %v2324, %v2322
          %v2464 = vpack.c.bf16 %v2328, %v2326
          %v2465 = vpack.c.bf16 %v2332, %v2330
          %v2466 = vpack.c.bf16 %v2336, %v2334
          %v2467 = vpack.c.bf16 %v2340, %v2338
          %v2468 = vpack.c.bf16 %v2344, %v2342
          %v2469 = vpack.c.bf16 %v2348, %v2346
          %v2470 = vpack.c.bf16 %v2352, %v2350
          %v2471 = vpack.c.bf16 %v2356, %v2354
          %v2472 = vpack.c.bf16 %v2360, %v2358
          %v2474 = vsel %vm2168, %v2457, 0
          %v2477 = vsel %vm2168, %v2458, 0
          %v2480 = vsel %vm2168, %v2459, 0
          %v2483 = vsel %vm2168, %v2460, 0
          %2485 = vmatprep.subr.bf16.mxu0 0
          %2486 = vmatpush1.bf16.msra.mxu0 %v1796
          %2487 = vmatprep.subr.bf16.mxu0 0
          %2488 = vmatpush1.bf16.msra.mxu0 %v1797
          %2489 = vmatprep.subr.bf16.mxu0 0
          %2490 = vmatpush1.bf16.msra.mxu0 %v1798
          %2491 = vmatprep.subr.bf16.mxu0 0
          %2492 = vmatpush1.bf16.msra.mxu0 %v1799
          %2493 = vmatprep.subr.bf16.mxu0 0
          %2494 = vmatpush1.bf16.msra.mxu0 0
          %2495 = vmatprep.subr.bf16.mxu0 0
          %2496 = vmatpush1.bf16.msra.mxu0 0
          %2497 = vmatprep.subr.bf16.mxu0 0
          %2498 = vmatpush1.bf16.msra.mxu0 0
          %2499 = vmatprep.subr.bf16.mxu0 0
          %2500 = vmatpush1.bf16.msra.mxu0 0
          %2501 = vmatprep.subr.bf16.mxu0 0
          %2502 = vmatpush1.bf16.msra.mxu0 0
          %2503 = vmatprep.subr.bf16.mxu0 0
          %2504 = vmatpush1.bf16.msra.mxu0 0
          %2505 = vmatprep.subr.bf16.mxu0 0
          %2506 = vmatpush1.bf16.msra.mxu0 0
          %2507 = vmatprep.subr.bf16.mxu0 0
          %2508 = vmatpush1.bf16.msra.mxu0 0
          %2509 = vmatprep.subr.bf16.mxu0 0
          %2510 = vmatpush1.bf16.msra.mxu0 0
          %2511 = vmatprep.subr.bf16.mxu0 0
          %2512 = vmatpush1.bf16.msra.mxu0 0
          %2513 = vmatprep.subr.bf16.mxu0 0
          %2514 = vmatpush1.bf16.msra.mxu0 0
          %2515 = vmatprep.subr.bf16.mxu0 0
          %2516 = vmatpush1.bf16.msra.mxu0 0
          %2517 = vmatprep.mubr.bf16.mxu0 0
          %2518 = vmatmul.mubr.bf16.gmra.mrb[0].mxu0 %v2474
          %v2519 = vpop.f32.mrb[0].mxu0
          %v2520 = vadd.f32 0.0, %v2519
          %v2521 = vpop.f32.mrb[0].mxu0
          %v2522 = vpop.f32.mrb[0].mxu0
          %v2523 = vadd.f32 0.0, %v2522
          %v2524 = vpop.f32.mrb[0].mxu0
          %2525 = vmatprep.mubr.bf16.mxu0 0
          %2526 = vmatmul.mubr.bf16.gmra.mrb[0].mxu0 %v2477
          %v2527 = vpop.f32.mrb[0].mxu0
          %v2528 = vadd.f32 0.0, %v2527
          %v2529 = vpop.f32.mrb[0].mxu0
          %v2530 = vpop.f32.mrb[0].mxu0
          %v2531 = vadd.f32 0.0, %v2530
          %v2532 = vpop.f32.mrb[0].mxu0
          %2533 = vmatprep.mubr.bf16.mxu0 0
          %2534 = vmatmul.mubr.bf16.gmra.mrb[0].mxu0 %v2480
          %v2535 = vpop.f32.mrb[0].mxu0
          %v2536 = vadd.f32 0.0, %v2535
          %v2537 = vpop.f32.mrb[0].mxu0
          %v2538 = vpop.f32.mrb[0].mxu0
          %v2539 = vadd.f32 0.0, %v2538
          %v2540 = vpop.f32.mrb[0].mxu0
          %2541 = vmatprep.mubr.bf16.mxu0 0
          %2542 = vmatmul.mubr.bf16.gmra.mrb[0].mxu0 %v2483
          %v2543 = vpop.f32.mrb[0].mxu0
          %v2544 = vadd.f32 0.0, %v2543
          %v2545 = vpop.f32.mrb[0].mxu0
          %v2546 = vpop.f32.mrb[0].mxu0
          %v2547 = vadd.f32 0.0, %v2546
          %v2548 = vpop.f32.mrb[0].mxu0
          %2549 = vdwg.mxu0
          %v2551 = vsel %vm2168, %v2461, 0
          %v2554 = vsel %vm2168, %v2462, 0
          %v2557 = vsel %vm2168, %v2463, 0
          %v2560 = vsel %vm2168, %v2464, 0
          %2562 = vmatprep.subr.bf16.mxu0 0
          %2563 = vmatpush1.bf16.msra.mxu0 %v1800
          %2564 = vmatprep.subr.bf16.mxu0 0
          %2565 = vmatpush1.bf16.msra.mxu0 %v1801
          %2566 = vmatprep.subr.bf16.mxu0 0
          %2567 = vmatpush1.bf16.msra.mxu0 %v1802
          %2568 = vmatprep.subr.bf16.mxu0 0
          %2569 = vmatpush1.bf16.msra.mxu0 %v1803
          %2570 = vmatprep.subr.bf16.mxu0 0
          %2571 = vmatpush1.bf16.msra.mxu0 0
          %2572 = vmatprep.subr.bf16.mxu0 0
          %2573 = vmatpush1.bf16.msra.mxu0 0
          %2574 = vmatprep.subr.bf16.mxu0 0
          %2575 = vmatpush1.bf16.msra.mxu0 0
          %2576 = vmatprep.subr.bf16.mxu0 0
          %2577 = vmatpush1.bf16.msra.mxu0 0
          %2578 = vmatprep.subr.bf16.mxu0 0
          %2579 = vmatpush1.bf16.msra.mxu0 0
          %2580 = vmatprep.subr.bf16.mxu0 0
          %2581 = vmatpush1.bf16.msra.mxu0 0
          %2582 = vmatprep.subr.bf16.mxu0 0
          %2583 = vmatpush1.bf16.msra.mxu0 0
          %2584 = vmatprep.subr.bf16.mxu0 0
          %2585 = vmatpush1.bf16.msra.mxu0 0
          %2586 = vmatprep.subr.bf16.mxu0 0
          %2587 = vmatpush1.bf16.msra.mxu0 0
          %2588 = vmatprep.subr.bf16.mxu0 0
          %2589 = vmatpush1.bf16.msra.mxu0 0
          %2590 = vmatprep.subr.bf16.mxu0 0
          %2591 = vmatpush1.bf16.msra.mxu0 0
          %2592 = vmatprep.subr.bf16.mxu0 0
          %2593 = vmatpush1.bf16.msra.mxu0 0
          %2594 = vmatprep.mubr.bf16.mxu0 0
          %2595 = vmatmul.mubr.bf16.gmra.mrb[0].mxu0 %v2551
          %v2596 = vpop.f32.mrb[0].mxu0
          %v2597 = vadd.f32 0.0, %v2596
          %v2598 = vpop.f32.mrb[0].mxu0
          %v2599 = vpop.f32.mrb[0].mxu0
          %v2600 = vadd.f32 0.0, %v2599
          %v2601 = vpop.f32.mrb[0].mxu0
          %2602 = vmatprep.mubr.bf16.mxu0 0
          %2603 = vmatmul.mubr.bf16.gmra.mrb[0].mxu0 %v2554
          %v2604 = vpop.f32.mrb[0].mxu0
          %v2605 = vadd.f32 0.0, %v2604
          %v2606 = vpop.f32.mrb[0].mxu0
          %v2607 = vpop.f32.mrb[0].mxu0
          %v2608 = vadd.f32 0.0, %v2607
          %v2609 = vpop.f32.mrb[0].mxu0
          %2610 = vmatprep.mubr.bf16.mxu0 0
          %2611 = vmatmul.mubr.bf16.gmra.mrb[0].mxu0 %v2557
          %v2612 = vpop.f32.mrb[0].mxu0
          %v2613 = vadd.f32 0.0, %v2612
          %v2614 = vpop.f32.mrb[0].mxu0
          %v2615 = vpop.f32.mrb[0].mxu0
          %v2616 = vadd.f32 0.0, %v2615
          %v2617 = vpop.f32.mrb[0].mxu0
          %2618 = vmatprep.mubr.bf16.mxu0 0
          %2619 = vmatmul.mubr.bf16.gmra.mrb[0].mxu0 %v2560
          %v2620 = vpop.f32.mrb[0].mxu0
          %v2621 = vadd.f32 0.0, %v2620
          %v2622 = vpop.f32.mrb[0].mxu0
          %v2623 = vpop.f32.mrb[0].mxu0
          %v2624 = vadd.f32 0.0, %v2623
          %v2625 = vpop.f32.mrb[0].mxu0
          %2626 = vdwg.mxu0
          %v2628 = vsel %vm2168, %v2465, 0
          %v2631 = vsel %vm2168, %v2466, 0
          %v2634 = vsel %vm2168, %v2467, 0
          %v2637 = vsel %vm2168, %v2468, 0
          %2639 = vmatprep.subr.bf16.mxu0 0
          %2640 = vmatpush1.bf16.msra.mxu0 %v1804
          %2641 = vmatprep.subr.bf16.mxu0 0
          %2642 = vmatpush1.bf16.msra.mxu0 %v1805
          %2643 = vmatprep.subr.bf16.mxu0 0
          %2644 = vmatpush1.bf16.msra.mxu0 %v1806
          %2645 = vmatprep.subr.bf16.mxu0 0
          %2646 = vmatpush1.bf16.msra.mxu0 %v1807
          %2647 = vmatprep.subr.bf16.mxu0 0
          %2648 = vmatpush1.bf16.msra.mxu0 0
          %2649 = vmatprep.subr.bf16.mxu0 0
          %2650 = vmatpush1.bf16.msra.mxu0 0
          %2651 = vmatprep.subr.bf16.mxu0 0
          %2652 = vmatpush1.bf16.msra.mxu0 0
          %2653 = vmatprep.subr.bf16.mxu0 0
          %2654 = vmatpush1.bf16.msra.mxu0 0
          %2655 = vmatprep.subr.bf16.mxu0 0
          %2656 = vmatpush1.bf16.msra.mxu0 0
          %2657 = vmatprep.subr.bf16.mxu0 0
          %2658 = vmatpush1.bf16.msra.mxu0 0
          %2659 = vmatprep.subr.bf16.mxu0 0
          %2660 = vmatpush1.bf16.msra.mxu0 0
          %2661 = vmatprep.subr.bf16.mxu0 0
          %2662 = vmatpush1.bf16.msra.mxu0 0
          %2663 = vmatprep.subr.bf16.mxu0 0
          %2664 = vmatpush1.bf16.msra.mxu0 0
          %2665 = vmatprep.subr.bf16.mxu0 0
          %2666 = vmatpush1.bf16.msra.mxu0 0
          %2667 = vmatprep.subr.bf16.mxu0 0
          %2668 = vmatpush1.bf16.msra.mxu0 0
          %2669 = vmatprep.subr.bf16.mxu0 0
          %2670 = vmatpush1.bf16.msra.mxu0 0
          %2671 = vmatprep.mubr.bf16.mxu0 0
          %2672 = vmatmul.mubr.bf16.gmra.mrb[0].mxu0 %v2628
          %v2673 = vpop.f32.mrb[0].mxu0
          %v2674 = vadd.f32 0.0, %v2673
          %v2675 = vpop.f32.mrb[0].mxu0
          %v2676 = vpop.f32.mrb[0].mxu0
          %v2677 = vadd.f32 0.0, %v2676
          %v2678 = vpop.f32.mrb[0].mxu0
          %2679 = vmatprep.mubr.bf16.mxu0 0
          %2680 = vmatmul.mubr.bf16.gmra.mrb[0].mxu0 %v2631
          %v2681 = vpop.f32.mrb[0].mxu0
          %v2682 = vadd.f32 0.0, %v2681
          %v2683 = vpop.f32.mrb[0].mxu0
          %v2684 = vpop.f32.mrb[0].mxu0
          %v2685 = vadd.f32 0.0, %v2684
          %v2686 = vpop.f32.mrb[0].mxu0
          %2687 = vmatprep.mubr.bf16.mxu0 0
          %2688 = vmatmul.mubr.bf16.gmra.mrb[0].mxu0 %v2634
          %v2689 = vpop.f32.mrb[0].mxu0
          %v2690 = vadd.f32 0.0, %v2689
          %v2691 = vpop.f32.mrb[0].mxu0
          %v2692 = vpop.f32.mrb[0].mxu0
          %v2693 = vadd.f32 0.0, %v2692
          %v2694 = vpop.f32.mrb[0].mxu0
          %2695 = vmatprep.mubr.bf16.mxu0 0
          %2696 = vmatmul.mubr.bf16.gmra.mrb[0].mxu0 %v2637
          %v2697 = vpop.f32.mrb[0].mxu0
          %v2698 = vadd.f32 0.0, %v2697
          %v2699 = vpop.f32.mrb[0].mxu0
          %v2700 = vpop.f32.mrb[0].mxu0
          %v2701 = vadd.f32 0.0, %v2700
          %v2702 = vpop.f32.mrb[0].mxu0
          %2703 = vdwg.mxu0
          %v2705 = vsel %vm2168, %v2469, 0
          %v2708 = vsel %vm2168, %v2470, 0
          %v2711 = vsel %vm2168, %v2471, 0
          %v2714 = vsel %vm2168, %v2472, 0
          %2716 = vmatprep.subr.bf16.mxu0 0
          %2717 = vmatpush1.bf16.msra.mxu0 %v1808
          %2718 = vmatprep.subr.bf16.mxu0 0
          %2719 = vmatpush1.bf16.msra.mxu0 %v1809
          %2720 = vmatprep.subr.bf16.mxu0 0
          %2721 = vmatpush1.bf16.msra.mxu0 %v1810
          %2722 = vmatprep.subr.bf16.mxu0 0
          %2723 = vmatpush1.bf16.msra.mxu0 %v1811
          %2724 = vmatprep.subr.bf16.mxu0 0
          %2725 = vmatpush1.bf16.msra.mxu0 0
          %2726 = vmatprep.subr.bf16.mxu0 0
          %2727 = vmatpush1.bf16.msra.mxu0 0
          %2728 = vmatprep.subr.bf16.mxu0 0
          %2729 = vmatpush1.bf16.msra.mxu0 0
          %2730 = vmatprep.subr.bf16.mxu0 0
          %2731 = vmatpush1.bf16.msra.mxu0 0
          %2732 = vmatprep.subr.bf16.mxu0 0
          %2733 = vmatpush1.bf16.msra.mxu0 0
          %2734 = vmatprep.subr.bf16.mxu0 0
          %2735 = vmatpush1.bf16.msra.mxu0 0
          %2736 = vmatprep.subr.bf16.mxu0 0
          %2737 = vmatpush1.bf16.msra.mxu0 0
          %2738 = vmatprep.subr.bf16.mxu0 0
          %2739 = vmatpush1.bf16.msra.mxu0 0
          %2740 = vmatprep.subr.bf16.mxu0 0
          %2741 = vmatpush1.bf16.msra.mxu0 0
          %2742 = vmatprep.subr.bf16.mxu0 0
          %2743 = vmatpush1.bf16.msra.mxu0 0
          %2744 = vmatprep.subr.bf16.mxu0 0
          %2745 = vmatpush1.bf16.msra.mxu0 0
          %2746 = vmatprep.subr.bf16.mxu0 0
          %2747 = vmatpush1.bf16.msra.mxu0 0
          %2748 = vmatprep.mubr.bf16.mxu0 0
          %2749 = vmatmul.mubr.bf16.gmra.mrb[0].mxu0 %v2705
          %v2750 = vpop.f32.mrb[0].mxu0
          %v2751 = vadd.f32 0.0, %v2750
          %v2752 = vpop.f32.mrb[0].mxu0
          %v2753 = vpop.f32.mrb[0].mxu0
          %v2754 = vadd.f32 0.0, %v2753
          %v2755 = vpop.f32.mrb[0].mxu0
          %2756 = vmatprep.mubr.bf16.mxu0 0
          %2757 = vmatmul.mubr.bf16.gmra.mrb[0].mxu0 %v2708
          %v2758 = vpop.f32.mrb[0].mxu0
          %v2759 = vadd.f32 0.0, %v2758
          %v2760 = vpop.f32.mrb[0].mxu0
          %v2761 = vpop.f32.mrb[0].mxu0
          %v2762 = vadd.f32 0.0, %v2761
          %v2763 = vpop.f32.mrb[0].mxu0
          %2764 = vmatprep.mubr.bf16.mxu0 0
          %2765 = vmatmul.mubr.bf16.gmra.mrb[0].mxu0 %v2711
          %v2766 = vpop.f32.mrb[0].mxu0
          %v2767 = vadd.f32 0.0, %v2766
          %v2768 = vpop.f32.mrb[0].mxu0
          %v2769 = vpop.f32.mrb[0].mxu0
          %v2770 = vadd.f32 0.0, %v2769
          %v2771 = vpop.f32.mrb[0].mxu0
          %2772 = vmatprep.mubr.bf16.mxu0 0
          %2773 = vmatmul.mubr.bf16.gmra.mrb[0].mxu0 %v2714
          %v2774 = vpop.f32.mrb[0].mxu0
          %v2775 = vadd.f32 0.0, %v2774
          %v2776 = vpop.f32.mrb[0].mxu0
          %v2777 = vpop.f32.mrb[0].mxu0
          %v2778 = vadd.f32 0.0, %v2777
          %v2779 = vpop.f32.mrb[0].mxu0
          %2780 = vdwg.mxu0
          %v2781 = vrcp.pop %v2363
          %v2782 = vrcp.pop %v2366
          %v2783 = vrcp.pop %v2369
          %v2784 = vrcp.pop %v2372
          %v2785 = vrcp.pop %v2375
          %v2786 = vrcp.pop %v2378
          %v2787 = vrcp.pop %v2381
          %v2788 = vrcp.pop %v2384
          %v2789 = vrcp.pop %v2387
          %v2790 = vrcp.pop %v2390
          %v2791 = vrcp.pop %v2393
          %v2792 = vrcp.pop %v2396
          %v2793 = vrcp.pop %v2399
          %v2794 = vrcp.pop %v2402
          %v2795 = vrcp.pop %v2405
          %v2796 = vrcp.pop %v2408
          %v2797 = vrcp.pop %v2411
          %v2798 = vrcp.pop %v2414
          %v2799 = vrcp.pop %v2417
          %v2800 = vrcp.pop %v2420
          %v2801 = vrcp.pop %v2423
          %v2802 = vrcp.pop %v2426
          %v2803 = vrcp.pop %v2429
          %v2804 = vrcp.pop %v2432
          %v2805 = vrcp.pop %v2435
          %v2806 = vrcp.pop %v2438
          %v2807 = vrcp.pop %v2441
          %v2808 = vrcp.pop %v2444
          %v2809 = vrcp.pop %v2447
          %v2810 = vrcp.pop %v2450
          %v2811 = vrcp.pop %v2453
          %v2812 = vrcp.pop %v2456
          %v2813 = vmul.f32 %v2520, %v2781
          %v2814 = vmul.f32 %v2523, %v2782
          %v2815 = vmul.f32 %v2528, %v2783
          %v2816 = vmul.f32 %v2531, %v2784
          %v2817 = vmul.f32 %v2536, %v2785
          %v2818 = vmul.f32 %v2539, %v2786
          %v2819 = vmul.f32 %v2544, %v2787
          %v2820 = vmul.f32 %v2547, %v2788
          %v2821 = vmul.f32 %v2597, %v2789
          %v2822 = vmul.f32 %v2600, %v2790
          %v2823 = vmul.f32 %v2605, %v2791
          %v2824 = vmul.f32 %v2608, %v2792
          %v2825 = vmul.f32 %v2613, %v2793
          %v2826 = vmul.f32 %v2616, %v2794
          %v2827 = vmul.f32 %v2621, %v2795
          %v2828 = vmul.f32 %v2624, %v2796
          %v2829 = vmul.f32 %v2674, %v2797
          %v2830 = vmul.f32 %v2677, %v2798
          %v2831 = vmul.f32 %v2682, %v2799
          %v2832 = vmul.f32 %v2685, %v2800
          %v2833 = vmul.f32 %v2690, %v2801
          %v2834 = vmul.f32 %v2693, %v2802
          %v2835 = vmul.f32 %v2698, %v2803
          %v2836 = vmul.f32 %v2701, %v2804
          %v2837 = vmul.f32 %v2751, %v2805
          %v2838 = vmul.f32 %v2754, %v2806
          %v2839 = vmul.f32 %v2759, %v2807
          %v2840 = vmul.f32 %v2762, %v2808
          %v2841 = vmul.f32 %v2767, %v2809
          %v2842 = vmul.f32 %v2770, %v2810
          %v2843 = vmul.f32 %v2775, %v2811
          %v2844 = vmul.f32 %v2778, %v2812
          %v2845 = vpack.c.bf16 %v2814, %v2813
          %v2846 = vpack.c.bf16 %v2816, %v2815
          %v2847 = vpack.c.bf16 %v2818, %v2817
          %v2848 = vpack.c.bf16 %v2820, %v2819
          %2849 = vst.msk [vmem:[#allocation6] sm:$0xff] %vm1306, %v2845
          %2850 = vst.msk [vmem:[#allocation6 + $0x8] sm:$0xff] %vm1306, %v2846
          %2851 = vst.msk [vmem:[#allocation6 + $0x10] sm:$0xff] %vm1306, %v2847
          %2852 = vst.msk [vmem:[#allocation6 + $0x18] sm:$0xff] %vm1306, %v2848
          %v2853 = vpack.c.bf16 %v2822, %v2821
          %v2854 = vpack.c.bf16 %v2824, %v2823
          %v2855 = vpack.c.bf16 %v2826, %v2825
          %v2856 = vpack.c.bf16 %v2828, %v2827
          %2861 = vrot.lane.b32.xlu0 %v2853, 32
          %v2862 = vpop.permute.xlu0 %2861
          %2863 = vrot.lane.b32.xlu0 %v2854, 32
          %v2864 = vpop.permute.xlu0 %2863
          %2865 = vrot.lane.b32.xlu0 %v2855, 32
          %v2866 = vpop.permute.xlu0 %2865
          %2867 = vrot.lane.b32.xlu0 %v2856, 32
          %v2868 = vpop.permute.xlu0 %2867
          %vm2873 = vcmask 523520
          %2874 = vst.msk [vmem:[#allocation6] sm:$0xff] %vm2873, %v2862
          %2875 = vst.msk [vmem:[#allocation6 + $0x8] sm:$0xff] %vm2873, %v2864
          %2876 = vst.msk [vmem:[#allocation6 + $0x10] sm:$0xff] %vm2873, %v2866
          %2877 = vst.msk [vmem:[#allocation6 + $0x18] sm:$0xff] %vm2873, %v2868
          %v2878 = vpack.c.bf16 %v2830, %v2829
          %v2879 = vpack.c.bf16 %v2832, %v2831
          %v2880 = vpack.c.bf16 %v2834, %v2833
          %v2881 = vpack.c.bf16 %v2836, %v2835
          %2886 = vrot.lane.b32.xlu0 %v2878, 64
          %v2887 = vpop.permute.xlu0 %2886
          %2888 = vrot.lane.b32.xlu0 %v2879, 64
          %v2889 = vpop.permute.xlu0 %2888
          %2890 = vrot.lane.b32.xlu0 %v2880, 64
          %v2891 = vpop.permute.xlu0 %2890
          %2892 = vrot.lane.b32.xlu0 %v2881, 64
          %v2893 = vpop.permute.xlu0 %2892
          %vm2898 = vcmask 785920
          %2899 = vst.msk [vmem:[#allocation6] sm:$0xff] %vm2898, %v2887
          %2900 = vst.msk [vmem:[#allocation6 + $0x8] sm:$0xff] %vm2898, %v2889
          %2901 = vst.msk [vmem:[#allocation6 + $0x10] sm:$0xff] %vm2898, %v2891
          %2902 = vst.msk [vmem:[#allocation6 + $0x18] sm:$0xff] %vm2898, %v2893
          %v2903 = vpack.c.bf16 %v2838, %v2837
          %v2904 = vpack.c.bf16 %v2840, %v2839
          %v2905 = vpack.c.bf16 %v2842, %v2841
          %v2906 = vpack.c.bf16 %v2844, %v2843
          %2911 = vrot.lane.b32.xlu0 %v2903, 96
          %v2912 = vpop.permute.xlu0 %2911
          %2913 = vrot.lane.b32.xlu0 %v2904, 96
          %v2914 = vpop.permute.xlu0 %2913
          %2915 = vrot.lane.b32.xlu0 %v2905, 96
          %v2916 = vpop.permute.xlu0 %2915
          %2917 = vrot.lane.b32.xlu0 %v2906, 96
          %v2918 = vpop.permute.xlu0 %2917
          %vm2923 = vcmask 1048320
          %2924 = vst.msk [vmem:[#allocation6] sm:$0xff] %vm2923, %v2912
          %2925 = vst.msk [vmem:[#allocation6 + $0x8] sm:$0xff] %vm2923, %v2914
          %2926 = vst.msk [vmem:[#allocation6 + $0x10] sm:$0xff] %vm2923, %v2916
          %2927 = vst.msk [vmem:[#allocation6 + $0x18] sm:$0xff] %vm2923, %v2918
          %v2928 = vld [vmem:[#allocation6] sm:$0xff]
          %v2929 = vld [vmem:[#allocation6 + $0x8] sm:$0xff]
          %v2930 = vld [vmem:[#allocation6 + $0x10] sm:$0xff]
          %v2931 = vld [vmem:[#allocation6 + $0x18] sm:$0xff]
          %v2932 = vld [vmem:[%s823] sm:$0xf]
          %v2933 = vld [vmem:[%s823 + $0x4] sm:$0xf]
          %v2934 = vld [vmem:[%s823 + $0x8] sm:$0xf]
          %v2935 = vld [vmem:[%s823 + $0xc] sm:$0xf]
          %v2936 = vld [vmem:[%s823 + $0x10] sm:$0xf]
          %v2937 = vld [vmem:[%s823 + $0x14] sm:$0xf]
          %v2938 = vld [vmem:[%s823 + $0x18] sm:$0xf]
          %v2939 = vld [vmem:[%s823 + $0x1c] sm:$0xf]
          %v2940 = vld [vmem:[%s823 + $0x20] sm:$0xf]
          %v2941 = vld [vmem:[%s823 + $0x24] sm:$0xf]
          %v2942 = vld [vmem:[%s823 + $0x28] sm:$0xf]
          %v2943 = vld [vmem:[%s823 + $0x2c] sm:$0xf]
          %v2944 = vld [vmem:[%s823 + $0x30] sm:$0xf]
          %v2945 = vld [vmem:[%s823 + $0x34] sm:$0xf]
          %v2946 = vld [vmem:[%s823 + $0x38] sm:$0xf]
          %v2947 = vld [vmem:[%s823 + $0x3c] sm:$0xf]
          %v2948 = vld [vmem:[%s963] sm:$0x1]
          %v2950 = vlaneseq
          %v2951 = vshrl.u32 %v2950, 7
          %v2952 = vsub.s32 0, %v2951
          %v2953 = vrot.slane %v2948, %v2952
          %v2971 = vunpack.c.l.b16 %v2932
          %v2972 = vunpack.c.l.b16 %v2933
          %v2973 = vunpack.c.l.b16 %v2934
          %v2974 = vunpack.c.l.b16 %v2935
          %v2975 = vunpack.c.l.b16 %v2936
          %v2976 = vunpack.c.l.b16 %v2937
          %v2977 = vunpack.c.l.b16 %v2938
          %v2978 = vunpack.c.l.b16 %v2939
          %v2979 = vunpack.c.l.b16 %v2940
          %v2980 = vunpack.c.l.b16 %v2941
          %v2981 = vunpack.c.l.b16 %v2942
          %v2982 = vunpack.c.l.b16 %v2943
          %v2983 = vunpack.c.l.b16 %v2944
          %v2984 = vunpack.c.l.b16 %v2945
          %v2985 = vunpack.c.l.b16 %v2946
          %v2986 = vunpack.c.l.b16 %v2947
          %v2987 = vpack.c.b16 %v2972, %v2971
          %v2988 = vpack.c.b16 %v2974, %v2973
          %v2989 = vpack.c.b16 %v2976, %v2975
          %v2990 = vpack.c.b16 %v2978, %v2977
          %v2991 = vpack.c.b16 %v2980, %v2979
          %v2992 = vpack.c.b16 %v2982, %v2981
          %v2993 = vpack.c.b16 %v2984, %v2983
          %v2994 = vpack.c.b16 %v2986, %v2985
          %3003 = vmatprep.subr.bf16.mxu0 0
          %3004 = vmatpush1.bf16.msra.mxu0 %v2987
          %3005 = vmatprep.subr.bf16.mxu0 0
          %3006 = vmatpush1.bf16.msra.mxu0 %v2988
          %3007 = vmatprep.subr.bf16.mxu0 0
          %3008 = vmatpush1.bf16.msra.mxu0 %v2989
          %3009 = vmatprep.subr.bf16.mxu0 0
          %3010 = vmatpush1.bf16.msra.mxu0 %v2990
          %3011 = vmatprep.subr.bf16.mxu0 0
          %3012 = vmatpush1.bf16.msra.mxu0 %v2991
          %3013 = vmatprep.subr.bf16.mxu0 0
          %3014 = vmatpush1.bf16.msra.mxu0 %v2992
          %3015 = vmatprep.subr.bf16.mxu0 0
          %3016 = vmatpush1.bf16.msra.mxu0 %v2993
          %3017 = vmatprep.subr.bf16.mxu0 0
          %3018 = vmatpush1.bf16.msra.mxu0 %v2994
          %3019 = vmatprep.subr.bf16.mxu0 0
          %3020 = vmatpush1.bf16.msra.mxu0 0
          %3021 = vmatprep.subr.bf16.mxu0 0
          %3022 = vmatpush1.bf16.msra.mxu0 0
          %3023 = vmatprep.subr.bf16.mxu0 0
          %3024 = vmatpush1.bf16.msra.mxu0 0
          %3025 = vmatprep.subr.bf16.mxu0 0
          %3026 = vmatpush1.bf16.msra.mxu0 0
          %3027 = vmatprep.subr.bf16.mxu0 0
          %3028 = vmatpush1.bf16.msra.mxu0 0
          %3029 = vmatprep.subr.bf16.mxu0 0
          %3030 = vmatpush1.bf16.msra.mxu0 0
          %3031 = vmatprep.subr.bf16.mxu0 0
          %3032 = vmatpush1.bf16.msra.mxu0 0
          %3033 = vmatprep.subr.bf16.mxu0 0
          %3034 = vmatpush1.bf16.msra.mxu0 0
          %3035 = vmatprep.mubr.bf16.mxu0 0
          %3036 = vmatmul.mubr.bf16.gmra.mrb[0].mxu0 %v2928
          %v3037 = vpop.f32.mrb[0].mxu0
          %v3038 = vadd.f32 %v2953, %v3037
          %v3039 = vpop.f32.mrb[0].mxu0
          %v3040 = vpop.f32.mrb[0].mxu0
          %v3041 = vadd.f32 %v2953, %v3040
          %v3042 = vpop.f32.mrb[0].mxu0
          %3043 = vmatprep.mubr.bf16.mxu0 0
          %3044 = vmatmul.mubr.bf16.gmra.mrb[0].mxu0 %v2929
          %v3045 = vpop.f32.mrb[0].mxu0
          %v3046 = vadd.f32 %v2953, %v3045
          %v3047 = vpop.f32.mrb[0].mxu0
          %v3048 = vpop.f32.mrb[0].mxu0
          %v3049 = vadd.f32 %v2953, %v3048
          %v3050 = vpop.f32.mrb[0].mxu0
          %3051 = vmatprep.mubr.bf16.mxu0 0
          %3052 = vmatmul.mubr.bf16.gmra.mrb[0].mxu0 %v2930
          %v3053 = vpop.f32.mrb[0].mxu0
          %v3054 = vadd.f32 %v2953, %v3053
          %v3055 = vpop.f32.mrb[0].mxu0
          %v3056 = vpop.f32.mrb[0].mxu0
          %v3057 = vadd.f32 %v2953, %v3056
          %v3058 = vpop.f32.mrb[0].mxu0
          %3059 = vmatprep.mubr.bf16.mxu0 0
          %3060 = vmatmul.mubr.bf16.gmra.mrb[0].mxu0 %v2931
          %v3061 = vpop.f32.mrb[0].mxu0
          %v3062 = vadd.f32 %v2953, %v3061
          %v3063 = vpop.f32.mrb[0].mxu0
          %v3064 = vpop.f32.mrb[0].mxu0
          %v3065 = vadd.f32 %v2953, %v3064
          %v3066 = vpop.f32.mrb[0].mxu0
          %3067 = vdwg.mxu0
          %v3068 = vadd.f32 %v1027, %v3038
          %v3069 = vadd.f32 %v1028, %v3041
          %v3070 = vadd.f32 %v1029, %v3046
          %v3071 = vadd.f32 %v1030, %v3049
          %v3072 = vadd.f32 %v1031, %v3054
          %v3073 = vadd.f32 %v1032, %v3057
          %v3074 = vadd.f32 %v1033, %v3062
          %v3075 = vadd.f32 %v1034, %v3065
          %v3076 = vld [vmem:[%s966] sm:$0x1]
          %v3077 = vld [vmem:[%s969] sm:$0x1]
          %3078 = vadd.xlane.f32.xlu0 %v3068
          %v3079 = vpop.xlane.xlu0 %3078
          %3080 = vadd.xlane.f32.xlu0 %v3069
          %v3081 = vpop.xlane.xlu0 %3080
          %3082 = vadd.xlane.f32.xlu0 %v3070
          %v3083 = vpop.xlane.xlu0 %3082
          %3084 = vadd.xlane.f32.xlu0 %v3071
          %v3085 = vpop.xlane.xlu0 %3084
          %3086 = vadd.xlane.f32.xlu0 %v3072
          %v3087 = vpop.xlane.xlu0 %3086
          %3088 = vadd.xlane.f32.xlu0 %v3073
          %v3089 = vpop.xlane.xlu0 %3088
          %3090 = vadd.xlane.f32.xlu0 %v3074
          %v3091 = vpop.xlane.xlu0 %3090
          %3092 = vadd.xlane.f32.xlu0 %v3075
          %v3093 = vpop.xlane.xlu0 %3092
          %v3094 = vmul.f32 %v3079, %v1053
          %v3095 = vmul.f32 %v3081, %v1053
          %v3096 = vmul.f32 %v3083, %v1053
          %v3097 = vmul.f32 %v3085, %v1053
          %v3098 = vmul.f32 %v3087, %v1053
          %v3099 = vmul.f32 %v3089, %v1053
          %v3100 = vmul.f32 %v3091, %v1053
          %v3101 = vmul.f32 %v3093, %v1053
          %v3102 = vsub.f32 %v3068, %v3094
          %v3103 = vsub.f32 %v3069, %v3095
          %v3104 = vsub.f32 %v3070, %v3096
          %v3105 = vsub.f32 %v3071, %v3097
          %v3106 = vsub.f32 %v3072, %v3098
          %v3107 = vsub.f32 %v3073, %v3099
          %v3108 = vsub.f32 %v3074, %v3100
          %v3109 = vsub.f32 %v3075, %v3101
          %v3110 = vmul.f32 %v3102, %v3102
          %v3111 = vmul.f32 %v3103, %v3103
          %v3112 = vmul.f32 %v3104, %v3104
          %v3113 = vmul.f32 %v3105, %v3105
          %v3114 = vmul.f32 %v3106, %v3106
          %v3115 = vmul.f32 %v3107, %v3107
          %v3116 = vmul.f32 %v3108, %v3108
          %v3117 = vmul.f32 %v3109, %v3109
          %3118 = vadd.xlane.f32.xlu0 %v3110
          %v3119 = vpop.xlane.xlu0 %3118
          %3120 = vadd.xlane.f32.xlu0 %v3111
          %v3121 = vpop.xlane.xlu0 %3120
          %3122 = vadd.xlane.f32.xlu0 %v3112
          %v3123 = vpop.xlane.xlu0 %3122
          %3124 = vadd.xlane.f32.xlu0 %v3113
          %v3125 = vpop.xlane.xlu0 %3124
          %3126 = vadd.xlane.f32.xlu0 %v3114
          %v3127 = vpop.xlane.xlu0 %3126
          %3128 = vadd.xlane.f32.xlu0 %v3115
          %v3129 = vpop.xlane.xlu0 %3128
          %3130 = vadd.xlane.f32.xlu0 %v3116
          %v3131 = vpop.xlane.xlu0 %3130
          %3132 = vadd.xlane.f32.xlu0 %v3117
          %v3133 = vpop.xlane.xlu0 %3132
          %v3134 = vmul.f32 %v3119, %v1053
          %v3135 = vmul.f32 %v3121, %v1053
          %v3136 = vmul.f32 %v3123, %v1053
          %v3137 = vmul.f32 %v3125, %v1053
          %v3138 = vmul.f32 %v3127, %v1053
          %v3139 = vmul.f32 %v3129, %v1053
          %v3140 = vmul.f32 %v3131, %v1053
          %v3141 = vmul.f32 %v3133, %v1053
          %v3142 = vadd.f32 %v3134, 1e-06
          %v3143 = vadd.f32 %v3135, 1e-06
          %v3144 = vadd.f32 %v3136, 1e-06
          %v3145 = vadd.f32 %v3137, 1e-06
          %v3146 = vadd.f32 %v3138, 1e-06
          %v3147 = vadd.f32 %v3139, 1e-06
          %v3148 = vadd.f32 %v3140, 1e-06
          %v3149 = vadd.f32 %v3141, 1e-06
          %v3150 = vrsqrt.pop %v3142
          %v3151 = vrsqrt.pop %v3143
          %v3152 = vrsqrt.pop %v3144
          %v3153 = vrsqrt.pop %v3145
          %v3154 = vrsqrt.pop %v3146
          %v3155 = vrsqrt.pop %v3147
          %v3156 = vrsqrt.pop %v3148
          %v3157 = vrsqrt.pop %v3149
          %v3158 = vmul.f32 %v3102, %v3150
          %v3159 = vmul.f32 %v3103, %v3151
          %v3160 = vmul.f32 %v3104, %v3152
          %v3161 = vmul.f32 %v3105, %v3153
          %v3162 = vmul.f32 %v3106, %v3154
          %v3163 = vmul.f32 %v3107, %v3155
          %v3164 = vmul.f32 %v3108, %v3156
          %v3165 = vmul.f32 %v3109, %v3157
          %v3167 = vlaneseq
          %v3168 = vshrl.u32 %v3167, 7
          %v3169 = vsub.s32 0, %v3168
          %v3170 = vrot.slane %v3076, %v3169
          %v3172 = vmul.f32 %v3158, %v3170
          %v3173 = vmul.f32 %v3159, %v3170
          %v3174 = vmul.f32 %v3160, %v3170
          %v3175 = vmul.f32 %v3161, %v3170
          %v3176 = vmul.f32 %v3162, %v3170
          %v3177 = vmul.f32 %v3163, %v3170
          %v3178 = vmul.f32 %v3164, %v3170
          %v3179 = vmul.f32 %v3165, %v3170
          %v3181 = vlaneseq
          %v3182 = vshrl.u32 %v3181, 7
          %v3183 = vsub.s32 0, %v3182
          %v3184 = vrot.slane %v3077, %v3183
          %v3186 = vadd.f32 %v3172, %v3184
          %v3187 = vadd.f32 %v3173, %v3184
          %v3188 = vadd.f32 %v3174, %v3184
          %v3189 = vadd.f32 %v3175, %v3184
          %v3190 = vadd.f32 %v3176, %v3184
          %v3191 = vadd.f32 %v3177, %v3184
          %v3192 = vadd.f32 %v3178, %v3184
          %v3193 = vadd.f32 %v3179, %v3184
          %v3194 = vpack.c.bf16 %v3187, %v3186
          %v3195 = vpack.c.bf16 %v3189, %v3188
          %v3196 = vpack.c.bf16 %v3191, %v3190
          %v3197 = vpack.c.bf16 %v3193, %v3192
          %3198 = vst [vmem:[#allocation2] sm:$0xff] %v3194
          %3199 = vst [vmem:[#allocation2 + $0x8] sm:$0xff] %v3195
          %3200 = vst [vmem:[#allocation2 + $0x10] sm:$0xff] %v3196
          %3201 = vst [vmem:[#allocation2 + $0x18] sm:$0xff] %v3197
          %v3202 = vld [vmem:[%s983] sm:$0x1]
          %v3204 = vlaneseq
          %v3205 = vshrl.u32 %v3204, 7
          %v3206 = vsub.s32 0, %v3205
          %v3207 = vrot.slane %v3202, %v3206
          %v3209 = vadd.f32 %v3068, %v3207
          %v3210 = vadd.f32 %v3069, %v3207
          %v3211 = vadd.f32 %v3070, %v3207
          %v3212 = vadd.f32 %v3071, %v3207
          %v3213 = vadd.f32 %v3072, %v3207
          %v3214 = vadd.f32 %v3073, %v3207
          %v3215 = vadd.f32 %v3074, %v3207
          %v3216 = vadd.f32 %v3075, %v3207
          %3217 = vst [vmem:[#allocation21] sm:$0xff] %v3209
          %3218 = vst [vmem:[#allocation21 + $0x8] sm:$0xff] %v3210
          %3219 = vst [vmem:[#allocation21 + $0x10] sm:$0xff] %v3211
          %3220 = vst [vmem:[#allocation21 + $0x18] sm:$0xff] %v3212
          %3221 = vst [vmem:[#allocation21 + $0x20] sm:$0xff] %v3213
          %3222 = vst [vmem:[#allocation21 + $0x28] sm:$0xff] %v3214
          %3223 = vst [vmem:[#allocation21 + $0x30] sm:$0xff] %v3215
          %3224 = vst [vmem:[#allocation21 + $0x38] sm:$0xff] %v3216
          %s3225 = scalar_lea.vmem [#allocation21], 64
          %v3226 = vld [vmem:[%s3225] sm:$0xff]
          %v3227 = vld [vmem:[%s3225 + $0x8] sm:$0xff]
          %v3228 = vld [vmem:[%s3225 + $0x10] sm:$0xff]
          %v3229 = vld [vmem:[%s3225 + $0x18] sm:$0xff]
          %v3230 = vld [vmem:[%s3225 + $0x20] sm:$0xff]
          %v3231 = vld [vmem:[%s3225 + $0x28] sm:$0xff]
          %v3232 = vld [vmem:[%s3225 + $0x30] sm:$0xff]
          %v3233 = vld [vmem:[%s3225 + $0x38] sm:$0xff]
          %v3234 = vld [vmem:[%s951] sm:$0x1]
          %v3235 = vld [vmem:[%s787] sm:$0x1]
          %3236 = vadd.xlane.f32.xlu0 %v3226
          %v3237 = vpop.xlane.xlu0 %3236
          %3238 = vadd.xlane.f32.xlu0 %v3227
          %v3239 = vpop.xlane.xlu0 %3238
          %3240 = vadd.xlane.f32.xlu0 %v3228
          %v3241 = vpop.xlane.xlu0 %3240
          %3242 = vadd.xlane.f32.xlu0 %v3229
          %v3243 = vpop.xlane.xlu0 %3242
          %3244 = vadd.xlane.f32.xlu0 %v3230
          %v3245 = vpop.xlane.xlu0 %3244
          %3246 = vadd.xlane.f32.xlu0 %v3231
          %v3247 = vpop.xlane.xlu0 %3246
          %3248 = vadd.xlane.f32.xlu0 %v3232
          %v3249 = vpop.xlane.xlu0 %3248
          %3250 = vadd.xlane.f32.xlu0 %v3233
          %v3251 = vpop.xlane.xlu0 %3250
          %v3252 = vmul.f32 %v3237, %v1053
          %v3253 = vmul.f32 %v3239, %v1053
          %v3254 = vmul.f32 %v3241, %v1053
          %v3255 = vmul.f32 %v3243, %v1053
          %v3256 = vmul.f32 %v3245, %v1053
          %v3257 = vmul.f32 %v3247, %v1053
          %v3258 = vmul.f32 %v3249, %v1053
          %v3259 = vmul.f32 %v3251, %v1053
          %v3260 = vsub.f32 %v3226, %v3252
          %v3261 = vsub.f32 %v3227, %v3253
          %v3262 = vsub.f32 %v3228, %v3254
          %v3263 = vsub.f32 %v3229, %v3255
          %v3264 = vsub.f32 %v3230, %v3256
          %v3265 = vsub.f32 %v3231, %v3257
          %v3266 = vsub.f32 %v3232, %v3258
          %v3267 = vsub.f32 %v3233, %v3259
          %v3268 = vmul.f32 %v3260, %v3260
          %v3269 = vmul.f32 %v3261, %v3261
          %v3270 = vmul.f32 %v3262, %v3262
          %v3271 = vmul.f32 %v3263, %v3263
          %v3272 = vmul.f32 %v3264, %v3264
          %v3273 = vmul.f32 %v3265, %v3265
          %v3274 = vmul.f32 %v3266, %v3266
          %v3275 = vmul.f32 %v3267, %v3267
          %3276 = vadd.xlane.f32.xlu0 %v3268
          %v3277 = vpop.xlane.xlu0 %3276
          %3278 = vadd.xlane.f32.xlu0 %v3269
          %v3279 = vpop.xlane.xlu0 %3278
          %3280 = vadd.xlane.f32.xlu0 %v3270
          %v3281 = vpop.xlane.xlu0 %3280
          %3282 = vadd.xlane.f32.xlu0 %v3271
          %v3283 = vpop.xlane.xlu0 %3282
          %3284 = vadd.xlane.f32.xlu0 %v3272
          %v3285 = vpop.xlane.xlu0 %3284
          %3286 = vadd.xlane.f32.xlu0 %v3273
          %v3287 = vpop.xlane.xlu0 %3286
          %3288 = vadd.xlane.f32.xlu0 %v3274
          %v3289 = vpop.xlane.xlu0 %3288
          %3290 = vadd.xlane.f32.xlu0 %v3275
          %v3291 = vpop.xlane.xlu0 %3290
          %v3292 = vmul.f32 %v3277, %v1053
          %v3293 = vmul.f32 %v3279, %v1053
          %v3294 = vmul.f32 %v3281, %v1053
          %v3295 = vmul.f32 %v3283, %v1053
          %v3296 = vmul.f32 %v3285, %v1053
          %v3297 = vmul.f32 %v3287, %v1053
          %v3298 = vmul.f32 %v3289, %v1053
          %v3299 = vmul.f32 %v3291, %v1053
          %v3300 = vadd.f32 %v3292, 1e-06
          %v3301 = vadd.f32 %v3293, 1e-06
          %v3302 = vadd.f32 %v3294, 1e-06
          %v3303 = vadd.f32 %v3295, 1e-06
          %v3304 = vadd.f32 %v3296, 1e-06
          %v3305 = vadd.f32 %v3297, 1e-06
          %v3306 = vadd.f32 %v3298, 1e-06
          %v3307 = vadd.f32 %v3299, 1e-06
          %v3308 = vrsqrt.pop %v3300
          %v3309 = vrsqrt.pop %v3301
          %v3310 = vrsqrt.pop %v3302
          %v3311 = vrsqrt.pop %v3303
          %v3312 = vrsqrt.pop %v3304
          %v3313 = vrsqrt.pop %v3305
          %v3314 = vrsqrt.pop %v3306
          %v3315 = vrsqrt.pop %v3307
          %v3316 = vmul.f32 %v3260, %v3308
          %v3317 = vmul.f32 %v3261, %v3309
          %v3318 = vmul.f32 %v3262, %v3310
          %v3319 = vmul.f32 %v3263, %v3311
          %v3320 = vmul.f32 %v3264, %v3312
          %v3321 = vmul.f32 %v3265, %v3313
          %v3322 = vmul.f32 %v3266, %v3314
          %v3323 = vmul.f32 %v3267, %v3315
          %v3325 = vlaneseq
          %v3326 = vshrl.u32 %v3325, 7
          %v3327 = vsub.s32 0, %v3326
          %v3328 = vrot.slane %v3234, %v3327
          %v3330 = vmul.f32 %v3316, %v3328
          %v3331 = vmul.f32 %v3317, %v3328
          %v3332 = vmul.f32 %v3318, %v3328
          %v3333 = vmul.f32 %v3319, %v3328
          %v3334 = vmul.f32 %v3320, %v3328
          %v3335 = vmul.f32 %v3321, %v3328
          %v3336 = vmul.f32 %v3322, %v3328
          %v3337 = vmul.f32 %v3323, %v3328
          %v3339 = vlaneseq
          %v3340 = vshrl.u32 %v3339, 7
          %v3341 = vsub.s32 0, %v3340
          %v3342 = vrot.slane %v3235, %v3341
          %v3344 = vadd.f32 %v3330, %v3342
          %v3345 = vadd.f32 %v3331, %v3342
          %v3346 = vadd.f32 %v3332, %v3342
          %v3347 = vadd.f32 %v3333, %v3342
          %v3348 = vadd.f32 %v3334, %v3342
          %v3349 = vadd.f32 %v3335, %v3342
          %v3350 = vadd.f32 %v3336, %v3342
          %v3351 = vadd.f32 %v3337, %v3342
          %v3352 = vpack.c.bf16 %v3345, %v3344
          %v3353 = vpack.c.bf16 %v3347, %v3346
          %v3354 = vpack.c.bf16 %v3349, %v3348
          %v3355 = vpack.c.bf16 %v3351, %v3350
          %v3356 = vld [vmem:[%s796] sm:$0xf]
          %v3357 = vld [vmem:[%s796 + $0x4] sm:$0xf]
          %v3358 = vld [vmem:[%s796 + $0x8] sm:$0xf]
          %v3359 = vld [vmem:[%s796 + $0xc] sm:$0xf]
          %v3360 = vld [vmem:[%s796 + $0x10] sm:$0xf]
          %v3361 = vld [vmem:[%s796 + $0x14] sm:$0xf]
          %v3362 = vld [vmem:[%s796 + $0x18] sm:$0xf]
          %v3363 = vld [vmem:[%s796 + $0x1c] sm:$0xf]
          %v3364 = vld [vmem:[%s796 + $0x20] sm:$0xf]
          %v3365 = vld [vmem:[%s796 + $0x24] sm:$0xf]
          %v3366 = vld [vmem:[%s796 + $0x28] sm:$0xf]
          %v3367 = vld [vmem:[%s796 + $0x2c] sm:$0xf]
          %v3368 = vld [vmem:[%s796 + $0x30] sm:$0xf]
          %v3369 = vld [vmem:[%s796 + $0x34] sm:$0xf]
          %v3370 = vld [vmem:[%s796 + $0x38] sm:$0xf]
          %v3371 = vld [vmem:[%s796 + $0x3c] sm:$0xf]
          %v3372 = vld [vmem:[%s954] sm:$0x1]
          %v3374 = vlaneseq
          %v3375 = vshrl.u32 %v3374, 7
          %v3376 = vsub.s32 0, %v3375
          %v3377 = vrot.slane %v3372, %v3376
          %v3395 = vunpack.c.l.b16 %v3356
          %v3396 = vunpack.c.l.b16 %v3357
          %v3397 = vunpack.c.l.b16 %v3358
          %v3398 = vunpack.c.l.b16 %v3359
          %v3399 = vunpack.c.l.b16 %v3360
          %v3400 = vunpack.c.l.b16 %v3361
          %v3401 = vunpack.c.l.b16 %v3362
          %v3402 = vunpack.c.l.b16 %v3363
          %v3403 = vunpack.c.l.b16 %v3364
          %v3404 = vunpack.c.l.b16 %v3365
          %v3405 = vunpack.c.l.b16 %v3366
          %v3406 = vunpack.c.l.b16 %v3367
          %v3407 = vunpack.c.l.b16 %v3368
          %v3408 = vunpack.c.l.b16 %v3369
          %v3409 = vunpack.c.l.b16 %v3370
          %v3410 = vunpack.c.l.b16 %v3371
          %v3411 = vpack.c.b16 %v3396, %v3395
          %v3412 = vpack.c.b16 %v3398, %v3397
          %v3413 = vpack.c.b16 %v3400, %v3399
          %v3414 = vpack.c.b16 %v3402, %v3401
          %v3415 = vpack.c.b16 %v3404, %v3403
          %v3416 = vpack.c.b16 %v3406, %v3405
          %v3417 = vpack.c.b16 %v3408, %v3407
          %v3418 = vpack.c.b16 %v3410, %v3409
          %3427 = vmatprep.subr.bf16.mxu0 0
          %3428 = vmatpush1.bf16.msra.mxu0 %v3411
          %3429 = vmatprep.subr.bf16.mxu0 0
          %3430 = vmatpush1.bf16.msra.mxu0 %v3412
          %3431 = vmatprep.subr.bf16.mxu0 0
          %3432 = vmatpush1.bf16.msra.mxu0 %v3413
          %3433 = vmatprep.subr.bf16.mxu0 0
          %3434 = vmatpush1.bf16.msra.mxu0 %v3414
          %3435 = vmatprep.subr.bf16.mxu0 0
          %3436 = vmatpush1.bf16.msra.mxu0 %v3415
          %3437 = vmatprep.subr.bf16.mxu0 0
          %3438 = vmatpush1.bf16.msra.mxu0 %v3416
          %3439 = vmatprep.subr.bf16.mxu0 0
          %3440 = vmatpush1.bf16.msra.mxu0 %v3417
          %3441 = vmatprep.subr.bf16.mxu0 0
          %3442 = vmatpush1.bf16.msra.mxu0 %v3418
          %3443 = vmatprep.subr.bf16.mxu0 0
          %3444 = vmatpush1.bf16.msra.mxu0 0
          %3445 = vmatprep.subr.bf16.mxu0 0
          %3446 = vmatpush1.bf16.msra.mxu0 0
          %3447 = vmatprep.subr.bf16.mxu0 0
          %3448 = vmatpush1.bf16.msra.mxu0 0
          %3449 = vmatprep.subr.bf16.mxu0 0
          %3450 = vmatpush1.bf16.msra.mxu0 0
          %3451 = vmatprep.subr.bf16.mxu0 0
          %3452 = vmatpush1.bf16.msra.mxu0 0
          %3453 = vmatprep.subr.bf16.mxu0 0
          %3454 = vmatpush1.bf16.msra.mxu0 0
          %3455 = vmatprep.subr.bf16.mxu0 0
          %3456 = vmatpush1.bf16.msra.mxu0 0
          %3457 = vmatprep.subr.bf16.mxu0 0
          %3458 = vmatpush1.bf16.msra.mxu0 0
          %3459 = vmatprep.mubr.bf16.mxu0 0
          %3460 = vmatmul.mubr.bf16.gmra.mrb[0].mxu0 %v3352
          %v3461 = vpop.f32.mrb[0].mxu0
          %v3462 = vadd.f32 %v3377, %v3461
          %v3463 = vpop.f32.mrb[0].mxu0
          %v3464 = vpop.f32.mrb[0].mxu0
          %v3465 = vadd.f32 %v3377, %v3464
          %v3466 = vpop.f32.mrb[0].mxu0
          %3467 = vmatprep.mubr.bf16.mxu0 0
          %3468 = vmatmul.mubr.bf16.gmra.mrb[0].mxu0 %v3353
          %v3469 = vpop.f32.mrb[0].mxu0
          %v3470 = vadd.f32 %v3377, %v3469
          %v3471 = vpop.f32.mrb[0].mxu0
          %v3472 = vpop.f32.mrb[0].mxu0
          %v3473 = vadd.f32 %v3377, %v3472
          %v3474 = vpop.f32.mrb[0].mxu0
          %3475 = vmatprep.mubr.bf16.mxu0 0
          %3476 = vmatmul.mubr.bf16.gmra.mrb[0].mxu0 %v3354
          %v3477 = vpop.f32.mrb[0].mxu0
          %v3478 = vadd.f32 %v3377, %v3477
          %v3479 = vpop.f32.mrb[0].mxu0
          %v3480 = vpop.f32.mrb[0].mxu0
          %v3481 = vadd.f32 %v3377, %v3480
          %v3482 = vpop.f32.mrb[0].mxu0
          %3483 = vmatprep.mubr.bf16.mxu0 0
          %3484 = vmatmul.mubr.bf16.gmra.mrb[0].mxu0 %v3355
          %v3485 = vpop.f32.mrb[0].mxu0
          %v3486 = vadd.f32 %v3377, %v3485
          %v3487 = vpop.f32.mrb[0].mxu0
          %v3488 = vpop.f32.mrb[0].mxu0
          %v3489 = vadd.f32 %v3377, %v3488
          %v3490 = vpop.f32.mrb[0].mxu0
          %3491 = vdwg.mxu0
          %v3492 = vmul.f32 %v3462, 0.17677669
          %v3493 = vmul.f32 %v3465, 0.17677669
          %v3494 = vmul.f32 %v3470, 0.17677669
          %v3495 = vmul.f32 %v3473, 0.17677669
          %v3496 = vmul.f32 %v3478, 0.17677669
          %v3497 = vmul.f32 %v3481, 0.17677669
          %v3498 = vmul.f32 %v3486, 0.17677669
          %v3499 = vmul.f32 %v3489, 0.17677669
          %v3500 = vpack.c.bf16 %v3493, %v3492
          %v3501 = vpack.c.bf16 %v3495, %v3494
          %v3502 = vpack.c.bf16 %v3497, %v3496
          %v3503 = vpack.c.bf16 %v3499, %v3498
          %3504 = vst.msk [vmem:[#allocation3] sm:$0xff] %vm1306, %v3500
          %3505 = vst.msk [vmem:[#allocation3 + $0x8] sm:$0xff] %vm1306, %v3501
          %3506 = vst.msk [vmem:[#allocation3 + $0x10] sm:$0xff] %vm1306, %v3502
          %3507 = vst.msk [vmem:[#allocation3 + $0x18] sm:$0xff] %vm1306, %v3503
          %3512 = vrot.lane.b32.xlu0 %v3500, 96
          %v3513 = vpop.permute.xlu0 %3512
          %3514 = vrot.lane.b32.xlu0 %v3501, 96
          %v3515 = vpop.permute.xlu0 %3514
          %3516 = vrot.lane.b32.xlu0 %v3502, 96
          %v3517 = vpop.permute.xlu0 %3516
          %3518 = vrot.lane.b32.xlu0 %v3503, 96
          %v3519 = vpop.permute.xlu0 %3518
          %3524 = vst.msk [vmem:[%s1327] sm:$0xff] %vm1306, %v3513
          %3525 = vst.msk [vmem:[%s1327 + $0x8] sm:$0xff] %vm1306, %v3515
          %3526 = vst.msk [vmem:[%s1327 + $0x10] sm:$0xff] %vm1306, %v3517
          %3527 = vst.msk [vmem:[%s1327 + $0x18] sm:$0xff] %vm1306, %v3519
          %3528 = vrot.lane.b32.xlu0 %v3500, 64
          %v3529 = vpop.permute.xlu0 %3528
          %3530 = vrot.lane.b32.xlu0 %v3501, 64
          %v3531 = vpop.permute.xlu0 %3530
          %3532 = vrot.lane.b32.xlu0 %v3502, 64
          %v3533 = vpop.permute.xlu0 %3532
          %3534 = vrot.lane.b32.xlu0 %v3503, 64
          %v3535 = vpop.permute.xlu0 %3534
          %3540 = vst.msk [vmem:[%s1344] sm:$0xff] %vm1306, %v3529
          %3541 = vst.msk [vmem:[%s1344 + $0x8] sm:$0xff] %vm1306, %v3531
          %3542 = vst.msk [vmem:[%s1344 + $0x10] sm:$0xff] %vm1306, %v3533
          %3543 = vst.msk [vmem:[%s1344 + $0x18] sm:$0xff] %vm1306, %v3535
          %3544 = vrot.lane.b32.xlu0 %v3500, 32
          %v3545 = vpop.permute.xlu0 %3544
          %3546 = vrot.lane.b32.xlu0 %v3501, 32
          %v3547 = vpop.permute.xlu0 %3546
          %3548 = vrot.lane.b32.xlu0 %v3502, 32
          %v3549 = vpop.permute.xlu0 %3548
          %3550 = vrot.lane.b32.xlu0 %v3503, 32
          %v3551 = vpop.permute.xlu0 %3550
          %3556 = vst.msk [vmem:[%s1361] sm:$0xff] %vm1306, %v3545
          %3557 = vst.msk [vmem:[%s1361 + $0x8] sm:$0xff] %vm1306, %v3547
          %3558 = vst.msk [vmem:[%s1361 + $0x10] sm:$0xff] %vm1306, %v3549
          %3559 = vst.msk [vmem:[%s1361 + $0x18] sm:$0xff] %vm1306, %v3551
          %v3560 = vld [vmem:[%s805] sm:$0xf]
          %v3561 = vld [vmem:[%s805 + $0x4] sm:$0xf]
          %v3562 = vld [vmem:[%s805 + $0x8] sm:$0xf]
          %v3563 = vld [vmem:[%s805 + $0xc] sm:$0xf]
          %v3564 = vld [vmem:[%s805 + $0x10] sm:$0xf]
          %v3565 = vld [vmem:[%s805 + $0x14] sm:$0xf]
          %v3566 = vld [vmem:[%s805 + $0x18] sm:$0xf]
          %v3567 = vld [vmem:[%s805 + $0x1c] sm:$0xf]
          %v3568 = vld [vmem:[%s805 + $0x20] sm:$0xf]
          %v3569 = vld [vmem:[%s805 + $0x24] sm:$0xf]
          %v3570 = vld [vmem:[%s805 + $0x28] sm:$0xf]
          %v3571 = vld [vmem:[%s805 + $0x2c] sm:$0xf]
          %v3572 = vld [vmem:[%s805 + $0x30] sm:$0xf]
          %v3573 = vld [vmem:[%s805 + $0x34] sm:$0xf]
          %v3574 = vld [vmem:[%s805 + $0x38] sm:$0xf]
          %v3575 = vld [vmem:[%s805 + $0x3c] sm:$0xf]
          %v3576 = vld [vmem:[%s957] sm:$0x1]
          %v3578 = vlaneseq
          %v3579 = vshrl.u32 %v3578, 7
          %v3580 = vsub.s32 0, %v3579
          %v3581 = vrot.slane %v3576, %v3580
          %v3599 = vunpack.c.l.b16 %v3560
          %v3600 = vunpack.c.l.b16 %v3561
          %v3601 = vunpack.c.l.b16 %v3562
          %v3602 = vunpack.c.l.b16 %v3563
          %v3603 = vunpack.c.l.b16 %v3564
          %v3604 = vunpack.c.l.b16 %v3565
          %v3605 = vunpack.c.l.b16 %v3566
          %v3606 = vunpack.c.l.b16 %v3567
          %v3607 = vunpack.c.l.b16 %v3568
          %v3608 = vunpack.c.l.b16 %v3569
          %v3609 = vunpack.c.l.b16 %v3570
          %v3610 = vunpack.c.l.b16 %v3571
          %v3611 = vunpack.c.l.b16 %v3572
          %v3612 = vunpack.c.l.b16 %v3573
          %v3613 = vunpack.c.l.b16 %v3574
          %v3614 = vunpack.c.l.b16 %v3575
          %v3615 = vpack.c.b16 %v3600, %v3599
          %v3616 = vpack.c.b16 %v3602, %v3601
          %v3617 = vpack.c.b16 %v3604, %v3603
          %v3618 = vpack.c.b16 %v3606, %v3605
          %v3619 = vpack.c.b16 %v3608, %v3607
          %v3620 = vpack.c.b16 %v3610, %v3609
          %v3621 = vpack.c.b16 %v3612, %v3611
          %v3622 = vpack.c.b16 %v3614, %v3613
          %3631 = vmatprep.subr.bf16.mxu0 0
          %3632 = vmatpush1.bf16.msra.mxu0 %v3615
          %3633 = vmatprep.subr.bf16.mxu0 0
          %3634 = vmatpush1.bf16.msra.mxu0 %v3616
          %3635 = vmatprep.subr.bf16.mxu0 0
          %3636 = vmatpush1.bf16.msra.mxu0 %v3617
          %3637 = vmatprep.subr.bf16.mxu0 0
          %3638 = vmatpush1.bf16.msra.mxu0 %v3618
          %3639 = vmatprep.subr.bf16.mxu0 0
          %3640 = vmatpush1.bf16.msra.mxu0 %v3619
          %3641 = vmatprep.subr.bf16.mxu0 0
          %3642 = vmatpush1.bf16.msra.mxu0 %v3620
          %3643 = vmatprep.subr.bf16.mxu0 0
          %3644 = vmatpush1.bf16.msra.mxu0 %v3621
          %3645 = vmatprep.subr.bf16.mxu0 0
          %3646 = vmatpush1.bf16.msra.mxu0 %v3622
          %3647 = vmatprep.subr.bf16.mxu0 0
          %3648 = vmatpush1.bf16.msra.mxu0 0
          %3649 = vmatprep.subr.bf16.mxu0 0
          %3650 = vmatpush1.bf16.msra.mxu0 0
          %3651 = vmatprep.subr.bf16.mxu0 0
          %3652 = vmatpush1.bf16.msra.mxu0 0
          %3653 = vmatprep.subr.bf16.mxu0 0
          %3654 = vmatpush1.bf16.msra.mxu0 0
          %3655 = vmatprep.subr.bf16.mxu0 0
          %3656 = vmatpush1.bf16.msra.mxu0 0
          %3657 = vmatprep.subr.bf16.mxu0 0
          %3658 = vmatpush1.bf16.msra.mxu0 0
          %3659 = vmatprep.subr.bf16.mxu0 0
          %3660 = vmatpush1.bf16.msra.mxu0 0
          %3661 = vmatprep.subr.bf16.mxu0 0
          %3662 = vmatpush1.bf16.msra.mxu0 0
          %3663 = vmatprep.mubr.bf16.mxu0 0
          %3664 = vmatmul.mubr.bf16.gmra.mrb[0].mxu0 %v3352
          %v3665 = vpop.f32.mrb[0].mxu0
          %v3666 = vadd.f32 %v3581, %v3665
          %v3667 = vpop.f32.mrb[0].mxu0
          %v3668 = vpop.f32.mrb[0].mxu0
          %v3669 = vadd.f32 %v3581, %v3668
          %v3670 = vpop.f32.mrb[0].mxu0
          %3671 = vmatprep.mubr.bf16.mxu0 0
          %3672 = vmatmul.mubr.bf16.gmra.mrb[0].mxu0 %v3353
          %v3673 = vpop.f32.mrb[0].mxu0
          %v3674 = vadd.f32 %v3581, %v3673
          %v3675 = vpop.f32.mrb[0].mxu0
          %v3676 = vpop.f32.mrb[0].mxu0
          %v3677 = vadd.f32 %v3581, %v3676
          %v3678 = vpop.f32.mrb[0].mxu0
          %3679 = vmatprep.mubr.bf16.mxu0 0
          %3680 = vmatmul.mubr.bf16.gmra.mrb[0].mxu0 %v3354
          %v3681 = vpop.f32.mrb[0].mxu0
          %v3682 = vadd.f32 %v3581, %v3681
          %v3683 = vpop.f32.mrb[0].mxu0
          %v3684 = vpop.f32.mrb[0].mxu0
          %v3685 = vadd.f32 %v3581, %v3684
          %v3686 = vpop.f32.mrb[0].mxu0
          %3687 = vmatprep.mubr.bf16.mxu0 0
          %3688 = vmatmul.mubr.bf16.gmra.mrb[0].mxu0 %v3355
          %v3689 = vpop.f32.mrb[0].mxu0
          %v3690 = vadd.f32 %v3581, %v3689
          %v3691 = vpop.f32.mrb[0].mxu0
          %v3692 = vpop.f32.mrb[0].mxu0
          %v3693 = vadd.f32 %v3581, %v3692
          %v3694 = vpop.f32.mrb[0].mxu0
          %3695 = vdwg.mxu0
          %v3696 = vpack.c.bf16 %v3669, %v3666
          %v3697 = vpack.c.bf16 %v3677, %v3674
          %v3698 = vpack.c.bf16 %v3685, %v3682
          %v3699 = vpack.c.bf16 %v3693, %v3690
          %3700 = vst.msk [vmem:[#allocation4] sm:$0xff] %vm1306, %v3696
          %3701 = vst.msk [vmem:[#allocation4 + $0x8] sm:$0xff] %vm1306, %v3697
          %3702 = vst.msk [vmem:[#allocation4 + $0x10] sm:$0xff] %vm1306, %v3698
          %3703 = vst.msk [vmem:[#allocation4 + $0x18] sm:$0xff] %vm1306, %v3699
          %3708 = vrot.lane.b32.xlu0 %v3696, 96
          %v3709 = vpop.permute.xlu0 %3708
          %3710 = vrot.lane.b32.xlu0 %v3697, 96
          %v3711 = vpop.permute.xlu0 %3710
          %3712 = vrot.lane.b32.xlu0 %v3698, 96
          %v3713 = vpop.permute.xlu0 %3712
          %3714 = vrot.lane.b32.xlu0 %v3699, 96
          %v3715 = vpop.permute.xlu0 %3714
          %3720 = vst.msk [vmem:[%s1526] sm:$0xff] %vm1306, %v3709
          %3721 = vst.msk [vmem:[%s1526 + $0x8] sm:$0xff] %vm1306, %v3711
          %3722 = vst.msk [vmem:[%s1526 + $0x10] sm:$0xff] %vm1306, %v3713
          %3723 = vst.msk [vmem:[%s1526 + $0x18] sm:$0xff] %vm1306, %v3715
          %3724 = vrot.lane.b32.xlu0 %v3696, 64
          %v3725 = vpop.permute.xlu0 %3724
          %3726 = vrot.lane.b32.xlu0 %v3697, 64
          %v3727 = vpop.permute.xlu0 %3726
          %3728 = vrot.lane.b32.xlu0 %v3698, 64
          %v3729 = vpop.permute.xlu0 %3728
          %3730 = vrot.lane.b32.xlu0 %v3699, 64
          %v3731 = vpop.permute.xlu0 %3730
          %3736 = vst.msk [vmem:[%s1543] sm:$0xff] %vm1306, %v3725
          %3737 = vst.msk [vmem:[%s1543 + $0x8] sm:$0xff] %vm1306, %v3727
          %3738 = vst.msk [vmem:[%s1543 + $0x10] sm:$0xff] %vm1306, %v3729
          %3739 = vst.msk [vmem:[%s1543 + $0x18] sm:$0xff] %vm1306, %v3731
          %3740 = vrot.lane.b32.xlu0 %v3696, 32
          %v3741 = vpop.permute.xlu0 %3740
          %3742 = vrot.lane.b32.xlu0 %v3697, 32
          %v3743 = vpop.permute.xlu0 %3742
          %3744 = vrot.lane.b32.xlu0 %v3698, 32
          %v3745 = vpop.permute.xlu0 %3744
          %3746 = vrot.lane.b32.xlu0 %v3699, 32
          %v3747 = vpop.permute.xlu0 %3746
          %3752 = vst.msk [vmem:[%s1560] sm:$0xff] %vm1306, %v3741
          %3753 = vst.msk [vmem:[%s1560 + $0x8] sm:$0xff] %vm1306, %v3743
          %3754 = vst.msk [vmem:[%s1560 + $0x10] sm:$0xff] %vm1306, %v3745
          %3755 = vst.msk [vmem:[%s1560 + $0x18] sm:$0xff] %vm1306, %v3747
          %v3756 = vld [vmem:[%s814] sm:$0xf]
          %v3757 = vld [vmem:[%s814 + $0x4] sm:$0xf]
          %v3758 = vld [vmem:[%s814 + $0x8] sm:$0xf]
          %v3759 = vld [vmem:[%s814 + $0xc] sm:$0xf]
          %v3760 = vld [vmem:[%s814 + $0x10] sm:$0xf]
          %v3761 = vld [vmem:[%s814 + $0x14] sm:$0xf]
          %v3762 = vld [vmem:[%s814 + $0x18] sm:$0xf]
          %v3763 = vld [vmem:[%s814 + $0x1c] sm:$0xf]
          %v3764 = vld [vmem:[%s814 + $0x20] sm:$0xf]
          %v3765 = vld [vmem:[%s814 + $0x24] sm:$0xf]
          %v3766 = vld [vmem:[%s814 + $0x28] sm:$0xf]
          %v3767 = vld [vmem:[%s814 + $0x2c] sm:$0xf]
          %v3768 = vld [vmem:[%s814 + $0x30] sm:$0xf]
          %v3769 = vld [vmem:[%s814 + $0x34] sm:$0xf]
          %v3770 = vld [vmem:[%s814 + $0x38] sm:$0xf]
          %v3771 = vld [vmem:[%s814 + $0x3c] sm:$0xf]
          %v3772 = vld [vmem:[%s960] sm:$0x1]
          %v3774 = vlaneseq
          %v3775 = vshrl.u32 %v3774, 7
          %v3776 = vsub.s32 0, %v3775
          %v3777 = vrot.slane %v3772, %v3776
          %v3795 = vunpack.c.l.b16 %v3756
          %v3796 = vunpack.c.l.b16 %v3757
          %v3797 = vunpack.c.l.b16 %v3758
          %v3798 = vunpack.c.l.b16 %v3759
          %v3799 = vunpack.c.l.b16 %v3760
          %v3800 = vunpack.c.l.b16 %v3761
          %v3801 = vunpack.c.l.b16 %v3762
          %v3802 = vunpack.c.l.b16 %v3763
          %v3803 = vunpack.c.l.b16 %v3764
          %v3804 = vunpack.c.l.b16 %v3765
          %v3805 = vunpack.c.l.b16 %v3766
          %v3806 = vunpack.c.l.b16 %v3767
          %v3807 = vunpack.c.l.b16 %v3768
          %v3808 = vunpack.c.l.b16 %v3769
          %v3809 = vunpack.c.l.b16 %v3770
          %v3810 = vunpack.c.l.b16 %v3771
          %v3811 = vpack.c.b16 %v3796, %v3795
          %v3812 = vpack.c.b16 %v3798, %v3797
          %v3813 = vpack.c.b16 %v3800, %v3799
          %v3814 = vpack.c.b16 %v3802, %v3801
          %v3815 = vpack.c.b16 %v3804, %v3803
          %v3816 = vpack.c.b16 %v3806, %v3805
          %v3817 = vpack.c.b16 %v3808, %v3807
          %v3818 = vpack.c.b16 %v3810, %v3809
          %3827 = vmatprep.subr.bf16.mxu0 0
          %3828 = vmatpush1.bf16.msra.mxu0 %v3811
          %3829 = vmatprep.subr.bf16.mxu0 0
          %3830 = vmatpush1.bf16.msra.mxu0 %v3812
          %3831 = vmatprep.subr.bf16.mxu0 0
          %3832 = vmatpush1.bf16.msra.mxu0 %v3813
          %3833 = vmatprep.subr.bf16.mxu0 0
          %3834 = vmatpush1.bf16.msra.mxu0 %v3814
          %3835 = vmatprep.subr.bf16.mxu0 0
          %3836 = vmatpush1.bf16.msra.mxu0 %v3815
          %3837 = vmatprep.subr.bf16.mxu0 0
          %3838 = vmatpush1.bf16.msra.mxu0 %v3816
          %3839 = vmatprep.subr.bf16.mxu0 0
          %3840 = vmatpush1.bf16.msra.mxu0 %v3817
          %3841 = vmatprep.subr.bf16.mxu0 0
          %3842 = vmatpush1.bf16.msra.mxu0 %v3818
          %3843 = vmatprep.subr.bf16.mxu0 0
          %3844 = vmatpush1.bf16.msra.mxu0 0
          %3845 = vmatprep.subr.bf16.mxu0 0
          %3846 = vmatpush1.bf16.msra.mxu0 0
          %3847 = vmatprep.subr.bf16.mxu0 0
          %3848 = vmatpush1.bf16.msra.mxu0 0
          %3849 = vmatprep.subr.bf16.mxu0 0
          %3850 = vmatpush1.bf16.msra.mxu0 0
          %3851 = vmatprep.subr.bf16.mxu0 0
          %3852 = vmatpush1.bf16.msra.mxu0 0
          %3853 = vmatprep.subr.bf16.mxu0 0
          %3854 = vmatpush1.bf16.msra.mxu0 0
          %3855 = vmatprep.subr.bf16.mxu0 0
          %3856 = vmatpush1.bf16.msra.mxu0 0
          %3857 = vmatprep.subr.bf16.mxu0 0
          %3858 = vmatpush1.bf16.msra.mxu0 0
          %3859 = vmatprep.mubr.bf16.mxu0 0
          %3860 = vmatmul.mubr.bf16.gmra.mrb[0].mxu0 %v3352
          %v3861 = vpop.f32.mrb[0].mxu0
          %v3862 = vadd.f32 %v3777, %v3861
          %v3863 = vpop.f32.mrb[0].mxu0
          %v3864 = vpop.f32.mrb[0].mxu0
          %v3865 = vadd.f32 %v3777, %v3864
          %v3866 = vpop.f32.mrb[0].mxu0
          %3867 = vmatprep.mubr.bf16.mxu0 0
          %3868 = vmatmul.mubr.bf16.gmra.mrb[0].mxu0 %v3353
          %v3869 = vpop.f32.mrb[0].mxu0
          %v3870 = vadd.f32 %v3777, %v3869
          %v3871 = vpop.f32.mrb[0].mxu0
          %v3872 = vpop.f32.mrb[0].mxu0
          %v3873 = vadd.f32 %v3777, %v3872
          %v3874 = vpop.f32.mrb[0].mxu0
          %3875 = vmatprep.mubr.bf16.mxu0 0
          %3876 = vmatmul.mubr.bf16.gmra.mrb[0].mxu0 %v3354
          %v3877 = vpop.f32.mrb[0].mxu0
          %v3878 = vadd.f32 %v3777, %v3877
          %v3879 = vpop.f32.mrb[0].mxu0
          %v3880 = vpop.f32.mrb[0].mxu0
          %v3881 = vadd.f32 %v3777, %v3880
          %v3882 = vpop.f32.mrb[0].mxu0
          %3883 = vmatprep.mubr.bf16.mxu0 0
          %3884 = vmatmul.mubr.bf16.gmra.mrb[0].mxu0 %v3355
          %v3885 = vpop.f32.mrb[0].mxu0
          %v3886 = vadd.f32 %v3777, %v3885
          %v3887 = vpop.f32.mrb[0].mxu0
          %v3888 = vpop.f32.mrb[0].mxu0
          %v3889 = vadd.f32 %v3777, %v3888
          %v3890 = vpop.f32.mrb[0].mxu0
          %3891 = vdwg.mxu0
          %v3892 = vpack.c.bf16 %v3865, %v3862
          %v3893 = vpack.c.bf16 %v3873, %v3870
          %v3894 = vpack.c.bf16 %v3881, %v3878
          %v3895 = vpack.c.bf16 %v3889, %v3886
          %3896 = vst.msk [vmem:[#allocation5] sm:$0xff] %vm1306, %v3892
          %3897 = vst.msk [vmem:[#allocation5 + $0x8] sm:$0xff] %vm1306, %v3893
          %3898 = vst.msk [vmem:[#allocation5 + $0x10] sm:$0xff] %vm1306, %v3894
          %3899 = vst.msk [vmem:[#allocation5 + $0x18] sm:$0xff] %vm1306, %v3895
          %3904 = vrot.lane.b32.xlu0 %v3892, 96
          %v3905 = vpop.permute.xlu0 %3904
          %3906 = vrot.lane.b32.xlu0 %v3893, 96
          %v3907 = vpop.permute.xlu0 %3906
          %3908 = vrot.lane.b32.xlu0 %v3894, 96
          %v3909 = vpop.permute.xlu0 %3908
          %3910 = vrot.lane.b32.xlu0 %v3895, 96
          %v3911 = vpop.permute.xlu0 %3910
          %3916 = vst.msk [vmem:[%s1725] sm:$0xff] %vm1306, %v3905
          %3917 = vst.msk [vmem:[%s1725 + $0x8] sm:$0xff] %vm1306, %v3907
          %3918 = vst.msk [vmem:[%s1725 + $0x10] sm:$0xff] %vm1306, %v3909
          %3919 = vst.msk [vmem:[%s1725 + $0x18] sm:$0xff] %vm1306, %v3911
          %3920 = vrot.lane.b32.xlu0 %v3892, 64
          %v3921 = vpop.permute.xlu0 %3920
          %3922 = vrot.lane.b32.xlu0 %v3893, 64
          %v3923 = vpop.permute.xlu0 %3922
          %3924 = vrot.lane.b32.xlu0 %v3894, 64
          %v3925 = vpop.permute.xlu0 %3924
          %3926 = vrot.lane.b32.xlu0 %v3895, 64
          %v3927 = vpop.permute.xlu0 %3926
          %3932 = vst.msk [vmem:[%s1742] sm:$0xff] %vm1306, %v3921
          %3933 = vst.msk [vmem:[%s1742 + $0x8] sm:$0xff] %vm1306, %v3923
          %3934 = vst.msk [vmem:[%s1742 + $0x10] sm:$0xff] %vm1306, %v3925
          %3935 = vst.msk [vmem:[%s1742 + $0x18] sm:$0xff] %vm1306, %v3927
          %3936 = vrot.lane.b32.xlu0 %v3892, 32
          %v3937 = vpop.permute.xlu0 %3936
          %3938 = vrot.lane.b32.xlu0 %v3893, 32
          %v3939 = vpop.permute.xlu0 %3938
          %3940 = vrot.lane.b32.xlu0 %v3894, 32
          %v3941 = vpop.permute.xlu0 %3940
          %3942 = vrot.lane.b32.xlu0 %v3895, 32
          %v3943 = vpop.permute.xlu0 %3942
          %3948 = vst.msk [vmem:[%s1759] sm:$0xff] %vm1306, %v3937
          %3949 = vst.msk [vmem:[%s1759 + $0x8] sm:$0xff] %vm1306, %v3939
          %3950 = vst.msk [vmem:[%s1759 + $0x10] sm:$0xff] %vm1306, %v3941
          %3951 = vst.msk [vmem:[%s1759 + $0x18] sm:$0xff] %vm1306, %v3943
          %v3952 = vld [vmem:[#allocation3] sm:$0xff]
          %v3953 = vld [vmem:[#allocation3 + $0x8] sm:$0xff]
          %v3954 = vld [vmem:[#allocation3 + $0x10] sm:$0xff]
          %v3955 = vld [vmem:[#allocation3 + $0x18] sm:$0xff]
          %v3956 = vld [vmem:[#allocation3 + $0x20] sm:$0xff]
          %v3957 = vld [vmem:[#allocation3 + $0x28] sm:$0xff]
          %v3958 = vld [vmem:[#allocation3 + $0x30] sm:$0xff]
          %v3959 = vld [vmem:[#allocation3 + $0x38] sm:$0xff]
          %v3960 = vld [vmem:[#allocation3 + $0x40] sm:$0xff]
          %v3961 = vld [vmem:[#allocation3 + $0x48] sm:$0xff]
          %v3962 = vld [vmem:[#allocation3 + $0x50] sm:$0xff]
          %v3963 = vld [vmem:[#allocation3 + $0x58] sm:$0xff]
          %v3964 = vld [vmem:[#allocation3 + $0x60] sm:$0xff]
          %v3965 = vld [vmem:[#allocation3 + $0x68] sm:$0xff]
          %v3966 = vld [vmem:[#allocation3 + $0x70] sm:$0xff]
          %v3967 = vld [vmem:[#allocation3 + $0x78] sm:$0xff]
          %v3968 = vld [vmem:[#allocation4] sm:$0xff]
          %v3969 = vld [vmem:[#allocation4 + $0x8] sm:$0xff]
          %v3970 = vld [vmem:[#allocation4 + $0x10] sm:$0xff]
          %v3971 = vld [vmem:[#allocation4 + $0x18] sm:$0xff]
          %v3972 = vld [vmem:[#allocation4 + $0x20] sm:$0xff]
          %v3973 = vld [vmem:[#allocation4 + $0x28] sm:$0xff]
          %v3974 = vld [vmem:[#allocation4 + $0x30] sm:$0xff]
          %v3975 = vld [vmem:[#allocation4 + $0x38] sm:$0xff]
          %v3976 = vld [vmem:[#allocation4 + $0x40] sm:$0xff]
          %v3977 = vld [vmem:[#allocation4 + $0x48] sm:$0xff]
          %v3978 = vld [vmem:[#allocation4 + $0x50] sm:$0xff]
          %v3979 = vld [vmem:[#allocation4 + $0x58] sm:$0xff]
          %v3980 = vld [vmem:[#allocation4 + $0x60] sm:$0xff]
          %v3981 = vld [vmem:[#allocation4 + $0x68] sm:$0xff]
          %v3982 = vld [vmem:[#allocation4 + $0x70] sm:$0xff]
          %v3983 = vld [vmem:[#allocation4 + $0x78] sm:$0xff]
          %v3984 = vld [vmem:[#allocation5] sm:$0xff]
          %v3985 = vld [vmem:[#allocation5 + $0x8] sm:$0xff]
          %v3986 = vld [vmem:[#allocation5 + $0x10] sm:$0xff]
          %v3987 = vld [vmem:[#allocation5 + $0x18] sm:$0xff]
          %v3988 = vld [vmem:[#allocation5 + $0x20] sm:$0xff]
          %v3989 = vld [vmem:[#allocation5 + $0x28] sm:$0xff]
          %v3990 = vld [vmem:[#allocation5 + $0x30] sm:$0xff]
          %v3991 = vld [vmem:[#allocation5 + $0x38] sm:$0xff]
          %v3992 = vld [vmem:[#allocation5 + $0x40] sm:$0xff]
          %v3993 = vld [vmem:[#allocation5 + $0x48] sm:$0xff]
          %v3994 = vld [vmem:[#allocation5 + $0x50] sm:$0xff]
          %v3995 = vld [vmem:[#allocation5 + $0x58] sm:$0xff]
          %v3996 = vld [vmem:[#allocation5 + $0x60] sm:$0xff]
          %v3997 = vld [vmem:[#allocation5 + $0x68] sm:$0xff]
          %v3998 = vld [vmem:[#allocation5 + $0x70] sm:$0xff]
          %v3999 = vld [vmem:[#allocation5 + $0x78] sm:$0xff]
          %v4001 = vsel %vm1306, %v3952, 0
          %v4004 = vsel %vm1306, %v3953, 0
          %v4007 = vsel %vm1306, %v3954, 0
          %v4010 = vsel %vm1306, %v3955, 0
          %v4013 = vsel %vm1306, %v3968, 0
          %v4016 = vsel %vm1306, %v3969, 0
          %v4019 = vsel %vm1306, %v3970, 0
          %v4022 = vsel %vm1306, %v3971, 0
          %4024 = vmatprep.subr.bf16.mxu0 0
          %4025 = vmatpush1.bf16.xpose.msra.mxu0 %v4013
          %4026 = vmatprep.subr.bf16.mxu0 0
          %4027 = vmatpush1.bf16.xpose.msra.mxu0 %v4016
          %4028 = vmatprep.subr.bf16.mxu0 0
          %4029 = vmatpush1.bf16.xpose.msra.mxu0 %v4019
          %4030 = vmatprep.subr.bf16.mxu0 0
          %4031 = vmatpush1.bf16.xpose.msra.mxu0 %v4022
          %4032 = vmatprep.subr.bf16.mxu0 0
          %4033 = vmatpush1.bf16.xpose.msra.mxu0 0
          %4034 = vmatprep.subr.bf16.mxu0 0
          %4035 = vmatpush1.bf16.xpose.msra.mxu0 0
          %4036 = vmatprep.subr.bf16.mxu0 0
          %4037 = vmatpush1.bf16.xpose.msra.mxu0 0
          %4038 = vmatprep.subr.bf16.mxu0 0
          %4039 = vmatpush1.bf16.xpose.msra.mxu0 0
          %4040 = vmatprep.subr.bf16.mxu0 0
          %4041 = vmatpush1.bf16.xpose.msra.mxu0 0
          %4042 = vmatprep.subr.bf16.mxu0 0
          %4043 = vmatpush1.bf16.xpose.msra.mxu0 0
          %4044 = vmatprep.subr.bf16.mxu0 0
          %4045 = vmatpush1.bf16.xpose.msra.mxu0 0
          %4046 = vmatprep.subr.bf16.mxu0 0
          %4047 = vmatpush1.bf16.xpose.msra.mxu0 0
          %4048 = vmatprep.subr.bf16.mxu0 0
          %4049 = vmatpush1.bf16.xpose.msra.mxu0 0
          %4050 = vmatprep.subr.bf16.mxu0 0
          %4051 = vmatpush1.bf16.xpose.msra.mxu0 0
          %4052 = vmatprep.subr.bf16.mxu0 0
          %4053 = vmatpush1.bf16.xpose.msra.mxu0 0
          %4054 = vmatprep.subr.bf16.mxu0 0
          %4055 = vmatpush1.bf16.xpose.msra.mxu0 0
          %4056 = vmatprep.mubr.bf16.mxu0 0
          %4057 = vmatmul.mubr.bf16.gmra.mrb[0].mxu0 %v4001
          %v4058 = vpop.f32.mrb[0].mxu0
          %v4059 = vadd.f32 0.0, %v4058
          %v4060 = vpop.f32.mrb[0].mxu0
          %v4061 = vpop.f32.mrb[0].mxu0
          %v4062 = vadd.f32 0.0, %v4061
          %v4063 = vpop.f32.mrb[0].mxu0
          %4064 = vmatprep.mubr.bf16.mxu0 0
          %4065 = vmatmul.mubr.bf16.gmra.mrb[0].mxu0 %v4004
          %v4066 = vpop.f32.mrb[0].mxu0
          %v4067 = vadd.f32 0.0, %v4066
          %v4068 = vpop.f32.mrb[0].mxu0
          %v4069 = vpop.f32.mrb[0].mxu0
          %v4070 = vadd.f32 0.0, %v4069
          %v4071 = vpop.f32.mrb[0].mxu0
          %4072 = vmatprep.mubr.bf16.mxu0 0
          %4073 = vmatmul.mubr.bf16.gmra.mrb[0].mxu0 %v4007
          %v4074 = vpop.f32.mrb[0].mxu0
          %v4075 = vadd.f32 0.0, %v4074
          %v4076 = vpop.f32.mrb[0].mxu0
          %v4077 = vpop.f32.mrb[0].mxu0
          %v4078 = vadd.f32 0.0, %v4077
          %v4079 = vpop.f32.mrb[0].mxu0
          %4080 = vmatprep.mubr.bf16.mxu0 0
          %4081 = vmatmul.mubr.bf16.gmra.mrb[0].mxu0 %v4010
          %v4082 = vpop.f32.mrb[0].mxu0
          %v4083 = vadd.f32 0.0, %v4082
          %v4084 = vpop.f32.mrb[0].mxu0
          %v4085 = vpop.f32.mrb[0].mxu0
          %v4086 = vadd.f32 0.0, %v4085
          %v4087 = vpop.f32.mrb[0].mxu0
          %4088 = vdwg.mxu0
          %v4090 = vsel %vm1306, %v3956, 0
          %v4093 = vsel %vm1306, %v3957, 0
          %v4096 = vsel %vm1306, %v3958, 0
          %v4099 = vsel %vm1306, %v3959, 0
          %v4102 = vsel %vm1306, %v3972, 0
          %v4105 = vsel %vm1306, %v3973, 0
          %v4108 = vsel %vm1306, %v3974, 0
          %v4111 = vsel %vm1306, %v3975, 0
          %4113 = vmatprep.subr.bf16.mxu0 0
          %4114 = vmatpush1.bf16.xpose.msra.mxu0 %v4102
          %4115 = vmatprep.subr.bf16.mxu0 0
          %4116 = vmatpush1.bf16.xpose.msra.mxu0 %v4105
          %4117 = vmatprep.subr.bf16.mxu0 0
          %4118 = vmatpush1.bf16.xpose.msra.mxu0 %v4108
          %4119 = vmatprep.subr.bf16.mxu0 0
          %4120 = vmatpush1.bf16.xpose.msra.mxu0 %v4111
          %4121 = vmatprep.subr.bf16.mxu0 0
          %4122 = vmatpush1.bf16.xpose.msra.mxu0 0
          %4123 = vmatprep.subr.bf16.mxu0 0
          %4124 = vmatpush1.bf16.xpose.msra.mxu0 0
          %4125 = vmatprep.subr.bf16.mxu0 0
          %4126 = vmatpush1.bf16.xpose.msra.mxu0 0
          %4127 = vmatprep.subr.bf16.mxu0 0
          %4128 = vmatpush1.bf16.xpose.msra.mxu0 0
          %4129 = vmatprep.subr.bf16.mxu0 0
          %4130 = vmatpush1.bf16.xpose.msra.mxu0 0
          %4131 = vmatprep.subr.bf16.mxu0 0
          %4132 = vmatpush1.bf16.xpose.msra.mxu0 0
          %4133 = vmatprep.subr.bf16.mxu0 0
          %4134 = vmatpush1.bf16.xpose.msra.mxu0 0
          %4135 = vmatprep.subr.bf16.mxu0 0
          %4136 = vmatpush1.bf16.xpose.msra.mxu0 0
          %4137 = vmatprep.subr.bf16.mxu0 0
          %4138 = vmatpush1.bf16.xpose.msra.mxu0 0
          %4139 = vmatprep.subr.bf16.mxu0 0
          %4140 = vmatpush1.bf16.xpose.msra.mxu0 0
          %4141 = vmatprep.subr.bf16.mxu0 0
          %4142 = vmatpush1.bf16.xpose.msra.mxu0 0
          %4143 = vmatprep.subr.bf16.mxu0 0
          %4144 = vmatpush1.bf16.xpose.msra.mxu0 0
          %4145 = vmatprep.mubr.bf16.mxu0 0
          %4146 = vmatmul.mubr.bf16.gmra.mrb[0].mxu0 %v4090
          %v4147 = vpop.f32.mrb[0].mxu0
          %v4148 = vadd.f32 0.0, %v4147
          %v4149 = vpop.f32.mrb[0].mxu0
          %v4150 = vpop.f32.mrb[0].mxu0
          %v4151 = vadd.f32 0.0, %v4150
          %v4152 = vpop.f32.mrb[0].mxu0
          %4153 = vmatprep.mubr.bf16.mxu0 0
          %4154 = vmatmul.mubr.bf16.gmra.mrb[0].mxu0 %v4093
          %v4155 = vpop.f32.mrb[0].mxu0
          %v4156 = vadd.f32 0.0, %v4155
          %v4157 = vpop.f32.mrb[0].mxu0
          %v4158 = vpop.f32.mrb[0].mxu0
          %v4159 = vadd.f32 0.0, %v4158
          %v4160 = vpop.f32.mrb[0].mxu0
          %4161 = vmatprep.mubr.bf16.mxu0 0
          %4162 = vmatmul.mubr.bf16.gmra.mrb[0].mxu0 %v4096
          %v4163 = vpop.f32.mrb[0].mxu0
          %v4164 = vadd.f32 0.0, %v4163
          %v4165 = vpop.f32.mrb[0].mxu0
          %v4166 = vpop.f32.mrb[0].mxu0
          %v4167 = vadd.f32 0.0, %v4166
          %v4168 = vpop.f32.mrb[0].mxu0
          %4169 = vmatprep.mubr.bf16.mxu0 0
          %4170 = vmatmul.mubr.bf16.gmra.mrb[0].mxu0 %v4099
          %v4171 = vpop.f32.mrb[0].mxu0
          %v4172 = vadd.f32 0.0, %v4171
          %v4173 = vpop.f32.mrb[0].mxu0
          %v4174 = vpop.f32.mrb[0].mxu0
          %v4175 = vadd.f32 0.0, %v4174
          %v4176 = vpop.f32.mrb[0].mxu0
          %4177 = vdwg.mxu0
          %v4179 = vsel %vm1306, %v3960, 0
          %v4182 = vsel %vm1306, %v3961, 0
          %v4185 = vsel %vm1306, %v3962, 0
          %v4188 = vsel %vm1306, %v3963, 0
          %v4191 = vsel %vm1306, %v3976, 0
          %v4194 = vsel %vm1306, %v3977, 0
          %v4197 = vsel %vm1306, %v3978, 0
          %v4200 = vsel %vm1306, %v3979, 0
          %4202 = vmatprep.subr.bf16.mxu0 0
          %4203 = vmatpush1.bf16.xpose.msra.mxu0 %v4191
          %4204 = vmatprep.subr.bf16.mxu0 0
          %4205 = vmatpush1.bf16.xpose.msra.mxu0 %v4194
          %4206 = vmatprep.subr.bf16.mxu0 0
          %4207 = vmatpush1.bf16.xpose.msra.mxu0 %v4197
          %4208 = vmatprep.subr.bf16.mxu0 0
          %4209 = vmatpush1.bf16.xpose.msra.mxu0 %v4200
          %4210 = vmatprep.subr.bf16.mxu0 0
          %4211 = vmatpush1.bf16.xpose.msra.mxu0 0
          %4212 = vmatprep.subr.bf16.mxu0 0
          %4213 = vmatpush1.bf16.xpose.msra.mxu0 0
          %4214 = vmatprep.subr.bf16.mxu0 0
          %4215 = vmatpush1.bf16.xpose.msra.mxu0 0
          %4216 = vmatprep.subr.bf16.mxu0 0
          %4217 = vmatpush1.bf16.xpose.msra.mxu0 0
          %4218 = vmatprep.subr.bf16.mxu0 0
          %4219 = vmatpush1.bf16.xpose.msra.mxu0 0
          %4220 = vmatprep.subr.bf16.mxu0 0
          %4221 = vmatpush1.bf16.xpose.msra.mxu0 0
          %4222 = vmatprep.subr.bf16.mxu0 0
          %4223 = vmatpush1.bf16.xpose.msra.mxu0 0
          %4224 = vmatprep.subr.bf16.mxu0 0
          %4225 = vmatpush1.bf16.xpose.msra.mxu0 0
          %4226 = vmatprep.subr.bf16.mxu0 0
          %4227 = vmatpush1.bf16.xpose.msra.mxu0 0
          %4228 = vmatprep.subr.bf16.mxu0 0
          %4229 = vmatpush1.bf16.xpose.msra.mxu0 0
          %4230 = vmatprep.subr.bf16.mxu0 0
          %4231 = vmatpush1.bf16.xpose.msra.mxu0 0
          %4232 = vmatprep.subr.bf16.mxu0 0
          %4233 = vmatpush1.bf16.xpose.msra.mxu0 0
          %4234 = vmatprep.mubr.bf16.mxu0 0
          %4235 = vmatmul.mubr.bf16.gmra.mrb[0].mxu0 %v4179
          %v4236 = vpop.f32.mrb[0].mxu0
          %v4237 = vadd.f32 0.0, %v4236
          %v4238 = vpop.f32.mrb[0].mxu0
          %v4239 = vpop.f32.mrb[0].mxu0
          %v4240 = vadd.f32 0.0, %v4239
          %v4241 = vpop.f32.mrb[0].mxu0
          %4242 = vmatprep.mubr.bf16.mxu0 0
          %4243 = vmatmul.mubr.bf16.gmra.mrb[0].mxu0 %v4182
          %v4244 = vpop.f32.mrb[0].mxu0
          %v4245 = vadd.f32 0.0, %v4244
          %v4246 = vpop.f32.mrb[0].mxu0
          %v4247 = vpop.f32.mrb[0].mxu0
          %v4248 = vadd.f32 0.0, %v4247
          %v4249 = vpop.f32.mrb[0].mxu0
          %4250 = vmatprep.mubr.bf16.mxu0 0
          %4251 = vmatmul.mubr.bf16.gmra.mrb[0].mxu0 %v4185
          %v4252 = vpop.f32.mrb[0].mxu0
          %v4253 = vadd.f32 0.0, %v4252
          %v4254 = vpop.f32.mrb[0].mxu0
          %v4255 = vpop.f32.mrb[0].mxu0
          %v4256 = vadd.f32 0.0, %v4255
          %v4257 = vpop.f32.mrb[0].mxu0
          %4258 = vmatprep.mubr.bf16.mxu0 0
          %4259 = vmatmul.mubr.bf16.gmra.mrb[0].mxu0 %v4188
          %v4260 = vpop.f32.mrb[0].mxu0
          %v4261 = vadd.f32 0.0, %v4260
          %v4262 = vpop.f32.mrb[0].mxu0
          %v4263 = vpop.f32.mrb[0].mxu0
          %v4264 = vadd.f32 0.0, %v4263
          %v4265 = vpop.f32.mrb[0].mxu0
          %4266 = vdwg.mxu0
          %v4268 = vsel %vm1306, %v3964, 0
          %v4271 = vsel %vm1306, %v3965, 0
          %v4274 = vsel %vm1306, %v3966, 0
          %v4277 = vsel %vm1306, %v3967, 0
          %v4280 = vsel %vm1306, %v3980, 0
          %v4283 = vsel %vm1306, %v3981, 0
          %v4286 = vsel %vm1306, %v3982, 0
          %v4289 = vsel %vm1306, %v3983, 0
          %4291 = vmatprep.subr.bf16.mxu0 0
          %4292 = vmatpush1.bf16.xpose.msra.mxu0 %v4280
          %4293 = vmatprep.subr.bf16.mxu0 0
          %4294 = vmatpush1.bf16.xpose.msra.mxu0 %v4283
          %4295 = vmatprep.subr.bf16.mxu0 0
          %4296 = vmatpush1.bf16.xpose.msra.mxu0 %v4286
          %4297 = vmatprep.subr.bf16.mxu0 0
          %4298 = vmatpush1.bf16.xpose.msra.mxu0 %v4289
          %4299 = vmatprep.subr.bf16.mxu0 0
          %4300 = vmatpush1.bf16.xpose.msra.mxu0 0
          %4301 = vmatprep.subr.bf16.mxu0 0
          %4302 = vmatpush1.bf16.xpose.msra.mxu0 0
          %4303 = vmatprep.subr.bf16.mxu0 0
          %4304 = vmatpush1.bf16.xpose.msra.mxu0 0
          %4305 = vmatprep.subr.bf16.mxu0 0
          %4306 = vmatpush1.bf16.xpose.msra.mxu0 0
          %4307 = vmatprep.subr.bf16.mxu0 0
          %4308 = vmatpush1.bf16.xpose.msra.mxu0 0
          %4309 = vmatprep.subr.bf16.mxu0 0
          %4310 = vmatpush1.bf16.xpose.msra.mxu0 0
          %4311 = vmatprep.subr.bf16.mxu0 0
          %4312 = vmatpush1.bf16.xpose.msra.mxu0 0
          %4313 = vmatprep.subr.bf16.mxu0 0
          %4314 = vmatpush1.bf16.xpose.msra.mxu0 0
          %4315 = vmatprep.subr.bf16.mxu0 0
          %4316 = vmatpush1.bf16.xpose.msra.mxu0 0
          %4317 = vmatprep.subr.bf16.mxu0 0
          %4318 = vmatpush1.bf16.xpose.msra.mxu0 0
          %4319 = vmatprep.subr.bf16.mxu0 0
          %4320 = vmatpush1.bf16.xpose.msra.mxu0 0
          %4321 = vmatprep.subr.bf16.mxu0 0
          %4322 = vmatpush1.bf16.xpose.msra.mxu0 0
          %4323 = vmatprep.mubr.bf16.mxu0 0
          %4324 = vmatmul.mubr.bf16.gmra.mrb[0].mxu0 %v4268
          %v4325 = vpop.f32.mrb[0].mxu0
          %v4326 = vadd.f32 0.0, %v4325
          %v4327 = vpop.f32.mrb[0].mxu0
          %v4328 = vpop.f32.mrb[0].mxu0
          %v4329 = vadd.f32 0.0, %v4328
          %v4330 = vpop.f32.mrb[0].mxu0
          %4331 = vmatprep.mubr.bf16.mxu0 0
          %4332 = vmatmul.mubr.bf16.gmra.mrb[0].mxu0 %v4271
          %v4333 = vpop.f32.mrb[0].mxu0
          %v4334 = vadd.f32 0.0, %v4333
          %v4335 = vpop.f32.mrb[0].mxu0
          %v4336 = vpop.f32.mrb[0].mxu0
          %v4337 = vadd.f32 0.0, %v4336
          %v4338 = vpop.f32.mrb[0].mxu0
          %4339 = vmatprep.mubr.bf16.mxu0 0
          %4340 = vmatmul.mubr.bf16.gmra.mrb[0].mxu0 %v4274
          %v4341 = vpop.f32.mrb[0].mxu0
          %v4342 = vadd.f32 0.0, %v4341
          %v4343 = vpop.f32.mrb[0].mxu0
          %v4344 = vpop.f32.mrb[0].mxu0
          %v4345 = vadd.f32 0.0, %v4344
          %v4346 = vpop.f32.mrb[0].mxu0
          %4347 = vmatprep.mubr.bf16.mxu0 0
          %4348 = vmatmul.mubr.bf16.gmra.mrb[0].mxu0 %v4277
          %v4349 = vpop.f32.mrb[0].mxu0
          %v4350 = vadd.f32 0.0, %v4349
          %v4351 = vpop.f32.mrb[0].mxu0
          %v4352 = vpop.f32.mrb[0].mxu0
          %v4353 = vadd.f32 0.0, %v4352
          %v4354 = vpop.f32.mrb[0].mxu0
          %4355 = vdwg.mxu0
          %v4356 = vsel %vm2168, %v4059, -inf
          %4357 = vmax.xlane.f32.xlu0 %v4356
          %v4358 = vpop.xlane.xlu0 %4357
          %v4359 = vsel %vm2168, %v4062, -inf
          %4360 = vmax.xlane.f32.xlu0 %v4359
          %v4361 = vpop.xlane.xlu0 %4360
          %v4362 = vsel %vm2168, %v4067, -inf
          %4363 = vmax.xlane.f32.xlu0 %v4362
          %v4364 = vpop.xlane.xlu0 %4363
          %v4365 = vsel %vm2168, %v4070, -inf
          %4366 = vmax.xlane.f32.xlu0 %v4365
          %v4367 = vpop.xlane.xlu0 %4366
          %v4368 = vsel %vm2168, %v4075, -inf
          %4369 = vmax.xlane.f32.xlu0 %v4368
          %v4370 = vpop.xlane.xlu0 %4369
          %v4371 = vsel %vm2168, %v4078, -inf
          %4372 = vmax.xlane.f32.xlu0 %v4371
          %v4373 = vpop.xlane.xlu0 %4372
          %v4374 = vsel %vm2168, %v4083, -inf
          %4375 = vmax.xlane.f32.xlu0 %v4374
          %v4376 = vpop.xlane.xlu0 %4375
          %v4377 = vsel %vm2168, %v4086, -inf
          %4378 = vmax.xlane.f32.xlu0 %v4377
          %v4379 = vpop.xlane.xlu0 %4378
          %v4380 = vsel %vm2168, %v4148, -inf
          %4381 = vmax.xlane.f32.xlu0 %v4380
          %v4382 = vpop.xlane.xlu0 %4381
          %v4383 = vsel %vm2168, %v4151, -inf
          %4384 = vmax.xlane.f32.xlu0 %v4383
          %v4385 = vpop.xlane.xlu0 %4384
          %v4386 = vsel %vm2168, %v4156, -inf
          %4387 = vmax.xlane.f32.xlu0 %v4386
          %v4388 = vpop.xlane.xlu0 %4387
          %v4389 = vsel %vm2168, %v4159, -inf
          %4390 = vmax.xlane.f32.xlu0 %v4389
          %v4391 = vpop.xlane.xlu0 %4390
          %v4392 = vsel %vm2168, %v4164, -inf
          %4393 = vmax.xlane.f32.xlu0 %v4392
          %v4394 = vpop.xlane.xlu0 %4393
          %v4395 = vsel %vm2168, %v4167, -inf
          %4396 = vmax.xlane.f32.xlu0 %v4395
          %v4397 = vpop.xlane.xlu0 %4396
          %v4398 = vsel %vm2168, %v4172, -inf
          %4399 = vmax.xlane.f32.xlu0 %v4398
          %v4400 = vpop.xlane.xlu0 %4399
          %v4401 = vsel %vm2168, %v4175, -inf
          %4402 = vmax.xlane.f32.xlu0 %v4401
          %v4403 = vpop.xlane.xlu0 %4402
          %v4404 = vsel %vm2168, %v4237, -inf
          %4405 = vmax.xlane.f32.xlu0 %v4404
          %v4406 = vpop.xlane.xlu0 %4405
          %v4407 = vsel %vm2168, %v4240, -inf
          %4408 = vmax.xlane.f32.xlu0 %v4407
          %v4409 = vpop.xlane.xlu0 %4408
          %v4410 = vsel %vm2168, %v4245, -inf
          %4411 = vmax.xlane.f32.xlu0 %v4410
          %v4412 = vpop.xlane.xlu0 %4411
          %v4413 = vsel %vm2168, %v4248, -inf
          %4414 = vmax.xlane.f32.xlu0 %v4413
          %v4415 = vpop.xlane.xlu0 %4414
          %v4416 = vsel %vm2168, %v4253, -inf
          %4417 = vmax.xlane.f32.xlu0 %v4416
          %v4418 = vpop.xlane.xlu0 %4417
          %v4419 = vsel %vm2168, %v4256, -inf
          %4420 = vmax.xlane.f32.xlu0 %v4419
          %v4421 = vpop.xlane.xlu0 %4420
          %v4422 = vsel %vm2168, %v4261, -inf
          %4423 = vmax.xlane.f32.xlu0 %v4422
          %v4424 = vpop.xlane.xlu0 %4423
          %v4425 = vsel %vm2168, %v4264, -inf
          %4426 = vmax.xlane.f32.xlu0 %v4425
          %v4427 = vpop.xlane.xlu0 %4426
          %v4428 = vsel %vm2168, %v4326, -inf
          %4429 = vmax.xlane.f32.xlu0 %v4428
          %v4430 = vpop.xlane.xlu0 %4429
          %v4431 = vsel %vm2168, %v4329, -inf
          %4432 = vmax.xlane.f32.xlu0 %v4431
          %v4433 = vpop.xlane.xlu0 %4432
          %v4434 = vsel %vm2168, %v4334, -inf
          %4435 = vmax.xlane.f32.xlu0 %v4434
          %v4436 = vpop.xlane.xlu0 %4435
          %v4437 = vsel %vm2168, %v4337, -inf
          %4438 = vmax.xlane.f32.xlu0 %v4437
          %v4439 = vpop.xlane.xlu0 %4438
          %v4440 = vsel %vm2168, %v4342, -inf
          %4441 = vmax.xlane.f32.xlu0 %v4440
          %v4442 = vpop.xlane.xlu0 %4441
          %v4443 = vsel %vm2168, %v4345, -inf
          %4444 = vmax.xlane.f32.xlu0 %v4443
          %v4445 = vpop.xlane.xlu0 %4444
          %v4446 = vsel %vm2168, %v4350, -inf
          %4447 = vmax.xlane.f32.xlu0 %v4446
          %v4448 = vpop.xlane.xlu0 %4447
          %v4449 = vsel %vm2168, %v4353, -inf
          %4450 = vmax.xlane.f32.xlu0 %v4449
          %v4451 = vpop.xlane.xlu0 %4450
          %v4452 = vsub.f32 %v4059, %v4358
          %v4453 = vsub.f32 %v4062, %v4361
          %v4454 = vsub.f32 %v4067, %v4364
          %v4455 = vsub.f32 %v4070, %v4367
          %v4456 = vsub.f32 %v4075, %v4370
          %v4457 = vsub.f32 %v4078, %v4373
          %v4458 = vsub.f32 %v4083, %v4376
          %v4459 = vsub.f32 %v4086, %v4379
          %v4460 = vsub.f32 %v4148, %v4382
          %v4461 = vsub.f32 %v4151, %v4385
          %v4462 = vsub.f32 %v4156, %v4388
          %v4463 = vsub.f32 %v4159, %v4391
          %v4464 = vsub.f32 %v4164, %v4394
          %v4465 = vsub.f32 %v4167, %v4397
          %v4466 = vsub.f32 %v4172, %v4400
          %v4467 = vsub.f32 %v4175, %v4403
          %v4468 = vsub.f32 %v4237, %v4406
          %v4469 = vsub.f32 %v4240, %v4409
          %v4470 = vsub.f32 %v4245, %v4412
          %v4471 = vsub.f32 %v4248, %v4415
          %v4472 = vsub.f32 %v4253, %v4418
          %v4473 = vsub.f32 %v4256, %v4421
          %v4474 = vsub.f32 %v4261, %v4424
          %v4475 = vsub.f32 %v4264, %v4427
          %v4476 = vsub.f32 %v4326, %v4430
          %v4477 = vsub.f32 %v4329, %v4433
          %v4478 = vsub.f32 %v4334, %v4436
          %v4479 = vsub.f32 %v4337, %v4439
          %v4480 = vsub.f32 %v4342, %v4442
          %v4481 = vsub.f32 %v4345, %v4445
          %v4482 = vsub.f32 %v4350, %v4448
          %v4483 = vsub.f32 %v4353, %v4451
          %v4484 = vmul.f32 %v4452, 1.442695
          %v4485 = vpow.pop %v4484
          %v4486 = vmul.f32 %v4453, 1.442695
          %v4487 = vpow.pop %v4486
          %v4488 = vmul.f32 %v4454, 1.442695
          %v4489 = vpow.pop %v4488
          %v4490 = vmul.f32 %v4455, 1.442695
          %v4491 = vpow.pop %v4490
          %v4492 = vmul.f32 %v4456, 1.442695
          %v4493 = vpow.pop %v4492
          %v4494 = vmul.f32 %v4457, 1.442695
          %v4495 = vpow.pop %v4494
          %v4496 = vmul.f32 %v4458, 1.442695
          %v4497 = vpow.pop %v4496
          %v4498 = vmul.f32 %v4459, 1.442695
          %v4499 = vpow.pop %v4498
          %v4500 = vmul.f32 %v4460, 1.442695
          %v4501 = vpow.pop %v4500
          %v4502 = vmul.f32 %v4461, 1.442695
          %v4503 = vpow.pop %v4502
          %v4504 = vmul.f32 %v4462, 1.442695
          %v4505 = vpow.pop %v4504
          %v4506 = vmul.f32 %v4463, 1.442695
          %v4507 = vpow.pop %v4506
          %v4508 = vmul.f32 %v4464, 1.442695
          %v4509 = vpow.pop %v4508
          %v4510 = vmul.f32 %v4465, 1.442695
          %v4511 = vpow.pop %v4510
          %v4512 = vmul.f32 %v4466, 1.442695
          %v4513 = vpow.pop %v4512
          %v4514 = vmul.f32 %v4467, 1.442695
          %v4515 = vpow.pop %v4514
          %v4516 = vmul.f32 %v4468, 1.442695
          %v4517 = vpow.pop %v4516
          %v4518 = vmul.f32 %v4469, 1.442695
          %v4519 = vpow.pop %v4518
          %v4520 = vmul.f32 %v4470, 1.442695
          %v4521 = vpow.pop %v4520
          %v4522 = vmul.f32 %v4471, 1.442695
          %v4523 = vpow.pop %v4522
          %v4524 = vmul.f32 %v4472, 1.442695
          %v4525 = vpow.pop %v4524
          %v4526 = vmul.f32 %v4473, 1.442695
          %v4527 = vpow.pop %v4526
          %v4528 = vmul.f32 %v4474, 1.442695
          %v4529 = vpow.pop %v4528
          %v4530 = vmul.f32 %v4475, 1.442695
          %v4531 = vpow.pop %v4530
          %v4532 = vmul.f32 %v4476, 1.442695
          %v4533 = vpow.pop %v4532
          %v4534 = vmul.f32 %v4477, 1.442695
          %v4535 = vpow.pop %v4534
          %v4536 = vmul.f32 %v4478, 1.442695
          %v4537 = vpow.pop %v4536
          %v4538 = vmul.f32 %v4479, 1.442695
          %v4539 = vpow.pop %v4538
          %v4540 = vmul.f32 %v4480, 1.442695
          %v4541 = vpow.pop %v4540
          %v4542 = vmul.f32 %v4481, 1.442695
          %v4543 = vpow.pop %v4542
          %v4544 = vmul.f32 %v4482, 1.442695
          %v4545 = vpow.pop %v4544
          %v4546 = vmul.f32 %v4483, 1.442695
          %v4547 = vpow.pop %v4546
          %v4548 = vsel %vm2168, %v4485, 0.0
          %4549 = vadd.xlane.f32.xlu0 %v4548
          %v4550 = vpop.xlane.xlu0 %4549
          %v4551 = vsel %vm2168, %v4487, 0.0
          %4552 = vadd.xlane.f32.xlu0 %v4551
          %v4553 = vpop.xlane.xlu0 %4552
          %v4554 = vsel %vm2168, %v4489, 0.0
          %4555 = vadd.xlane.f32.xlu0 %v4554
          %v4556 = vpop.xlane.xlu0 %4555
          %v4557 = vsel %vm2168, %v4491, 0.0
          %4558 = vadd.xlane.f32.xlu0 %v4557
          %v4559 = vpop.xlane.xlu0 %4558
          %v4560 = vsel %vm2168, %v4493, 0.0
          %4561 = vadd.xlane.f32.xlu0 %v4560
          %v4562 = vpop.xlane.xlu0 %4561
          %v4563 = vsel %vm2168, %v4495, 0.0
          %4564 = vadd.xlane.f32.xlu0 %v4563
          %v4565 = vpop.xlane.xlu0 %4564
          %v4566 = vsel %vm2168, %v4497, 0.0
          %4567 = vadd.xlane.f32.xlu0 %v4566
          %v4568 = vpop.xlane.xlu0 %4567
          %v4569 = vsel %vm2168, %v4499, 0.0
          %4570 = vadd.xlane.f32.xlu0 %v4569
          %v4571 = vpop.xlane.xlu0 %4570
          %v4572 = vsel %vm2168, %v4501, 0.0
          %4573 = vadd.xlane.f32.xlu0 %v4572
          %v4574 = vpop.xlane.xlu0 %4573
          %v4575 = vsel %vm2168, %v4503, 0.0
          %4576 = vadd.xlane.f32.xlu0 %v4575
          %v4577 = vpop.xlane.xlu0 %4576
          %v4578 = vsel %vm2168, %v4505, 0.0
          %4579 = vadd.xlane.f32.xlu0 %v4578
          %v4580 = vpop.xlane.xlu0 %4579
          %v4581 = vsel %vm2168, %v4507, 0.0
          %4582 = vadd.xlane.f32.xlu0 %v4581
          %v4583 = vpop.xlane.xlu0 %4582
          %v4584 = vsel %vm2168, %v4509, 0.0
          %4585 = vadd.xlane.f32.xlu0 %v4584
          %v4586 = vpop.xlane.xlu0 %4585
          %v4587 = vsel %vm2168, %v4511, 0.0
          %4588 = vadd.xlane.f32.xlu0 %v4587
          %v4589 = vpop.xlane.xlu0 %4588
          %v4590 = vsel %vm2168, %v4513, 0.0
          %4591 = vadd.xlane.f32.xlu0 %v4590
          %v4592 = vpop.xlane.xlu0 %4591
          %v4593 = vsel %vm2168, %v4515, 0.0
          %4594 = vadd.xlane.f32.xlu0 %v4593
          %v4595 = vpop.xlane.xlu0 %4594
          %v4596 = vsel %vm2168, %v4517, 0.0
          %4597 = vadd.xlane.f32.xlu0 %v4596
          %v4598 = vpop.xlane.xlu0 %4597
          %v4599 = vsel %vm2168, %v4519, 0.0
          %4600 = vadd.xlane.f32.xlu0 %v4599
          %v4601 = vpop.xlane.xlu0 %4600
          %v4602 = vsel %vm2168, %v4521, 0.0
          %4603 = vadd.xlane.f32.xlu0 %v4602
          %v4604 = vpop.xlane.xlu0 %4603
          %v4605 = vsel %vm2168, %v4523, 0.0
          %4606 = vadd.xlane.f32.xlu0 %v4605
          %v4607 = vpop.xlane.xlu0 %4606
          %v4608 = vsel %vm2168, %v4525, 0.0
          %4609 = vadd.xlane.f32.xlu0 %v4608
          %v4610 = vpop.xlane.xlu0 %4609
          %v4611 = vsel %vm2168, %v4527, 0.0
          %4612 = vadd.xlane.f32.xlu0 %v4611
          %v4613 = vpop.xlane.xlu0 %4612
          %v4614 = vsel %vm2168, %v4529, 0.0
          %4615 = vadd.xlane.f32.xlu0 %v4614
          %v4616 = vpop.xlane.xlu0 %4615
          %v4617 = vsel %vm2168, %v4531, 0.0
          %4618 = vadd.xlane.f32.xlu0 %v4617
          %v4619 = vpop.xlane.xlu0 %4618
          %v4620 = vsel %vm2168, %v4533, 0.0
          %4621 = vadd.xlane.f32.xlu0 %v4620
          %v4622 = vpop.xlane.xlu0 %4621
          %v4623 = vsel %vm2168, %v4535, 0.0
          %4624 = vadd.xlane.f32.xlu0 %v4623
          %v4625 = vpop.xlane.xlu0 %4624
          %v4626 = vsel %vm2168, %v4537, 0.0
          %4627 = vadd.xlane.f32.xlu0 %v4626
          %v4628 = vpop.xlane.xlu0 %4627
          %v4629 = vsel %vm2168, %v4539, 0.0
          %4630 = vadd.xlane.f32.xlu0 %v4629
          %v4631 = vpop.xlane.xlu0 %4630
          %v4632 = vsel %vm2168, %v4541, 0.0
          %4633 = vadd.xlane.f32.xlu0 %v4632
          %v4634 = vpop.xlane.xlu0 %4633
          %v4635 = vsel %vm2168, %v4543, 0.0
          %4636 = vadd.xlane.f32.xlu0 %v4635
          %v4637 = vpop.xlane.xlu0 %4636
          %v4638 = vsel %vm2168, %v4545, 0.0
          %4639 = vadd.xlane.f32.xlu0 %v4638
          %v4640 = vpop.xlane.xlu0 %4639
          %v4641 = vsel %vm2168, %v4547, 0.0
          %4642 = vadd.xlane.f32.xlu0 %v4641
          %v4643 = vpop.xlane.xlu0 %4642
          %v4644 = vpack.c.bf16 %v4487, %v4485
          %v4645 = vpack.c.bf16 %v4491, %v4489
          %v4646 = vpack.c.bf16 %v4495, %v4493
          %v4647 = vpack.c.bf16 %v4499, %v4497
          %v4648 = vpack.c.bf16 %v4503, %v4501
          %v4649 = vpack.c.bf16 %v4507, %v4505
          %v4650 = vpack.c.bf16 %v4511, %v4509
          %v4651 = vpack.c.bf16 %v4515, %v4513
          %v4652 = vpack.c.bf16 %v4519, %v4517
          %v4653 = vpack.c.bf16 %v4523, %v4521
          %v4654 = vpack.c.bf16 %v4527, %v4525
          %v4655 = vpack.c.bf16 %v4531, %v4529
          %v4656 = vpack.c.bf16 %v4535, %v4533
          %v4657 = vpack.c.bf16 %v4539, %v4537
          %v4658 = vpack.c.bf16 %v4543, %v4541
          %v4659 = vpack.c.bf16 %v4547, %v4545
          %v4661 = vsel %vm2168, %v4644, 0
          %v4664 = vsel %vm2168, %v4645, 0
          %v4667 = vsel %vm2168, %v4646, 0
          %v4670 = vsel %vm2168, %v4647, 0
          %4672 = vmatprep.subr.bf16.mxu0 0
          %4673 = vmatpush1.bf16.msra.mxu0 %v3984
          %4674 = vmatprep.subr.bf16.mxu0 0
          %4675 = vmatpush1.bf16.msra.mxu0 %v3985
          %4676 = vmatprep.subr.bf16.mxu0 0
          %4677 = vmatpush1.bf16.msra.mxu0 %v3986
          %4678 = vmatprep.subr.bf16.mxu0 0
          %4679 = vmatpush1.bf16.msra.mxu0 %v3987
          %4680 = vmatprep.subr.bf16.mxu0 0
          %4681 = vmatpush1.bf16.msra.mxu0 0
          %4682 = vmatprep.subr.bf16.mxu0 0
          %4683 = vmatpush1.bf16.msra.mxu0 0
          %4684 = vmatprep.subr.bf16.mxu0 0
          %4685 = vmatpush1.bf16.msra.mxu0 0
          %4686 = vmatprep.subr.bf16.mxu0 0
          %4687 = vmatpush1.bf16.msra.mxu0 0
          %4688 = vmatprep.subr.bf16.mxu0 0
          %4689 = vmatpush1.bf16.msra.mxu0 0
          %4690 = vmatprep.subr.bf16.mxu0 0
          %4691 = vmatpush1.bf16.msra.mxu0 0
          %4692 = vmatprep.subr.bf16.mxu0 0
          %4693 = vmatpush1.bf16.msra.mxu0 0
          %4694 = vmatprep.subr.bf16.mxu0 0
          %4695 = vmatpush1.bf16.msra.mxu0 0
          %4696 = vmatprep.subr.bf16.mxu0 0
          %4697 = vmatpush1.bf16.msra.mxu0 0
          %4698 = vmatprep.subr.bf16.mxu0 0
          %4699 = vmatpush1.bf16.msra.mxu0 0
          %4700 = vmatprep.subr.bf16.mxu0 0
          %4701 = vmatpush1.bf16.msra.mxu0 0
          %4702 = vmatprep.subr.bf16.mxu0 0
          %4703 = vmatpush1.bf16.msra.mxu0 0
          %4704 = vmatprep.mubr.bf16.mxu0 0
          %4705 = vmatmul.mubr.bf16.gmra.mrb[0].mxu0 %v4661
          %v4706 = vpop.f32.mrb[0].mxu0
          %v4707 = vadd.f32 0.0, %v4706
          %v4708 = vpop.f32.mrb[0].mxu0
          %v4709 = vpop.f32.mrb[0].mxu0
          %v4710 = vadd.f32 0.0, %v4709
          %v4711 = vpop.f32.mrb[0].mxu0
          %4712 = vmatprep.mubr.bf16.mxu0 0
          %4713 = vmatmul.mubr.bf16.gmra.mrb[0].mxu0 %v4664
          %v4714 = vpop.f32.mrb[0].mxu0
          %v4715 = vadd.f32 0.0, %v4714
          %v4716 = vpop.f32.mrb[0].mxu0
          %v4717 = vpop.f32.mrb[0].mxu0
          %v4718 = vadd.f32 0.0, %v4717
          %v4719 = vpop.f32.mrb[0].mxu0
          %4720 = vmatprep.mubr.bf16.mxu0 0
          %4721 = vmatmul.mubr.bf16.gmra.mrb[0].mxu0 %v4667
          %v4722 = vpop.f32.mrb[0].mxu0
          %v4723 = vadd.f32 0.0, %v4722
          %v4724 = vpop.f32.mrb[0].mxu0
          %v4725 = vpop.f32.mrb[0].mxu0
          %v4726 = vadd.f32 0.0, %v4725
          %v4727 = vpop.f32.mrb[0].mxu0
          %4728 = vmatprep.mubr.bf16.mxu0 0
          %4729 = vmatmul.mubr.bf16.gmra.mrb[0].mxu0 %v4670
          %v4730 = vpop.f32.mrb[0].mxu0
          %v4731 = vadd.f32 0.0, %v4730
          %v4732 = vpop.f32.mrb[0].mxu0
          %v4733 = vpop.f32.mrb[0].mxu0
          %v4734 = vadd.f32 0.0, %v4733
          %v4735 = vpop.f32.mrb[0].mxu0
          %4736 = vdwg.mxu0
          %v4738 = vsel %vm2168, %v4648, 0
          %v4741 = vsel %vm2168, %v4649, 0
          %v4744 = vsel %vm2168, %v4650, 0
          %v4747 = vsel %vm2168, %v4651, 0
          %4749 = vmatprep.subr.bf16.mxu0 0
          %4750 = vmatpush1.bf16.msra.mxu0 %v3988
          %4751 = vmatprep.subr.bf16.mxu0 0
          %4752 = vmatpush1.bf16.msra.mxu0 %v3989
          %4753 = vmatprep.subr.bf16.mxu0 0
          %4754 = vmatpush1.bf16.msra.mxu0 %v3990
          %4755 = vmatprep.subr.bf16.mxu0 0
          %4756 = vmatpush1.bf16.msra.mxu0 %v3991
          %4757 = vmatprep.subr.bf16.mxu0 0
          %4758 = vmatpush1.bf16.msra.mxu0 0
          %4759 = vmatprep.subr.bf16.mxu0 0
          %4760 = vmatpush1.bf16.msra.mxu0 0
          %4761 = vmatprep.subr.bf16.mxu0 0
          %4762 = vmatpush1.bf16.msra.mxu0 0
          %4763 = vmatprep.subr.bf16.mxu0 0
          %4764 = vmatpush1.bf16.msra.mxu0 0
          %4765 = vmatprep.subr.bf16.mxu0 0
          %4766 = vmatpush1.bf16.msra.mxu0 0
          %4767 = vmatprep.subr.bf16.mxu0 0
          %4768 = vmatpush1.bf16.msra.mxu0 0
          %4769 = vmatprep.subr.bf16.mxu0 0
          %4770 = vmatpush1.bf16.msra.mxu0 0
          %4771 = vmatprep.subr.bf16.mxu0 0
          %4772 = vmatpush1.bf16.msra.mxu0 0
          %4773 = vmatprep.subr.bf16.mxu0 0
          %4774 = vmatpush1.bf16.msra.mxu0 0
          %4775 = vmatprep.subr.bf16.mxu0 0
          %4776 = vmatpush1.bf16.msra.mxu0 0
          %4777 = vmatprep.subr.bf16.mxu0 0
          %4778 = vmatpush1.bf16.msra.mxu0 0
          %4779 = vmatprep.subr.bf16.mxu0 0
          %4780 = vmatpush1.bf16.msra.mxu0 0
          %4781 = vmatprep.mubr.bf16.mxu0 0
          %4782 = vmatmul.mubr.bf16.gmra.mrb[0].mxu0 %v4738
          %v4783 = vpop.f32.mrb[0].mxu0
          %v4784 = vadd.f32 0.0, %v4783
          %v4785 = vpop.f32.mrb[0].mxu0
          %v4786 = vpop.f32.mrb[0].mxu0
          %v4787 = vadd.f32 0.0, %v4786
          %v4788 = vpop.f32.mrb[0].mxu0
          %4789 = vmatprep.mubr.bf16.mxu0 0
          %4790 = vmatmul.mubr.bf16.gmra.mrb[0].mxu0 %v4741
          %v4791 = vpop.f32.mrb[0].mxu0
          %v4792 = vadd.f32 0.0, %v4791
          %v4793 = vpop.f32.mrb[0].mxu0
          %v4794 = vpop.f32.mrb[0].mxu0
          %v4795 = vadd.f32 0.0, %v4794
          %v4796 = vpop.f32.mrb[0].mxu0
          %4797 = vmatprep.mubr.bf16.mxu0 0
          %4798 = vmatmul.mubr.bf16.gmra.mrb[0].mxu0 %v4744
          %v4799 = vpop.f32.mrb[0].mxu0
          %v4800 = vadd.f32 0.0, %v4799
          %v4801 = vpop.f32.mrb[0].mxu0
          %v4802 = vpop.f32.mrb[0].mxu0
          %v4803 = vadd.f32 0.0, %v4802
          %v4804 = vpop.f32.mrb[0].mxu0
          %4805 = vmatprep.mubr.bf16.mxu0 0
          %4806 = vmatmul.mubr.bf16.gmra.mrb[0].mxu0 %v4747
          %v4807 = vpop.f32.mrb[0].mxu0
          %v4808 = vadd.f32 0.0, %v4807
          %v4809 = vpop.f32.mrb[0].mxu0
          %v4810 = vpop.f32.mrb[0].mxu0
          %v4811 = vadd.f32 0.0, %v4810
          %v4812 = vpop.f32.mrb[0].mxu0
          %4813 = vdwg.mxu0
          %v4815 = vsel %vm2168, %v4652, 0
          %v4818 = vsel %vm2168, %v4653, 0
          %v4821 = vsel %vm2168, %v4654, 0
          %v4824 = vsel %vm2168, %v4655, 0
          %4826 = vmatprep.subr.bf16.mxu0 0
          %4827 = vmatpush1.bf16.msra.mxu0 %v3992
          %4828 = vmatprep.subr.bf16.mxu0 0
          %4829 = vmatpush1.bf16.msra.mxu0 %v3993
          %4830 = vmatprep.subr.bf16.mxu0 0
          %4831 = vmatpush1.bf16.msra.mxu0 %v3994
          %4832 = vmatprep.subr.bf16.mxu0 0
          %4833 = vmatpush1.bf16.msra.mxu0 %v3995
          %4834 = vmatprep.subr.bf16.mxu0 0
          %4835 = vmatpush1.bf16.msra.mxu0 0
          %4836 = vmatprep.subr.bf16.mxu0 0
          %4837 = vmatpush1.bf16.msra.mxu0 0
          %4838 = vmatprep.subr.bf16.mxu0 0
          %4839 = vmatpush1.bf16.msra.mxu0 0
          %4840 = vmatprep.subr.bf16.mxu0 0
          %4841 = vmatpush1.bf16.msra.mxu0 0
          %4842 = vmatprep.subr.bf16.mxu0 0
          %4843 = vmatpush1.bf16.msra.mxu0 0
          %4844 = vmatprep.subr.bf16.mxu0 0
          %4845 = vmatpush1.bf16.msra.mxu0 0
          %4846 = vmatprep.subr.bf16.mxu0 0
          %4847 = vmatpush1.bf16.msra.mxu0 0
          %4848 = vmatprep.subr.bf16.mxu0 0
          %4849 = vmatpush1.bf16.msra.mxu0 0
          %4850 = vmatprep.subr.bf16.mxu0 0
          %4851 = vmatpush1.bf16.msra.mxu0 0
          %4852 = vmatprep.subr.bf16.mxu0 0
          %4853 = vmatpush1.bf16.msra.mxu0 0
          %4854 = vmatprep.subr.bf16.mxu0 0
          %4855 = vmatpush1.bf16.msra.mxu0 0
          %4856 = vmatprep.subr.bf16.mxu0 0
          %4857 = vmatpush1.bf16.msra.mxu0 0
          %4858 = vmatprep.mubr.bf16.mxu0 0
          %4859 = vmatmul.mubr.bf16.gmra.mrb[0].mxu0 %v4815
          %v4860 = vpop.f32.mrb[0].mxu0
          %v4861 = vadd.f32 0.0, %v4860
          %v4862 = vpop.f32.mrb[0].mxu0
          %v4863 = vpop.f32.mrb[0].mxu0
          %v4864 = vadd.f32 0.0, %v4863
          %v4865 = vpop.f32.mrb[0].mxu0
          %4866 = vmatprep.mubr.bf16.mxu0 0
          %4867 = vmatmul.mubr.bf16.gmra.mrb[0].mxu0 %v4818
          %v4868 = vpop.f32.mrb[0].mxu0
          %v4869 = vadd.f32 0.0, %v4868
          %v4870 = vpop.f32.mrb[0].mxu0
          %v4871 = vpop.f32.mrb[0].mxu0
          %v4872 = vadd.f32 0.0, %v4871
          %v4873 = vpop.f32.mrb[0].mxu0
          %4874 = vmatprep.mubr.bf16.mxu0 0
          %4875 = vmatmul.mubr.bf16.gmra.mrb[0].mxu0 %v4821
          %v4876 = vpop.f32.mrb[0].mxu0
          %v4877 = vadd.f32 0.0, %v4876
          %v4878 = vpop.f32.mrb[0].mxu0
          %v4879 = vpop.f32.mrb[0].mxu0
          %v4880 = vadd.f32 0.0, %v4879
          %v4881 = vpop.f32.mrb[0].mxu0
          %4882 = vmatprep.mubr.bf16.mxu0 0
          %4883 = vmatmul.mubr.bf16.gmra.mrb[0].mxu0 %v4824
          %v4884 = vpop.f32.mrb[0].mxu0
          %v4885 = vadd.f32 0.0, %v4884
          %v4886 = vpop.f32.mrb[0].mxu0
          %v4887 = vpop.f32.mrb[0].mxu0
          %v4888 = vadd.f32 0.0, %v4887
          %v4889 = vpop.f32.mrb[0].mxu0
          %4890 = vdwg.mxu0
          %v4892 = vsel %vm2168, %v4656, 0
          %v4895 = vsel %vm2168, %v4657, 0
          %v4898 = vsel %vm2168, %v4658, 0
          %v4901 = vsel %vm2168, %v4659, 0
          %4903 = vmatprep.subr.bf16.mxu0 0
          %4904 = vmatpush1.bf16.msra.mxu0 %v3996
          %4905 = vmatprep.subr.bf16.mxu0 0
          %4906 = vmatpush1.bf16.msra.mxu0 %v3997
          %4907 = vmatprep.subr.bf16.mxu0 0
          %4908 = vmatpush1.bf16.msra.mxu0 %v3998
          %4909 = vmatprep.subr.bf16.mxu0 0
          %4910 = vmatpush1.bf16.msra.mxu0 %v3999
          %4911 = vmatprep.subr.bf16.mxu0 0
          %4912 = vmatpush1.bf16.msra.mxu0 0
          %4913 = vmatprep.subr.bf16.mxu0 0
          %4914 = vmatpush1.bf16.msra.mxu0 0
          %4915 = vmatprep.subr.bf16.mxu0 0
          %4916 = vmatpush1.bf16.msra.mxu0 0
          %4917 = vmatprep.subr.bf16.mxu0 0
          %4918 = vmatpush1.bf16.msra.mxu0 0
          %4919 = vmatprep.subr.bf16.mxu0 0
          %4920 = vmatpush1.bf16.msra.mxu0 0
          %4921 = vmatprep.subr.bf16.mxu0 0
          %4922 = vmatpush1.bf16.msra.mxu0 0
          %4923 = vmatprep.subr.bf16.mxu0 0
          %4924 = vmatpush1.bf16.msra.mxu0 0
          %4925 = vmatprep.subr.bf16.mxu0 0
          %4926 = vmatpush1.bf16.msra.mxu0 0
          %4927 = vmatprep.subr.bf16.mxu0 0
          %4928 = vmatpush1.bf16.msra.mxu0 0
          %4929 = vmatprep.subr.bf16.mxu0 0
          %4930 = vmatpush1.bf16.msra.mxu0 0
          %4931 = vmatprep.subr.bf16.mxu0 0
          %4932 = vmatpush1.bf16.msra.mxu0 0
          %4933 = vmatprep.subr.bf16.mxu0 0
          %4934 = vmatpush1.bf16.msra.mxu0 0
          %4935 = vmatprep.mubr.bf16.mxu0 0
          %4936 = vmatmul.mubr.bf16.gmra.mrb[0].mxu0 %v4892
          %v4937 = vpop.f32.mrb[0].mxu0
          %v4938 = vadd.f32 0.0, %v4937
          %v4939 = vpop.f32.mrb[0].mxu0
          %v4940 = vpop.f32.mrb[0].mxu0
          %v4941 = vadd.f32 0.0, %v4940
          %v4942 = vpop.f32.mrb[0].mxu0
          %4943 = vmatprep.mubr.bf16.mxu0 0
          %4944 = vmatmul.mubr.bf16.gmra.mrb[0].mxu0 %v4895
          %v4945 = vpop.f32.mrb[0].mxu0
          %v4946 = vadd.f32 0.0, %v4945
          %v4947 = vpop.f32.mrb[0].mxu0
          %v4948 = vpop.f32.mrb[0].mxu0
          %v4949 = vadd.f32 0.0, %v4948
          %v4950 = vpop.f32.mrb[0].mxu0
          %4951 = vmatprep.mubr.bf16.mxu0 0
          %4952 = vmatmul.mubr.bf16.gmra.mrb[0].mxu0 %v4898
          %v4953 = vpop.f32.mrb[0].mxu0
          %v4954 = vadd.f32 0.0, %v4953
          %v4955 = vpop.f32.mrb[0].mxu0
          %v4956 = vpop.f32.mrb[0].mxu0
          %v4957 = vadd.f32 0.0, %v4956
          %v4958 = vpop.f32.mrb[0].mxu0
          %4959 = vmatprep.mubr.bf16.mxu0 0
          %4960 = vmatmul.mubr.bf16.gmra.mrb[0].mxu0 %v4901
          %v4961 = vpop.f32.mrb[0].mxu0
          %v4962 = vadd.f32 0.0, %v4961
          %v4963 = vpop.f32.mrb[0].mxu0
          %v4964 = vpop.f32.mrb[0].mxu0
          %v4965 = vadd.f32 0.0, %v4964
          %v4966 = vpop.f32.mrb[0].mxu0
          %4967 = vdwg.mxu0
          %v4968 = vrcp.pop %v4550
          %v4969 = vrcp.pop %v4553
          %v4970 = vrcp.pop %v4556
          %v4971 = vrcp.pop %v4559
          %v4972 = vrcp.pop %v4562
          %v4973 = vrcp.pop %v4565
          %v4974 = vrcp.pop %v4568
          %v4975 = vrcp.pop %v4571
          %v4976 = vrcp.pop %v4574
          %v4977 = vrcp.pop %v4577
          %v4978 = vrcp.pop %v4580
          %v4979 = vrcp.pop %v4583
          %v4980 = vrcp.pop %v4586
          %v4981 = vrcp.pop %v4589
          %v4982 = vrcp.pop %v4592
          %v4983 = vrcp.pop %v4595
          %v4984 = vrcp.pop %v4598
          %v4985 = vrcp.pop %v4601
          %v4986 = vrcp.pop %v4604
          %v4987 = vrcp.pop %v4607
          %v4988 = vrcp.pop %v4610
          %v4989 = vrcp.pop %v4613
          %v4990 = vrcp.pop %v4616
          %v4991 = vrcp.pop %v4619
          %v4992 = vrcp.pop %v4622
          %v4993 = vrcp.pop %v4625
          %v4994 = vrcp.pop %v4628
          %v4995 = vrcp.pop %v4631
          %v4996 = vrcp.pop %v4634
          %v4997 = vrcp.pop %v4637
          %v4998 = vrcp.pop %v4640
          %v4999 = vrcp.pop %v4643
          %v5000 = vmul.f32 %v4707, %v4968
          %v5001 = vmul.f32 %v4710, %v4969
          %v5002 = vmul.f32 %v4715, %v4970
          %v5003 = vmul.f32 %v4718, %v4971
          %v5004 = vmul.f32 %v4723, %v4972
          %v5005 = vmul.f32 %v4726, %v4973
          %v5006 = vmul.f32 %v4731, %v4974
          %v5007 = vmul.f32 %v4734, %v4975
          %v5008 = vmul.f32 %v4784, %v4976
          %v5009 = vmul.f32 %v4787, %v4977
          %v5010 = vmul.f32 %v4792, %v4978
          %v5011 = vmul.f32 %v4795, %v4979
          %v5012 = vmul.f32 %v4800, %v4980
          %v5013 = vmul.f32 %v4803, %v4981
          %v5014 = vmul.f32 %v4808, %v4982
          %v5015 = vmul.f32 %v4811, %v4983
          %v5016 = vmul.f32 %v4861, %v4984
          %v5017 = vmul.f32 %v4864, %v4985
          %v5018 = vmul.f32 %v4869, %v4986
          %v5019 = vmul.f32 %v4872, %v4987
          %v5020 = vmul.f32 %v4877, %v4988
          %v5021 = vmul.f32 %v4880, %v4989
          %v5022 = vmul.f32 %v4885, %v4990
          %v5023 = vmul.f32 %v4888, %v4991
          %v5024 = vmul.f32 %v4938, %v4992
          %v5025 = vmul.f32 %v4941, %v4993
          %v5026 = vmul.f32 %v4946, %v4994
          %v5027 = vmul.f32 %v4949, %v4995
          %v5028 = vmul.f32 %v4954, %v4996
          %v5029 = vmul.f32 %v4957, %v4997
          %v5030 = vmul.f32 %v4962, %v4998
          %v5031 = vmul.f32 %v4965, %v4999
          %v5032 = vpack.c.bf16 %v5001, %v5000
          %v5033 = vpack.c.bf16 %v5003, %v5002
          %v5034 = vpack.c.bf16 %v5005, %v5004
          %v5035 = vpack.c.bf16 %v5007, %v5006
          %5036 = vst.msk [vmem:[#allocation6] sm:$0xff] %vm1306, %v5032
          %5037 = vst.msk [vmem:[#allocation6 + $0x8] sm:$0xff] %vm1306, %v5033
          %5038 = vst.msk [vmem:[#allocation6 + $0x10] sm:$0xff] %vm1306, %v5034
          %5039 = vst.msk [vmem:[#allocation6 + $0x18] sm:$0xff] %vm1306, %v5035
          %v5040 = vpack.c.bf16 %v5009, %v5008
          %v5041 = vpack.c.bf16 %v5011, %v5010
          %v5042 = vpack.c.bf16 %v5013, %v5012
          %v5043 = vpack.c.bf16 %v5015, %v5014
          %5048 = vrot.lane.b32.xlu0 %v5040, 32
          %v5049 = vpop.permute.xlu0 %5048
          %5050 = vrot.lane.b32.xlu0 %v5041, 32
          %v5051 = vpop.permute.xlu0 %5050
          %5052 = vrot.lane.b32.xlu0 %v5042, 32
          %v5053 = vpop.permute.xlu0 %5052
          %5054 = vrot.lane.b32.xlu0 %v5043, 32
          %v5055 = vpop.permute.xlu0 %5054
          %5060 = vst.msk [vmem:[#allocation6] sm:$0xff] %vm2873, %v5049
          %5061 = vst.msk [vmem:[#allocation6 + $0x8] sm:$0xff] %vm2873, %v5051
          %5062 = vst.msk [vmem:[#allocation6 + $0x10] sm:$0xff] %vm2873, %v5053
          %5063 = vst.msk [vmem:[#allocation6 + $0x18] sm:$0xff] %vm2873, %v5055
          %v5064 = vpack.c.bf16 %v5017, %v5016
          %v5065 = vpack.c.bf16 %v5019, %v5018
          %v5066 = vpack.c.bf16 %v5021, %v5020
          %v5067 = vpack.c.bf16 %v5023, %v5022
          %5072 = vrot.lane.b32.xlu0 %v5064, 64
          %v5073 = vpop.permute.xlu0 %5072
          %5074 = vrot.lane.b32.xlu0 %v5065, 64
          %v5075 = vpop.permute.xlu0 %5074
          %5076 = vrot.lane.b32.xlu0 %v5066, 64
          %v5077 = vpop.permute.xlu0 %5076
          %5078 = vrot.lane.b32.xlu0 %v5067, 64
          %v5079 = vpop.permute.xlu0 %5078
          %5084 = vst.msk [vmem:[#allocation6] sm:$0xff] %vm2898, %v5073
          %5085 = vst.msk [vmem:[#allocation6 + $0x8] sm:$0xff] %vm2898, %v5075
          %5086 = vst.msk [vmem:[#allocation6 + $0x10] sm:$0xff] %vm2898, %v5077
          %5087 = vst.msk [vmem:[#allocation6 + $0x18] sm:$0xff] %vm2898, %v5079
          %v5088 = vpack.c.bf16 %v5025, %v5024
          %v5089 = vpack.c.bf16 %v5027, %v5026
          %v5090 = vpack.c.bf16 %v5029, %v5028
          %v5091 = vpack.c.bf16 %v5031, %v5030
          %5096 = vrot.lane.b32.xlu0 %v5088, 96
          %v5097 = vpop.permute.xlu0 %5096
          %5098 = vrot.lane.b32.xlu0 %v5089, 96
          %v5099 = vpop.permute.xlu0 %5098
          %5100 = vrot.lane.b32.xlu0 %v5090, 96
          %v5101 = vpop.permute.xlu0 %5100
          %5102 = vrot.lane.b32.xlu0 %v5091, 96
          %v5103 = vpop.permute.xlu0 %5102
          %5108 = vst.msk [vmem:[#allocation6] sm:$0xff] %vm2923, %v5097
          %5109 = vst.msk [vmem:[#allocation6 + $0x8] sm:$0xff] %vm2923, %v5099
          %5110 = vst.msk [vmem:[#allocation6 + $0x10] sm:$0xff] %vm2923, %v5101
          %5111 = vst.msk [vmem:[#allocation6 + $0x18] sm:$0xff] %vm2923, %v5103
          %v5112 = vld [vmem:[#allocation6] sm:$0xff]
          %v5113 = vld [vmem:[#allocation6 + $0x8] sm:$0xff]
          %v5114 = vld [vmem:[#allocation6 + $0x10] sm:$0xff]
          %v5115 = vld [vmem:[#allocation6 + $0x18] sm:$0xff]
          %v5116 = vld [vmem:[%s823] sm:$0xf]
          %v5117 = vld [vmem:[%s823 + $0x4] sm:$0xf]
          %v5118 = vld [vmem:[%s823 + $0x8] sm:$0xf]
          %v5119 = vld [vmem:[%s823 + $0xc] sm:$0xf]
          %v5120 = vld [vmem:[%s823 + $0x10] sm:$0xf]
          %v5121 = vld [vmem:[%s823 + $0x14] sm:$0xf]
          %v5122 = vld [vmem:[%s823 + $0x18] sm:$0xf]
          %v5123 = vld [vmem:[%s823 + $0x1c] sm:$0xf]
          %v5124 = vld [vmem:[%s823 + $0x20] sm:$0xf]
          %v5125 = vld [vmem:[%s823 + $0x24] sm:$0xf]
          %v5126 = vld [vmem:[%s823 + $0x28] sm:$0xf]
          %v5127 = vld [vmem:[%s823 + $0x2c] sm:$0xf]
          %v5128 = vld [vmem:[%s823 + $0x30] sm:$0xf]
          %v5129 = vld [vmem:[%s823 + $0x34] sm:$0xf]
          %v5130 = vld [vmem:[%s823 + $0x38] sm:$0xf]
          %v5131 = vld [vmem:[%s823 + $0x3c] sm:$0xf]
          %v5132 = vld [vmem:[%s963] sm:$0x1]
          %v5134 = vlaneseq
          %v5135 = vshrl.u32 %v5134, 7
          %v5136 = vsub.s32 0, %v5135
          %v5137 = vrot.slane %v5132, %v5136
          %v5155 = vunpack.c.l.b16 %v5116
          %v5156 = vunpack.c.l.b16 %v5117
          %v5157 = vunpack.c.l.b16 %v5118
          %v5158 = vunpack.c.l.b16 %v5119
          %v5159 = vunpack.c.l.b16 %v5120
          %v5160 = vunpack.c.l.b16 %v5121
          %v5161 = vunpack.c.l.b16 %v5122
          %v5162 = vunpack.c.l.b16 %v5123
          %v5163 = vunpack.c.l.b16 %v5124
          %v5164 = vunpack.c.l.b16 %v5125
          %v5165 = vunpack.c.l.b16 %v5126
          %v5166 = vunpack.c.l.b16 %v5127
          %v5167 = vunpack.c.l.b16 %v5128
          %v5168 = vunpack.c.l.b16 %v5129
          %v5169 = vunpack.c.l.b16 %v5130
          %v5170 = vunpack.c.l.b16 %v5131
          %v5171 = vpack.c.b16 %v5156, %v5155
          %v5172 = vpack.c.b16 %v5158, %v5157
          %v5173 = vpack.c.b16 %v5160, %v5159
          %v5174 = vpack.c.b16 %v5162, %v5161
          %v5175 = vpack.c.b16 %v5164, %v5163
          %v5176 = vpack.c.b16 %v5166, %v5165
          %v5177 = vpack.c.b16 %v5168, %v5167
          %v5178 = vpack.c.b16 %v5170, %v5169
          %5187 = vmatprep.subr.bf16.mxu0 0
          %5188 = vmatpush1.bf16.msra.mxu0 %v5171
          %5189 = vmatprep.subr.bf16.mxu0 0
          %5190 = vmatpush1.bf16.msra.mxu0 %v5172
          %5191 = vmatprep.subr.bf16.mxu0 0
          %5192 = vmatpush1.bf16.msra.mxu0 %v5173
          %5193 = vmatprep.subr.bf16.mxu0 0
          %5194 = vmatpush1.bf16.msra.mxu0 %v5174
          %5195 = vmatprep.subr.bf16.mxu0 0
          %5196 = vmatpush1.bf16.msra.mxu0 %v5175
          %5197 = vmatprep.subr.bf16.mxu0 0
          %5198 = vmatpush1.bf16.msra.mxu0 %v5176
          %5199 = vmatprep.subr.bf16.mxu0 0
          %5200 = vmatpush1.bf16.msra.mxu0 %v5177
          %5201 = vmatprep.subr.bf16.mxu0 0
          %5202 = vmatpush1.bf16.msra.mxu0 %v5178
          %5203 = vmatprep.subr.bf16.mxu0 0
          %5204 = vmatpush1.bf16.msra.mxu0 0
          %5205 = vmatprep.subr.bf16.mxu0 0
          %5206 = vmatpush1.bf16.msra.mxu0 0
          %5207 = vmatprep.subr.bf16.mxu0 0
          %5208 = vmatpush1.bf16.msra.mxu0 0
          %5209 = vmatprep.subr.bf16.mxu0 0
          %5210 = vmatpush1.bf16.msra.mxu0 0
          %5211 = vmatprep.subr.bf16.mxu0 0
          %5212 = vmatpush1.bf16.msra.mxu0 0
          %5213 = vmatprep.subr.bf16.mxu0 0
          %5214 = vmatpush1.bf16.msra.mxu0 0
          %5215 = vmatprep.subr.bf16.mxu0 0
          %5216 = vmatpush1.bf16.msra.mxu0 0
          %5217 = vmatprep.subr.bf16.mxu0 0
          %5218 = vmatpush1.bf16.msra.mxu0 0
          %5219 = vmatprep.mubr.bf16.mxu0 0
          %5220 = vmatmul.mubr.bf16.gmra.mrb[0].mxu0 %v5112
          %v5221 = vpop.f32.mrb[0].mxu0
          %v5222 = vadd.f32 %v5137, %v5221
          %v5223 = vpop.f32.mrb[0].mxu0
          %v5224 = vpop.f32.mrb[0].mxu0
          %v5225 = vadd.f32 %v5137, %v5224
          %v5226 = vpop.f32.mrb[0].mxu0
          %5227 = vmatprep.mubr.bf16.mxu0 0
          %5228 = vmatmul.mubr.bf16.gmra.mrb[0].mxu0 %v5113
          %v5229 = vpop.f32.mrb[0].mxu0
          %v5230 = vadd.f32 %v5137, %v5229
          %v5231 = vpop.f32.mrb[0].mxu0
          %v5232 = vpop.f32.mrb[0].mxu0
          %v5233 = vadd.f32 %v5137, %v5232
          %v5234 = vpop.f32.mrb[0].mxu0
          %5235 = vmatprep.mubr.bf16.mxu0 0
          %5236 = vmatmul.mubr.bf16.gmra.mrb[0].mxu0 %v5114
          %v5237 = vpop.f32.mrb[0].mxu0
          %v5238 = vadd.f32 %v5137, %v5237
          %v5239 = vpop.f32.mrb[0].mxu0
          %v5240 = vpop.f32.mrb[0].mxu0
          %v5241 = vadd.f32 %v5137, %v5240
          %v5242 = vpop.f32.mrb[0].mxu0
          %5243 = vmatprep.mubr.bf16.mxu0 0
          %5244 = vmatmul.mubr.bf16.gmra.mrb[0].mxu0 %v5115
          %v5245 = vpop.f32.mrb[0].mxu0
          %v5246 = vadd.f32 %v5137, %v5245
          %v5247 = vpop.f32.mrb[0].mxu0
          %v5248 = vpop.f32.mrb[0].mxu0
          %v5249 = vadd.f32 %v5137, %v5248
          %v5250 = vpop.f32.mrb[0].mxu0
          %5251 = vdwg.mxu0
          %v5252 = vadd.f32 %v3226, %v5222
          %v5253 = vadd.f32 %v3227, %v5225
          %v5254 = vadd.f32 %v3228, %v5230
          %v5255 = vadd.f32 %v3229, %v5233
          %v5256 = vadd.f32 %v3230, %v5238
          %v5257 = vadd.f32 %v3231, %v5241
          %v5258 = vadd.f32 %v3232, %v5246
          %v5259 = vadd.f32 %v3233, %v5249
          %v5260 = vld [vmem:[%s966] sm:$0x1]
          %v5261 = vld [vmem:[%s969] sm:$0x1]
          %5262 = vadd.xlane.f32.xlu0 %v5252
          %v5263 = vpop.xlane.xlu0 %5262
          %5264 = vadd.xlane.f32.xlu0 %v5253
          %v5265 = vpop.xlane.xlu0 %5264
          %5266 = vadd.xlane.f32.xlu0 %v5254
          %v5267 = vpop.xlane.xlu0 %5266
          %5268 = vadd.xlane.f32.xlu0 %v5255
          %v5269 = vpop.xlane.xlu0 %5268
          %5270 = vadd.xlane.f32.xlu0 %v5256
          %v5271 = vpop.xlane.xlu0 %5270
          %5272 = vadd.xlane.f32.xlu0 %v5257
          %v5273 = vpop.xlane.xlu0 %5272
          %5274 = vadd.xlane.f32.xlu0 %v5258
          %v5275 = vpop.xlane.xlu0 %5274
          %5276 = vadd.xlane.f32.xlu0 %v5259
          %v5277 = vpop.xlane.xlu0 %5276
          %v5278 = vmul.f32 %v5263, %v1053
          %v5279 = vmul.f32 %v5265, %v1053
          %v5280 = vmul.f32 %v5267, %v1053
          %v5281 = vmul.f32 %v5269, %v1053
          %v5282 = vmul.f32 %v5271, %v1053
          %v5283 = vmul.f32 %v5273, %v1053
          %v5284 = vmul.f32 %v5275, %v1053
          %v5285 = vmul.f32 %v5277, %v1053
          %v5286 = vsub.f32 %v5252, %v5278
          %v5287 = vsub.f32 %v5253, %v5279
          %v5288 = vsub.f32 %v5254, %v5280
          %v5289 = vsub.f32 %v5255, %v5281
          %v5290 = vsub.f32 %v5256, %v5282
          %v5291 = vsub.f32 %v5257, %v5283
          %v5292 = vsub.f32 %v5258, %v5284
          %v5293 = vsub.f32 %v5259, %v5285
          %v5294 = vmul.f32 %v5286, %v5286
          %v5295 = vmul.f32 %v5287, %v5287
          %v5296 = vmul.f32 %v5288, %v5288
          %v5297 = vmul.f32 %v5289, %v5289
          %v5298 = vmul.f32 %v5290, %v5290
          %v5299 = vmul.f32 %v5291, %v5291
          %v5300 = vmul.f32 %v5292, %v5292
          %v5301 = vmul.f32 %v5293, %v5293
          %5302 = vadd.xlane.f32.xlu0 %v5294
          %v5303 = vpop.xlane.xlu0 %5302
          %5304 = vadd.xlane.f32.xlu0 %v5295
          %v5305 = vpop.xlane.xlu0 %5304
          %5306 = vadd.xlane.f32.xlu0 %v5296
          %v5307 = vpop.xlane.xlu0 %5306
          %5308 = vadd.xlane.f32.xlu0 %v5297
          %v5309 = vpop.xlane.xlu0 %5308
          %5310 = vadd.xlane.f32.xlu0 %v5298
          %v5311 = vpop.xlane.xlu0 %5310
          %5312 = vadd.xlane.f32.xlu0 %v5299
          %v5313 = vpop.xlane.xlu0 %5312
          %5314 = vadd.xlane.f32.xlu0 %v5300
          %v5315 = vpop.xlane.xlu0 %5314
          %5316 = vadd.xlane.f32.xlu0 %v5301
          %v5317 = vpop.xlane.xlu0 %5316
          %v5318 = vmul.f32 %v5303, %v1053
          %v5319 = vmul.f32 %v5305, %v1053
          %v5320 = vmul.f32 %v5307, %v1053
          %v5321 = vmul.f32 %v5309, %v1053
          %v5322 = vmul.f32 %v5311, %v1053
          %v5323 = vmul.f32 %v5313, %v1053
          %v5324 = vmul.f32 %v5315, %v1053
          %v5325 = vmul.f32 %v5317, %v1053
          %v5326 = vadd.f32 %v5318, 1e-06
          %v5327 = vadd.f32 %v5319, 1e-06
          %v5328 = vadd.f32 %v5320, 1e-06
          %v5329 = vadd.f32 %v5321, 1e-06
          %v5330 = vadd.f32 %v5322, 1e-06
          %v5331 = vadd.f32 %v5323, 1e-06
          %v5332 = vadd.f32 %v5324, 1e-06
          %v5333 = vadd.f32 %v5325, 1e-06
          %v5334 = vrsqrt.pop %v5326
          %v5335 = vrsqrt.pop %v5327
          %v5336 = vrsqrt.pop %v5328
          %v5337 = vrsqrt.pop %v5329
          %v5338 = vrsqrt.pop %v5330
          %v5339 = vrsqrt.pop %v5331
          %v5340 = vrsqrt.pop %v5332
          %v5341 = vrsqrt.pop %v5333
          %v5342 = vmul.f32 %v5286, %v5334
          %v5343 = vmul.f32 %v5287, %v5335
          %v5344 = vmul.f32 %v5288, %v5336
          %v5345 = vmul.f32 %v5289, %v5337
          %v5346 = vmul.f32 %v5290, %v5338
          %v5347 = vmul.f32 %v5291, %v5339
          %v5348 = vmul.f32 %v5292, %v5340
          %v5349 = vmul.f32 %v5293, %v5341
          %v5351 = vlaneseq
          %v5352 = vshrl.u32 %v5351, 7
          %v5353 = vsub.s32 0, %v5352
          %v5354 = vrot.slane %v5260, %v5353
          %v5356 = vmul.f32 %v5342, %v5354
          %v5357 = vmul.f32 %v5343, %v5354
          %v5358 = vmul.f32 %v5344, %v5354
          %v5359 = vmul.f32 %v5345, %v5354
          %v5360 = vmul.f32 %v5346, %v5354
          %v5361 = vmul.f32 %v5347, %v5354
          %v5362 = vmul.f32 %v5348, %v5354
          %v5363 = vmul.f32 %v5349, %v5354
          %v5365 = vlaneseq
          %v5366 = vshrl.u32 %v5365, 7
          %v5367 = vsub.s32 0, %v5366
          %v5368 = vrot.slane %v5261, %v5367
          %v5370 = vadd.f32 %v5356, %v5368
          %v5371 = vadd.f32 %v5357, %v5368
          %v5372 = vadd.f32 %v5358, %v5368
          %v5373 = vadd.f32 %v5359, %v5368
          %v5374 = vadd.f32 %v5360, %v5368
          %v5375 = vadd.f32 %v5361, %v5368
          %v5376 = vadd.f32 %v5362, %v5368
          %v5377 = vadd.f32 %v5363, %v5368
          %v5378 = vpack.c.bf16 %v5371, %v5370
          %v5379 = vpack.c.bf16 %v5373, %v5372
          %v5380 = vpack.c.bf16 %v5375, %v5374
          %v5381 = vpack.c.bf16 %v5377, %v5376
          %5382 = vst [vmem:[#allocation2 + $0x20] sm:$0xff] %v5378
          %5383 = vst [vmem:[#allocation2 + $0x28] sm:$0xff] %v5379
          %5384 = vst [vmem:[#allocation2 + $0x30] sm:$0xff] %v5380
          %5385 = vst [vmem:[#allocation2 + $0x38] sm:$0xff] %v5381
          %v5386 = vld [vmem:[%s983] sm:$0x1]
          %v5388 = vlaneseq
          %v5389 = vshrl.u32 %v5388, 7
          %v5390 = vsub.s32 0, %v5389
          %v5391 = vrot.slane %v5386, %v5390
          %v5393 = vadd.f32 %v5252, %v5391
          %v5394 = vadd.f32 %v5253, %v5391
          %v5395 = vadd.f32 %v5254, %v5391
          %v5396 = vadd.f32 %v5255, %v5391
          %v5397 = vadd.f32 %v5256, %v5391
          %v5398 = vadd.f32 %v5257, %v5391
          %v5399 = vadd.f32 %v5258, %v5391
          %v5400 = vadd.f32 %v5259, %v5391
          %5401 = vst [vmem:[%s3225] sm:$0xff] %v5393
          %5402 = vst [vmem:[%s3225 + $0x8] sm:$0xff] %v5394
          %5403 = vst [vmem:[%s3225 + $0x10] sm:$0xff] %v5395
          %5404 = vst [vmem:[%s3225 + $0x18] sm:$0xff] %v5396
          %5405 = vst [vmem:[%s3225 + $0x20] sm:$0xff] %v5397
          %5406 = vst [vmem:[%s3225 + $0x28] sm:$0xff] %v5398
          %5407 = vst [vmem:[%s3225 + $0x30] sm:$0xff] %v5399
          %5408 = vst [vmem:[%s3225 + $0x38] sm:$0xff] %v5400
        $region128: #{tpu_custom_call.1} parent=87 // pred_fallthru
          _
        %v5409 = vld [vmem:[#allocation2] sm:$0xff]
        %v5410 = vld [vmem:[#allocation2 + $0x8] sm:$0xff]
        %v5411 = vld [vmem:[#allocation2 + $0x10] sm:$0xff]
        %v5412 = vld [vmem:[#allocation2 + $0x18] sm:$0xff]
        %v5413 = vld [vmem:[#allocation2 + $0x20] sm:$0xff]
        %v5414 = vld [vmem:[#allocation2 + $0x28] sm:$0xff]
        %v5415 = vld [vmem:[#allocation2 + $0x30] sm:$0xff]
        %v5416 = vld [vmem:[#allocation2 + $0x38] sm:$0xff]
        %v5417 = vld [vmem:[%s832] sm:$0xff]
        %v5418 = vld [vmem:[%s832 + $0x8] sm:$0xff]
        %v5419 = vld [vmem:[%s832 + $0x10] sm:$0xff]
        %v5420 = vld [vmem:[%s832 + $0x18] sm:$0xff]
        %v5421 = vld [vmem:[%s832 + $0x20] sm:$0xff]
        %v5422 = vld [vmem:[%s832 + $0x28] sm:$0xff]
        %v5423 = vld [vmem:[%s832 + $0x30] sm:$0xff]
        %v5424 = vld [vmem:[%s832 + $0x38] sm:$0xff]
        %v5425 = vld [vmem:[%s832 + $0x40] sm:$0xff]
        %v5426 = vld [vmem:[%s832 + $0x48] sm:$0xff]
        %v5427 = vld [vmem:[%s832 + $0x50] sm:$0xff]
        %v5428 = vld [vmem:[%s832 + $0x58] sm:$0xff]
        %v5429 = vld [vmem:[%s832 + $0x60] sm:$0xff]
        %v5430 = vld [vmem:[%s832 + $0x68] sm:$0xff]
        %v5431 = vld [vmem:[%s832 + $0x70] sm:$0xff]
        %v5432 = vld [vmem:[%s832 + $0x78] sm:$0xff]
        %v5433 = vld [vmem:[%s978] sm:$0x3]
        %v5435 = vlaneseq
        %v5436 = vshrl.u32 %v5435, 7
        %v5437 = vsub.s32 0, %v5436
        %v5438 = vrot.slane %v5433, %v5437
        %v5439 = vlaneseq
        %v5440 = vshrl.u32 %v5439, 7
        %v5441 = vsub.s32 1, %v5440
        %v5442 = vrot.slane %v5433, %v5441
        %v5461 = vunpack.c.l.b16 %v5417
        %v5462 = vunpack.c.h.b16 %v5417
        %v5463 = vunpack.c.l.b16 %v5418
        %v5464 = vunpack.c.h.b16 %v5418
        %v5465 = vunpack.c.l.b16 %v5419
        %v5466 = vunpack.c.h.b16 %v5419
        %v5467 = vunpack.c.l.b16 %v5420
        %v5468 = vunpack.c.h.b16 %v5420
        %v5469 = vunpack.c.l.b16 %v5421
        %v5470 = vunpack.c.h.b16 %v5421
        %v5471 = vunpack.c.l.b16 %v5422
        %v5472 = vunpack.c.h.b16 %v5422
        %v5473 = vunpack.c.l.b16 %v5423
        %v5474 = vunpack.c.h.b16 %v5423
        %v5475 = vunpack.c.l.b16 %v5424
        %v5476 = vunpack.c.h.b16 %v5424
        %v5477 = vunpack.c.l.b16 %v5425
        %v5478 = vunpack.c.h.b16 %v5425
        %v5479 = vunpack.c.l.b16 %v5426
        %v5480 = vunpack.c.h.b16 %v5426
        %v5481 = vunpack.c.l.b16 %v5427
        %v5482 = vunpack.c.h.b16 %v5427
        %v5483 = vunpack.c.l.b16 %v5428
        %v5484 = vunpack.c.h.b16 %v5428
        %v5485 = vunpack.c.l.b16 %v5429
        %v5486 = vunpack.c.h.b16 %v5429
        %v5487 = vunpack.c.l.b16 %v5430
        %v5488 = vunpack.c.h.b16 %v5430
        %v5489 = vunpack.c.l.b16 %v5431
        %v5490 = vunpack.c.h.b16 %v5431
        %v5491 = vunpack.c.l.b16 %v5432
        %v5492 = vunpack.c.h.b16 %v5432
        %v5493 = vpack.c.b16 %v5463, %v5461
        %v5494 = vpack.c.b16 %v5464, %v5462
        %v5495 = vpack.c.b16 %v5467, %v5465
        %v5496 = vpack.c.b16 %v5468, %v5466
        %v5497 = vpack.c.b16 %v5471, %v5469
        %v5498 = vpack.c.b16 %v5472, %v5470
        %v5499 = vpack.c.b16 %v5475, %v5473
        %v5500 = vpack.c.b16 %v5476, %v5474
        %v5501 = vpack.c.b16 %v5479, %v5477
        %v5502 = vpack.c.b16 %v5480, %v5478
        %v5503 = vpack.c.b16 %v5483, %v5481
        %v5504 = vpack.c.b16 %v5484, %v5482
        %v5505 = vpack.c.b16 %v5487, %v5485
        %v5506 = vpack.c.b16 %v5488, %v5486
        %v5507 = vpack.c.b16 %v5491, %v5489
        %v5508 = vpack.c.b16 %v5492, %v5490
        %5525 = vmatprep.subr.bf16.mxu0 %v5494
        %5526 = vmatpush1.bf16.msra.mxu0 %v5493
        %5527 = vmatprep.subr.bf16.mxu0 %v5496
        %5528 = vmatpush1.bf16.msra.mxu0 %v5495
        %5529 = vmatprep.subr.bf16.mxu0 %v5498
        %5530 = vmatpush1.bf16.msra.mxu0 %v5497
        %5531 = vmatprep.subr.bf16.mxu0 %v5500
        %5532 = vmatpush1.bf16.msra.mxu0 %v5499
        %5533 = vmatprep.subr.bf16.mxu0 %v5502
        %5534 = vmatpush1.bf16.msra.mxu0 %v5501
        %5535 = vmatprep.subr.bf16.mxu0 %v5504
        %5536 = vmatpush1.bf16.msra.mxu0 %v5503
        %5537 = vmatprep.subr.bf16.mxu0 %v5506
        %5538 = vmatpush1.bf16.msra.mxu0 %v5505
        %5539 = vmatprep.subr.bf16.mxu0 %v5508
        %5540 = vmatpush1.bf16.msra.mxu0 %v5507
        %5541 = vmatprep.subr.bf16.mxu0 0
        %5542 = vmatpush1.bf16.msra.mxu0 0
        %5543 = vmatprep.subr.bf16.mxu0 0
        %5544 = vmatpush1.bf16.msra.mxu0 0
        %5545 = vmatprep.subr.bf16.mxu0 0
        %5546 = vmatpush1.bf16.msra.mxu0 0
        %5547 = vmatprep.subr.bf16.mxu0 0
        %5548 = vmatpush1.bf16.msra.mxu0 0
        %5549 = vmatprep.subr.bf16.mxu0 0
        %5550 = vmatpush1.bf16.msra.mxu0 0
        %5551 = vmatprep.subr.bf16.mxu0 0
        %5552 = vmatpush1.bf16.msra.mxu0 0
        %5553 = vmatprep.subr.bf16.mxu0 0
        %5554 = vmatpush1.bf16.msra.mxu0 0
        %5555 = vmatprep.subr.bf16.mxu0 0
        %5556 = vmatpush1.bf16.msra.mxu0 0
        %5557 = vmatprep.mubr.bf16.mxu0 0
        %5558 = vmatmul.mubr.bf16.gmra.mrb[0].mxu0 %v5409
        %v5559 = vpop.f32.mrb[0].mxu0
        %v5560 = vadd.f32 %v5438, %v5559
        %v5561 = vpop.f32.mrb[0].mxu0
        %v5562 = vadd.f32 %v5442, %v5561
        %v5563 = vpop.f32.mrb[0].mxu0
        %v5564 = vadd.f32 %v5438, %v5563
        %v5565 = vpop.f32.mrb[0].mxu0
        %v5566 = vadd.f32 %v5442, %v5565
        %5567 = vmatprep.mubr.bf16.mxu0 0
        %5568 = vmatmul.mubr.bf16.gmra.mrb[0].mxu0 %v5410
        %v5569 = vpop.f32.mrb[0].mxu0
        %v5570 = vadd.f32 %v5438, %v5569
        %v5571 = vpop.f32.mrb[0].mxu0
        %v5572 = vadd.f32 %v5442, %v5571
        %v5573 = vpop.f32.mrb[0].mxu0
        %v5574 = vadd.f32 %v5438, %v5573
        %v5575 = vpop.f32.mrb[0].mxu0
        %v5576 = vadd.f32 %v5442, %v5575
        %5577 = vmatprep.mubr.bf16.mxu0 0
        %5578 = vmatmul.mubr.bf16.gmra.mrb[0].mxu0 %v5411
        %v5579 = vpop.f32.mrb[0].mxu0
        %v5580 = vadd.f32 %v5438, %v5579
        %v5581 = vpop.f32.mrb[0].mxu0
        %v5582 = vadd.f32 %v5442, %v5581
        %v5583 = vpop.f32.mrb[0].mxu0
        %v5584 = vadd.f32 %v5438, %v5583
        %v5585 = vpop.f32.mrb[0].mxu0
        %v5586 = vadd.f32 %v5442, %v5585
        %5587 = vmatprep.mubr.bf16.mxu0 0
        %5588 = vmatmul.mubr.bf16.gmra.mrb[0].mxu0 %v5412
        %v5589 = vpop.f32.mrb[0].mxu0
        %v5590 = vadd.f32 %v5438, %v5589
        %v5591 = vpop.f32.mrb[0].mxu0
        %v5592 = vadd.f32 %v5442, %v5591
        %v5593 = vpop.f32.mrb[0].mxu0
        %v5594 = vadd.f32 %v5438, %v5593
        %v5595 = vpop.f32.mrb[0].mxu0
        %v5596 = vadd.f32 %v5442, %v5595
        %5597 = vmatprep.mubr.bf16.mxu0 0
        %5598 = vmatmul.mubr.bf16.gmra.mrb[0].mxu0 %v5413
        %v5599 = vpop.f32.mrb[0].mxu0
        %v5600 = vadd.f32 %v5438, %v5599
        %v5601 = vpop.f32.mrb[0].mxu0
        %v5602 = vadd.f32 %v5442, %v5601
        %v5603 = vpop.f32.mrb[0].mxu0
        %v5604 = vadd.f32 %v5438, %v5603
        %v5605 = vpop.f32.mrb[0].mxu0
        %v5606 = vadd.f32 %v5442, %v5605
        %5607 = vmatprep.mubr.bf16.mxu0 0
        %5608 = vmatmul.mubr.bf16.gmra.mrb[0].mxu0 %v5414
        %v5609 = vpop.f32.mrb[0].mxu0
        %v5610 = vadd.f32 %v5438, %v5609
        %v5611 = vpop.f32.mrb[0].mxu0
        %v5612 = vadd.f32 %v5442, %v5611
        %v5613 = vpop.f32.mrb[0].mxu0
        %v5614 = vadd.f32 %v5438, %v5613
        %v5615 = vpop.f32.mrb[0].mxu0
        %v5616 = vadd.f32 %v5442, %v5615
        %5617 = vmatprep.mubr.bf16.mxu0 0
        %5618 = vmatmul.mubr.bf16.gmra.mrb[0].mxu0 %v5415
        %v5619 = vpop.f32.mrb[0].mxu0
        %v5620 = vadd.f32 %v5438, %v5619
        %v5621 = vpop.f32.mrb[0].mxu0
        %v5622 = vadd.f32 %v5442, %v5621
        %v5623 = vpop.f32.mrb[0].mxu0
        %v5624 = vadd.f32 %v5438, %v5623
        %v5625 = vpop.f32.mrb[0].mxu0
        %v5626 = vadd.f32 %v5442, %v5625
        %5627 = vmatprep.mubr.bf16.mxu0 0
        %5628 = vmatmul.mubr.bf16.gmra.mrb[0].mxu0 %v5416
        %v5629 = vpop.f32.mrb[0].mxu0
        %v5630 = vadd.f32 %v5438, %v5629
        %v5631 = vpop.f32.mrb[0].mxu0
        %v5632 = vadd.f32 %v5442, %v5631
        %v5633 = vpop.f32.mrb[0].mxu0
        %v5634 = vadd.f32 %v5438, %v5633
        %v5635 = vpop.f32.mrb[0].mxu0
        %v5636 = vadd.f32 %v5442, %v5635
        %5637 = vdwg.mxu0
        %v5638 = vmul.f32 %v5560, %v5560
        %v5639 = vmul.f32 %v5562, %v5562
        %v5640 = vmul.f32 %v5564, %v5564
        %v5641 = vmul.f32 %v5566, %v5566
        %v5642 = vmul.f32 %v5570, %v5570
        %v5643 = vmul.f32 %v5572, %v5572
        %v5644 = vmul.f32 %v5574, %v5574
        %v5645 = vmul.f32 %v5576, %v5576
        %v5646 = vmul.f32 %v5580, %v5580
        %v5647 = vmul.f32 %v5582, %v5582
        %v5648 = vmul.f32 %v5584, %v5584
        %v5649 = vmul.f32 %v5586, %v5586
        %v5650 = vmul.f32 %v5590, %v5590
        %v5651 = vmul.f32 %v5592, %v5592
        %v5652 = vmul.f32 %v5594, %v5594
        %v5653 = vmul.f32 %v5596, %v5596
        %v5654 = vmul.f32 %v5600, %v5600
        %v5655 = vmul.f32 %v5602, %v5602
        %v5656 = vmul.f32 %v5604, %v5604
        %v5657 = vmul.f32 %v5606, %v5606
        %v5658 = vmul.f32 %v5610, %v5610
        %v5659 = vmul.f32 %v5612, %v5612
        %v5660 = vmul.f32 %v5614, %v5614
        %v5661 = vmul.f32 %v5616, %v5616
        %v5662 = vmul.f32 %v5620, %v5620
        %v5663 = vmul.f32 %v5622, %v5622
        %v5664 = vmul.f32 %v5624, %v5624
        %v5665 = vmul.f32 %v5626, %v5626
        %v5666 = vmul.f32 %v5630, %v5630
        %v5667 = vmul.f32 %v5632, %v5632
        %v5668 = vmul.f32 %v5634, %v5634
        %v5669 = vmul.f32 %v5636, %v5636
        %v5670 = vmul.f32 %v5560, %v5638
        %v5671 = vmul.f32 %v5562, %v5639
        %v5672 = vmul.f32 %v5564, %v5640
        %v5673 = vmul.f32 %v5566, %v5641
        %v5674 = vmul.f32 %v5570, %v5642
        %v5675 = vmul.f32 %v5572, %v5643
        %v5676 = vmul.f32 %v5574, %v5644
        %v5677 = vmul.f32 %v5576, %v5645
        %v5678 = vmul.f32 %v5580, %v5646
        %v5679 = vmul.f32 %v5582, %v5647
        %v5680 = vmul.f32 %v5584, %v5648
        %v5681 = vmul.f32 %v5586, %v5649
        %v5682 = vmul.f32 %v5590, %v5650
        %v5683 = vmul.f32 %v5592, %v5651
        %v5684 = vmul.f32 %v5594, %v5652
        %v5685 = vmul.f32 %v5596, %v5653
        %v5686 = vmul.f32 %v5600, %v5654
        %v5687 = vmul.f32 %v5602, %v5655
        %v5688 = vmul.f32 %v5604, %v5656
        %v5689 = vmul.f32 %v5606, %v5657
        %v5690 = vmul.f32 %v5610, %v5658
        %v5691 = vmul.f32 %v5612, %v5659
        %v5692 = vmul.f32 %v5614, %v5660
        %v5693 = vmul.f32 %v5616, %v5661
        %v5694 = vmul.f32 %v5620, %v5662
        %v5695 = vmul.f32 %v5622, %v5663
        %v5696 = vmul.f32 %v5624, %v5664
        %v5697 = vmul.f32 %v5626, %v5665
        %v5698 = vmul.f32 %v5630, %v5666
        %v5699 = vmul.f32 %v5632, %v5667
        %v5700 = vmul.f32 %v5634, %v5668
        %v5701 = vmul.f32 %v5636, %v5669
        %v5702 = vmul.f32 %v5670, 0.044715
        %v5703 = vmul.f32 %v5671, 0.044715
        %v5704 = vmul.f32 %v5672, 0.044715
        %v5705 = vmul.f32 %v5673, 0.044715
        %v5706 = vmul.f32 %v5674, 0.044715
        %v5707 = vmul.f32 %v5675, 0.044715
        %v5708 = vmul.f32 %v5676, 0.044715
        %v5709 = vmul.f32 %v5677, 0.044715
        %v5710 = vmul.f32 %v5678, 0.044715
        %v5711 = vmul.f32 %v5679, 0.044715
        %v5712 = vmul.f32 %v5680, 0.044715
        %v5713 = vmul.f32 %v5681, 0.044715
        %v5714 = vmul.f32 %v5682, 0.044715
        %v5715 = vmul.f32 %v5683, 0.044715
        %v5716 = vmul.f32 %v5684, 0.044715
        %v5717 = vmul.f32 %v5685, 0.044715
        %v5718 = vmul.f32 %v5686, 0.044715
        %v5719 = vmul.f32 %v5687, 0.044715
        %v5720 = vmul.f32 %v5688, 0.044715
        %v5721 = vmul.f32 %v5689, 0.044715
        %v5722 = vmul.f32 %v5690, 0.044715
        %v5723 = vmul.f32 %v5691, 0.044715
        %v5724 = vmul.f32 %v5692, 0.044715
        %v5725 = vmul.f32 %v5693, 0.044715
        %v5726 = vmul.f32 %v5694, 0.044715
        %v5727 = vmul.f32 %v5695, 0.044715
        %v5728 = vmul.f32 %v5696, 0.044715
        %v5729 = vmul.f32 %v5697, 0.044715
        %v5730 = vmul.f32 %v5698, 0.044715
        %v5731 = vmul.f32 %v5699, 0.044715
        %v5732 = vmul.f32 %v5700, 0.044715
        %v5733 = vmul.f32 %v5701, 0.044715
        %v5734 = vadd.f32 %v5560, %v5702
        %v5735 = vadd.f32 %v5562, %v5703
        %v5736 = vadd.f32 %v5564, %v5704
        %v5737 = vadd.f32 %v5566, %v5705
        %v5738 = vadd.f32 %v5570, %v5706
        %v5739 = vadd.f32 %v5572, %v5707
        %v5740 = vadd.f32 %v5574, %v5708
        %v5741 = vadd.f32 %v5576, %v5709
        %v5742 = vadd.f32 %v5580, %v5710
        %v5743 = vadd.f32 %v5582, %v5711
        %v5744 = vadd.f32 %v5584, %v5712
        %v5745 = vadd.f32 %v5586, %v5713
        %v5746 = vadd.f32 %v5590, %v5714
        %v5747 = vadd.f32 %v5592, %v5715
        %v5748 = vadd.f32 %v5594, %v5716
        %v5749 = vadd.f32 %v5596, %v5717
        %v5750 = vadd.f32 %v5600, %v5718
        %v5751 = vadd.f32 %v5602, %v5719
        %v5752 = vadd.f32 %v5604, %v5720
        %v5753 = vadd.f32 %v5606, %v5721
        %v5754 = vadd.f32 %v5610, %v5722
        %v5755 = vadd.f32 %v5612, %v5723
        %v5756 = vadd.f32 %v5614, %v5724
        %v5757 = vadd.f32 %v5616, %v5725
        %v5758 = vadd.f32 %v5620, %v5726
        %v5759 = vadd.f32 %v5622, %v5727
        %v5760 = vadd.f32 %v5624, %v5728
        %v5761 = vadd.f32 %v5626, %v5729
        %v5762 = vadd.f32 %v5630, %v5730
        %v5763 = vadd.f32 %v5632, %v5731
        %v5764 = vadd.f32 %v5634, %v5732
        %v5765 = vadd.f32 %v5636, %v5733
        %v5766 = vmul.f32 %v5734, 0.7978846
        %v5767 = vmul.f32 %v5735, 0.7978846
        %v5768 = vmul.f32 %v5736, 0.7978846
        %v5769 = vmul.f32 %v5737, 0.7978846
        %v5770 = vmul.f32 %v5738, 0.7978846
        %v5771 = vmul.f32 %v5739, 0.7978846
        %v5772 = vmul.f32 %v5740, 0.7978846
        %v5773 = vmul.f32 %v5741, 0.7978846
        %v5774 = vmul.f32 %v5742, 0.7978846
        %v5775 = vmul.f32 %v5743, 0.7978846
        %v5776 = vmul.f32 %v5744, 0.7978846
        %v5777 = vmul.f32 %v5745, 0.7978846
        %v5778 = vmul.f32 %v5746, 0.7978846
        %v5779 = vmul.f32 %v5747, 0.7978846
        %v5780 = vmul.f32 %v5748, 0.7978846
        %v5781 = vmul.f32 %v5749, 0.7978846
        %v5782 = vmul.f32 %v5750, 0.7978846
        %v5783 = vmul.f32 %v5751, 0.7978846
        %v5784 = vmul.f32 %v5752, 0.7978846
        %v5785 = vmul.f32 %v5753, 0.7978846
        %v5786 = vmul.f32 %v5754, 0.7978846
        %v5787 = vmul.f32 %v5755, 0.7978846
        %v5788 = vmul.f32 %v5756, 0.7978846
        %v5789 = vmul.f32 %v5757, 0.7978846
        %v5790 = vmul.f32 %v5758, 0.7978846
        %v5791 = vmul.f32 %v5759, 0.7978846
        %v5792 = vmul.f32 %v5760, 0.7978846
        %v5793 = vmul.f32 %v5761, 0.7978846
        %v5794 = vmul.f32 %v5762, 0.7978846
        %v5795 = vmul.f32 %v5763, 0.7978846
        %v5796 = vmul.f32 %v5764, 0.7978846
        %v5797 = vmul.f32 %v5765, 0.7978846
        %v5798 = vtanh.pop %v5766
        %v5799 = vtanh.pop %v5767
        %v5800 = vtanh.pop %v5768
        %v5801 = vtanh.pop %v5769
        %v5802 = vtanh.pop %v5770
        %v5803 = vtanh.pop %v5771
        %v5804 = vtanh.pop %v5772
        %v5805 = vtanh.pop %v5773
        %v5806 = vtanh.pop %v5774
        %v5807 = vtanh.pop %v5775
        %v5808 = vtanh.pop %v5776
        %v5809 = vtanh.pop %v5777
        %v5810 = vtanh.pop %v5778
        %v5811 = vtanh.pop %v5779
        %v5812 = vtanh.pop %v5780
        %v5813 = vtanh.pop %v5781
        %v5814 = vtanh.pop %v5782
        %v5815 = vtanh.pop %v5783
        %v5816 = vtanh.pop %v5784
        %v5817 = vtanh.pop %v5785
        %v5818 = vtanh.pop %v5786
        %v5819 = vtanh.pop %v5787
        %v5820 = vtanh.pop %v5788
        %v5821 = vtanh.pop %v5789
        %v5822 = vtanh.pop %v5790
        %v5823 = vtanh.pop %v5791
        %v5824 = vtanh.pop %v5792
        %v5825 = vtanh.pop %v5793
        %v5826 = vtanh.pop %v5794
        %v5827 = vtanh.pop %v5795
        %v5828 = vtanh.pop %v5796
        %v5829 = vtanh.pop %v5797
        %v5830 = vadd.f32 %v5798, 1.0
        %v5831 = vadd.f32 %v5799, 1.0
        %v5832 = vadd.f32 %v5800, 1.0
        %v5833 = vadd.f32 %v5801, 1.0
        %v5834 = vadd.f32 %v5802, 1.0
        %v5835 = vadd.f32 %v5803, 1.0
        %v5836 = vadd.f32 %v5804, 1.0
        %v5837 = vadd.f32 %v5805, 1.0
        %v5838 = vadd.f32 %v5806, 1.0
        %v5839 = vadd.f32 %v5807, 1.0
        %v5840 = vadd.f32 %v5808, 1.0
        %v5841 = vadd.f32 %v5809, 1.0
        %v5842 = vadd.f32 %v5810, 1.0
        %v5843 = vadd.f32 %v5811, 1.0
        %v5844 = vadd.f32 %v5812, 1.0
        %v5845 = vadd.f32 %v5813, 1.0
        %v5846 = vadd.f32 %v5814, 1.0
        %v5847 = vadd.f32 %v5815, 1.0
        %v5848 = vadd.f32 %v5816, 1.0
        %v5849 = vadd.f32 %v5817, 1.0
        %v5850 = vadd.f32 %v5818, 1.0
        %v5851 = vadd.f32 %v5819, 1.0
        %v5852 = vadd.f32 %v5820, 1.0
        %v5853 = vadd.f32 %v5821, 1.0
        %v5854 = vadd.f32 %v5822, 1.0
        %v5855 = vadd.f32 %v5823, 1.0
        %v5856 = vadd.f32 %v5824, 1.0
        %v5857 = vadd.f32 %v5825, 1.0
        %v5858 = vadd.f32 %v5826, 1.0
        %v5859 = vadd.f32 %v5827, 1.0
        %v5860 = vadd.f32 %v5828, 1.0
        %v5861 = vadd.f32 %v5829, 1.0
        %v5862 = vmul.f32 %v5830, 0.5
        %v5863 = vmul.f32 %v5831, 0.5
        %v5864 = vmul.f32 %v5832, 0.5
        %v5865 = vmul.f32 %v5833, 0.5
        %v5866 = vmul.f32 %v5834, 0.5
        %v5867 = vmul.f32 %v5835, 0.5
        %v5868 = vmul.f32 %v5836, 0.5
        %v5869 = vmul.f32 %v5837, 0.5
        %v5870 = vmul.f32 %v5838, 0.5
        %v5871 = vmul.f32 %v5839, 0.5
        %v5872 = vmul.f32 %v5840, 0.5
        %v5873 = vmul.f32 %v5841, 0.5
        %v5874 = vmul.f32 %v5842, 0.5
        %v5875 = vmul.f32 %v5843, 0.5
        %v5876 = vmul.f32 %v5844, 0.5
        %v5877 = vmul.f32 %v5845, 0.5
        %v5878 = vmul.f32 %v5846, 0.5
        %v5879 = vmul.f32 %v5847, 0.5
        %v5880 = vmul.f32 %v5848, 0.5
        %v5881 = vmul.f32 %v5849, 0.5
        %v5882 = vmul.f32 %v5850, 0.5
        %v5883 = vmul.f32 %v5851, 0.5
        %v5884 = vmul.f32 %v5852, 0.5
        %v5885 = vmul.f32 %v5853, 0.5
        %v5886 = vmul.f32 %v5854, 0.5
        %v5887 = vmul.f32 %v5855, 0.5
        %v5888 = vmul.f32 %v5856, 0.5
        %v5889 = vmul.f32 %v5857, 0.5
        %v5890 = vmul.f32 %v5858, 0.5
        %v5891 = vmul.f32 %v5859, 0.5
        %v5892 = vmul.f32 %v5860, 0.5
        %v5893 = vmul.f32 %v5861, 0.5
        %v5894 = vmul.f32 %v5560, %v5862
        %v5895 = vmul.f32 %v5562, %v5863
        %v5896 = vmul.f32 %v5564, %v5864
        %v5897 = vmul.f32 %v5566, %v5865
        %v5898 = vmul.f32 %v5570, %v5866
        %v5899 = vmul.f32 %v5572, %v5867
        %v5900 = vmul.f32 %v5574, %v5868
        %v5901 = vmul.f32 %v5576, %v5869
        %v5902 = vmul.f32 %v5580, %v5870
        %v5903 = vmul.f32 %v5582, %v5871
        %v5904 = vmul.f32 %v5584, %v5872
        %v5905 = vmul.f32 %v5586, %v5873
        %v5906 = vmul.f32 %v5590, %v5874
        %v5907 = vmul.f32 %v5592, %v5875
        %v5908 = vmul.f32 %v5594, %v5876
        %v5909 = vmul.f32 %v5596, %v5877
        %v5910 = vmul.f32 %v5600, %v5878
        %v5911 = vmul.f32 %v5602, %v5879
        %v5912 = vmul.f32 %v5604, %v5880
        %v5913 = vmul.f32 %v5606, %v5881
        %v5914 = vmul.f32 %v5610, %v5882
        %v5915 = vmul.f32 %v5612, %v5883
        %v5916 = vmul.f32 %v5614, %v5884
        %v5917 = vmul.f32 %v5616, %v5885
        %v5918 = vmul.f32 %v5620, %v5886
        %v5919 = vmul.f32 %v5622, %v5887
        %v5920 = vmul.f32 %v5624, %v5888
        %v5921 = vmul.f32 %v5626, %v5889
        %v5922 = vmul.f32 %v5630, %v5890
        %v5923 = vmul.f32 %v5632, %v5891
        %v5924 = vmul.f32 %v5634, %v5892
        %v5925 = vmul.f32 %v5636, %v5893
        %v5926 = vpack.c.bf16 %v5896, %v5894
        %v5927 = vpack.c.bf16 %v5897, %v5895
        %v5928 = vpack.c.bf16 %v5900, %v5898
        %v5929 = vpack.c.bf16 %v5901, %v5899
        %v5930 = vpack.c.bf16 %v5904, %v5902
        %v5931 = vpack.c.bf16 %v5905, %v5903
        %v5932 = vpack.c.bf16 %v5908, %v5906
        %v5933 = vpack.c.bf16 %v5909, %v5907
        %v5934 = vpack.c.bf16 %v5912, %v5910
        %v5935 = vpack.c.bf16 %v5913, %v5911
        %v5936 = vpack.c.bf16 %v5916, %v5914
        %v5937 = vpack.c.bf16 %v5917, %v5915
        %v5938 = vpack.c.bf16 %v5920, %v5918
        %v5939 = vpack.c.bf16 %v5921, %v5919
        %v5940 = vpack.c.bf16 %v5924, %v5922
        %v5941 = vpack.c.bf16 %v5925, %v5923
        %v5942 = vld [vmem:[%s841] sm:$0xf]
        %v5943 = vld [vmem:[%s841 + $0x4] sm:$0xf]
        %v5944 = vld [vmem:[%s841 + $0x8] sm:$0xf]
        %v5945 = vld [vmem:[%s841 + $0xc] sm:$0xf]
        %v5946 = vld [vmem:[%s841 + $0x10] sm:$0xf]
        %v5947 = vld [vmem:[%s841 + $0x14] sm:$0xf]
        %v5948 = vld [vmem:[%s841 + $0x18] sm:$0xf]
        %v5949 = vld [vmem:[%s841 + $0x1c] sm:$0xf]
        %v5950 = vld [vmem:[%s841 + $0x20] sm:$0xf]
        %v5951 = vld [vmem:[%s841 + $0x24] sm:$0xf]
        %v5952 = vld [vmem:[%s841 + $0x28] sm:$0xf]
        %v5953 = vld [vmem:[%s841 + $0x2c] sm:$0xf]
        %v5954 = vld [vmem:[%s841 + $0x30] sm:$0xf]
        %v5955 = vld [vmem:[%s841 + $0x34] sm:$0xf]
        %v5956 = vld [vmem:[%s841 + $0x38] sm:$0xf]
        %v5957 = vld [vmem:[%s841 + $0x3c] sm:$0xf]
        %v5958 = vld [vmem:[%s841 + $0x40] sm:$0xf]
        %v5959 = vld [vmem:[%s841 + $0x44] sm:$0xf]
        %v5960 = vld [vmem:[%s841 + $0x48] sm:$0xf]
        %v5961 = vld [vmem:[%s841 + $0x4c] sm:$0xf]
        %v5962 = vld [vmem:[%s841 + $0x50] sm:$0xf]
        %v5963 = vld [vmem:[%s841 + $0x54] sm:$0xf]
        %v5964 = vld [vmem:[%s841 + $0x58] sm:$0xf]
        %v5965 = vld [vmem:[%s841 + $0x5c] sm:$0xf]
        %v5966 = vld [vmem:[%s841 + $0x60] sm:$0xf]
        %v5967 = vld [vmem:[%s841 + $0x64] sm:$0xf]
        %v5968 = vld [vmem:[%s841 + $0x68] sm:$0xf]
        %v5969 = vld [vmem:[%s841 + $0x6c] sm:$0xf]
        %v5970 = vld [vmem:[%s841 + $0x70] sm:$0xf]
        %v5971 = vld [vmem:[%s841 + $0x74] sm:$0xf]
        %v5972 = vld [vmem:[%s841 + $0x78] sm:$0xf]
        %v5973 = vld [vmem:[%s841 + $0x7c] sm:$0xf]
        %v6006 = vunpack.c.l.b16 %v5942
        %v6007 = vunpack.c.l.b16 %v5943
        %v6008 = vunpack.c.l.b16 %v5944
        %v6009 = vunpack.c.l.b16 %v5945
        %v6010 = vunpack.c.l.b16 %v5946
        %v6011 = vunpack.c.l.b16 %v5947
        %v6012 = vunpack.c.l.b16 %v5948
        %v6013 = vunpack.c.l.b16 %v5949
        %v6014 = vunpack.c.l.b16 %v5950
        %v6015 = vunpack.c.l.b16 %v5951
        %v6016 = vunpack.c.l.b16 %v5952
        %v6017 = vunpack.c.l.b16 %v5953
        %v6018 = vunpack.c.l.b16 %v5954
        %v6019 = vunpack.c.l.b16 %v5955
        %v6020 = vunpack.c.l.b16 %v5956
        %v6021 = vunpack.c.l.b16 %v5957
        %v6022 = vunpack.c.l.b16 %v5958
        %v6023 = vunpack.c.l.b16 %v5959
        %v6024 = vunpack.c.l.b16 %v5960
        %v6025 = vunpack.c.l.b16 %v5961
        %v6026 = vunpack.c.l.b16 %v5962
        %v6027 = vunpack.c.l.b16 %v5963
        %v6028 = vunpack.c.l.b16 %v5964
        %v6029 = vunpack.c.l.b16 %v5965
        %v6030 = vunpack.c.l.b16 %v5966
        %v6031 = vunpack.c.l.b16 %v5967
        %v6032 = vunpack.c.l.b16 %v5968
        %v6033 = vunpack.c.l.b16 %v5969
        %v6034 = vunpack.c.l.b16 %v5970
        %v6035 = vunpack.c.l.b16 %v5971
        %v6036 = vunpack.c.l.b16 %v5972
        %v6037 = vunpack.c.l.b16 %v5973
        %v6038 = vpack.c.b16 %v6007, %v6006
        %v6039 = vpack.c.b16 %v6009, %v6008
        %v6040 = vpack.c.b16 %v6011, %v6010
        %v6041 = vpack.c.b16 %v6013, %v6012
        %v6042 = vpack.c.b16 %v6015, %v6014
        %v6043 = vpack.c.b16 %v6017, %v6016
        %v6044 = vpack.c.b16 %v6019, %v6018
        %v6045 = vpack.c.b16 %v6021, %v6020
        %v6046 = vpack.c.b16 %v6023, %v6022
        %v6047 = vpack.c.b16 %v6025, %v6024
        %v6048 = vpack.c.b16 %v6027, %v6026
        %v6049 = vpack.c.b16 %v6029, %v6028
        %v6050 = vpack.c.b16 %v6031, %v6030
        %v6051 = vpack.c.b16 %v6033, %v6032
        %v6052 = vpack.c.b16 %v6035, %v6034
        %v6053 = vpack.c.b16 %v6037, %v6036
        %6070 = vmatprep.subr.bf16.mxu0 0
        %6071 = vmatpush1.bf16.msra.mxu0 %v6038
        %6072 = vmatprep.subr.bf16.mxu0 0
        %6073 = vmatpush1.bf16.msra.mxu0 %v6039
        %6074 = vmatprep.subr.bf16.mxu0 0
        %6075 = vmatpush1.bf16.msra.mxu0 %v6040
        %6076 = vmatprep.subr.bf16.mxu0 0
        %6077 = vmatpush1.bf16.msra.mxu0 %v6041
        %6078 = vmatprep.subr.bf16.mxu0 0
        %6079 = vmatpush1.bf16.msra.mxu0 %v6042
        %6080 = vmatprep.subr.bf16.mxu0 0
        %6081 = vmatpush1.bf16.msra.mxu0 %v6043
        %6082 = vmatprep.subr.bf16.mxu0 0
        %6083 = vmatpush1.bf16.msra.mxu0 %v6044
        %6084 = vmatprep.subr.bf16.mxu0 0
        %6085 = vmatpush1.bf16.msra.mxu0 %v6045
        %6086 = vmatprep.subr.bf16.mxu0 0
        %6087 = vmatpush1.bf16.msra.mxu0 %v6046
        %6088 = vmatprep.subr.bf16.mxu0 0
        %6089 = vmatpush1.bf16.msra.mxu0 %v6047
        %6090 = vmatprep.subr.bf16.mxu0 0
        %6091 = vmatpush1.bf16.msra.mxu0 %v6048
        %6092 = vmatprep.subr.bf16.mxu0 0
        %6093 = vmatpush1.bf16.msra.mxu0 %v6049
        %6094 = vmatprep.subr.bf16.mxu0 0
        %6095 = vmatpush1.bf16.msra.mxu0 %v6050
        %6096 = vmatprep.subr.bf16.mxu0 0
        %6097 = vmatpush1.bf16.msra.mxu0 %v6051
        %6098 = vmatprep.subr.bf16.mxu0 0
        %6099 = vmatpush1.bf16.msra.mxu0 %v6052
        %6100 = vmatprep.subr.bf16.mxu0 0
        %6101 = vmatpush1.bf16.msra.mxu0 %v6053
        %6102 = vmatprep.mubr.bf16.mxu0 %v5927
        %6103 = vmatmul.mubr.bf16.gmra.mrb[0].mxu0 %v5926
        %v6104 = vpop.f32.mrb[0].mxu0
        %v6105 = vadd.f32 0.0, %v6104
        %v6106 = vpop.f32.mrb[0].mxu0
        %v6107 = vpop.f32.mrb[0].mxu0
        %v6108 = vadd.f32 0.0, %v6107
        %v6109 = vpop.f32.mrb[0].mxu0
        %6110 = vmatprep.mubr.bf16.mxu0 %v5929
        %6111 = vmatmul.mubr.bf16.gmra.mrb[0].mxu0 %v5928
        %v6112 = vpop.f32.mrb[0].mxu0
        %v6113 = vadd.f32 0.0, %v6112
        %v6114 = vpop.f32.mrb[0].mxu0
        %v6115 = vpop.f32.mrb[0].mxu0
        %v6116 = vadd.f32 0.0, %v6115
        %v6117 = vpop.f32.mrb[0].mxu0
        %6118 = vmatprep.mubr.bf16.mxu0 %v5931
        %6119 = vmatmul.mubr.bf16.gmra.mrb[0].mxu0 %v5930
        %v6120 = vpop.f32.mrb[0].mxu0
        %v6121 = vadd.f32 0.0, %v6120
        %v6122 = vpop.f32.mrb[0].mxu0
        %v6123 = vpop.f32.mrb[0].mxu0
        %v6124 = vadd.f32 0.0, %v6123
        %v6125 = vpop.f32.mrb[0].mxu0
        %6126 = vmatprep.mubr.bf16.mxu0 %v5933
        %6127 = vmatmul.mubr.bf16.gmra.mrb[0].mxu0 %v5932
        %v6128 = vpop.f32.mrb[0].mxu0
        %v6129 = vadd.f32 0.0, %v6128
        %v6130 = vpop.f32.mrb[0].mxu0
        %v6131 = vpop.f32.mrb[0].mxu0
        %v6132 = vadd.f32 0.0, %v6131
        %v6133 = vpop.f32.mrb[0].mxu0
        %6134 = vmatprep.mubr.bf16.mxu0 %v5935
        %6135 = vmatmul.mubr.bf16.gmra.mrb[0].mxu0 %v5934
        %v6136 = vpop.f32.mrb[0].mxu0
        %v6137 = vadd.f32 0.0, %v6136
        %v6138 = vpop.f32.mrb[0].mxu0
        %v6139 = vpop.f32.mrb[0].mxu0
        %v6140 = vadd.f32 0.0, %v6139
        %v6141 = vpop.f32.mrb[0].mxu0
        %6142 = vmatprep.mubr.bf16.mxu0 %v5937
        %6143 = vmatmul.mubr.bf16.gmra.mrb[0].mxu0 %v5936
        %v6144 = vpop.f32.mrb[0].mxu0
        %v6145 = vadd.f32 0.0, %v6144
        %v6146 = vpop.f32.mrb[0].mxu0
        %v6147 = vpop.f32.mrb[0].mxu0
        %v6148 = vadd.f32 0.0, %v6147
        %v6149 = vpop.f32.mrb[0].mxu0
        %6150 = vmatprep.mubr.bf16.mxu0 %v5939
        %6151 = vmatmul.mubr.bf16.gmra.mrb[0].mxu0 %v5938
        %v6152 = vpop.f32.mrb[0].mxu0
        %v6153 = vadd.f32 0.0, %v6152
        %v6154 = vpop.f32.mrb[0].mxu0
        %v6155 = vpop.f32.mrb[0].mxu0
        %v6156 = vadd.f32 0.0, %v6155
        %v6157 = vpop.f32.mrb[0].mxu0
        %6158 = vmatprep.mubr.bf16.mxu0 %v5941
        %6159 = vmatmul.mubr.bf16.gmra.mrb[0].mxu0 %v5940
        %v6160 = vpop.f32.mrb[0].mxu0
        %v6161 = vadd.f32 0.0, %v6160
        %v6162 = vpop.f32.mrb[0].mxu0
        %v6163 = vpop.f32.mrb[0].mxu0
        %v6164 = vadd.f32 0.0, %v6163
        %v6165 = vpop.f32.mrb[0].mxu0
        %6166 = vdwg.mxu0
        %v6167 = vld [vmem:[#allocation21] sm:$0xff]
        %v6168 = vld [vmem:[#allocation21 + $0x8] sm:$0xff]
        %v6169 = vld [vmem:[#allocation21 + $0x10] sm:$0xff]
        %v6170 = vld [vmem:[#allocation21 + $0x18] sm:$0xff]
        %v6171 = vld [vmem:[#allocation21 + $0x20] sm:$0xff]
        %v6172 = vld [vmem:[#allocation21 + $0x28] sm:$0xff]
        %v6173 = vld [vmem:[#allocation21 + $0x30] sm:$0xff]
        %v6174 = vld [vmem:[#allocation21 + $0x38] sm:$0xff]
        %v6175 = vadd.f32 %v6167, %v6105
        %v6176 = vadd.f32 %v6168, %v6108
        %v6177 = vadd.f32 %v6169, %v6113
        %v6178 = vadd.f32 %v6170, %v6116
        %v6179 = vadd.f32 %v6171, %v6121
        %v6180 = vadd.f32 %v6172, %v6124
        %v6181 = vadd.f32 %v6173, %v6129
        %v6182 = vadd.f32 %v6174, %v6132
        %6183 = vst [vmem:[#allocation21] sm:$0xff] %v6175
        %6184 = vst [vmem:[#allocation21 + $0x8] sm:$0xff] %v6176
        %6185 = vst [vmem:[#allocation21 + $0x10] sm:$0xff] %v6177
        %6186 = vst [vmem:[#allocation21 + $0x18] sm:$0xff] %v6178
        %6187 = vst [vmem:[#allocation21 + $0x20] sm:$0xff] %v6179
        %6188 = vst [vmem:[#allocation21 + $0x28] sm:$0xff] %v6180
        %6189 = vst [vmem:[#allocation21 + $0x30] sm:$0xff] %v6181
        %6190 = vst [vmem:[#allocation21 + $0x38] sm:$0xff] %v6182
        %s6191 = scalar_lea.vmem [#allocation21], 64
        %v6192 = vld [vmem:[%s6191] sm:$0xff]
        %v6193 = vld [vmem:[%s6191 + $0x8] sm:$0xff]
        %v6194 = vld [vmem:[%s6191 + $0x10] sm:$0xff]
        %v6195 = vld [vmem:[%s6191 + $0x18] sm:$0xff]
        %v6196 = vld [vmem:[%s6191 + $0x20] sm:$0xff]
        %v6197 = vld [vmem:[%s6191 + $0x28] sm:$0xff]
        %v6198 = vld [vmem:[%s6191 + $0x30] sm:$0xff]
        %v6199 = vld [vmem:[%s6191 + $0x38] sm:$0xff]
        %v6200 = vadd.f32 %v6192, %v6137
        %v6201 = vadd.f32 %v6193, %v6140
        %v6202 = vadd.f32 %v6194, %v6145
        %v6203 = vadd.f32 %v6195, %v6148
        %v6204 = vadd.f32 %v6196, %v6153
        %v6205 = vadd.f32 %v6197, %v6156
        %v6206 = vadd.f32 %v6198, %v6161
        %v6207 = vadd.f32 %v6199, %v6164
        %6208 = vst [vmem:[%s6191] sm:$0xff] %v6200
        %6209 = vst [vmem:[%s6191 + $0x8] sm:$0xff] %v6201
        %6210 = vst [vmem:[%s6191 + $0x10] sm:$0xff] %v6202
        %6211 = vst [vmem:[%s6191 + $0x18] sm:$0xff] %v6203
        %6212 = vst [vmem:[%s6191 + $0x20] sm:$0xff] %v6204
        %6213 = vst [vmem:[%s6191 + $0x28] sm:$0xff] %v6205
        %6214 = vst [vmem:[%s6191 + $0x30] sm:$0xff] %v6206
        %6215 = vst [vmem:[%s6191 + $0x38] sm:$0xff] %v6207
        // Predicated region
        $region129: #{tpu_custom_call.1} parent=87 // pred_check
          %p6216 = pneg %p527
        $region130: #{tpu_custom_call.1} parent=87 // pred_check_branch
          %6218 = sbr.rel (%p6216) target = $region132
        $region131: #{tpu_custom_call.1} parent=87 // pred_region
          %s6219 = smul.u32 2, %s47
          %s6221 = ssub.s32 2048, 2048
          %6222 = vsyncadd [#allocation9], %s6221
          %s6223 = smul.addr %s6219, 8
          %s6224 = smul.addr %s6223, 128
          %s6225 = scalar_lea.hbm %s17, %s6224
          %s6226 = sshll.u32 [#allocation21], 4
          %s6227 = int_to_ptr.vmem [resolvable:$true] %s6226
          %6232 = dma.vmem_to_hbm [thread:$0]  %s6227, 2048, %s6225, [#allocation9], 128, 128, 8
        $region132: #{tpu_custom_call.1} parent=87 // pred_fallthru
          _
        // Predicated region
        $region133: #{tpu_custom_call.1} parent=87 // pred_check
          %p6233 = pneg %p527
        $region134: #{tpu_custom_call.1} parent=87 // pred_check_branch
          %6235 = sbr.rel (%p6233) target = $region136
        $region135: #{tpu_custom_call.1} parent=87 // pred_region
          %6236 = dma.done [#allocation9], 2048
        $region136: #{tpu_custom_call.1} parent=87 // pred_fallthru
          _
      $region88: #{tpu_custom_call.1} parent=5 // pred_fallthru
        _
      %p6237 = scmp.le.s32.totalorder 2, %s37
      // Predicated region
      $region137: #{tpu_custom_call.1} parent=5 // pred_check
        %p6238 = pneg %p6237
      $region138: #{tpu_custom_call.1} parent=5 // pred_check_branch
        %6240 = sbr.rel (%p6238) target = $region140
      $region139: #{tpu_custom_call.1} parent=5 // pred_region
        %s6241 = ssub.s32 %s37, 2
      $region140: #{tpu_custom_call.1} parent=5 // pred_fallthru
        _
    $region6: #{tpu_custom_call.1} parent=1 // loop_footer
      %s41 = sadd.s32 1, %s37
    $region7: #{tpu_custom_call.1} parent=1 // loop_footer_branch
      %36 = sbr.rel target = $region3
    $region8: #{tpu_custom_call.1} parent=1 // loop_exit
      _
    %6242 = vsyncpa [#allocation8], 1
    %s6243 = scalar_lea.sflag [#allocation8], 1
    %6244 = vsyncpa %s6243, 1
    %6245 = vsyncpa [#allocation11], 1
    %s6246 = scalar_lea.sflag [#allocation11], 1
    %6247 = vsyncpa %s6246, 1
    %6248 = vsyncpa [#allocation14], 1
    %s6249 = scalar_lea.sflag [#allocation14], 1
    %6250 = vsyncpa %s6249, 1
    %6251 = vsyncpa [#allocation17], 1
    %s6252 = scalar_lea.sflag [#allocation17], 1
    %6253 = vsyncpa %s6252, 1
    %6254 = vsyncpa [#allocation20], 1
    %s6255 = scalar_lea.sflag [#allocation20], 1
    %6256 = vsyncpa %s6255, 1
    %6257 = vsyncpa [#allocation9], 1
    %s6258 = scalar_lea.sflag [#allocation9], 1
    %6259 = vsyncpa %s6258, 1

</llo_original>
